<compile_context>
chip_gen: v7x
topology: tpu7x:2x2x1
jax: 0.10.0
libtpu: 0.0.40
codegen_flags: <defaults>
</compile_context>

<pallas_src>
import numpy as np

import jax
import jax.numpy as jnp
from jax.experimental import pallas as pl
from jax.experimental.pallas import tpu as pltpu


# ---------------------------------------------------------------------------
# Constant structural matrices (built once, at trace time, with numpy).
# They turn tap-extraction / pooling / padding / freq-mean into plain 2-D MXU
# matmuls so the entire forward fuses into one Pallas kernel.
# ---------------------------------------------------------------------------
def _tap_select(h_out, w_out, h_pad, w_pad):
    """(9, h_out*w_out, h_pad*w_pad) one-hot row selections for the 3x3 taps."""
    s = np.zeros((9, h_out * w_out, h_pad * w_pad), np.float32)
    for dh in range(3):
        for dw in range(3):
            k = dh * 3 + dw
            for i in range(h_out):
                for j in range(w_out):
                    s[k, i * w_out + j, (i + dh) * w_pad + (j + dw)] = 1.0
    return s


def _avgpool2x2_mat(h, w):
    """(h//2*w//2, h*w): 2x2 average pooling on a row-major flattened grid."""
    ho, wo = h // 2, w // 2
    p = np.zeros((ho * wo, h * w), np.float32)
    for i in range(ho):
        for j in range(wo):
            for di in range(2):
                for dj in range(2):
                    p[i * wo + j, (2 * i + di) * w + (2 * j + dj)] = 0.25
    return p


def _zeropad_mat(h, w):
    """((h+2)*(w+2), h*w): embed an (h,w) grid into a zero-padded (h+2,w+2)."""
    m = np.zeros(((h + 2) * (w + 2), h * w), np.float32)
    for i in range(h):
        for j in range(w):
            m[(i + 1) * (w + 2) + (j + 1), i * w + j] = 1.0
    return m


def _freq_mean_mat(t, f):
    """(t, t*f): mean over the frequency axis of a row-major (t, f) grid."""
    m = np.zeros((t, t * f), np.float32)
    for i in range(t):
        m[i, i * f:(i + 1) * f] = 1.0 / float(f)
    return m


# ---------------------------------------------------------------------------
# Fused Pallas kernel: one grid step == one batch sample, all stages in VMEM.
# ---------------------------------------------------------------------------
def _fused_forward_kernel(x_ref, s1_ref, pp1_ref, s2_ref, p2_ref, mf_ref,
                          w1_ref, b1_ref, w2_ref, b2_ref,
                          fc1w_ref, fc1b_ref, fcw_ref, fcb_ref, o_ref):
    f32 = jnp.float32
    xcol = x_ref[0]                        # ((T+2)*(F+2), 1) padded, flattened
    w1 = w1_ref[...]                       # (9, c1)
    n_tap = s1_ref.shape[0]                # 9

    # conv1: 3x3 'same', Cin=1 -> c1, bias + ReLU.  In-kernel im2col: each tap
    # is a constant row-selection matmul; the Cin=1 channel product is a lane
    # broadcast (avoids a degenerate K=1 MXU pass).
    acc1 = None
    for k in range(n_tap):
        tap = jnp.dot(s1_ref[k], xcol * w1[k:k + 1, :],
                      preferred_element_type=f32)                  # (T*F, c1)
        acc1 = tap if acc1 is None else acc1 + tap
    h1 = jnp.maximum(acc1 + b1_ref[...], 0.0)                      # (T*F, c1)

    # avgpool2x2 fused with the zero-pad needed by conv2 (one constant matmul,
    # so the full-resolution conv1 output never leaves VMEM).
    h1pp = jnp.dot(pp1_ref[...], h1,
                   preferred_element_type=f32)                     # ((T/2+2)*(F/2+2), c1)

    # conv2: 3x3 'same', c1 -> c2, bias + ReLU (9 accumulating MXU matmuls
    # contracting over the input channels).
    acc2 = None
    for k in range(n_tap):
        tap = jnp.dot(s2_ref[k], h1pp, preferred_element_type=f32)     # (T/2*F/2, c1)
        contrib = jnp.dot(tap, w2_ref[k], preferred_element_type=f32)  # (T/2*F/2, c2)
        acc2 = contrib if acc2 is None else acc2 + contrib
    h2 = jnp.maximum(acc2 + b2_ref[...], 0.0)                      # (T/2*F/2, c2)

    # second avgpool2x2 (constant matmul)
    h2p = jnp.dot(p2_ref[...], h2, preferred_element_type=f32)     # (T/4*F/4, c2)

    # CNN14-style global pooling: mean over freq, then max-over-time + mean-over-time.
    xm = jnp.dot(mf_ref[...], h2p, preferred_element_type=f32)     # (T/4, c2)
    pooled = (jnp.max(xm, axis=0, keepdims=True)
              + jnp.mean(xm, axis=0, keepdims=True))               # (1, c2)

    # fc1 + ReLU (backbone embedding).  Broadcast M to 8 rows so the MXU pass
    # is non-degenerate; rows are identical, row 0 is the answer.
    pooled8 = jnp.broadcast_to(pooled, (8, pooled.shape[1]))
    emb = jnp.maximum(
        jnp.dot(pooled8, fc1w_ref[...], preferred_element_type=f32) + fc1b_ref[...],
        0.0)                                                       # (8, emb)

    # TODO(synk): nn.Dropout(p=0.1) is identity in eval/inference mode;
    # training-mode stochastic dropout is intentionally not applied here.
    logits = (jnp.dot(emb, fcw_ref[...], preferred_element_type=f32)
              + fcb_ref[...])                                      # (8, num_class)
    o_ref[0] = logits[:1, :]


# ---------------------------------------------------------------------------
# Wrapper: parameter/constant prep + a single pallas_call.
# ---------------------------------------------------------------------------
def sound_classifier_forward(x, params):
    """x: (B, T, F) float32 spectrogram -> logits (B, num_class)."""
    B, T, F = x.shape
    assert T % 4 == 0 and F % 4 == 0, "two 2x2 avg-pools need T, F divisible by 4"
    # TODO(synk): the constant structural matrices scale as O((T*F)^2); for real
    # CNN14 spectrogram lengths this fused kernel would need spatial tiling.

    c1 = params["conv1_w"].shape[-1]
    c2 = params["conv2_w"].shape[-1]
    emb = params["fc1_w"].shape[-1]
    ncls = params["fc_w"].shape[-1]

    T2, F2 = T // 2, F // 2
    T3, F3 = T // 4, F // 4

    # Constant structural matrices (trace-time; folded into the jit).
    s1 = jnp.asarray(_tap_select(T, F, T + 2, F + 2))                  # (9, T*F, (T+2)*(F+2))
    pp1 = jnp.asarray(_zeropad_mat(T2, F2) @ _avgpool2x2_mat(T, F))    # ((T2+2)*(F2+2), T*F)
    s2 = jnp.asarray(_tap_select(T2, F2, T2 + 2, F2 + 2))              # (9, T2*F2, (T2+2)*(F2+2))
    p2 = jnp.asarray(_avgpool2x2_mat(T2, F2))                          # (T3*F3, T2*F2)
    mf = jnp.asarray(_freq_mean_mat(T3, F3))                           # (T3, T3*F3)

    # Parameters reshaped for the kernel (HWIO conv weights flattened over taps).
    w1 = params["conv1_w"].reshape(9, c1).astype(jnp.float32)
    b1 = params["conv1_b"].reshape(1, c1).astype(jnp.float32)
    w2 = params["conv2_w"].reshape(9, c1, c2).astype(jnp.float32)
    b2 = params["conv2_b"].reshape(1, c2).astype(jnp.float32)
    fc1w = params["fc1_w"].astype(jnp.float32)
    fc1b = params["fc1_b"].reshape(1, emb).astype(jnp.float32)
    fcw = params["fc_w"].astype(jnp.float32)
    fcb = params["fc_b"].reshape(1, ncls).astype(jnp.float32)

    # PyTorch does x.unsqueeze(1) -> NCHW (B,1,T,F); here the single channel is
    # the trailing length-1 column of the row-major flattened, zero-padded grid.
    xp = jnp.pad(x.astype(jnp.float32), ((0, 0), (1, 1), (1, 1)))
    xcol = xp.reshape(B, (T + 2) * (F + 2), 1)

    out = pl.pallas_call(
        _fused_forward_kernel,
        out_shape=jax.ShapeDtypeStruct((B, 1, ncls), jnp.float32),
        grid=(B,),
        in_specs=[
            pl.BlockSpec((1, (T + 2) * (F + 2), 1), lambda i: (i, 0, 0)),  # per-sample input
            pl.BlockSpec(s1.shape, lambda i: (0, 0, 0)),
            pl.BlockSpec(pp1.shape, lambda i: (0, 0)),
            pl.BlockSpec(s2.shape, lambda i: (0, 0, 0)),
            pl.BlockSpec(p2.shape, lambda i: (0, 0)),
            pl.BlockSpec(mf.shape, lambda i: (0, 0)),
            pl.BlockSpec(w1.shape, lambda i: (0, 0)),
            pl.BlockSpec(b1.shape, lambda i: (0, 0)),
            pl.BlockSpec(w2.shape, lambda i: (0, 0, 0)),
            pl.BlockSpec(b2.shape, lambda i: (0, 0)),
            pl.BlockSpec(fc1w.shape, lambda i: (0, 0)),
            pl.BlockSpec(fc1b.shape, lambda i: (0, 0)),
            pl.BlockSpec(fcw.shape, lambda i: (0, 0)),
            pl.BlockSpec(fcb.shape, lambda i: (0, 0)),
        ],
        out_specs=pl.BlockSpec((1, 1, ncls), lambda i: (i, 0, 0)),
        compiler_params=pltpu.CompilerParams(
            dimension_semantics=("parallel",),     # shards batch across v7x's 2 TCs
            vmem_limit_bytes=32 * 1024 * 1024,
        ),
    )(xcol, s1, pp1, s2, p2, mf, w1, b1, w2, b2, fc1w, fc1b, fcw, fcb)
    return out.reshape(B, ncls)


# ---------------------------------------------------------------------------
# Synthetic CNN14-style backbone params (inference-mode BN folded into conv).
# ---------------------------------------------------------------------------
def init_params(key, c1=8, c2=16, emb_size=32, num_class=5):
    ks = jax.random.split(key, 4)

    def w(k, shape, fan_in):
        return jax.random.normal(k, shape, jnp.float32) / jnp.sqrt(float(fan_in))

    return {
        "conv1_w": w(ks[0], (3, 3, 1, c1), 9 * 1),
        "conv1_b": jnp.zeros((c1,), jnp.float32),
        "conv2_w": w(ks[1], (3, 3, c1, c2), 9 * c1),
        "conv2_b": jnp.zeros((c2,), jnp.float32),
        "fc1_w": w(ks[2], (c2, emb_size), c2),            # backbone embedding proj
        "fc1_b": jnp.zeros((emb_size,), jnp.float32),
        "fc_w": w(ks[3], (emb_size, num_class), emb_size),  # classifier head
        "fc_b": jnp.zeros((num_class,), jnp.float32),
    }


# ---------------------------------------------------------------------------
# Plain-JAX (XLA) reference, used only for a numerical sanity check.
# ---------------------------------------------------------------------------
def _reference_forward(x, params):
    h = x[:, :, :, None].astype(jnp.float32)

    def conv3x3_relu(h, w, b):
        Bh, H, W, Ci = h.shape
        hp = jnp.pad(h, ((0, 0), (1, 1), (1, 1), (0, 0)))
        cols = [hp[:, dh:dh + H, dw:dw + W, :] for dh in range(3) for dw in range(3)]
        patches = jnp.stack(cols, axis=3).reshape(Bh, H, W, 9 * Ci)
        y = jnp.einsum("bhwk,kc->bhwc", patches, w.reshape(9 * Ci, -1)) + b
        return jnp.maximum(y, 0.0)

    def pool(h):
        Bh, H, W, C = h.shape
        return h.reshape(Bh, H // 2, 2, W // 2, 2, C).mean(axis=(2, 4))

    h = pool(conv3x3_relu(h, params["conv1_w"], params["conv1_b"]))
    h = pool(conv3x3_relu(h, params["conv2_w"], params["conv2_b"]))
    h = jnp.mean(h, axis=2)
    h = jnp.max(h, axis=1) + jnp.mean(h, axis=1)
    emb = jnp.maximum(h @ params["fc1_w"] + params["fc1_b"], 0.0)
    return emb @ params["fc_w"] + params["fc_b"]


if __name__ == "__main__":
    key = jax.random.PRNGKey(0)
    pkey, xkey = jax.random.split(key)

    params = init_params(pkey, c1=8, c2=16, emb_size=32, num_class=5)

    B, T, F = 2, 16, 16
    x = jax.random.normal(xkey, (B, T, F), jnp.float32)

    fwd = jax.jit(lambda inp: sound_classifier_forward(inp, params))
    logits = fwd(x)
    jax.block_until_ready(logits)

    assert logits.shape == (B, 5), logits.shape
    assert logits.dtype == jnp.float32

    ref = _reference_forward(x, params)
    assert jnp.allclose(logits, ref, rtol=1e-4, atol=1e-4), (
        "Pallas kernel disagrees with plain-JAX reference")

    print("KERNEL_OK")
</pallas_src>

<mosaic_0001>
module attributes {stable_mosaic.version = 11 : i64} {
  func.func @_fused_forward_kernel(%arg0: i32, %arg1: memref<1x324x1xf32, #tpu.memory_space<vmem>>, %arg2: memref<9x256x324xf32, #tpu.memory_space<vmem>>, %arg3: memref<100x256xf32, #tpu.memory_space<vmem>>, %arg4: memref<9x64x100xf32, #tpu.memory_space<vmem>>, %arg5: memref<16x64xf32, #tpu.memory_space<vmem>>, %arg6: memref<4x16xf32, #tpu.memory_space<vmem>>, %arg7: memref<9x8xf32, #tpu.memory_space<vmem>>, %arg8: memref<1x8xf32, #tpu.memory_space<vmem>>, %arg9: memref<9x8x16xf32, #tpu.memory_space<vmem>>, %arg10: memref<1x16xf32, #tpu.memory_space<vmem>>, %arg11: memref<16x32xf32, #tpu.memory_space<vmem>>, %arg12: memref<1x32xf32, #tpu.memory_space<vmem>>, %arg13: memref<32x5xf32, #tpu.memory_space<vmem>>, %arg14: memref<1x5xf32, #tpu.memory_space<vmem>>, %arg15: memref<1x1x5xf32, #tpu.memory_space<vmem>>) attributes {dimension_semantics = [#tpu.dimension_semantics<parallel>], iteration_bounds = array<i64: 2>, scalar_prefetch = 0 : i64, scratch_operands = 0 : i64, tpu.core_type = #tpu.core_type<tc>, window_params = [{transform_indices = @transform_0, window_bounds = array<i64: 1, 324, 1>}, {pipeline_mode = #tpu.pipeline_mode<synchronous>, transform_indices = @transform_1, window_bounds = array<i64: 9, 256, 324>}, {pipeline_mode = #tpu.pipeline_mode<synchronous>, transform_indices = @transform_2, window_bounds = array<i64: 100, 256>}, {pipeline_mode = #tpu.pipeline_mode<synchronous>, transform_indices = @transform_3, window_bounds = array<i64: 9, 64, 100>}, {pipeline_mode = #tpu.pipeline_mode<synchronous>, transform_indices = @transform_4, window_bounds = array<i64: 16, 64>}, {pipeline_mode = #tpu.pipeline_mode<synchronous>, transform_indices = @transform_5, window_bounds = array<i64: 4, 16>}, {pipeline_mode = #tpu.pipeline_mode<synchronous>, transform_indices = @transform_6, window_bounds = array<i64: 9, 8>}, {pipeline_mode = #tpu.pipeline_mode<synchronous>, transform_indices = @transform_7, window_bounds = array<i64: 1, 8>}, {pipeline_mode = #tpu.pipeline_mode<synchronous>, transform_indices = @transform_8, window_bounds = array<i64: 9, 8, 16>}, {pipeline_mode = #tpu.pipeline_mode<synchronous>, transform_indices = @transform_9, window_bounds = array<i64: 1, 16>}, {pipeline_mode = #tpu.pipeline_mode<synchronous>, transform_indices = @transform_10, window_bounds = array<i64: 16, 32>}, {pipeline_mode = #tpu.pipeline_mode<synchronous>, transform_indices = @transform_11, window_bounds = array<i64: 1, 32>}, {pipeline_mode = #tpu.pipeline_mode<synchronous>, transform_indices = @transform_12, window_bounds = array<i64: 32, 5>}, {pipeline_mode = #tpu.pipeline_mode<synchronous>, transform_indices = @transform_13, window_bounds = array<i64: 1, 5>}, {transform_indices = @transform_14, window_bounds = array<i64: 1, 1, 5>}]} {
    %c0 = arith.constant 0 : index
    %c0_0 = arith.constant 0 : index
    %c0_1 = arith.constant 0 : index
    %0 = vector.load %arg1[%c0, %c0_0, %c0_1] : memref<1x324x1xf32, #tpu.memory_space<vmem>>, vector<1x324x1xf32>
    %1 = vector.shape_cast %0 : vector<1x324x1xf32> to vector<324x1xf32>
    %c0_2 = arith.constant 0 : index
    %c0_3 = arith.constant 0 : index
    %2 = vector.load %arg7[%c0_2, %c0_3] : memref<9x8xf32, #tpu.memory_space<vmem>>, vector<9x8xf32>
    %c0_4 = arith.constant 0 : index
    %c0_5 = arith.constant 0 : index
    %c0_6 = arith.constant 0 : index
    %3 = vector.load %arg2[%c0_4, %c0_5, %c0_6] : memref<9x256x324xf32, #tpu.memory_space<vmem>>, vector<1x256x324xf32>
    %4 = vector.shape_cast %3 : vector<1x256x324xf32> to vector<256x324xf32>
    %5 = vector.extract_strided_slice %2 {offsets = [0, 0], sizes = [1, 8], strides = [1, 1]} : vector<9x8xf32> to vector<1x8xf32>
    %6 = vector.broadcast %1 : vector<324x1xf32> to vector<324x8xf32>
    %7 = vector.broadcast %5 : vector<1x8xf32> to vector<324x8xf32>
    %8 = arith.mulf %6, %7 : vector<324x8xf32>
    %cst = arith.constant dense<0.000000e+00> : vector<256x8xf32>
    %9 = tpu.matmul %4, %8, %cst {dimension_numbers = #tpu.dot_dimension_numbers<[1], [0], [0], [1], [0, 0, 1, 1], [], []>} : vector<256x324xf32>, vector<324x8xf32>, vector<256x8xf32> -> vector<256x8xf32>
    %c1 = arith.constant 1 : index
    %c0_7 = arith.constant 0 : index
    %c0_8 = arith.constant 0 : index
    %10 = vector.load %arg2[%c1, %c0_7, %c0_8] : memref<9x256x324xf32, #tpu.memory_space<vmem>>, vector<1x256x324xf32>
    %11 = vector.shape_cast %10 : vector<1x256x324xf32> to vector<256x324xf32>
    %12 = vector.extract_strided_slice %2 {offsets = [1, 0], sizes = [1, 8], strides = [1, 1]} : vector<9x8xf32> to vector<1x8xf32>
    %13 = vector.broadcast %1 : vector<324x1xf32> to vector<324x8xf32>
    %14 = vector.broadcast %12 : vector<1x8xf32> to vector<324x8xf32>
    %15 = arith.mulf %13, %14 : vector<324x8xf32>
    %cst_9 = arith.constant dense<0.000000e+00> : vector<256x8xf32>
    %16 = tpu.matmul %11, %15, %cst_9 {dimension_numbers = #tpu.dot_dimension_numbers<[1], [0], [0], [1], [0, 0, 1, 1], [], []>} : vector<256x324xf32>, vector<324x8xf32>, vector<256x8xf32> -> vector<256x8xf32>
    %17 = arith.addf %9, %16 : vector<256x8xf32>
    %c2 = arith.constant 2 : index
    %c0_10 = arith.constant 0 : index
    %c0_11 = arith.constant 0 : index
    %18 = vector.load %arg2[%c2, %c0_10, %c0_11] : memref<9x256x324xf32, #tpu.memory_space<vmem>>, vector<1x256x324xf32>
    %19 = vector.shape_cast %18 : vector<1x256x324xf32> to vector<256x324xf32>
    %20 = vector.extract_strided_slice %2 {offsets = [2, 0], sizes = [1, 8], strides = [1, 1]} : vector<9x8xf32> to vector<1x8xf32>
    %21 = vector.broadcast %1 : vector<324x1xf32> to vector<324x8xf32>
    %22 = vector.broadcast %20 : vector<1x8xf32> to vector<324x8xf32>
    %23 = arith.mulf %21, %22 : vector<324x8xf32>
    %cst_12 = arith.constant dense<0.000000e+00> : vector<256x8xf32>
    %24 = tpu.matmul %19, %23, %cst_12 {dimension_numbers = #tpu.dot_dimension_numbers<[1], [0], [0], [1], [0, 0, 1, 1], [], []>} : vector<256x324xf32>, vector<324x8xf32>, vector<256x8xf32> -> vector<256x8xf32>
    %25 = arith.addf %17, %24 : vector<256x8xf32>
    %c3 = arith.constant 3 : index
    %c0_13 = arith.constant 0 : index
    %c0_14 = arith.constant 0 : index
    %26 = vector.load %arg2[%c3, %c0_13, %c0_14] : memref<9x256x324xf32, #tpu.memory_space<vmem>>, vector<1x256x324xf32>
    %27 = vector.shape_cast %26 : vector<1x256x324xf32> to vector<256x324xf32>
    %28 = vector.extract_strided_slice %2 {offsets = [3, 0], sizes = [1, 8], strides = [1, 1]} : vector<9x8xf32> to vector<1x8xf32>
    %29 = vector.broadcast %1 : vector<324x1xf32> to vector<324x8xf32>
    %30 = vector.broadcast %28 : vector<1x8xf32> to vector<324x8xf32>
    %31 = arith.mulf %29, %30 : vector<324x8xf32>
    %cst_15 = arith.constant dense<0.000000e+00> : vector<256x8xf32>
    %32 = tpu.matmul %27, %31, %cst_15 {dimension_numbers = #tpu.dot_dimension_numbers<[1], [0], [0], [1], [0, 0, 1, 1], [], []>} : vector<256x324xf32>, vector<324x8xf32>, vector<256x8xf32> -> vector<256x8xf32>
    %33 = arith.addf %25, %32 : vector<256x8xf32>
    %c4 = arith.constant 4 : index
    %c0_16 = arith.constant 0 : index
    %c0_17 = arith.constant 0 : index
    %34 = vector.load %arg2[%c4, %c0_16, %c0_17] : memref<9x256x324xf32, #tpu.memory_space<vmem>>, vector<1x256x324xf32>
    %35 = vector.shape_cast %34 : vector<1x256x324xf32> to vector<256x324xf32>
    %36 = vector.extract_strided_slice %2 {offsets = [4, 0], sizes = [1, 8], strides = [1, 1]} : vector<9x8xf32> to vector<1x8xf32>
    %37 = vector.broadcast %1 : vector<324x1xf32> to vector<324x8xf32>
    %38 = vector.broadcast %36 : vector<1x8xf32> to vector<324x8xf32>
    %39 = arith.mulf %37, %38 : vector<324x8xf32>
    %cst_18 = arith.constant dense<0.000000e+00> : vector<256x8xf32>
    %40 = tpu.matmul %35, %39, %cst_18 {dimension_numbers = #tpu.dot_dimension_numbers<[1], [0], [0], [1], [0, 0, 1, 1], [], []>} : vector<256x324xf32>, vector<324x8xf32>, vector<256x8xf32> -> vector<256x8xf32>
    %41 = arith.addf %33, %40 : vector<256x8xf32>
    %c5 = arith.constant 5 : index
    %c0_19 = arith.constant 0 : index
    %c0_20 = arith.constant 0 : index
    %42 = vector.load %arg2[%c5, %c0_19, %c0_20] : memref<9x256x324xf32, #tpu.memory_space<vmem>>, vector<1x256x324xf32>
    %43 = vector.shape_cast %42 : vector<1x256x324xf32> to vector<256x324xf32>
    %44 = vector.extract_strided_slice %2 {offsets = [5, 0], sizes = [1, 8], strides = [1, 1]} : vector<9x8xf32> to vector<1x8xf32>
    %45 = vector.broadcast %1 : vector<324x1xf32> to vector<324x8xf32>
    %46 = vector.broadcast %44 : vector<1x8xf32> to vector<324x8xf32>
    %47 = arith.mulf %45, %46 : vector<324x8xf32>
    %cst_21 = arith.constant dense<0.000000e+00> : vector<256x8xf32>
    %48 = tpu.matmul %43, %47, %cst_21 {dimension_numbers = #tpu.dot_dimension_numbers<[1], [0], [0], [1], [0, 0, 1, 1], [], []>} : vector<256x324xf32>, vector<324x8xf32>, vector<256x8xf32> -> vector<256x8xf32>
    %49 = arith.addf %41, %48 : vector<256x8xf32>
    %c6 = arith.constant 6 : index
    %c0_22 = arith.constant 0 : index
    %c0_23 = arith.constant 0 : index
    %50 = vector.load %arg2[%c6, %c0_22, %c0_23] : memref<9x256x324xf32, #tpu.memory_space<vmem>>, vector<1x256x324xf32>
    %51 = vector.shape_cast %50 : vector<1x256x324xf32> to vector<256x324xf32>
    %52 = vector.extract_strided_slice %2 {offsets = [6, 0], sizes = [1, 8], strides = [1, 1]} : vector<9x8xf32> to vector<1x8xf32>
    %53 = vector.broadcast %1 : vector<324x1xf32> to vector<324x8xf32>
    %54 = vector.broadcast %52 : vector<1x8xf32> to vector<324x8xf32>
    %55 = arith.mulf %53, %54 : vector<324x8xf32>
    %cst_24 = arith.constant dense<0.000000e+00> : vector<256x8xf32>
    %56 = tpu.matmul %51, %55, %cst_24 {dimension_numbers = #tpu.dot_dimension_numbers<[1], [0], [0], [1], [0, 0, 1, 1], [], []>} : vector<256x324xf32>, vector<324x8xf32>, vector<256x8xf32> -> vector<256x8xf32>
    %57 = arith.addf %49, %56 : vector<256x8xf32>
    %c7 = arith.constant 7 : index
    %c0_25 = arith.constant 0 : index
    %c0_26 = arith.constant 0 : index
    %58 = vector.load %arg2[%c7, %c0_25, %c0_26] : memref<9x256x324xf32, #tpu.memory_space<vmem>>, vector<1x256x324xf32>
    %59 = vector.shape_cast %58 : vector<1x256x324xf32> to vector<256x324xf32>
    %60 = vector.extract_strided_slice %2 {offsets = [7, 0], sizes = [1, 8], strides = [1, 1]} : vector<9x8xf32> to vector<1x8xf32>
    %61 = vector.broadcast %1 : vector<324x1xf32> to vector<324x8xf32>
    %62 = vector.broadcast %60 : vector<1x8xf32> to vector<324x8xf32>
    %63 = arith.mulf %61, %62 : vector<324x8xf32>
    %cst_27 = arith.constant dense<0.000000e+00> : vector<256x8xf32>
    %64 = tpu.matmul %59, %63, %cst_27 {dimension_numbers = #tpu.dot_dimension_numbers<[1], [0], [0], [1], [0, 0, 1, 1], [], []>} : vector<256x324xf32>, vector<324x8xf32>, vector<256x8xf32> -> vector<256x8xf32>
    %65 = arith.addf %57, %64 : vector<256x8xf32>
    %c8 = arith.constant 8 : index
    %c0_28 = arith.constant 0 : index
    %c0_29 = arith.constant 0 : index
    %66 = vector.load %arg2[%c8, %c0_28, %c0_29] : memref<9x256x324xf32, #tpu.memory_space<vmem>>, vector<1x256x324xf32>
    %67 = vector.shape_cast %66 : vector<1x256x324xf32> to vector<256x324xf32>
    %68 = vector.extract_strided_slice %2 {offsets = [8, 0], sizes = [1, 8], strides = [1, 1]} : vector<9x8xf32> to vector<1x8xf32>
    %69 = vector.broadcast %1 : vector<324x1xf32> to vector<324x8xf32>
    %70 = vector.broadcast %68 : vector<1x8xf32> to vector<324x8xf32>
    %71 = arith.mulf %69, %70 : vector<324x8xf32>
    %cst_30 = arith.constant dense<0.000000e+00> : vector<256x8xf32>
    %72 = tpu.matmul %67, %71, %cst_30 {dimension_numbers = #tpu.dot_dimension_numbers<[1], [0], [0], [1], [0, 0, 1, 1], [], []>} : vector<256x324xf32>, vector<324x8xf32>, vector<256x8xf32> -> vector<256x8xf32>
    %73 = arith.addf %65, %72 : vector<256x8xf32>
    %c0_31 = arith.constant 0 : index
    %c0_32 = arith.constant 0 : index
    %74 = vector.load %arg8[%c0_31, %c0_32] : memref<1x8xf32, #tpu.memory_space<vmem>>, vector<1x8xf32>
    %75 = vector.broadcast %74 : vector<1x8xf32> to vector<256x8xf32>
    %76 = arith.addf %73, %75 : vector<256x8xf32>
    %cst_33 = arith.constant 0.000000e+00 : f32
    %77 = vector.broadcast %cst_33 : f32 to vector<256x8xf32>
    %78 = arith.maximumf %76, %77 : vector<256x8xf32>
    %c0_34 = arith.constant 0 : index
    %c0_35 = arith.constant 0 : index
    %79 = vector.load %arg3[%c0_34, %c0_35] : memref<100x256xf32, #tpu.memory_space<vmem>>, vector<100x256xf32>
    %cst_36 = arith.constant dense<0.000000e+00> : vector<100x8xf32>
    %80 = tpu.matmul %79, %78, %cst_36 {dimension_numbers = #tpu.dot_dimension_numbers<[1], [0], [0], [1], [0, 0, 1, 1], [], []>} : vector<100x256xf32>, vector<256x8xf32>, vector<100x8xf32> -> vector<100x8xf32>
    %c0_37 = arith.constant 0 : index
    %c0_38 = arith.constant 0 : index
    %c0_39 = arith.constant 0 : index
    %81 = vector.load %arg4[%c0_37, %c0_38, %c0_39] : memref<9x64x100xf32, #tpu.memory_space<vmem>>, vector<1x64x100xf32>
    %82 = vector.shape_cast %81 : vector<1x64x100xf32> to vector<64x100xf32>
    %cst_40 = arith.constant dense<0.000000e+00> : vector<64x8xf32>
    %83 = tpu.matmul %82, %80, %cst_40 {dimension_numbers = #tpu.dot_dimension_numbers<[1], [0], [0], [1], [0, 0, 1, 1], [], []>} : vector<64x100xf32>, vector<100x8xf32>, vector<64x8xf32> -> vector<64x8xf32>
    %c0_41 = arith.constant 0 : index
    %c0_42 = arith.constant 0 : index
    %c0_43 = arith.constant 0 : index
    %84 = vector.load %arg9[%c0_41, %c0_42, %c0_43] : memref<9x8x16xf32, #tpu.memory_space<vmem>>, vector<1x8x16xf32>
    %85 = vector.shape_cast %84 : vector<1x8x16xf32> to vector<8x16xf32>
    %cst_44 = arith.constant dense<0.000000e+00> : vector<64x16xf32>
    %86 = tpu.matmul %83, %85, %cst_44 {dimension_numbers = #tpu.dot_dimension_numbers<[1], [0], [0], [1], [0, 0, 1, 1], [], []>} : vector<64x8xf32>, vector<8x16xf32>, vector<64x16xf32> -> vector<64x16xf32>
    %c1_45 = arith.constant 1 : index
    %c0_46 = arith.constant 0 : index
    %c0_47 = arith.constant 0 : index
    %87 = vector.load %arg4[%c1_45, %c0_46, %c0_47] : memref<9x64x100xf32, #tpu.memory_space<vmem>>, vector<1x64x100xf32>
    %88 = vector.shape_cast %87 : vector<1x64x100xf32> to vector<64x100xf32>
    %cst_48 = arith.constant dense<0.000000e+00> : vector<64x8xf32>
    %89 = tpu.matmul %88, %80, %cst_48 {dimension_numbers = #tpu.dot_dimension_numbers<[1], [0], [0], [1], [0, 0, 1, 1], [], []>} : vector<64x100xf32>, vector<100x8xf32>, vector<64x8xf32> -> vector<64x8xf32>
    %c1_49 = arith.constant 1 : index
    %c0_50 = arith.constant 0 : index
    %c0_51 = arith.constant 0 : index
    %90 = vector.load %arg9[%c1_49, %c0_50, %c0_51] : memref<9x8x16xf32, #tpu.memory_space<vmem>>, vector<1x8x16xf32>
    %91 = vector.shape_cast %90 : vector<1x8x16xf32> to vector<8x16xf32>
    %cst_52 = arith.constant dense<0.000000e+00> : vector<64x16xf32>
    %92 = tpu.matmul %89, %91, %cst_52 {dimension_numbers = #tpu.dot_dimension_numbers<[1], [0], [0], [1], [0, 0, 1, 1], [], []>} : vector<64x8xf32>, vector<8x16xf32>, vector<64x16xf32> -> vector<64x16xf32>
    %93 = arith.addf %86, %92 : vector<64x16xf32>
    %c2_53 = arith.constant 2 : index
    %c0_54 = arith.constant 0 : index
    %c0_55 = arith.constant 0 : index
    %94 = vector.load %arg4[%c2_53, %c0_54, %c0_55] : memref<9x64x100xf32, #tpu.memory_space<vmem>>, vector<1x64x100xf32>
    %95 = vector.shape_cast %94 : vector<1x64x100xf32> to vector<64x100xf32>
    %cst_56 = arith.constant dense<0.000000e+00> : vector<64x8xf32>
    %96 = tpu.matmul %95, %80, %cst_56 {dimension_numbers = #tpu.dot_dimension_numbers<[1], [0], [0], [1], [0, 0, 1, 1], [], []>} : vector<64x100xf32>, vector<100x8xf32>, vector<64x8xf32> -> vector<64x8xf32>
    %c2_57 = arith.constant 2 : index
    %c0_58 = arith.constant 0 : index
    %c0_59 = arith.constant 0 : index
    %97 = vector.load %arg9[%c2_57, %c0_58, %c0_59] : memref<9x8x16xf32, #tpu.memory_space<vmem>>, vector<1x8x16xf32>
    %98 = vector.shape_cast %97 : vector<1x8x16xf32> to vector<8x16xf32>
    %cst_60 = arith.constant dense<0.000000e+00> : vector<64x16xf32>
    %99 = tpu.matmul %96, %98, %cst_60 {dimension_numbers = #tpu.dot_dimension_numbers<[1], [0], [0], [1], [0, 0, 1, 1], [], []>} : vector<64x8xf32>, vector<8x16xf32>, vector<64x16xf32> -> vector<64x16xf32>
    %100 = arith.addf %93, %99 : vector<64x16xf32>
    %c3_61 = arith.constant 3 : index
    %c0_62 = arith.constant 0 : index
    %c0_63 = arith.constant 0 : index
    %101 = vector.load %arg4[%c3_61, %c0_62, %c0_63] : memref<9x64x100xf32, #tpu.memory_space<vmem>>, vector<1x64x100xf32>
    %102 = vector.shape_cast %101 : vector<1x64x100xf32> to vector<64x100xf32>
    %cst_64 = arith.constant dense<0.000000e+00> : vector<64x8xf32>
    %103 = tpu.matmul %102, %80, %cst_64 {dimension_numbers = #tpu.dot_dimension_numbers<[1], [0], [0], [1], [0, 0, 1, 1], [], []>} : vector<64x100xf32>, vector<100x8xf32>, vector<64x8xf32> -> vector<64x8xf32>
    %c3_65 = arith.constant 3 : index
    %c0_66 = arith.constant 0 : index
    %c0_67 = arith.constant 0 : index
    %104 = vector.load %arg9[%c3_65, %c0_66, %c0_67] : memref<9x8x16xf32, #tpu.memory_space<vmem>>, vector<1x8x16xf32>
    %105 = vector.shape_cast %104 : vector<1x8x16xf32> to vector<8x16xf32>
    %cst_68 = arith.constant dense<0.000000e+00> : vector<64x16xf32>
    %106 = tpu.matmul %103, %105, %cst_68 {dimension_numbers = #tpu.dot_dimension_numbers<[1], [0], [0], [1], [0, 0, 1, 1], [], []>} : vector<64x8xf32>, vector<8x16xf32>, vector<64x16xf32> -> vector<64x16xf32>
    %107 = arith.addf %100, %106 : vector<64x16xf32>
    %c4_69 = arith.constant 4 : index
    %c0_70 = arith.constant 0 : index
    %c0_71 = arith.constant 0 : index
    %108 = vector.load %arg4[%c4_69, %c0_70, %c0_71] : memref<9x64x100xf32, #tpu.memory_space<vmem>>, vector<1x64x100xf32>
    %109 = vector.shape_cast %108 : vector<1x64x100xf32> to vector<64x100xf32>
    %cst_72 = arith.constant dense<0.000000e+00> : vector<64x8xf32>
    %110 = tpu.matmul %109, %80, %cst_72 {dimension_numbers = #tpu.dot_dimension_numbers<[1], [0], [0], [1], [0, 0, 1, 1], [], []>} : vector<64x100xf32>, vector<100x8xf32>, vector<64x8xf32> -> vector<64x8xf32>
    %c4_73 = arith.constant 4 : index
    %c0_74 = arith.constant 0 : index
    %c0_75 = arith.constant 0 : index
    %111 = vector.load %arg9[%c4_73, %c0_74, %c0_75] : memref<9x8x16xf32, #tpu.memory_space<vmem>>, vector<1x8x16xf32>
    %112 = vector.shape_cast %111 : vector<1x8x16xf32> to vector<8x16xf32>
    %cst_76 = arith.constant dense<0.000000e+00> : vector<64x16xf32>
    %113 = tpu.matmul %110, %112, %cst_76 {dimension_numbers = #tpu.dot_dimension_numbers<[1], [0], [0], [1], [0, 0, 1, 1], [], []>} : vector<64x8xf32>, vector<8x16xf32>, vector<64x16xf32> -> vector<64x16xf32>
    %114 = arith.addf %107, %113 : vector<64x16xf32>
    %c5_77 = arith.constant 5 : index
    %c0_78 = arith.constant 0 : index
    %c0_79 = arith.constant 0 : index
    %115 = vector.load %arg4[%c5_77, %c0_78, %c0_79] : memref<9x64x100xf32, #tpu.memory_space<vmem>>, vector<1x64x100xf32>
    %116 = vector.shape_cast %115 : vector<1x64x100xf32> to vector<64x100xf32>
    %cst_80 = arith.constant dense<0.000000e+00> : vector<64x8xf32>
    %117 = tpu.matmul %116, %80, %cst_80 {dimension_numbers = #tpu.dot_dimension_numbers<[1], [0], [0], [1], [0, 0, 1, 1], [], []>} : vector<64x100xf32>, vector<100x8xf32>, vector<64x8xf32> -> vector<64x8xf32>
    %c5_81 = arith.constant 5 : index
    %c0_82 = arith.constant 0 : index
    %c0_83 = arith.constant 0 : index
    %118 = vector.load %arg9[%c5_81, %c0_82, %c0_83] : memref<9x8x16xf32, #tpu.memory_space<vmem>>, vector<1x8x16xf32>
    %119 = vector.shape_cast %118 : vector<1x8x16xf32> to vector<8x16xf32>
    %cst_84 = arith.constant dense<0.000000e+00> : vector<64x16xf32>
    %120 = tpu.matmul %117, %119, %cst_84 {dimension_numbers = #tpu.dot_dimension_numbers<[1], [0], [0], [1], [0, 0, 1, 1], [], []>} : vector<64x8xf32>, vector<8x16xf32>, vector<64x16xf32> -> vector<64x16xf32>
    %121 = arith.addf %114, %120 : vector<64x16xf32>
    %c6_85 = arith.constant 6 : index
    %c0_86 = arith.constant 0 : index
    %c0_87 = arith.constant 0 : index
    %122 = vector.load %arg4[%c6_85, %c0_86, %c0_87] : memref<9x64x100xf32, #tpu.memory_space<vmem>>, vector<1x64x100xf32>
    %123 = vector.shape_cast %122 : vector<1x64x100xf32> to vector<64x100xf32>
    %cst_88 = arith.constant dense<0.000000e+00> : vector<64x8xf32>
    %124 = tpu.matmul %123, %80, %cst_88 {dimension_numbers = #tpu.dot_dimension_numbers<[1], [0], [0], [1], [0, 0, 1, 1], [], []>} : vector<64x100xf32>, vector<100x8xf32>, vector<64x8xf32> -> vector<64x8xf32>
    %c6_89 = arith.constant 6 : index
    %c0_90 = arith.constant 0 : index
    %c0_91 = arith.constant 0 : index
    %125 = vector.load %arg9[%c6_89, %c0_90, %c0_91] : memref<9x8x16xf32, #tpu.memory_space<vmem>>, vector<1x8x16xf32>
    %126 = vector.shape_cast %125 : vector<1x8x16xf32> to vector<8x16xf32>
    %cst_92 = arith.constant dense<0.000000e+00> : vector<64x16xf32>
    %127 = tpu.matmul %124, %126, %cst_92 {dimension_numbers = #tpu.dot_dimension_numbers<[1], [0], [0], [1], [0, 0, 1, 1], [], []>} : vector<64x8xf32>, vector<8x16xf32>, vector<64x16xf32> -> vector<64x16xf32>
    %128 = arith.addf %121, %127 : vector<64x16xf32>
    %c7_93 = arith.constant 7 : index
    %c0_94 = arith.constant 0 : index
    %c0_95 = arith.constant 0 : index
    %129 = vector.load %arg4[%c7_93, %c0_94, %c0_95] : memref<9x64x100xf32, #tpu.memory_space<vmem>>, vector<1x64x100xf32>
    %130 = vector.shape_cast %129 : vector<1x64x100xf32> to vector<64x100xf32>
    %cst_96 = arith.constant dense<0.000000e+00> : vector<64x8xf32>
    %131 = tpu.matmul %130, %80, %cst_96 {dimension_numbers = #tpu.dot_dimension_numbers<[1], [0], [0], [1], [0, 0, 1, 1], [], []>} : vector<64x100xf32>, vector<100x8xf32>, vector<64x8xf32> -> vector<64x8xf32>
    %c7_97 = arith.constant 7 : index
    %c0_98 = arith.constant 0 : index
    %c0_99 = arith.constant 0 : index
    %132 = vector.load %arg9[%c7_97, %c0_98, %c0_99] : memref<9x8x16xf32, #tpu.memory_space<vmem>>, vector<1x8x16xf32>
    %133 = vector.shape_cast %132 : vector<1x8x16xf32> to vector<8x16xf32>
    %cst_100 = arith.constant dense<0.000000e+00> : vector<64x16xf32>
    %134 = tpu.matmul %131, %133, %cst_100 {dimension_numbers = #tpu.dot_dimension_numbers<[1], [0], [0], [1], [0, 0, 1, 1], [], []>} : vector<64x8xf32>, vector<8x16xf32>, vector<64x16xf32> -> vector<64x16xf32>
    %135 = arith.addf %128, %134 : vector<64x16xf32>
    %c8_101 = arith.constant 8 : index
    %c0_102 = arith.constant 0 : index
    %c0_103 = arith.constant 0 : index
    %136 = vector.load %arg4[%c8_101, %c0_102, %c0_103] : memref<9x64x100xf32, #tpu.memory_space<vmem>>, vector<1x64x100xf32>
    %137 = vector.shape_cast %136 : vector<1x64x100xf32> to vector<64x100xf32>
    %cst_104 = arith.constant dense<0.000000e+00> : vector<64x8xf32>
    %138 = tpu.matmul %137, %80, %cst_104 {dimension_numbers = #tpu.dot_dimension_numbers<[1], [0], [0], [1], [0, 0, 1, 1], [], []>} : vector<64x100xf32>, vector<100x8xf32>, vector<64x8xf32> -> vector<64x8xf32>
    %c8_105 = arith.constant 8 : index
    %c0_106 = arith.constant 0 : index
    %c0_107 = arith.constant 0 : index
    %139 = vector.load %arg9[%c8_105, %c0_106, %c0_107] : memref<9x8x16xf32, #tpu.memory_space<vmem>>, vector<1x8x16xf32>
    %140 = vector.shape_cast %139 : vector<1x8x16xf32> to vector<8x16xf32>
    %cst_108 = arith.constant dense<0.000000e+00> : vector<64x16xf32>
    %141 = tpu.matmul %138, %140, %cst_108 {dimension_numbers = #tpu.dot_dimension_numbers<[1], [0], [0], [1], [0, 0, 1, 1], [], []>} : vector<64x8xf32>, vector<8x16xf32>, vector<64x16xf32> -> vector<64x16xf32>
    %142 = arith.addf %135, %141 : vector<64x16xf32>
    %c0_109 = arith.constant 0 : index
    %c0_110 = arith.constant 0 : index
    %143 = vector.load %arg10[%c0_109, %c0_110] : memref<1x16xf32, #tpu.memory_space<vmem>>, vector<1x16xf32>
    %144 = vector.broadcast %143 : vector<1x16xf32> to vector<64x16xf32>
    %145 = arith.addf %142, %144 : vector<64x16xf32>
    %cst_111 = arith.constant 0.000000e+00 : f32
    %146 = vector.broadcast %cst_111 : f32 to vector<64x16xf32>
    %147 = arith.maximumf %145, %146 : vector<64x16xf32>
    %c0_112 = arith.constant 0 : index
    %c0_113 = arith.constant 0 : index
    %148 = vector.load %arg5[%c0_112, %c0_113] : memref<16x64xf32, #tpu.memory_space<vmem>>, vector<16x64xf32>
    %cst_114 = arith.constant dense<0.000000e+00> : vector<16x16xf32>
    %149 = tpu.matmul %148, %147, %cst_114 {dimension_numbers = #tpu.dot_dimension_numbers<[1], [0], [0], [1], [0, 0, 1, 1], [], []>} : vector<16x64xf32>, vector<64x16xf32>, vector<16x16xf32> -> vector<16x16xf32>
    %c0_115 = arith.constant 0 : index
    %c0_116 = arith.constant 0 : index
    %150 = vector.load %arg6[%c0_115, %c0_116] : memref<4x16xf32, #tpu.memory_space<vmem>>, vector<4x16xf32>
    %cst_117 = arith.constant dense<0.000000e+00> : vector<4x16xf32>
    %151 = tpu.matmul %150, %149, %cst_117 {dimension_numbers = #tpu.dot_dimension_numbers<[1], [0], [0], [1], [0, 0, 1, 1], [], []>} : vector<4x16xf32>, vector<16x16xf32>, vector<4x16xf32> -> vector<4x16xf32>
    %cst_118 = arith.constant dense<0xFF800000> : vector<16xf32>
    %152 = vector.multi_reduction <maximumf>, %151, %cst_118 [0] : vector<4x16xf32> to vector<16xf32>
    %153 = vector.shape_cast %152 : vector<16xf32> to vector<1x16xf32>
    %cst_119 = arith.constant dense<0.000000e+00> : vector<16xf32>
    %154 = vector.multi_reduction <add>, %151, %cst_119 [0] : vector<4x16xf32> to vector<16xf32>
    %155 = vector.shape_cast %154 : vector<16xf32> to vector<1x16xf32>
    %cst_120 = arith.constant 4.000000e+00 : f32
    %156 = vector.broadcast %cst_120 : f32 to vector<1x16xf32>
    %157 = arith.divf %155, %156 : vector<1x16xf32>
    %158 = arith.addf %153, %157 : vector<1x16xf32>
    %159 = vector.shape_cast %158 : vector<1x16xf32> to vector<1x16xf32>
    %160 = vector.broadcast %159 : vector<1x16xf32> to vector<8x16xf32>
    %c0_121 = arith.constant 0 : index
    %c0_122 = arith.constant 0 : index
    %161 = vector.load %arg11[%c0_121, %c0_122] : memref<16x32xf32, #tpu.memory_space<vmem>>, vector<16x32xf32>
    %cst_123 = arith.constant dense<0.000000e+00> : vector<8x32xf32>
    %162 = tpu.matmul %160, %161, %cst_123 {dimension_numbers = #tpu.dot_dimension_numbers<[1], [0], [0], [1], [0, 0, 1, 1], [], []>} : vector<8x16xf32>, vector<16x32xf32>, vector<8x32xf32> -> vector<8x32xf32>
    %c0_124 = arith.constant 0 : index
    %c0_125 = arith.constant 0 : index
    %163 = vector.load %arg12[%c0_124, %c0_125] : memref<1x32xf32, #tpu.memory_space<vmem>>, vector<1x32xf32>
    %164 = vector.broadcast %163 : vector<1x32xf32> to vector<8x32xf32>
    %165 = arith.addf %162, %164 : vector<8x32xf32>
    %cst_126 = arith.constant 0.000000e+00 : f32
    %166 = vector.broadcast %cst_126 : f32 to vector<8x32xf32>
    %167 = arith.maximumf %165, %166 : vector<8x32xf32>
    %c0_127 = arith.constant 0 : index
    %c0_128 = arith.constant 0 : index
    %168 = vector.load %arg13[%c0_127, %c0_128] : memref<32x5xf32, #tpu.memory_space<vmem>>, vector<32x5xf32>
    %cst_129 = arith.constant dense<0.000000e+00> : vector<8x5xf32>
    %169 = tpu.matmul %167, %168, %cst_129 {dimension_numbers = #tpu.dot_dimension_numbers<[1], [0], [0], [1], [0, 0, 1, 1], [], []>} : vector<8x32xf32>, vector<32x5xf32>, vector<8x5xf32> -> vector<8x5xf32>
    %c0_130 = arith.constant 0 : index
    %c0_131 = arith.constant 0 : index
    %170 = vector.load %arg14[%c0_130, %c0_131] : memref<1x5xf32, #tpu.memory_space<vmem>>, vector<1x5xf32>
    %171 = vector.broadcast %170 : vector<1x5xf32> to vector<8x5xf32>
    %172 = arith.addf %169, %171 : vector<8x5xf32>
    %173 = vector.extract_strided_slice %172 {offsets = [0, 0], sizes = [1, 5], strides = [1, 1]} : vector<8x5xf32> to vector<1x5xf32>
    %c0_132 = arith.constant 0 : index
    %c0_133 = arith.constant 0 : index
    %c0_134 = arith.constant 0 : index
    %174 = vector.load %arg15[%c0_132, %c0_133, %c0_134] : memref<1x1x5xf32, #tpu.memory_space<vmem>>, vector<1x1x5xf32>
    %175 = vector.shape_cast %174 : vector<1x1x5xf32> to vector<1x5xf32>
    %176 = vector.shape_cast %173 : vector<1x5xf32> to vector<1x1x5xf32>
    tpu.vector_store %arg15[%c0_132, %c0_133, %c0_134], %176 {strides = array<i32>} : memref<1x1x5xf32, #tpu.memory_space<vmem>>, vector<1x1x5xf32>,
    return
  }
  func.func @transform_0(%arg0: i32) -> (i32, i32, i32) {
    %c0_i32 = arith.constant 0 : i32
    %c0_i32_0 = arith.constant 0 : i32
    %c0_i32_1 = arith.constant 0 : i32
    return %arg0, %c0_i32, %c0_i32_0 : i32, i32, i32
  }
  func.func @transform_1(%arg0: i32) -> (i32, i32, i32) {
    %c0_i32 = arith.constant 0 : i32
    %c0_i32_0 = arith.constant 0 : i32
    %c0_i32_1 = arith.constant 0 : i32
    %c0_i32_2 = arith.constant 0 : i32
    return %c0_i32, %c0_i32_0, %c0_i32_1 : i32, i32, i32
  }
  func.func @transform_2(%arg0: i32) -> (i32, i32) {
    %c0_i32 = arith.constant 0 : i32
    %c0_i32_0 = arith.constant 0 : i32
    %c0_i32_1 = arith.constant 0 : i32
    return %c0_i32, %c0_i32_0 : i32, i32
  }
  func.func @transform_3(%arg0: i32) -> (i32, i32, i32) {
    %c0_i32 = arith.constant 0 : i32
    %c0_i32_0 = arith.constant 0 : i32
    %c0_i32_1 = arith.constant 0 : i32
    %c0_i32_2 = arith.constant 0 : i32
    return %c0_i32, %c0_i32_0, %c0_i32_1 : i32, i32, i32
  }
  func.func @transform_4(%arg0: i32) -> (i32, i32) {
    %c0_i32 = arith.constant 0 : i32
    %c0_i32_0 = arith.constant 0 : i32
    %c0_i32_1 = arith.constant 0 : i32
    return %c0_i32, %c0_i32_0 : i32, i32
  }
  func.func @transform_5(%arg0: i32) -> (i32, i32) {
    %c0_i32 = arith.constant 0 : i32
    %c0_i32_0 = arith.constant 0 : i32
    %c0_i32_1 = arith.constant 0 : i32
    return %c0_i32, %c0_i32_0 : i32, i32
  }
  func.func @transform_6(%arg0: i32) -> (i32, i32) {
    %c0_i32 = arith.constant 0 : i32
    %c0_i32_0 = arith.constant 0 : i32
    %c0_i32_1 = arith.constant 0 : i32
    return %c0_i32, %c0_i32_0 : i32, i32
  }
  func.func @transform_7(%arg0: i32) -> (i32, i32) {
    %c0_i32 = arith.constant 0 : i32
    %c0_i32_0 = arith.constant 0 : i32
    %c0_i32_1 = arith.constant 0 : i32
    return %c0_i32, %c0_i32_0 : i32, i32
  }
  func.func @transform_8(%arg0: i32) -> (i32, i32, i32) {
    %c0_i32 = arith.constant 0 : i32
    %c0_i32_0 = arith.constant 0 : i32
    %c0_i32_1 = arith.constant 0 : i32
    %c0_i32_2 = arith.constant 0 : i32
    return %c0_i32, %c0_i32_0, %c0_i32_1 : i32, i32, i32
  }
  func.func @transform_9(%arg0: i32) -> (i32, i32) {
    %c0_i32 = arith.constant 0 : i32
    %c0_i32_0 = arith.constant 0 : i32
    %c0_i32_1 = arith.constant 0 : i32
    return %c0_i32, %c0_i32_0 : i32, i32
  }
  func.func @transform_10(%arg0: i32) -> (i32, i32) {
    %c0_i32 = arith.constant 0 : i32
    %c0_i32_0 = arith.constant 0 : i32
    %c0_i32_1 = arith.constant 0 : i32
    return %c0_i32, %c0_i32_0 : i32, i32
  }
  func.func @transform_11(%arg0: i32) -> (i32, i32) {
    %c0_i32 = arith.constant 0 : i32
    %c0_i32_0 = arith.constant 0 : i32
    %c0_i32_1 = arith.constant 0 : i32
    return %c0_i32, %c0_i32_0 : i32, i32
  }
  func.func @transform_12(%arg0: i32) -> (i32, i32) {
    %c0_i32 = arith.constant 0 : i32
    %c0_i32_0 = arith.constant 0 : i32
    %c0_i32_1 = arith.constant 0 : i32
    return %c0_i32, %c0_i32_0 : i32, i32
  }
  func.func @transform_13(%arg0: i32) -> (i32, i32) {
    %c0_i32 = arith.constant 0 : i32
    %c0_i32_0 = arith.constant 0 : i32
    %c0_i32_1 = arith.constant 0 : i32
    return %c0_i32, %c0_i32_0 : i32, i32
  }
  func.func @transform_14(%arg0: i32) -> (i32, i32, i32) {
    %c0_i32 = arith.constant 0 : i32
    %c0_i32_0 = arith.constant 0 : i32
    %c0_i32_1 = arith.constant 0 : i32
    return %arg0, %c0_i32, %c0_i32_0 : i32, i32, i32
  }
}

</mosaic_0001>

<llo_original>
// kernel: _lambda_.1
$region0: #{_lambda_.1}
  #allocation0 [shape = 'u32[]', space=smem, size = 0x4, offset = 0x4, fixed_abs, tag = 'smem constant byte address 0x4 - core index']
  #allocation1 [shape = 'u32[144,128]{1,0:T(1,128)}', space=vmem, size = 0x12000, scoped, tag = 'internal scratch']
  %s0 = inlined_call_operand.vmem [shape: f32[2,324,1], index: 0, kind: input, shape index: {}]
  %s1 = inlined_call_operand.hbm [shape: f32[9,256,324], index: 1, kind: input, shape index: {}]
  %s2 = inlined_call_operand.hbm [shape: f32[100,256], index: 2, kind: input, shape index: {}]
  %s3 = inlined_call_operand.hbm [shape: f32[9,64,100], index: 3, kind: input, shape index: {}]
  %s4 = inlined_call_operand.hbm [shape: f32[16,64], index: 4, kind: input, shape index: {}]
  %s5 = inlined_call_operand.hbm [shape: f32[4,16], index: 5, kind: input, shape index: {}]
  %s6 = inlined_call_operand.hbm [shape: f32[9,8], index: 6, kind: input, shape index: {}]
  %s7 = inlined_call_operand.vmem [shape: f32[1,8], index: 7, kind: input, shape index: {}]
  %s8 = inlined_call_operand.hbm [shape: f32[9,8,16], index: 8, kind: input, shape index: {}]
  %s9 = inlined_call_operand.vmem [shape: f32[1,16], index: 9, kind: input, shape index: {}]
  %s10 = inlined_call_operand.hbm [shape: f32[16,32], index: 10, kind: input, shape index: {}]
  %s11 = inlined_call_operand.vmem [shape: f32[1,32], index: 11, kind: input, shape index: {}]
  %s12 = inlined_call_operand.hbm [shape: f32[32,5], index: 12, kind: input, shape index: {}]
  %s13 = inlined_call_operand.vmem [shape: f32[1,5], index: 13, kind: input, shape index: {}]
  %s14 = inlined_call_operand.hbm [shape: f32[2,1,5], index: 14, kind: output, shape index: {}]
  %s15 = sld [smem:[#allocation0]]
  $region125: #{_lambda_.1} parent=0
    _
  %s17 = ssub.s32 1, %s15
  %s18 = scalar_select 0, %s17, %s15
  $region1: #{_lambda_.1} parent=0
    #allocation2 [shape = 'u8[3538944]{0}', space=vmem, size = 0x360000, scoped, tag = 'input window, operand 1, single buffered']
    #allocation3 [shape = 's32[2]{0}', space=sflag, size = 0x8, scoped, tag = 'scoped memory for _lambda_.1']
    #allocation4 [shape = 's32[2]{0}', space=sflag, size = 0x8, scoped, tag = 'scoped memory for _lambda_.1']
    #allocation5 [shape = 'u8[106496]{0}', space=vmem, size = 0x1a000, scoped, tag = 'input window, operand 2, single buffered']
    #allocation6 [shape = 's32[1]{0}', space=sflag, size = 0x4, scoped, tag = 'scoped memory for _lambda_.1']
    #allocation7 [shape = 'u8[294912]{0}', space=vmem, size = 0x48000, scoped, tag = 'input window, operand 3, single buffered']
    #allocation8 [shape = 'u8[8192]{0}', space=vmem, size = 0x2000, scoped, tag = 'input window, operand 4, single buffered']
    #allocation9 [shape = 's32[1]{0}', space=sflag, size = 0x4, scoped, tag = 'scoped memory for _lambda_.1']
    #allocation10 [shape = 'u8[2048]{0}', space=vmem, size = 0x800, scoped, tag = 'input window, operand 5, single buffered']
    #allocation11 [shape = 'u8[8192]{0}', space=vmem, size = 0x2000, scoped, tag = 'input window, operand 6, single buffered']
    #allocation12 [shape = 's32[1]{0}', space=sflag, size = 0x4, scoped, tag = 'scoped memory for _lambda_.1']
    #allocation13 [shape = 'u8[36864]{0}', space=vmem, size = 0x9000, scoped, tag = 'input window, operand 8, single buffered']
    #allocation14 [shape = 'u8[8192]{0}', space=vmem, size = 0x2000, scoped, tag = 'input window, operand 10, single buffered']
    #allocation15 [shape = 's32[1]{0}', space=sflag, size = 0x4, scoped, tag = 'scoped memory for _lambda_.1']
    #allocation16 [shape = 'u8[16384]{0}', space=vmem, size = 0x4000, scoped, tag = 'input window, operand 12, single buffered']
    #allocation17 [shape = 'u8[1024]{0}', space=vmem, size = 0x400, scoped, tag = 'output window, operand 0']
    %19 = vsyncpa [#allocation3], 0
    %20 = vsyncpa [#allocation6], 0
    %21 = vsyncpa [#allocation9], 0
    %22 = vsyncpa [#allocation12], 0
    %23 = vsyncpa [#allocation15], 0
    %24 = vsyncpa [#allocation4], 0
    %s25 = scalar_lea.sflag [#allocation4], 1
    %26 = vsyncpa %s25, 0
    loop: start=0, step=1, limit=4
    $region2: #{_lambda_.1} parent=1 // loop_pre_header
      _
    $region3: #{_lambda_.1} parent=1 // loop_header
      %s28 = sphi 0, %s32
      %p29 = scmp.ge.s32.totalorder %s28, 4
      %s38 = sphi 0, %s40
      %s41 = sphi 0, %s38
      %s42 = sphi 0, %s41
      %s58 = sphi 0, %s42
      %s62 = sphi 0, %s62
      %s64 = sphi 0, %s62
      %s65 = sphi 0, %s64
      %s79 = sphi 0, %s65
      %s83 = sphi 0, %s83
      %s85 = sphi 0, %s83
      %s86 = sphi 0, %s85
      %s100 = sphi 0, %s86
      %s104 = sphi 0, %s104
      %s106 = sphi 0, %s104
      %s107 = sphi 0, %s106
      %s121 = sphi 0, %s107
      %s125 = sphi 0, %s125
      %s127 = sphi 0, %s125
      %s128 = sphi 0, %s127
      %s142 = sphi 0, %s128
      %s146 = sphi 0, %s146
      %s148 = sphi 0, %s146
      %s149 = sphi 0, %s148
      %s163 = sphi 0, %s149
      %s167 = sphi 0, %s167
      %s169 = sphi 0, %s167
      %s170 = sphi 0, %s169
      %s184 = sphi 0, %s170
      %s188 = sphi 0, %s188
      %s190 = sphi 0, %s188
      %s191 = sphi 0, %s190
      %s205 = sphi 0, %s191
      %s209 = sphi 0, %s209
      %s211 = sphi 0, %s209
      %s212 = sphi 0, %s211
      %s226 = sphi 0, %s212
      %s230 = sphi 0, %s230
      %s232 = sphi 0, %s230
      %s233 = sphi 0, %s232
      %s247 = sphi 0, %s233
      %s251 = sphi 0, %s251
      %s253 = sphi 0, %s251
      %s254 = sphi 0, %s253
      %s268 = sphi 0, %s254
      %s272 = sphi 0, %s272
      %s274 = sphi 0, %s272
      %s275 = sphi 0, %s274
      %s289 = sphi 0, %s275
      %s293 = sphi 0, %s293
      %s295 = sphi 0, %s293
      %s296 = sphi 0, %s295
      %s310 = sphi 0, %s296
      %s314 = sphi 0, %s314
      %s316 = sphi 0, %s314
      %s317 = sphi 0, %s316
      %s331 = sphi 0, %s317
      %s337 = sphi 0, %s339
      %s340 = sphi 0, %s337
      %s341 = sphi 0, %s340
      %s357 = sphi 0, %s341
    $region4: #{_lambda_.1} parent=1 // loop_header_branch
      %31 = sbr.rel (%p29) target = $region8
    $region5: #{_lambda_.1} parent=1 // loop_body
      %s33 = ssub.s32 %s28, 1
      %s34 = ssub.s32 %s28, 2
      %s35 = sadd.s32 %s28, 1
      %s36 = ssub.s32 %s28, %s35
      %p37 = scmp.eq.s32.totalorder %s36, 0
      %s39 = sadd.s32 %s38, 1
      %s40 = scalar_select %p37, %s38, %s39
      %p43 = pneg %p37
      %p44 = scmp.eq.s32.totalorder %s28, 1
      %p45 = por %p43, %p44
      %p46 = scmp.ne.s32.totalorder %s38, %s41
      %p47 = scmp.eq.s32.totalorder %s28, 0
      %p48 = por %p46, %p47
      %p49 = scmp.ne.s32.totalorder %s38, %s41
      %p50 = scmp.eq.s32.totalorder %s33, 1
      %p51 = por %p49, %p50
      %p52 = scmp.ne.s32.totalorder %s41, %s42
      %p53 = scmp.eq.s32.totalorder %s33, 0
      %p54 = por %p52, %p53
      %p55 = scmp.ne.s32.totalorder %s41, %s42
      %p56 = scmp.eq.s32.totalorder %s34, 1
      %p57 = por %p55, %p56
      %p59 = scmp.ne.s32.totalorder %s42, %s58
      %p60 = scmp.eq.s32.totalorder %s34, 0
      %p61 = por %p59, %p60
      %s63 = sadd.s32 %s62, 1
      %p66 = scmp.eq.s32.totalorder %s28, 1
      %p67 = scmp.ne.s32.totalorder %s62, %s64
      %p68 = scmp.eq.s32.totalorder %s28, 0
      %p69 = por %p67, %p68
      %p70 = scmp.ne.s32.totalorder %s62, %s64
      %p71 = scmp.eq.s32.totalorder %s33, 1
      %p72 = por %p70, %p71
      %p73 = scmp.ne.s32.totalorder %s64, %s65
      %p74 = scmp.eq.s32.totalorder %s33, 0
      %p75 = por %p73, %p74
      %p76 = scmp.ne.s32.totalorder %s64, %s65
      %p77 = scmp.eq.s32.totalorder %s34, 1
      %p78 = por %p76, %p77
      %p80 = scmp.ne.s32.totalorder %s65, %s79
      %p81 = scmp.eq.s32.totalorder %s34, 0
      %p82 = por %p80, %p81
      %s84 = sadd.s32 %s83, 1
      %p87 = scmp.eq.s32.totalorder %s28, 1
      %p88 = scmp.ne.s32.totalorder %s83, %s85
      %p89 = scmp.eq.s32.totalorder %s28, 0
      %p90 = por %p88, %p89
      %p91 = scmp.ne.s32.totalorder %s83, %s85
      %p92 = scmp.eq.s32.totalorder %s33, 1
      %p93 = por %p91, %p92
      %p94 = scmp.ne.s32.totalorder %s85, %s86
      %p95 = scmp.eq.s32.totalorder %s33, 0
      %p96 = por %p94, %p95
      %p97 = scmp.ne.s32.totalorder %s85, %s86
      %p98 = scmp.eq.s32.totalorder %s34, 1
      %p99 = por %p97, %p98
      %p101 = scmp.ne.s32.totalorder %s86, %s100
      %p102 = scmp.eq.s32.totalorder %s34, 0
      %p103 = por %p101, %p102
      %s105 = sadd.s32 %s104, 1
      %p108 = scmp.eq.s32.totalorder %s28, 1
      %p109 = scmp.ne.s32.totalorder %s104, %s106
      %p110 = scmp.eq.s32.totalorder %s28, 0
      %p111 = por %p109, %p110
      %p112 = scmp.ne.s32.totalorder %s104, %s106
      %p113 = scmp.eq.s32.totalorder %s33, 1
      %p114 = por %p112, %p113
      %p115 = scmp.ne.s32.totalorder %s106, %s107
      %p116 = scmp.eq.s32.totalorder %s33, 0
      %p117 = por %p115, %p116
      %p118 = scmp.ne.s32.totalorder %s106, %s107
      %p119 = scmp.eq.s32.totalorder %s34, 1
      %p120 = por %p118, %p119
      %p122 = scmp.ne.s32.totalorder %s107, %s121
      %p123 = scmp.eq.s32.totalorder %s34, 0
      %p124 = por %p122, %p123
      %s126 = sadd.s32 %s125, 1
      %p129 = scmp.eq.s32.totalorder %s28, 1
      %p130 = scmp.ne.s32.totalorder %s125, %s127
      %p131 = scmp.eq.s32.totalorder %s28, 0
      %p132 = por %p130, %p131
      %p133 = scmp.ne.s32.totalorder %s125, %s127
      %p134 = scmp.eq.s32.totalorder %s33, 1
      %p135 = por %p133, %p134
      %p136 = scmp.ne.s32.totalorder %s127, %s128
      %p137 = scmp.eq.s32.totalorder %s33, 0
      %p138 = por %p136, %p137
      %p139 = scmp.ne.s32.totalorder %s127, %s128
      %p140 = scmp.eq.s32.totalorder %s34, 1
      %p141 = por %p139, %p140
      %p143 = scmp.ne.s32.totalorder %s128, %s142
      %p144 = scmp.eq.s32.totalorder %s34, 0
      %p145 = por %p143, %p144
      %s147 = sadd.s32 %s146, 1
      %p150 = scmp.eq.s32.totalorder %s28, 1
      %p151 = scmp.ne.s32.totalorder %s146, %s148
      %p152 = scmp.eq.s32.totalorder %s28, 0
      %p153 = por %p151, %p152
      %p154 = scmp.ne.s32.totalorder %s146, %s148
      %p155 = scmp.eq.s32.totalorder %s33, 1
      %p156 = por %p154, %p155
      %p157 = scmp.ne.s32.totalorder %s148, %s149
      %p158 = scmp.eq.s32.totalorder %s33, 0
      %p159 = por %p157, %p158
      %p160 = scmp.ne.s32.totalorder %s148, %s149
      %p161 = scmp.eq.s32.totalorder %s34, 1
      %p162 = por %p160, %p161
      %p164 = scmp.ne.s32.totalorder %s149, %s163
      %p165 = scmp.eq.s32.totalorder %s34, 0
      %p166 = por %p164, %p165
      %s168 = sadd.s32 %s167, 1
      %p171 = scmp.eq.s32.totalorder %s28, 1
      %p172 = scmp.ne.s32.totalorder %s167, %s169
      %p173 = scmp.eq.s32.totalorder %s28, 0
      %p174 = por %p172, %p173
      %p175 = scmp.ne.s32.totalorder %s167, %s169
      %p176 = scmp.eq.s32.totalorder %s33, 1
      %p177 = por %p175, %p176
      %p178 = scmp.ne.s32.totalorder %s169, %s170
      %p179 = scmp.eq.s32.totalorder %s33, 0
      %p180 = por %p178, %p179
      %p181 = scmp.ne.s32.totalorder %s169, %s170
      %p182 = scmp.eq.s32.totalorder %s34, 1
      %p183 = por %p181, %p182
      %p185 = scmp.ne.s32.totalorder %s170, %s184
      %p186 = scmp.eq.s32.totalorder %s34, 0
      %p187 = por %p185, %p186
      %s189 = sadd.s32 %s188, 1
      %p192 = scmp.eq.s32.totalorder %s28, 1
      %p193 = scmp.ne.s32.totalorder %s188, %s190
      %p194 = scmp.eq.s32.totalorder %s28, 0
      %p195 = por %p193, %p194
      %p196 = scmp.ne.s32.totalorder %s188, %s190
      %p197 = scmp.eq.s32.totalorder %s33, 1
      %p198 = por %p196, %p197
      %p199 = scmp.ne.s32.totalorder %s190, %s191
      %p200 = scmp.eq.s32.totalorder %s33, 0
      %p201 = por %p199, %p200
      %p202 = scmp.ne.s32.totalorder %s190, %s191
      %p203 = scmp.eq.s32.totalorder %s34, 1
      %p204 = por %p202, %p203
      %p206 = scmp.ne.s32.totalorder %s191, %s205
      %p207 = scmp.eq.s32.totalorder %s34, 0
      %p208 = por %p206, %p207
      %s210 = sadd.s32 %s209, 1
      %p213 = scmp.eq.s32.totalorder %s28, 1
      %p214 = scmp.ne.s32.totalorder %s209, %s211
      %p215 = scmp.eq.s32.totalorder %s28, 0
      %p216 = por %p214, %p215
      %p217 = scmp.ne.s32.totalorder %s209, %s211
      %p218 = scmp.eq.s32.totalorder %s33, 1
      %p219 = por %p217, %p218
      %p220 = scmp.ne.s32.totalorder %s211, %s212
      %p221 = scmp.eq.s32.totalorder %s33, 0
      %p222 = por %p220, %p221
      %p223 = scmp.ne.s32.totalorder %s211, %s212
      %p224 = scmp.eq.s32.totalorder %s34, 1
      %p225 = por %p223, %p224
      %p227 = scmp.ne.s32.totalorder %s212, %s226
      %p228 = scmp.eq.s32.totalorder %s34, 0
      %p229 = por %p227, %p228
      %s231 = sadd.s32 %s230, 1
      %p234 = scmp.eq.s32.totalorder %s28, 1
      %p235 = scmp.ne.s32.totalorder %s230, %s232
      %p236 = scmp.eq.s32.totalorder %s28, 0
      %p237 = por %p235, %p236
      %p238 = scmp.ne.s32.totalorder %s230, %s232
      %p239 = scmp.eq.s32.totalorder %s33, 1
      %p240 = por %p238, %p239
      %p241 = scmp.ne.s32.totalorder %s232, %s233
      %p242 = scmp.eq.s32.totalorder %s33, 0
      %p243 = por %p241, %p242
      %p244 = scmp.ne.s32.totalorder %s232, %s233
      %p245 = scmp.eq.s32.totalorder %s34, 1
      %p246 = por %p244, %p245
      %p248 = scmp.ne.s32.totalorder %s233, %s247
      %p249 = scmp.eq.s32.totalorder %s34, 0
      %p250 = por %p248, %p249
      %s252 = sadd.s32 %s251, 1
      %p255 = scmp.eq.s32.totalorder %s28, 1
      %p256 = scmp.ne.s32.totalorder %s251, %s253
      %p257 = scmp.eq.s32.totalorder %s28, 0
      %p258 = por %p256, %p257
      %p259 = scmp.ne.s32.totalorder %s251, %s253
      %p260 = scmp.eq.s32.totalorder %s33, 1
      %p261 = por %p259, %p260
      %p262 = scmp.ne.s32.totalorder %s253, %s254
      %p263 = scmp.eq.s32.totalorder %s33, 0
      %p264 = por %p262, %p263
      %p265 = scmp.ne.s32.totalorder %s253, %s254
      %p266 = scmp.eq.s32.totalorder %s34, 1
      %p267 = por %p265, %p266
      %p269 = scmp.ne.s32.totalorder %s254, %s268
      %p270 = scmp.eq.s32.totalorder %s34, 0
      %p271 = por %p269, %p270
      %s273 = sadd.s32 %s272, 1
      %p276 = scmp.eq.s32.totalorder %s28, 1
      %p277 = scmp.ne.s32.totalorder %s272, %s274
      %p278 = scmp.eq.s32.totalorder %s28, 0
      %p279 = por %p277, %p278
      %p280 = scmp.ne.s32.totalorder %s272, %s274
      %p281 = scmp.eq.s32.totalorder %s33, 1
      %p282 = por %p280, %p281
      %p283 = scmp.ne.s32.totalorder %s274, %s275
      %p284 = scmp.eq.s32.totalorder %s33, 0
      %p285 = por %p283, %p284
      %p286 = scmp.ne.s32.totalorder %s274, %s275
      %p287 = scmp.eq.s32.totalorder %s34, 1
      %p288 = por %p286, %p287
      %p290 = scmp.ne.s32.totalorder %s275, %s289
      %p291 = scmp.eq.s32.totalorder %s34, 0
      %p292 = por %p290, %p291
      %s294 = sadd.s32 %s293, 1
      %p297 = scmp.eq.s32.totalorder %s28, 1
      %p298 = scmp.ne.s32.totalorder %s293, %s295
      %p299 = scmp.eq.s32.totalorder %s28, 0
      %p300 = por %p298, %p299
      %p301 = scmp.ne.s32.totalorder %s293, %s295
      %p302 = scmp.eq.s32.totalorder %s33, 1
      %p303 = por %p301, %p302
      %p304 = scmp.ne.s32.totalorder %s295, %s296
      %p305 = scmp.eq.s32.totalorder %s33, 0
      %p306 = por %p304, %p305
      %p307 = scmp.ne.s32.totalorder %s295, %s296
      %p308 = scmp.eq.s32.totalorder %s34, 1
      %p309 = por %p307, %p308
      %p311 = scmp.ne.s32.totalorder %s296, %s310
      %p312 = scmp.eq.s32.totalorder %s34, 0
      %p313 = por %p311, %p312
      %s315 = sadd.s32 %s314, 1
      %p318 = scmp.eq.s32.totalorder %s28, 1
      %p319 = scmp.ne.s32.totalorder %s314, %s316
      %p320 = scmp.eq.s32.totalorder %s28, 0
      %p321 = por %p319, %p320
      %p322 = scmp.ne.s32.totalorder %s314, %s316
      %p323 = scmp.eq.s32.totalorder %s33, 1
      %p324 = por %p322, %p323
      %p325 = scmp.ne.s32.totalorder %s316, %s317
      %p326 = scmp.eq.s32.totalorder %s33, 0
      %p327 = por %p325, %p326
      %p328 = scmp.ne.s32.totalorder %s316, %s317
      %p329 = scmp.eq.s32.totalorder %s34, 1
      %p330 = por %p328, %p329
      %p332 = scmp.ne.s32.totalorder %s317, %s331
      %p333 = scmp.eq.s32.totalorder %s34, 0
      %p334 = por %p332, %p333
      %s335 = ssub.s32 %s28, %s35
      %p336 = scmp.eq.s32.totalorder %s335, 0
      %s338 = sadd.s32 %s337, 1
      %s339 = scalar_select %p336, %s337, %s338
      %p342 = pneg %p336
      %p343 = scmp.eq.s32.totalorder %s28, 1
      %p344 = por %p342, %p343
      %p345 = scmp.ne.s32.totalorder %s337, %s340
      %p346 = scmp.eq.s32.totalorder %s28, 0
      %p347 = por %p345, %p346
      %p348 = scmp.ne.s32.totalorder %s337, %s340
      %p349 = scmp.eq.s32.totalorder %s33, 1
      %p350 = por %p348, %p349
      %p351 = scmp.ne.s32.totalorder %s340, %s341
      %p352 = scmp.eq.s32.totalorder %s33, 0
      %p353 = por %p351, %p352
      %p354 = scmp.ne.s32.totalorder %s340, %s341
      %p355 = scmp.eq.s32.totalorder %s34, 1
      %p356 = por %p354, %p355
      %p358 = scmp.ne.s32.totalorder %s341, %s357
      %p359 = scmp.eq.s32.totalorder %s34, 0
      %p360 = por %p358, %p359
      %p361 = scmp.le.s32.totalorder 1, %s28
      %p362 = scmp.lt.s32.totalorder %s28, 3
      %p363 = pnand %p361, %p362
      %p364 = pneg %p363
      // Predicated region
      $region9: #{_lambda_.1} parent=5 // pred_check
        _
      $region10: #{_lambda_.1} parent=5 // pred_check_branch
        %366 = sbr.rel (%p363) target = $region12
      $region11: #{_lambda_.1} parent=5 // pred_region
        %s367 = ssub.s32 %s28, 1
        // Predicated region
        $region13: #{_lambda_.1} parent=11 // pred_check
          %p368 = pneg %p75
        $region14: #{_lambda_.1} parent=11 // pred_check_branch
          %370 = sbr.rel (%p368) target = $region16
        $region15: #{_lambda_.1} parent=11 // pred_region
          %s372 = ssub.s32 110592, 110592
          %373 = vsyncadd [#allocation3], %s372
          %s374 = sshll.u32 [#allocation2], 4
          %s375 = int_to_ptr.vmem [resolvable:$true] %s374
          %380 = dma.hbm_to_vmem [thread:$0]  %s1, 110592, %s375, [#allocation3], 384, 384, 24
        $region16: #{_lambda_.1} parent=11 // pred_fallthru
          _
        // Predicated region
        $region17: #{_lambda_.1} parent=11 // pred_check
          %p381 = pneg %p96
        $region18: #{_lambda_.1} parent=11 // pred_check_branch
          %383 = sbr.rel (%p381) target = $region20
        $region19: #{_lambda_.1} parent=11 // pred_region
          %s385 = ssub.s32 3328, 3328
          %386 = vsyncadd [#allocation6], %s385
          %s387 = sshll.u32 [#allocation5], 4
          %s388 = int_to_ptr.vmem [resolvable:$true] %s387
          %393 = dma.hbm_to_vmem [thread:$0]  %s2, 3328, %s388, [#allocation6], 256, 256, 16
        $region20: #{_lambda_.1} parent=11 // pred_fallthru
          _
        // Predicated region
        $region21: #{_lambda_.1} parent=11 // pred_check
          %p394 = pneg %p117
        $region22: #{_lambda_.1} parent=11 // pred_check_branch
          %396 = sbr.rel (%p394) target = $region24
        $region23: #{_lambda_.1} parent=11 // pred_region
          %s398 = ssub.s32 9216, 9216
          %399 = vsyncadd [#allocation6], %s398
          %s400 = sshll.u32 [#allocation7], 4
          %s401 = int_to_ptr.vmem [resolvable:$true] %s400
          %406 = dma.hbm_to_vmem [thread:$0]  %s3, 9216, %s401, [#allocation6], 128, 128, 8
        $region24: #{_lambda_.1} parent=11 // pred_fallthru
          _
        // Predicated region
        $region25: #{_lambda_.1} parent=11 // pred_check
          %p407 = pneg %p138
        $region26: #{_lambda_.1} parent=11 // pred_check_branch
          %409 = sbr.rel (%p407) target = $region28
        $region27: #{_lambda_.1} parent=11 // pred_region
          %s411 = ssub.s32 256, 256
          %412 = vsyncadd [#allocation9], %s411
          %s413 = sshll.u32 [#allocation8], 4
          %s414 = int_to_ptr.vmem [resolvable:$true] %s413
          %419 = dma.hbm_to_vmem [thread:$0]  %s4, 256, %s414, [#allocation9], 128, 128, 8
        $region28: #{_lambda_.1} parent=11 // pred_fallthru
          _
        // Predicated region
        $region29: #{_lambda_.1} parent=11 // pred_check
          %p420 = pneg %p159
        $region30: #{_lambda_.1} parent=11 // pred_check_branch
          %422 = sbr.rel (%p420) target = $region32
        $region31: #{_lambda_.1} parent=11 // pred_region
          %s424 = ssub.s32 64, 64
          %425 = vsyncadd [#allocation9], %s424
          %s427 = sshll.u32 [#allocation10], 4
          %s428 = int_to_ptr.vmem [resolvable:$true] %s427
          %430 = dma.hbm_to_vmem [thread:$0]  %s5, 64, %s428, [#allocation9]
        $region32: #{_lambda_.1} parent=11 // pred_fallthru
          _
        // Predicated region
        $region33: #{_lambda_.1} parent=11 // pred_check
          %p431 = pneg %p180
        $region34: #{_lambda_.1} parent=11 // pred_check_branch
          %433 = sbr.rel (%p431) target = $region36
        $region35: #{_lambda_.1} parent=11 // pred_region
          %s435 = ssub.s32 256, 256
          %436 = vsyncadd [#allocation12], %s435
          %s437 = sshll.u32 [#allocation11], 4
          %s438 = int_to_ptr.vmem [resolvable:$true] %s437
          %443 = dma.hbm_to_vmem [thread:$0]  %s6, 256, %s438, [#allocation12], 128, 128, 8
        $region36: #{_lambda_.1} parent=11 // pred_fallthru
          _
        // Predicated region
        $region37: #{_lambda_.1} parent=11 // pred_check
          %p444 = pneg %p201
        $region38: #{_lambda_.1} parent=11 // pred_check_branch
          %446 = sbr.rel (%p444) target = $region40
        $region39: #{_lambda_.1} parent=11 // pred_region
          _
        $region40: #{_lambda_.1} parent=11 // pred_fallthru
          _
        // Predicated region
        $region41: #{_lambda_.1} parent=11 // pred_check
          %p447 = pneg %p222
        $region42: #{_lambda_.1} parent=11 // pred_check_branch
          %449 = sbr.rel (%p447) target = $region44
        $region43: #{_lambda_.1} parent=11 // pred_region
          %s451 = ssub.s32 1152, 1152
          %452 = vsyncadd [#allocation12], %s451
          %s453 = sshll.u32 [#allocation13], 4
          %s454 = int_to_ptr.vmem [resolvable:$true] %s453
          %459 = dma.hbm_to_vmem [thread:$0]  %s8, 1152, %s454, [#allocation12], 128, 128, 8
        $region44: #{_lambda_.1} parent=11 // pred_fallthru
          _
        // Predicated region
        $region45: #{_lambda_.1} parent=11 // pred_check
          %p460 = pneg %p243
        $region46: #{_lambda_.1} parent=11 // pred_check_branch
          %462 = sbr.rel (%p460) target = $region48
        $region47: #{_lambda_.1} parent=11 // pred_region
          _
        $region48: #{_lambda_.1} parent=11 // pred_fallthru
          _
        // Predicated region
        $region49: #{_lambda_.1} parent=11 // pred_check
          %p463 = pneg %p264
        $region50: #{_lambda_.1} parent=11 // pred_check_branch
          %465 = sbr.rel (%p463) target = $region52
        $region51: #{_lambda_.1} parent=11 // pred_region
          %s467 = ssub.s32 256, 256
          %468 = vsyncadd [#allocation15], %s467
          %s469 = sshll.u32 [#allocation14], 4
          %s470 = int_to_ptr.vmem [resolvable:$true] %s469
          %475 = dma.hbm_to_vmem [thread:$0]  %s10, 256, %s470, [#allocation15], 128, 128, 8
        $region52: #{_lambda_.1} parent=11 // pred_fallthru
          _
        // Predicated region
        $region53: #{_lambda_.1} parent=11 // pred_check
          %p476 = pneg %p285
        $region54: #{_lambda_.1} parent=11 // pred_check_branch
          %478 = sbr.rel (%p476) target = $region56
        $region55: #{_lambda_.1} parent=11 // pred_region
          _
        $region56: #{_lambda_.1} parent=11 // pred_fallthru
          _
        // Predicated region
        $region57: #{_lambda_.1} parent=11 // pred_check
          %p479 = pneg %p306
        $region58: #{_lambda_.1} parent=11 // pred_check_branch
          %481 = sbr.rel (%p479) target = $region60
        $region59: #{_lambda_.1} parent=11 // pred_region
          %s483 = ssub.s32 512, 512
          %484 = vsyncadd [#allocation15], %s483
          %s485 = sshll.u32 [#allocation16], 4
          %s486 = int_to_ptr.vmem [resolvable:$true] %s485
          %491 = dma.hbm_to_vmem [thread:$0]  %s12, 512, %s486, [#allocation15], 128, 128, 8
        $region60: #{_lambda_.1} parent=11 // pred_fallthru
          _
        // Predicated region
        $region61: #{_lambda_.1} parent=11 // pred_check
          %p492 = pneg %p327
        $region62: #{_lambda_.1} parent=11 // pred_check_branch
          %494 = sbr.rel (%p492) target = $region64
        $region63: #{_lambda_.1} parent=11 // pred_region
          _
        $region64: #{_lambda_.1} parent=11 // pred_fallthru
          _
      $region12: #{_lambda_.1} parent=5 // pred_fallthru
        _
      %p495 = scmp.lt.s32.totalorder %s28, 2
      // Predicated region
      $region65: #{_lambda_.1} parent=5 // pred_check
        %p496 = pneg %p495
      $region66: #{_lambda_.1} parent=5 // pred_check_branch
        %498 = sbr.rel (%p496) target = $region68
      $region67: #{_lambda_.1} parent=5 // pred_region
        // Predicated region
        $region69: #{_lambda_.1} parent=67 // pred_check
          %p499 = pneg %p48
        $region70: #{_lambda_.1} parent=67 // pred_check_branch
          %501 = sbr.rel (%p499) target = $region72
        $region71: #{_lambda_.1} parent=67 // pred_region
          %p502 = scmp.lt.s32.totalorder %s28, 1
          %s503 = scalar_select %p502, %s28, 1
          %s504 = smul.addr %s503, 41
          %s505 = smul.addr %s504, 8
          %s506 = scalar_lea.vmem %s0, %s505
        $region72: #{_lambda_.1} parent=67 // pred_fallthru
          _
      $region68: #{_lambda_.1} parent=5 // pred_fallthru
        _
      %p507 = scmp.le.s32.totalorder 1, %s28
      %p508 = scmp.lt.s32.totalorder %s28, 3
      %p509 = pnand %p507, %p508
      %p510 = pneg %p509
      // Predicated region
      $region73: #{_lambda_.1} parent=5 // pred_check
        _
      $region74: #{_lambda_.1} parent=5 // pred_check_branch
        %512 = sbr.rel (%p509) target = $region76
      $region75: #{_lambda_.1} parent=5 // pred_region
        %s513 = ssub.s32 %s28, 1
        // Predicated region
        $region77: #{_lambda_.1} parent=75 // pred_check
          %p514 = pneg %p75
        $region78: #{_lambda_.1} parent=75 // pred_check_branch
          %516 = sbr.rel (%p514) target = $region80
        $region79: #{_lambda_.1} parent=75 // pred_region
          %517 = dma.done [#allocation3], 110592
        $region80: #{_lambda_.1} parent=75 // pred_fallthru
          _
        // Predicated region
        $region81: #{_lambda_.1} parent=75 // pred_check
          %p518 = pneg %p96
        $region82: #{_lambda_.1} parent=75 // pred_check_branch
          %520 = sbr.rel (%p518) target = $region84
        $region83: #{_lambda_.1} parent=75 // pred_region
          %521 = dma.done [#allocation6], 3328
        $region84: #{_lambda_.1} parent=75 // pred_fallthru
          _
        // Predicated region
        $region85: #{_lambda_.1} parent=75 // pred_check
          %p522 = pneg %p117
        $region86: #{_lambda_.1} parent=75 // pred_check_branch
          %524 = sbr.rel (%p522) target = $region88
        $region87: #{_lambda_.1} parent=75 // pred_region
          %525 = dma.done [#allocation6], 9216
        $region88: #{_lambda_.1} parent=75 // pred_fallthru
          _
        // Predicated region
        $region89: #{_lambda_.1} parent=75 // pred_check
          %p526 = pneg %p138
        $region90: #{_lambda_.1} parent=75 // pred_check_branch
          %528 = sbr.rel (%p526) target = $region92
        $region91: #{_lambda_.1} parent=75 // pred_region
          %529 = dma.done [#allocation9], 256
        $region92: #{_lambda_.1} parent=75 // pred_fallthru
          _
        // Predicated region
        $region93: #{_lambda_.1} parent=75 // pred_check
          %p530 = pneg %p159
        $region94: #{_lambda_.1} parent=75 // pred_check_branch
          %532 = sbr.rel (%p530) target = $region96
        $region95: #{_lambda_.1} parent=75 // pred_region
          %533 = dma.done [#allocation9], 64
        $region96: #{_lambda_.1} parent=75 // pred_fallthru
          _
        // Predicated region
        $region97: #{_lambda_.1} parent=75 // pred_check
          %p534 = pneg %p180
        $region98: #{_lambda_.1} parent=75 // pred_check_branch
          %536 = sbr.rel (%p534) target = $region100
        $region99: #{_lambda_.1} parent=75 // pred_region
          %537 = dma.done [#allocation12], 256
        $region100: #{_lambda_.1} parent=75 // pred_fallthru
          _
        // Predicated region
        $region101: #{_lambda_.1} parent=75 // pred_check
          %p538 = pneg %p222
        $region102: #{_lambda_.1} parent=75 // pred_check_branch
          %540 = sbr.rel (%p538) target = $region104
        $region103: #{_lambda_.1} parent=75 // pred_region
          %541 = dma.done [#allocation12], 1152
        $region104: #{_lambda_.1} parent=75 // pred_fallthru
          _
        // Predicated region
        $region105: #{_lambda_.1} parent=75 // pred_check
          %p542 = pneg %p264
        $region106: #{_lambda_.1} parent=75 // pred_check_branch
          %544 = sbr.rel (%p542) target = $region108
        $region107: #{_lambda_.1} parent=75 // pred_region
          %545 = dma.done [#allocation15], 256
        $region108: #{_lambda_.1} parent=75 // pred_fallthru
          _
        // Predicated region
        $region109: #{_lambda_.1} parent=75 // pred_check
          %p546 = pneg %p306
        $region110: #{_lambda_.1} parent=75 // pred_check_branch
          %548 = sbr.rel (%p546) target = $region112
        $region111: #{_lambda_.1} parent=75 // pred_region
          %549 = dma.done [#allocation15], 512
        $region112: #{_lambda_.1} parent=75 // pred_fallthru
          _
        %p550 = scmp.lt.s32.totalorder %s33, 1
        %s551 = scalar_select %p550, %s33, 1
        %s552 = smul.addr %s551, 41
        %s553 = smul.addr %s552, 8
        %s554 = scalar_lea.vmem %s0, %s553
        %p555 = pneg %p54
        %p556 = pneg %p51
        %p557 = pneg %p75
        %p558 = pneg %p72
        %p559 = pneg %p96
        %p560 = pneg %p93
        %p561 = pneg %p117
        %p562 = pneg %p114
        %p563 = pneg %p138
        %p564 = pneg %p135
        %p565 = pneg %p159
        %p566 = pneg %p156
        %p567 = pneg %p180
        %p568 = pneg %p177
        %p569 = pneg %p201
        %p570 = pneg %p198
        %p571 = pneg %p222
        %p572 = pneg %p219
        %p573 = pneg %p243
        %p574 = pneg %p240
        %p575 = pneg %p264
        %p576 = pneg %p261
        %p577 = pneg %p285
        %p578 = pneg %p282
        %p579 = pneg %p306
        %p580 = pneg %p303
        %p581 = pneg %p327
        %p582 = pneg %p324
        %p583 = pneg %p353
        %p584 = pneg %p350
        %s585 = sand.u32 %s340, 1
        %s586 = scalar_lea.sflag [#allocation4], %s585
        %s587 = sand.u32 %s340, 1
        %s588 = scalar_lea.vmem [#allocation17], %s587
        %p589 = scmp.lt.s32.totalorder %s33, 1
        %s590 = scalar_select %p589, %s33, 1
        %s591 = smul.addr %s590, 41
        %s592 = smul.addr %s591, 8
        %s593 = scalar_lea.vmem %s0, %s592
        %v594 = vld [vmem:[%s593] sm:$0xff]
        %v595 = vld [vmem:[%s593 + $0x8] sm:$0xff]
        %v596 = vld [vmem:[%s593 + $0x10] sm:$0xff]
        %v597 = vld [vmem:[%s593 + $0x18] sm:$0xff]
        %v598 = vld [vmem:[%s593 + $0x20] sm:$0xff]
        %v599 = vld [vmem:[%s593 + $0x28] sm:$0xff]
        %v600 = vld [vmem:[%s593 + $0x30] sm:$0xff]
        %v601 = vld [vmem:[%s593 + $0x38] sm:$0xff]
        %v602 = vld [vmem:[%s593 + $0x40] sm:$0xff]
        %v603 = vld [vmem:[%s593 + $0x48] sm:$0xff]
        %v604 = vld [vmem:[%s593 + $0x50] sm:$0xff]
        %v605 = vld [vmem:[%s593 + $0x58] sm:$0xff]
        %v606 = vld [vmem:[%s593 + $0x60] sm:$0xff]
        %v607 = vld [vmem:[%s593 + $0x68] sm:$0xff]
        %v608 = vld [vmem:[%s593 + $0x70] sm:$0xff]
        %v609 = vld [vmem:[%s593 + $0x78] sm:$0xff]
        %v610 = vld [vmem:[%s593 + $0x80] sm:$0xff]
        %v611 = vld [vmem:[%s593 + $0x88] sm:$0xff]
        %v612 = vld [vmem:[%s593 + $0x90] sm:$0xff]
        %v613 = vld [vmem:[%s593 + $0x98] sm:$0xff]
        %v614 = vld [vmem:[%s593 + $0xa0] sm:$0xff]
        %v615 = vld [vmem:[%s593 + $0xa8] sm:$0xff]
        %v616 = vld [vmem:[%s593 + $0xb0] sm:$0xff]
        %v617 = vld [vmem:[%s593 + $0xb8] sm:$0xff]
        %v618 = vld [vmem:[%s593 + $0xc0] sm:$0xff]
        %v619 = vld [vmem:[%s593 + $0xc8] sm:$0xff]
        %v620 = vld [vmem:[%s593 + $0xd0] sm:$0xff]
        %v621 = vld [vmem:[%s593 + $0xd8] sm:$0xff]
        %v622 = vld [vmem:[%s593 + $0xe0] sm:$0xff]
        %v623 = vld [vmem:[%s593 + $0xe8] sm:$0xff]
        %v624 = vld [vmem:[%s593 + $0xf0] sm:$0xff]
        %v625 = vld [vmem:[%s593 + $0xf8] sm:$0xff]
        %v626 = vld [vmem:[%s593 + $0x100] sm:$0xff]
        %v627 = vld [vmem:[%s593 + $0x108] sm:$0xff]
        %v628 = vld [vmem:[%s593 + $0x110] sm:$0xff]
        %v629 = vld [vmem:[%s593 + $0x118] sm:$0xff]
        %v630 = vld [vmem:[%s593 + $0x120] sm:$0xff]
        %v631 = vld [vmem:[%s593 + $0x128] sm:$0xff]
        %v632 = vld [vmem:[%s593 + $0x130] sm:$0xff]
        %v633 = vld [vmem:[%s593 + $0x138] sm:$0xff]
        %v634 = vld [vmem:[%s593 + $0x140] sm:$0xf]
        %v635 = vld [vmem:[#allocation11] sm:$0xff]
        %v636 = vld [vmem:[#allocation11 + $0x8] sm:$0x1]
        %v637 = vld [vmem:[#allocation2] sm:$0xff]
        %v638 = vld [vmem:[#allocation2 + $0x8] sm:$0xff]
        %v639 = vld [vmem:[#allocation2 + $0x10] sm:$0xff]
        %v640 = vld [vmem:[#allocation2 + $0x18] sm:$0xff]
        %v641 = vld [vmem:[#allocation2 + $0x20] sm:$0xff]
        %v642 = vld [vmem:[#allocation2 + $0x28] sm:$0xff]
        %v643 = vld [vmem:[#allocation2 + $0x30] sm:$0xff]
        %v644 = vld [vmem:[#allocation2 + $0x38] sm:$0xff]
        %v645 = vld [vmem:[#allocation2 + $0x40] sm:$0xff]
        %v646 = vld [vmem:[#allocation2 + $0x48] sm:$0xff]
        %v647 = vld [vmem:[#allocation2 + $0x50] sm:$0xff]
        %v648 = vld [vmem:[#allocation2 + $0x58] sm:$0xff]
        %v649 = vld [vmem:[#allocation2 + $0x60] sm:$0xff]
        %v650 = vld [vmem:[#allocation2 + $0x68] sm:$0xff]
        %v651 = vld [vmem:[#allocation2 + $0x70] sm:$0xff]
        %v652 = vld [vmem:[#allocation2 + $0x78] sm:$0xff]
        %v653 = vld [vmem:[#allocation2 + $0x80] sm:$0xff]
        %v654 = vld [vmem:[#allocation2 + $0x88] sm:$0xff]
        %v655 = vld [vmem:[#allocation2 + $0x90] sm:$0xff]
        %v656 = vld [vmem:[#allocation2 + $0x98] sm:$0xff]
        %v657 = vld [vmem:[#allocation2 + $0xa0] sm:$0xff]
        %v658 = vld [vmem:[#allocation2 + $0xa8] sm:$0xff]
        %v659 = vld [vmem:[#allocation2 + $0xb0] sm:$0xff]
        %v660 = vld [vmem:[#allocation2 + $0xb8] sm:$0xff]
        %v661 = vld [vmem:[#allocation2 + $0xc0] sm:$0xff]
        %v662 = vld [vmem:[#allocation2 + $0xc8] sm:$0xff]
        %v663 = vld [vmem:[#allocation2 + $0xd0] sm:$0xff]
        %v664 = vld [vmem:[#allocation2 + $0xd8] sm:$0xff]
        %v665 = vld [vmem:[#allocation2 + $0xe0] sm:$0xff]
        %v666 = vld [vmem:[#allocation2 + $0xe8] sm:$0xff]
        %v667 = vld [vmem:[#allocation2 + $0xf0] sm:$0xff]
        %v668 = vld [vmem:[#allocation2 + $0xf8] sm:$0xff]
        %v669 = vld [vmem:[#allocation2 + $0x100] sm:$0xff]
        %v670 = vld [vmem:[#allocation2 + $0x108] sm:$0xff]
        %v671 = vld [vmem:[#allocation2 + $0x110] sm:$0xff]
        %v672 = vld [vmem:[#allocation2 + $0x118] sm:$0xff]
        %v673 = vld [vmem:[#allocation2 + $0x120] sm:$0xff]
        %v674 = vld [vmem:[#allocation2 + $0x128] sm:$0xff]
        %v675 = vld [vmem:[#allocation2 + $0x130] sm:$0xff]
        %v676 = vld [vmem:[#allocation2 + $0x138] sm:$0xff]
        %v677 = vld [vmem:[#allocation2 + $0x140] sm:$0xff]
        %v678 = vld [vmem:[#allocation2 + $0x148] sm:$0xff]
        %v679 = vld [vmem:[#allocation2 + $0x150] sm:$0xff]
        %v680 = vld [vmem:[#allocation2 + $0x158] sm:$0xff]
        %v681 = vld [vmem:[#allocation2 + $0x160] sm:$0xff]
        %v682 = vld [vmem:[#allocation2 + $0x168] sm:$0xff]
        %v683 = vld [vmem:[#allocation2 + $0x170] sm:$0xff]
        %v684 = vld [vmem:[#allocation2 + $0x178] sm:$0xff]
        %v685 = vld [vmem:[#allocation2 + $0x180] sm:$0xff]
        %v686 = vld [vmem:[#allocation2 + $0x188] sm:$0xff]
        %v687 = vld [vmem:[#allocation2 + $0x190] sm:$0xff]
        %v688 = vld [vmem:[#allocation2 + $0x198] sm:$0xff]
        %v689 = vld [vmem:[#allocation2 + $0x1a0] sm:$0xff]
        %v690 = vld [vmem:[#allocation2 + $0x1a8] sm:$0xff]
        %v691 = vld [vmem:[#allocation2 + $0x1b0] sm:$0xff]
        %v692 = vld [vmem:[#allocation2 + $0x1b8] sm:$0xff]
        %v693 = vld [vmem:[#allocation2 + $0x1c0] sm:$0xff]
        %v694 = vld [vmem:[#allocation2 + $0x1c8] sm:$0xff]
        %v695 = vld [vmem:[#allocation2 + $0x1d0] sm:$0xff]
        %v696 = vld [vmem:[#allocation2 + $0x1d8] sm:$0xff]
        %v697 = vld [vmem:[#allocation2 + $0x1e0] sm:$0xff]
        %v698 = vld [vmem:[#allocation2 + $0x1e8] sm:$0xff]
        %v699 = vld [vmem:[#allocation2 + $0x1f0] sm:$0xff]
        %v700 = vld [vmem:[#allocation2 + $0x1f8] sm:$0xff]
        %v701 = vld [vmem:[#allocation2 + $0x200] sm:$0xff]
        %v702 = vld [vmem:[#allocation2 + $0x208] sm:$0xff]
        %v703 = vld [vmem:[#allocation2 + $0x210] sm:$0xff]
        %v704 = vld [vmem:[#allocation2 + $0x218] sm:$0xff]
        %v705 = vld [vmem:[#allocation2 + $0x220] sm:$0xff]
        %v706 = vld [vmem:[#allocation2 + $0x228] sm:$0xff]
        %v707 = vld [vmem:[#allocation2 + $0x230] sm:$0xff]
        %v708 = vld [vmem:[#allocation2 + $0x238] sm:$0xff]
        %v709 = vld [vmem:[#allocation2 + $0x240] sm:$0xff]
        %v710 = vld [vmem:[#allocation2 + $0x248] sm:$0xff]
        %v711 = vld [vmem:[#allocation2 + $0x250] sm:$0xff]
        %v712 = vld [vmem:[#allocation2 + $0x258] sm:$0xff]
        %v713 = vld [vmem:[#allocation2 + $0x260] sm:$0xff]
        %v714 = vld [vmem:[#allocation2 + $0x268] sm:$0xff]
        %v715 = vld [vmem:[#allocation2 + $0x270] sm:$0xff]
        %v716 = vld [vmem:[#allocation2 + $0x278] sm:$0xff]
        %v717 = vld [vmem:[#allocation2 + $0x280] sm:$0xff]
        %v718 = vld [vmem:[#allocation2 + $0x288] sm:$0xff]
        %v719 = vld [vmem:[#allocation2 + $0x290] sm:$0xff]
        %v720 = vld [vmem:[#allocation2 + $0x298] sm:$0xff]
        %v721 = vld [vmem:[#allocation2 + $0x2a0] sm:$0xff]
        %v722 = vld [vmem:[#allocation2 + $0x2a8] sm:$0xff]
        %v723 = vld [vmem:[#allocation2 + $0x2b0] sm:$0xff]
        %v724 = vld [vmem:[#allocation2 + $0x2b8] sm:$0xff]
        %v725 = vld [vmem:[#allocation2 + $0x2c0] sm:$0xff]
        %v726 = vld [vmem:[#allocation2 + $0x2c8] sm:$0xff]
        %v727 = vld [vmem:[#allocation2 + $0x2d0] sm:$0xff]
        %v728 = vld [vmem:[#allocation2 + $0x2d8] sm:$0xff]
        %v729 = vld [vmem:[#allocation2 + $0x2e0] sm:$0xff]
        %v730 = vld [vmem:[#allocation2 + $0x2e8] sm:$0xff]
        %v731 = vld [vmem:[#allocation2 + $0x2f0] sm:$0xff]
        %v732 = vld [vmem:[#allocation2 + $0x2f8] sm:$0xff]
        %734 = vset.pattern.permute.xlu0 0
        %735 = vperm.xlu0 %734, %v594
        %v736 = vpop.permute.xlu0 %735
        %739 = vset.pattern.permute.xlu0 0
        %740 = vperm.xlu0 %739, %v595
        %v741 = vpop.permute.xlu0 %740
        %744 = vset.pattern.permute.xlu0 0
        %745 = vperm.xlu0 %744, %v596
        %v746 = vpop.permute.xlu0 %745
        %749 = vset.pattern.permute.xlu0 0
        %750 = vperm.xlu0 %749, %v597
        %v751 = vpop.permute.xlu0 %750
        %754 = vset.pattern.permute.xlu0 0
        %755 = vperm.xlu0 %754, %v598
        %v756 = vpop.permute.xlu0 %755
        %759 = vset.pattern.permute.xlu0 0
        %760 = vperm.xlu0 %759, %v599
        %v761 = vpop.permute.xlu0 %760
        %764 = vset.pattern.permute.xlu0 0
        %765 = vperm.xlu0 %764, %v600
        %v766 = vpop.permute.xlu0 %765
        %769 = vset.pattern.permute.xlu0 0
        %770 = vperm.xlu0 %769, %v601
        %v771 = vpop.permute.xlu0 %770
        %774 = vset.pattern.permute.xlu0 0
        %775 = vperm.xlu0 %774, %v602
        %v776 = vpop.permute.xlu0 %775
        %779 = vset.pattern.permute.xlu0 0
        %780 = vperm.xlu0 %779, %v603
        %v781 = vpop.permute.xlu0 %780
        %784 = vset.pattern.permute.xlu0 0
        %785 = vperm.xlu0 %784, %v604
        %v786 = vpop.permute.xlu0 %785
        %789 = vset.pattern.permute.xlu0 0
        %790 = vperm.xlu0 %789, %v605
        %v791 = vpop.permute.xlu0 %790
        %794 = vset.pattern.permute.xlu0 0
        %795 = vperm.xlu0 %794, %v606
        %v796 = vpop.permute.xlu0 %795
        %799 = vset.pattern.permute.xlu0 0
        %800 = vperm.xlu0 %799, %v607
        %v801 = vpop.permute.xlu0 %800
        %804 = vset.pattern.permute.xlu0 0
        %805 = vperm.xlu0 %804, %v608
        %v806 = vpop.permute.xlu0 %805
        %809 = vset.pattern.permute.xlu0 0
        %810 = vperm.xlu0 %809, %v609
        %v811 = vpop.permute.xlu0 %810
        %814 = vset.pattern.permute.xlu0 0
        %815 = vperm.xlu0 %814, %v610
        %v816 = vpop.permute.xlu0 %815
        %819 = vset.pattern.permute.xlu0 0
        %820 = vperm.xlu0 %819, %v611
        %v821 = vpop.permute.xlu0 %820
        %824 = vset.pattern.permute.xlu0 0
        %825 = vperm.xlu0 %824, %v612
        %v826 = vpop.permute.xlu0 %825
        %829 = vset.pattern.permute.xlu0 0
        %830 = vperm.xlu0 %829, %v613
        %v831 = vpop.permute.xlu0 %830
        %834 = vset.pattern.permute.xlu0 0
        %835 = vperm.xlu0 %834, %v614
        %v836 = vpop.permute.xlu0 %835
        %839 = vset.pattern.permute.xlu0 0
        %840 = vperm.xlu0 %839, %v615
        %v841 = vpop.permute.xlu0 %840
        %844 = vset.pattern.permute.xlu0 0
        %845 = vperm.xlu0 %844, %v616
        %v846 = vpop.permute.xlu0 %845
        %849 = vset.pattern.permute.xlu0 0
        %850 = vperm.xlu0 %849, %v617
        %v851 = vpop.permute.xlu0 %850
        %854 = vset.pattern.permute.xlu0 0
        %855 = vperm.xlu0 %854, %v618
        %v856 = vpop.permute.xlu0 %855
        %859 = vset.pattern.permute.xlu0 0
        %860 = vperm.xlu0 %859, %v619
        %v861 = vpop.permute.xlu0 %860
        %864 = vset.pattern.permute.xlu0 0
        %865 = vperm.xlu0 %864, %v620
        %v866 = vpop.permute.xlu0 %865
        %869 = vset.pattern.permute.xlu0 0
        %870 = vperm.xlu0 %869, %v621
        %v871 = vpop.permute.xlu0 %870
        %874 = vset.pattern.permute.xlu0 0
        %875 = vperm.xlu0 %874, %v622
        %v876 = vpop.permute.xlu0 %875
        %879 = vset.pattern.permute.xlu0 0
        %880 = vperm.xlu0 %879, %v623
        %v881 = vpop.permute.xlu0 %880
        %884 = vset.pattern.permute.xlu0 0
        %885 = vperm.xlu0 %884, %v624
        %v886 = vpop.permute.xlu0 %885
        %889 = vset.pattern.permute.xlu0 0
        %890 = vperm.xlu0 %889, %v625
        %v891 = vpop.permute.xlu0 %890
        %894 = vset.pattern.permute.xlu0 0
        %895 = vperm.xlu0 %894, %v626
        %v896 = vpop.permute.xlu0 %895
        %899 = vset.pattern.permute.xlu0 0
        %900 = vperm.xlu0 %899, %v627
        %v901 = vpop.permute.xlu0 %900
        %904 = vset.pattern.permute.xlu0 0
        %905 = vperm.xlu0 %904, %v628
        %v906 = vpop.permute.xlu0 %905
        %909 = vset.pattern.permute.xlu0 0
        %910 = vperm.xlu0 %909, %v629
        %v911 = vpop.permute.xlu0 %910
        %914 = vset.pattern.permute.xlu0 0
        %915 = vperm.xlu0 %914, %v630
        %v916 = vpop.permute.xlu0 %915
        %919 = vset.pattern.permute.xlu0 0
        %920 = vperm.xlu0 %919, %v631
        %v921 = vpop.permute.xlu0 %920
        %924 = vset.pattern.permute.xlu0 0
        %925 = vperm.xlu0 %924, %v632
        %v926 = vpop.permute.xlu0 %925
        %929 = vset.pattern.permute.xlu0 0
        %930 = vperm.xlu0 %929, %v633
        %v931 = vpop.permute.xlu0 %930
        %934 = vset.pattern.permute.xlu0 0
        %935 = vperm.xlu0 %934, %v634
        %v936 = vpop.permute.xlu0 %935
        %v938 = vlaneseq
        %v939 = vshrl.u32 %v938, 7
        %v940 = vsub.s32 0, %v939
        %v941 = vrot.slane %v635, %v940
        %v942 = vmul.f32 %v736, %v941
        %v943 = vmul.f32 %v741, %v941
        %v944 = vmul.f32 %v746, %v941
        %v945 = vmul.f32 %v751, %v941
        %v946 = vmul.f32 %v756, %v941
        %v947 = vmul.f32 %v761, %v941
        %v948 = vmul.f32 %v766, %v941
        %v949 = vmul.f32 %v771, %v941
        %v950 = vmul.f32 %v776, %v941
        %v951 = vmul.f32 %v781, %v941
        %v952 = vmul.f32 %v786, %v941
        %v953 = vmul.f32 %v791, %v941
        %v954 = vmul.f32 %v796, %v941
        %v955 = vmul.f32 %v801, %v941
        %v956 = vmul.f32 %v806, %v941
        %v957 = vmul.f32 %v811, %v941
        %v958 = vmul.f32 %v816, %v941
        %v959 = vmul.f32 %v821, %v941
        %v960 = vmul.f32 %v826, %v941
        %v961 = vmul.f32 %v831, %v941
        %v962 = vmul.f32 %v836, %v941
        %v963 = vmul.f32 %v841, %v941
        %v964 = vmul.f32 %v846, %v941
        %v965 = vmul.f32 %v851, %v941
        %v966 = vmul.f32 %v856, %v941
        %v967 = vmul.f32 %v861, %v941
        %v968 = vmul.f32 %v866, %v941
        %v969 = vmul.f32 %v871, %v941
        %v970 = vmul.f32 %v876, %v941
        %v971 = vmul.f32 %v881, %v941
        %v972 = vmul.f32 %v886, %v941
        %v973 = vmul.f32 %v891, %v941
        %v974 = vmul.f32 %v896, %v941
        %v975 = vmul.f32 %v901, %v941
        %v976 = vmul.f32 %v906, %v941
        %v977 = vmul.f32 %v911, %v941
        %v978 = vmul.f32 %v916, %v941
        %v979 = vmul.f32 %v921, %v941
        %v980 = vmul.f32 %v926, %v941
        %v981 = vmul.f32 %v931, %v941
        %v982 = vmul.f32 %v936, %v941
        %s983 = scalar_lea.vmem [#allocation2], 768
        %v984 = vld [vmem:[%s983] sm:$0xff]
        %v985 = vld [vmem:[%s983 + $0x8] sm:$0xff]
        %v986 = vld [vmem:[%s983 + $0x10] sm:$0xff]
        %v987 = vld [vmem:[%s983 + $0x18] sm:$0xff]
        %v988 = vld [vmem:[%s983 + $0x20] sm:$0xff]
        %v989 = vld [vmem:[%s983 + $0x28] sm:$0xff]
        %v990 = vld [vmem:[%s983 + $0x30] sm:$0xff]
        %v991 = vld [vmem:[%s983 + $0x38] sm:$0xff]
        %v992 = vld [vmem:[%s983 + $0x40] sm:$0xff]
        %v993 = vld [vmem:[%s983 + $0x48] sm:$0xff]
        %v994 = vld [vmem:[%s983 + $0x50] sm:$0xff]
        %v995 = vld [vmem:[%s983 + $0x58] sm:$0xff]
        %v996 = vld [vmem:[%s983 + $0x60] sm:$0xff]
        %v997 = vld [vmem:[%s983 + $0x68] sm:$0xff]
        %v998 = vld [vmem:[%s983 + $0x70] sm:$0xff]
        %v999 = vld [vmem:[%s983 + $0x78] sm:$0xff]
        %v1000 = vld [vmem:[%s983 + $0x80] sm:$0xff]
        %v1001 = vld [vmem:[%s983 + $0x88] sm:$0xff]
        %v1002 = vld [vmem:[%s983 + $0x90] sm:$0xff]
        %v1003 = vld [vmem:[%s983 + $0x98] sm:$0xff]
        %v1004 = vld [vmem:[%s983 + $0xa0] sm:$0xff]
        %v1005 = vld [vmem:[%s983 + $0xa8] sm:$0xff]
        %v1006 = vld [vmem:[%s983 + $0xb0] sm:$0xff]
        %v1007 = vld [vmem:[%s983 + $0xb8] sm:$0xff]
        %v1008 = vld [vmem:[%s983 + $0xc0] sm:$0xff]
        %v1009 = vld [vmem:[%s983 + $0xc8] sm:$0xff]
        %v1010 = vld [vmem:[%s983 + $0xd0] sm:$0xff]
        %v1011 = vld [vmem:[%s983 + $0xd8] sm:$0xff]
        %v1012 = vld [vmem:[%s983 + $0xe0] sm:$0xff]
        %v1013 = vld [vmem:[%s983 + $0xe8] sm:$0xff]
        %v1014 = vld [vmem:[%s983 + $0xf0] sm:$0xff]
        %v1015 = vld [vmem:[%s983 + $0xf8] sm:$0xff]
        %v1016 = vld [vmem:[%s983 + $0x100] sm:$0xff]
        %v1017 = vld [vmem:[%s983 + $0x108] sm:$0xff]
        %v1018 = vld [vmem:[%s983 + $0x110] sm:$0xff]
        %v1019 = vld [vmem:[%s983 + $0x118] sm:$0xff]
        %v1020 = vld [vmem:[%s983 + $0x120] sm:$0xff]
        %v1021 = vld [vmem:[%s983 + $0x128] sm:$0xff]
        %v1022 = vld [vmem:[%s983 + $0x130] sm:$0xff]
        %v1023 = vld [vmem:[%s983 + $0x138] sm:$0xff]
        %v1024 = vld [vmem:[%s983 + $0x140] sm:$0xff]
        %v1025 = vld [vmem:[%s983 + $0x148] sm:$0xff]
        %v1026 = vld [vmem:[%s983 + $0x150] sm:$0xff]
        %v1027 = vld [vmem:[%s983 + $0x158] sm:$0xff]
        %v1028 = vld [vmem:[%s983 + $0x160] sm:$0xff]
        %v1029 = vld [vmem:[%s983 + $0x168] sm:$0xff]
        %v1030 = vld [vmem:[%s983 + $0x170] sm:$0xff]
        %v1031 = vld [vmem:[%s983 + $0x178] sm:$0xff]
        %v1032 = vld [vmem:[%s983 + $0x180] sm:$0xff]
        %v1033 = vld [vmem:[%s983 + $0x188] sm:$0xff]
        %v1034 = vld [vmem:[%s983 + $0x190] sm:$0xff]
        %v1035 = vld [vmem:[%s983 + $0x198] sm:$0xff]
        %v1036 = vld [vmem:[%s983 + $0x1a0] sm:$0xff]
        %v1037 = vld [vmem:[%s983 + $0x1a8] sm:$0xff]
        %v1038 = vld [vmem:[%s983 + $0x1b0] sm:$0xff]
        %v1039 = vld [vmem:[%s983 + $0x1b8] sm:$0xff]
        %v1040 = vld [vmem:[%s983 + $0x1c0] sm:$0xff]
        %v1041 = vld [vmem:[%s983 + $0x1c8] sm:$0xff]
        %v1042 = vld [vmem:[%s983 + $0x1d0] sm:$0xff]
        %v1043 = vld [vmem:[%s983 + $0x1d8] sm:$0xff]
        %v1044 = vld [vmem:[%s983 + $0x1e0] sm:$0xff]
        %v1045 = vld [vmem:[%s983 + $0x1e8] sm:$0xff]
        %v1046 = vld [vmem:[%s983 + $0x1f0] sm:$0xff]
        %v1047 = vld [vmem:[%s983 + $0x1f8] sm:$0xff]
        %v1048 = vld [vmem:[%s983 + $0x200] sm:$0xff]
        %v1049 = vld [vmem:[%s983 + $0x208] sm:$0xff]
        %v1050 = vld [vmem:[%s983 + $0x210] sm:$0xff]
        %v1051 = vld [vmem:[%s983 + $0x218] sm:$0xff]
        %v1052 = vld [vmem:[%s983 + $0x220] sm:$0xff]
        %v1053 = vld [vmem:[%s983 + $0x228] sm:$0xff]
        %v1054 = vld [vmem:[%s983 + $0x230] sm:$0xff]
        %v1055 = vld [vmem:[%s983 + $0x238] sm:$0xff]
        %v1056 = vld [vmem:[%s983 + $0x240] sm:$0xff]
        %v1057 = vld [vmem:[%s983 + $0x248] sm:$0xff]
        %v1058 = vld [vmem:[%s983 + $0x250] sm:$0xff]
        %v1059 = vld [vmem:[%s983 + $0x258] sm:$0xff]
        %v1060 = vld [vmem:[%s983 + $0x260] sm:$0xff]
        %v1061 = vld [vmem:[%s983 + $0x268] sm:$0xff]
        %v1062 = vld [vmem:[%s983 + $0x270] sm:$0xff]
        %v1063 = vld [vmem:[%s983 + $0x278] sm:$0xff]
        %v1064 = vld [vmem:[%s983 + $0x280] sm:$0xff]
        %v1065 = vld [vmem:[%s983 + $0x288] sm:$0xff]
        %v1066 = vld [vmem:[%s983 + $0x290] sm:$0xff]
        %v1067 = vld [vmem:[%s983 + $0x298] sm:$0xff]
        %v1068 = vld [vmem:[%s983 + $0x2a0] sm:$0xff]
        %v1069 = vld [vmem:[%s983 + $0x2a8] sm:$0xff]
        %v1070 = vld [vmem:[%s983 + $0x2b0] sm:$0xff]
        %v1071 = vld [vmem:[%s983 + $0x2b8] sm:$0xff]
        %v1072 = vld [vmem:[%s983 + $0x2c0] sm:$0xff]
        %v1073 = vld [vmem:[%s983 + $0x2c8] sm:$0xff]
        %v1074 = vld [vmem:[%s983 + $0x2d0] sm:$0xff]
        %v1075 = vld [vmem:[%s983 + $0x2d8] sm:$0xff]
        %v1076 = vld [vmem:[%s983 + $0x2e0] sm:$0xff]
        %v1077 = vld [vmem:[%s983 + $0x2e8] sm:$0xff]
        %v1078 = vld [vmem:[%s983 + $0x2f0] sm:$0xff]
        %v1079 = vld [vmem:[%s983 + $0x2f8] sm:$0xff]
        %v1080 = vlaneseq
        %v1081 = vshrl.u32 %v1080, 7
        %v1082 = vsub.s32 1, %v1081
        %v1083 = vrot.slane %v635, %v1082
        %v1084 = vmul.f32 %v736, %v1083
        %v1085 = vmul.f32 %v741, %v1083
        %v1086 = vmul.f32 %v746, %v1083
        %v1087 = vmul.f32 %v751, %v1083
        %v1088 = vmul.f32 %v756, %v1083
        %v1089 = vmul.f32 %v761, %v1083
        %v1090 = vmul.f32 %v766, %v1083
        %v1091 = vmul.f32 %v771, %v1083
        %v1092 = vmul.f32 %v776, %v1083
        %v1093 = vmul.f32 %v781, %v1083
        %v1094 = vmul.f32 %v786, %v1083
        %v1095 = vmul.f32 %v791, %v1083
        %v1096 = vmul.f32 %v796, %v1083
        %v1097 = vmul.f32 %v801, %v1083
        %v1098 = vmul.f32 %v806, %v1083
        %v1099 = vmul.f32 %v811, %v1083
        %v1100 = vmul.f32 %v816, %v1083
        %v1101 = vmul.f32 %v821, %v1083
        %v1102 = vmul.f32 %v826, %v1083
        %v1103 = vmul.f32 %v831, %v1083
        %v1104 = vmul.f32 %v836, %v1083
        %v1105 = vmul.f32 %v841, %v1083
        %v1106 = vmul.f32 %v846, %v1083
        %v1107 = vmul.f32 %v851, %v1083
        %v1108 = vmul.f32 %v856, %v1083
        %v1109 = vmul.f32 %v861, %v1083
        %v1110 = vmul.f32 %v866, %v1083
        %v1111 = vmul.f32 %v871, %v1083
        %v1112 = vmul.f32 %v876, %v1083
        %v1113 = vmul.f32 %v881, %v1083
        %v1114 = vmul.f32 %v886, %v1083
        %v1115 = vmul.f32 %v891, %v1083
        %v1116 = vmul.f32 %v896, %v1083
        %v1117 = vmul.f32 %v901, %v1083
        %v1118 = vmul.f32 %v906, %v1083
        %v1119 = vmul.f32 %v911, %v1083
        %v1120 = vmul.f32 %v916, %v1083
        %v1121 = vmul.f32 %v921, %v1083
        %v1122 = vmul.f32 %v926, %v1083
        %v1123 = vmul.f32 %v931, %v1083
        %v1124 = vmul.f32 %v936, %v1083
        %vm1125 = vcmask 556032
        %v1127 = vsel %vm1125, %v986, 0
        %v1130 = vsel %vm1125, %v989, 0
        %v1133 = vsel %vm1125, %v992, 0
        %v1136 = vsel %vm1125, %v995, 0
        %v1139 = vsel %vm1125, %v998, 0
        %v1142 = vsel %vm1125, %v1001, 0
        %v1145 = vsel %vm1125, %v1004, 0
        %v1148 = vsel %vm1125, %v1007, 0
        %v1151 = vsel %vm1125, %v1010, 0
        %v1154 = vsel %vm1125, %v1013, 0
        %v1157 = vsel %vm1125, %v1016, 0
        %v1160 = vsel %vm1125, %v1019, 0
        %v1163 = vsel %vm1125, %v1022, 0
        %v1166 = vsel %vm1125, %v1025, 0
        %v1169 = vsel %vm1125, %v1028, 0
        %v1172 = vsel %vm1125, %v1031, 0
        %v1175 = vsel %vm1125, %v1034, 0
        %v1178 = vsel %vm1125, %v1037, 0
        %v1181 = vsel %vm1125, %v1040, 0
        %v1184 = vsel %vm1125, %v1043, 0
        %v1187 = vsel %vm1125, %v1046, 0
        %v1190 = vsel %vm1125, %v1049, 0
        %v1193 = vsel %vm1125, %v1052, 0
        %v1196 = vsel %vm1125, %v1055, 0
        %v1199 = vsel %vm1125, %v1058, 0
        %v1202 = vsel %vm1125, %v1061, 0
        %v1205 = vsel %vm1125, %v1064, 0
        %v1208 = vsel %vm1125, %v1067, 0
        %v1211 = vsel %vm1125, %v1070, 0
        %v1214 = vsel %vm1125, %v1073, 0
        %v1217 = vsel %vm1125, %v1076, 0
        %v1220 = vsel %vm1125, %v1079, 0
        %vm1222 = vcmask 1043456
        %v1224 = vsel %vm1222, %v1124, 0
        %1226 = vmatprep.subr.mxu0 0.0
        %1227 = vmatpush1.msra.mxu0 %v1084
        %1228 = vmatprep.subr.mxu0 0.0
        %1229 = vmatpush1.msra.mxu0 %v1085
        %1230 = vmatprep.subr.mxu0 0.0
        %1231 = vmatpush1.msra.mxu0 %v1086
        %1232 = vmatprep.subr.mxu0 0.0
        %1233 = vmatpush1.msra.mxu0 %v1087
        %1234 = vmatprep.subr.mxu0 0.0
        %1235 = vmatpush1.msra.mxu0 %v1088
        %1236 = vmatprep.subr.mxu0 0.0
        %1237 = vmatpush1.msra.mxu0 %v1089
        %1238 = vmatprep.subr.mxu0 0.0
        %1239 = vmatpush1.msra.mxu0 %v1090
        %1240 = vmatprep.subr.mxu0 0.0
        %1241 = vmatpush1.msra.mxu0 %v1091
        %1242 = vmatprep.subr.mxu0 0.0
        %1243 = vmatpush1.msra.mxu0 %v1092
        %1244 = vmatprep.subr.mxu0 0.0
        %1245 = vmatpush1.msra.mxu0 %v1093
        %1246 = vmatprep.subr.mxu0 0.0
        %1247 = vmatpush1.msra.mxu0 %v1094
        %1248 = vmatprep.subr.mxu0 0.0
        %1249 = vmatpush1.msra.mxu0 %v1095
        %1250 = vmatprep.subr.mxu0 0.0
        %1251 = vmatpush1.msra.mxu0 %v1096
        %1252 = vmatprep.subr.mxu0 0.0
        %1253 = vmatpush1.msra.mxu0 %v1097
        %1254 = vmatprep.subr.mxu0 0.0
        %1255 = vmatpush1.msra.mxu0 %v1098
        %1256 = vmatprep.subr.mxu0 0.0
        %1257 = vmatpush1.msra.mxu0 %v1099
        %1258 = vmatprep.subr.mxu0 0.0
        %1259 = vmatpush1.msra.mxu0 %v1100
        %1260 = vmatprep.subr.mxu0 0.0
        %1261 = vmatpush1.msra.mxu0 %v1101
        %1262 = vmatprep.subr.mxu0 0.0
        %1263 = vmatpush1.msra.mxu0 %v1102
        %1264 = vmatprep.subr.mxu0 0.0
        %1265 = vmatpush1.msra.mxu0 %v1103
        %1266 = vmatprep.subr.mxu0 0.0
        %1267 = vmatpush1.msra.mxu0 %v1104
        %1268 = vmatprep.subr.mxu0 0.0
        %1269 = vmatpush1.msra.mxu0 %v1105
        %1270 = vmatprep.subr.mxu0 0.0
        %1271 = vmatpush1.msra.mxu0 %v1106
        %1272 = vmatprep.subr.mxu0 0.0
        %1273 = vmatpush1.msra.mxu0 %v1107
        %1274 = vmatprep.subr.mxu0 0.0
        %1275 = vmatpush1.msra.mxu0 %v1108
        %1276 = vmatprep.subr.mxu0 0.0
        %1277 = vmatpush1.msra.mxu0 %v1109
        %1278 = vmatprep.subr.mxu0 0.0
        %1279 = vmatpush1.msra.mxu0 %v1110
        %1280 = vmatprep.subr.mxu0 0.0
        %1281 = vmatpush1.msra.mxu0 %v1111
        %1282 = vmatprep.subr.mxu0 0.0
        %1283 = vmatpush1.msra.mxu0 %v1112
        %1284 = vmatprep.subr.mxu0 0.0
        %1285 = vmatpush1.msra.mxu0 %v1113
        %1286 = vmatprep.subr.mxu0 0.0
        %1287 = vmatpush1.msra.mxu0 %v1114
        %1288 = vmatprep.subr.mxu0 0.0
        %1289 = vmatpush1.msra.mxu0 %v1115
        %1290 = vmatprep.mubr.f32.mxu0 %v985
        %1291 = vmatmul.mubr.f32.gmra.mrb[0].mxu0 %v984
        %v1292 = vpop.f32.mrb[0].mxu0
        %v1293 = vadd.f32 0.0, %v1292
        %v1294 = vpop.f32.mrb[0].mxu0
        %1295 = vmatprep.mubr.f32.mxu0 %v988
        %1296 = vmatmul.mubr.f32.gmra.mrb[0].mxu0 %v987
        %v1297 = vpop.f32.mrb[0].mxu0
        %v1298 = vadd.f32 0.0, %v1297
        %v1299 = vpop.f32.mrb[0].mxu0
        %1300 = vmatprep.mubr.f32.mxu0 %v991
        %1301 = vmatmul.mubr.f32.gmra.mrb[0].mxu0 %v990
        %v1302 = vpop.f32.mrb[0].mxu0
        %v1303 = vadd.f32 0.0, %v1302
        %v1304 = vpop.f32.mrb[0].mxu0
        %1305 = vmatprep.mubr.f32.mxu0 %v994
        %1306 = vmatmul.mubr.f32.gmra.mrb[0].mxu0 %v993
        %v1307 = vpop.f32.mrb[0].mxu0
        %v1308 = vadd.f32 0.0, %v1307
        %v1309 = vpop.f32.mrb[0].mxu0
        %1310 = vmatprep.mubr.f32.mxu0 %v997
        %1311 = vmatmul.mubr.f32.gmra.mrb[0].mxu0 %v996
        %v1312 = vpop.f32.mrb[0].mxu0
        %v1313 = vadd.f32 0.0, %v1312
        %v1314 = vpop.f32.mrb[0].mxu0
        %1315 = vmatprep.mubr.f32.mxu0 %v1000
        %1316 = vmatmul.mubr.f32.gmra.mrb[0].mxu0 %v999
        %v1317 = vpop.f32.mrb[0].mxu0
        %v1318 = vadd.f32 0.0, %v1317
        %v1319 = vpop.f32.mrb[0].mxu0
        %1320 = vmatprep.mubr.f32.mxu0 %v1003
        %1321 = vmatmul.mubr.f32.gmra.mrb[0].mxu0 %v1002
        %v1322 = vpop.f32.mrb[0].mxu0
        %v1323 = vadd.f32 0.0, %v1322
        %v1324 = vpop.f32.mrb[0].mxu0
        %1325 = vmatprep.mubr.f32.mxu0 %v1006
        %1326 = vmatmul.mubr.f32.gmra.mrb[0].mxu0 %v1005
        %v1327 = vpop.f32.mrb[0].mxu0
        %v1328 = vadd.f32 0.0, %v1327
        %v1329 = vpop.f32.mrb[0].mxu0
        %1330 = vmatprep.mubr.f32.mxu0 %v1009
        %1331 = vmatmul.mubr.f32.gmra.mrb[0].mxu0 %v1008
        %v1332 = vpop.f32.mrb[0].mxu0
        %v1333 = vadd.f32 0.0, %v1332
        %v1334 = vpop.f32.mrb[0].mxu0
        %1335 = vmatprep.mubr.f32.mxu0 %v1012
        %1336 = vmatmul.mubr.f32.gmra.mrb[0].mxu0 %v1011
        %v1337 = vpop.f32.mrb[0].mxu0
        %v1338 = vadd.f32 0.0, %v1337
        %v1339 = vpop.f32.mrb[0].mxu0
        %1340 = vmatprep.mubr.f32.mxu0 %v1015
        %1341 = vmatmul.mubr.f32.gmra.mrb[0].mxu0 %v1014
        %v1342 = vpop.f32.mrb[0].mxu0
        %v1343 = vadd.f32 0.0, %v1342
        %v1344 = vpop.f32.mrb[0].mxu0
        %1345 = vmatprep.mubr.f32.mxu0 %v1018
        %1346 = vmatmul.mubr.f32.gmra.mrb[0].mxu0 %v1017
        %v1347 = vpop.f32.mrb[0].mxu0
        %v1348 = vadd.f32 0.0, %v1347
        %v1349 = vpop.f32.mrb[0].mxu0
        %1350 = vmatprep.mubr.f32.mxu0 %v1021
        %1351 = vmatmul.mubr.f32.gmra.mrb[0].mxu0 %v1020
        %v1352 = vpop.f32.mrb[0].mxu0
        %v1353 = vadd.f32 0.0, %v1352
        %v1354 = vpop.f32.mrb[0].mxu0
        %1355 = vmatprep.mubr.f32.mxu0 %v1024
        %1356 = vmatmul.mubr.f32.gmra.mrb[0].mxu0 %v1023
        %v1357 = vpop.f32.mrb[0].mxu0
        %v1358 = vadd.f32 0.0, %v1357
        %v1359 = vpop.f32.mrb[0].mxu0
        %1360 = vmatprep.mubr.f32.mxu0 %v1027
        %1361 = vmatmul.mubr.f32.gmra.mrb[0].mxu0 %v1026
        %v1362 = vpop.f32.mrb[0].mxu0
        %v1363 = vadd.f32 0.0, %v1362
        %v1364 = vpop.f32.mrb[0].mxu0
        %1365 = vmatprep.mubr.f32.mxu0 %v1030
        %1366 = vmatmul.mubr.f32.gmra.mrb[0].mxu0 %v1029
        %v1367 = vpop.f32.mrb[0].mxu0
        %v1368 = vadd.f32 0.0, %v1367
        %v1369 = vpop.f32.mrb[0].mxu0
        %1370 = vmatprep.mubr.f32.mxu0 %v1033
        %1371 = vmatmul.mubr.f32.gmra.mrb[0].mxu0 %v1032
        %v1372 = vpop.f32.mrb[0].mxu0
        %v1373 = vadd.f32 0.0, %v1372
        %v1374 = vpop.f32.mrb[0].mxu0
        %1375 = vmatprep.mubr.f32.mxu0 %v1036
        %1376 = vmatmul.mubr.f32.gmra.mrb[0].mxu0 %v1035
        %v1377 = vpop.f32.mrb[0].mxu0
        %v1378 = vadd.f32 0.0, %v1377
        %v1379 = vpop.f32.mrb[0].mxu0
        %1380 = vmatprep.mubr.f32.mxu0 %v1039
        %1381 = vmatmul.mubr.f32.gmra.mrb[0].mxu0 %v1038
        %v1382 = vpop.f32.mrb[0].mxu0
        %v1383 = vadd.f32 0.0, %v1382
        %v1384 = vpop.f32.mrb[0].mxu0
        %1385 = vmatprep.mubr.f32.mxu0 %v1042
        %1386 = vmatmul.mubr.f32.gmra.mrb[0].mxu0 %v1041
        %v1387 = vpop.f32.mrb[0].mxu0
        %v1388 = vadd.f32 0.0, %v1387
        %v1389 = vpop.f32.mrb[0].mxu0
        %1390 = vmatprep.mubr.f32.mxu0 %v1045
        %1391 = vmatmul.mubr.f32.gmra.mrb[0].mxu0 %v1044
        %v1392 = vpop.f32.mrb[0].mxu0
        %v1393 = vadd.f32 0.0, %v1392
        %v1394 = vpop.f32.mrb[0].mxu0
        %1395 = vmatprep.mubr.f32.mxu0 %v1048
        %1396 = vmatmul.mubr.f32.gmra.mrb[0].mxu0 %v1047
        %v1397 = vpop.f32.mrb[0].mxu0
        %v1398 = vadd.f32 0.0, %v1397
        %v1399 = vpop.f32.mrb[0].mxu0
        %1400 = vmatprep.mubr.f32.mxu0 %v1051
        %1401 = vmatmul.mubr.f32.gmra.mrb[0].mxu0 %v1050
        %v1402 = vpop.f32.mrb[0].mxu0
        %v1403 = vadd.f32 0.0, %v1402
        %v1404 = vpop.f32.mrb[0].mxu0
        %1405 = vmatprep.mubr.f32.mxu0 %v1054
        %1406 = vmatmul.mubr.f32.gmra.mrb[0].mxu0 %v1053
        %v1407 = vpop.f32.mrb[0].mxu0
        %v1408 = vadd.f32 0.0, %v1407
        %v1409 = vpop.f32.mrb[0].mxu0
        %1410 = vmatprep.mubr.f32.mxu0 %v1057
        %1411 = vmatmul.mubr.f32.gmra.mrb[0].mxu0 %v1056
        %v1412 = vpop.f32.mrb[0].mxu0
        %v1413 = vadd.f32 0.0, %v1412
        %v1414 = vpop.f32.mrb[0].mxu0
        %1415 = vmatprep.mubr.f32.mxu0 %v1060
        %1416 = vmatmul.mubr.f32.gmra.mrb[0].mxu0 %v1059
        %v1417 = vpop.f32.mrb[0].mxu0
        %v1418 = vadd.f32 0.0, %v1417
        %v1419 = vpop.f32.mrb[0].mxu0
        %1420 = vmatprep.mubr.f32.mxu0 %v1063
        %1421 = vmatmul.mubr.f32.gmra.mrb[0].mxu0 %v1062
        %v1422 = vpop.f32.mrb[0].mxu0
        %v1423 = vadd.f32 0.0, %v1422
        %v1424 = vpop.f32.mrb[0].mxu0
        %1425 = vmatprep.mubr.f32.mxu0 %v1066
        %1426 = vmatmul.mubr.f32.gmra.mrb[0].mxu0 %v1065
        %v1427 = vpop.f32.mrb[0].mxu0
        %v1428 = vadd.f32 0.0, %v1427
        %v1429 = vpop.f32.mrb[0].mxu0
        %1430 = vmatprep.mubr.f32.mxu0 %v1069
        %1431 = vmatmul.mubr.f32.gmra.mrb[0].mxu0 %v1068
        %v1432 = vpop.f32.mrb[0].mxu0
        %v1433 = vadd.f32 0.0, %v1432
        %v1434 = vpop.f32.mrb[0].mxu0
        %1435 = vmatprep.mubr.f32.mxu0 %v1072
        %1436 = vmatmul.mubr.f32.gmra.mrb[0].mxu0 %v1071
        %v1437 = vpop.f32.mrb[0].mxu0
        %v1438 = vadd.f32 0.0, %v1437
        %v1439 = vpop.f32.mrb[0].mxu0
        %1440 = vmatprep.mubr.f32.mxu0 %v1075
        %1441 = vmatmul.mubr.f32.gmra.mrb[0].mxu0 %v1074
        %v1442 = vpop.f32.mrb[0].mxu0
        %v1443 = vadd.f32 0.0, %v1442
        %v1444 = vpop.f32.mrb[0].mxu0
        %1445 = vmatprep.mubr.f32.mxu0 %v1078
        %1446 = vmatmul.mubr.f32.gmra.mrb[0].mxu0 %v1077
        %v1447 = vpop.f32.mrb[0].mxu0
        %v1448 = vadd.f32 0.0, %v1447
        %v1449 = vpop.f32.mrb[0].mxu0
        %1450 = vdwg.mxu0
        %1451 = vmatprep.subr.mxu0 0.0
        %1452 = vmatpush1.msra.mxu0 %v1116
        %1453 = vmatprep.subr.mxu0 0.0
        %1454 = vmatpush1.msra.mxu0 %v1117
        %1455 = vmatprep.subr.mxu0 0.0
        %1456 = vmatpush1.msra.mxu0 %v1118
        %1457 = vmatprep.subr.mxu0 0.0
        %1458 = vmatpush1.msra.mxu0 %v1119
        %1459 = vmatprep.subr.mxu0 0.0
        %1460 = vmatpush1.msra.mxu0 %v1120
        %1461 = vmatprep.subr.mxu0 0.0
        %1462 = vmatpush1.msra.mxu0 %v1121
        %1463 = vmatprep.subr.mxu0 0.0
        %1464 = vmatpush1.msra.mxu0 %v1122
        %1465 = vmatprep.subr.mxu0 0.0
        %1466 = vmatpush1.msra.mxu0 %v1123
        %1467 = vmatprep.subr.mxu0 0.0
        %1468 = vmatpush1.msra.mxu0 %v1224
        %1469 = vmatprep.subr.mxu0 0.0
        %1470 = vmatpush1.msra.mxu0 0.0
        %1471 = vmatprep.subr.mxu0 0.0
        %1472 = vmatpush1.msra.mxu0 0.0
        %1473 = vmatprep.subr.mxu0 0.0
        %1474 = vmatpush1.msra.mxu0 0.0
        %1475 = vmatprep.subr.mxu0 0.0
        %1476 = vmatpush1.msra.mxu0 0.0
        %1477 = vmatprep.subr.mxu0 0.0
        %1478 = vmatpush1.msra.mxu0 0.0
        %1479 = vmatprep.subr.mxu0 0.0
        %1480 = vmatpush1.msra.mxu0 0.0
        %1481 = vmatprep.subr.mxu0 0.0
        %1482 = vmatpush1.msra.mxu0 0.0
        %1483 = vmatprep.subr.mxu0 0.0
        %1484 = vmatpush1.msra.mxu0 0.0
        %1485 = vmatprep.subr.mxu0 0.0
        %1486 = vmatpush1.msra.mxu0 0.0
        %1487 = vmatprep.subr.mxu0 0.0
        %1488 = vmatpush1.msra.mxu0 0.0
        %1489 = vmatprep.subr.mxu0 0.0
        %1490 = vmatpush1.msra.mxu0 0.0
        %1491 = vmatprep.subr.mxu0 0.0
        %1492 = vmatpush1.msra.mxu0 0.0
        %1493 = vmatprep.subr.mxu0 0.0
        %1494 = vmatpush1.msra.mxu0 0.0
        %1495 = vmatprep.subr.mxu0 0.0
        %1496 = vmatpush1.msra.mxu0 0.0
        %1497 = vmatprep.subr.mxu0 0.0
        %1498 = vmatpush1.msra.mxu0 0.0
        %1499 = vmatprep.subr.mxu0 0.0
        %1500 = vmatpush1.msra.mxu0 0.0
        %1501 = vmatprep.subr.mxu0 0.0
        %1502 = vmatpush1.msra.mxu0 0.0
        %1503 = vmatprep.subr.mxu0 0.0
        %1504 = vmatpush1.msra.mxu0 0.0
        %1505 = vmatprep.subr.mxu0 0.0
        %1506 = vmatpush1.msra.mxu0 0.0
        %1507 = vmatprep.subr.mxu0 0.0
        %1508 = vmatpush1.msra.mxu0 0.0
        %1509 = vmatprep.subr.mxu0 0.0
        %1510 = vmatpush1.msra.mxu0 0.0
        %1511 = vmatprep.subr.mxu0 0.0
        %1512 = vmatpush1.msra.mxu0 0.0
        %1513 = vmatprep.subr.mxu0 0.0
        %1514 = vmatpush1.msra.mxu0 0.0
        %1515 = vmatprep.mubr.f32.mxu0 0.0
        %1516 = vmatmul.mubr.f32.gmra.mrb[0].mxu0 %v1127
        %v1517 = vpop.f32.mrb[0].mxu0
        %v1518 = vadd.f32 %v1293, %v1517
        %v1519 = vpop.f32.mrb[0].mxu0
        %1520 = vmatprep.mubr.f32.mxu0 0.0
        %1521 = vmatmul.mubr.f32.gmra.mrb[0].mxu0 %v1130
        %v1522 = vpop.f32.mrb[0].mxu0
        %v1523 = vadd.f32 %v1298, %v1522
        %v1524 = vpop.f32.mrb[0].mxu0
        %1525 = vmatprep.mubr.f32.mxu0 0.0
        %1526 = vmatmul.mubr.f32.gmra.mrb[0].mxu0 %v1133
        %v1527 = vpop.f32.mrb[0].mxu0
        %v1528 = vadd.f32 %v1303, %v1527
        %v1529 = vpop.f32.mrb[0].mxu0
        %1530 = vmatprep.mubr.f32.mxu0 0.0
        %1531 = vmatmul.mubr.f32.gmra.mrb[0].mxu0 %v1136
        %v1532 = vpop.f32.mrb[0].mxu0
        %v1533 = vadd.f32 %v1308, %v1532
        %v1534 = vpop.f32.mrb[0].mxu0
        %1535 = vmatprep.mubr.f32.mxu0 0.0
        %1536 = vmatmul.mubr.f32.gmra.mrb[0].mxu0 %v1139
        %v1537 = vpop.f32.mrb[0].mxu0
        %v1538 = vadd.f32 %v1313, %v1537
        %v1539 = vpop.f32.mrb[0].mxu0
        %1540 = vmatprep.mubr.f32.mxu0 0.0
        %1541 = vmatmul.mubr.f32.gmra.mrb[0].mxu0 %v1142
        %v1542 = vpop.f32.mrb[0].mxu0
        %v1543 = vadd.f32 %v1318, %v1542
        %v1544 = vpop.f32.mrb[0].mxu0
        %1545 = vmatprep.mubr.f32.mxu0 0.0
        %1546 = vmatmul.mubr.f32.gmra.mrb[0].mxu0 %v1145
        %v1547 = vpop.f32.mrb[0].mxu0
        %v1548 = vadd.f32 %v1323, %v1547
        %v1549 = vpop.f32.mrb[0].mxu0
        %1550 = vmatprep.mubr.f32.mxu0 0.0
        %1551 = vmatmul.mubr.f32.gmra.mrb[0].mxu0 %v1148
        %v1552 = vpop.f32.mrb[0].mxu0
        %v1553 = vadd.f32 %v1328, %v1552
        %v1554 = vpop.f32.mrb[0].mxu0
        %1555 = vmatprep.mubr.f32.mxu0 0.0
        %1556 = vmatmul.mubr.f32.gmra.mrb[0].mxu0 %v1151
        %v1557 = vpop.f32.mrb[0].mxu0
        %v1558 = vadd.f32 %v1333, %v1557
        %v1559 = vpop.f32.mrb[0].mxu0
        %1560 = vmatprep.mubr.f32.mxu0 0.0
        %1561 = vmatmul.mubr.f32.gmra.mrb[0].mxu0 %v1154
        %v1562 = vpop.f32.mrb[0].mxu0
        %v1563 = vadd.f32 %v1338, %v1562
        %v1564 = vpop.f32.mrb[0].mxu0
        %1565 = vmatprep.mubr.f32.mxu0 0.0
        %1566 = vmatmul.mubr.f32.gmra.mrb[0].mxu0 %v1157
        %v1567 = vpop.f32.mrb[0].mxu0
        %v1568 = vadd.f32 %v1343, %v1567
        %v1569 = vpop.f32.mrb[0].mxu0
        %1570 = vmatprep.mubr.f32.mxu0 0.0
        %1571 = vmatmul.mubr.f32.gmra.mrb[0].mxu0 %v1160
        %v1572 = vpop.f32.mrb[0].mxu0
        %v1573 = vadd.f32 %v1348, %v1572
        %v1574 = vpop.f32.mrb[0].mxu0
        %1575 = vmatprep.mubr.f32.mxu0 0.0
        %1576 = vmatmul.mubr.f32.gmra.mrb[0].mxu0 %v1163
        %v1577 = vpop.f32.mrb[0].mxu0
        %v1578 = vadd.f32 %v1353, %v1577
        %v1579 = vpop.f32.mrb[0].mxu0
        %1580 = vmatprep.mubr.f32.mxu0 0.0
        %1581 = vmatmul.mubr.f32.gmra.mrb[0].mxu0 %v1166
        %v1582 = vpop.f32.mrb[0].mxu0
        %v1583 = vadd.f32 %v1358, %v1582
        %v1584 = vpop.f32.mrb[0].mxu0
        %1585 = vmatprep.mubr.f32.mxu0 0.0
        %1586 = vmatmul.mubr.f32.gmra.mrb[0].mxu0 %v1169
        %v1587 = vpop.f32.mrb[0].mxu0
        %v1588 = vadd.f32 %v1363, %v1587
        %v1589 = vpop.f32.mrb[0].mxu0
        %1590 = vmatprep.mubr.f32.mxu0 0.0
        %1591 = vmatmul.mubr.f32.gmra.mrb[0].mxu0 %v1172
        %v1592 = vpop.f32.mrb[0].mxu0
        %v1593 = vadd.f32 %v1368, %v1592
        %v1594 = vpop.f32.mrb[0].mxu0
        %1595 = vmatprep.mubr.f32.mxu0 0.0
        %1596 = vmatmul.mubr.f32.gmra.mrb[0].mxu0 %v1175
        %v1597 = vpop.f32.mrb[0].mxu0
        %v1598 = vadd.f32 %v1373, %v1597
        %v1599 = vpop.f32.mrb[0].mxu0
        %1600 = vmatprep.mubr.f32.mxu0 0.0
        %1601 = vmatmul.mubr.f32.gmra.mrb[0].mxu0 %v1178
        %v1602 = vpop.f32.mrb[0].mxu0
        %v1603 = vadd.f32 %v1378, %v1602
        %v1604 = vpop.f32.mrb[0].mxu0
        %1605 = vmatprep.mubr.f32.mxu0 0.0
        %1606 = vmatmul.mubr.f32.gmra.mrb[0].mxu0 %v1181
        %v1607 = vpop.f32.mrb[0].mxu0
        %v1608 = vadd.f32 %v1383, %v1607
        %v1609 = vpop.f32.mrb[0].mxu0
        %1610 = vmatprep.mubr.f32.mxu0 0.0
        %1611 = vmatmul.mubr.f32.gmra.mrb[0].mxu0 %v1184
        %v1612 = vpop.f32.mrb[0].mxu0
        %v1613 = vadd.f32 %v1388, %v1612
        %v1614 = vpop.f32.mrb[0].mxu0
        %1615 = vmatprep.mubr.f32.mxu0 0.0
        %1616 = vmatmul.mubr.f32.gmra.mrb[0].mxu0 %v1187
        %v1617 = vpop.f32.mrb[0].mxu0
        %v1618 = vadd.f32 %v1393, %v1617
        %v1619 = vpop.f32.mrb[0].mxu0
        %1620 = vmatprep.mubr.f32.mxu0 0.0
        %1621 = vmatmul.mubr.f32.gmra.mrb[0].mxu0 %v1190
        %v1622 = vpop.f32.mrb[0].mxu0
        %v1623 = vadd.f32 %v1398, %v1622
        %v1624 = vpop.f32.mrb[0].mxu0
        %1625 = vmatprep.mubr.f32.mxu0 0.0
        %1626 = vmatmul.mubr.f32.gmra.mrb[0].mxu0 %v1193
        %v1627 = vpop.f32.mrb[0].mxu0
        %v1628 = vadd.f32 %v1403, %v1627
        %v1629 = vpop.f32.mrb[0].mxu0
        %1630 = vmatprep.mubr.f32.mxu0 0.0
        %1631 = vmatmul.mubr.f32.gmra.mrb[0].mxu0 %v1196
        %v1632 = vpop.f32.mrb[0].mxu0
        %v1633 = vadd.f32 %v1408, %v1632
        %v1634 = vpop.f32.mrb[0].mxu0
        %1635 = vmatprep.mubr.f32.mxu0 0.0
        %1636 = vmatmul.mubr.f32.gmra.mrb[0].mxu0 %v1199
        %v1637 = vpop.f32.mrb[0].mxu0
        %v1638 = vadd.f32 %v1413, %v1637
        %v1639 = vpop.f32.mrb[0].mxu0
        %1640 = vmatprep.mubr.f32.mxu0 0.0
        %1641 = vmatmul.mubr.f32.gmra.mrb[0].mxu0 %v1202
        %v1642 = vpop.f32.mrb[0].mxu0
        %v1643 = vadd.f32 %v1418, %v1642
        %v1644 = vpop.f32.mrb[0].mxu0
        %1645 = vmatprep.mubr.f32.mxu0 0.0
        %1646 = vmatmul.mubr.f32.gmra.mrb[0].mxu0 %v1205
        %v1647 = vpop.f32.mrb[0].mxu0
        %v1648 = vadd.f32 %v1423, %v1647
        %v1649 = vpop.f32.mrb[0].mxu0
        %1650 = vmatprep.mubr.f32.mxu0 0.0
        %1651 = vmatmul.mubr.f32.gmra.mrb[0].mxu0 %v1208
        %v1652 = vpop.f32.mrb[0].mxu0
        %v1653 = vadd.f32 %v1428, %v1652
        %v1654 = vpop.f32.mrb[0].mxu0
        %1655 = vmatprep.mubr.f32.mxu0 0.0
        %1656 = vmatmul.mubr.f32.gmra.mrb[0].mxu0 %v1211
        %v1657 = vpop.f32.mrb[0].mxu0
        %v1658 = vadd.f32 %v1433, %v1657
        %v1659 = vpop.f32.mrb[0].mxu0
        %1660 = vmatprep.mubr.f32.mxu0 0.0
        %1661 = vmatmul.mubr.f32.gmra.mrb[0].mxu0 %v1214
        %v1662 = vpop.f32.mrb[0].mxu0
        %v1663 = vadd.f32 %v1438, %v1662
        %v1664 = vpop.f32.mrb[0].mxu0
        %1665 = vmatprep.mubr.f32.mxu0 0.0
        %1666 = vmatmul.mubr.f32.gmra.mrb[0].mxu0 %v1217
        %v1667 = vpop.f32.mrb[0].mxu0
        %v1668 = vadd.f32 %v1443, %v1667
        %v1669 = vpop.f32.mrb[0].mxu0
        %1670 = vmatprep.mubr.f32.mxu0 0.0
        %1671 = vmatmul.mubr.f32.gmra.mrb[0].mxu0 %v1220
        %v1672 = vpop.f32.mrb[0].mxu0
        %v1673 = vadd.f32 %v1448, %v1672
        %v1674 = vpop.f32.mrb[0].mxu0
        %1675 = vdwg.mxu0
        %v1677 = vsel %vm1125, %v639, 0
        %v1680 = vsel %vm1125, %v642, 0
        %v1683 = vsel %vm1125, %v645, 0
        %v1686 = vsel %vm1125, %v648, 0
        %v1689 = vsel %vm1125, %v651, 0
        %v1692 = vsel %vm1125, %v654, 0
        %v1695 = vsel %vm1125, %v657, 0
        %v1698 = vsel %vm1125, %v660, 0
        %v1701 = vsel %vm1125, %v663, 0
        %v1704 = vsel %vm1125, %v666, 0
        %v1707 = vsel %vm1125, %v669, 0
        %v1710 = vsel %vm1125, %v672, 0
        %v1713 = vsel %vm1125, %v675, 0
        %v1716 = vsel %vm1125, %v678, 0
        %v1719 = vsel %vm1125, %v681, 0
        %v1722 = vsel %vm1125, %v684, 0
        %v1725 = vsel %vm1125, %v687, 0
        %v1728 = vsel %vm1125, %v690, 0
        %v1731 = vsel %vm1125, %v693, 0
        %v1734 = vsel %vm1125, %v696, 0
        %v1737 = vsel %vm1125, %v699, 0
        %v1740 = vsel %vm1125, %v702, 0
        %v1743 = vsel %vm1125, %v705, 0
        %v1746 = vsel %vm1125, %v708, 0
        %v1749 = vsel %vm1125, %v711, 0
        %v1752 = vsel %vm1125, %v714, 0
        %v1755 = vsel %vm1125, %v717, 0
        %v1758 = vsel %vm1125, %v720, 0
        %v1761 = vsel %vm1125, %v723, 0
        %v1764 = vsel %vm1125, %v726, 0
        %v1767 = vsel %vm1125, %v729, 0
        %v1770 = vsel %vm1125, %v732, 0
        %v1773 = vsel %vm1222, %v982, 0
        %1775 = vmatprep.subr.mxu0 0.0
        %1776 = vmatpush1.msra.mxu0 %v942
        %1777 = vmatprep.subr.mxu0 0.0
        %1778 = vmatpush1.msra.mxu0 %v943
        %1779 = vmatprep.subr.mxu0 0.0
        %1780 = vmatpush1.msra.mxu0 %v944
        %1781 = vmatprep.subr.mxu0 0.0
        %1782 = vmatpush1.msra.mxu0 %v945
        %1783 = vmatprep.subr.mxu0 0.0
        %1784 = vmatpush1.msra.mxu0 %v946
        %1785 = vmatprep.subr.mxu0 0.0
        %1786 = vmatpush1.msra.mxu0 %v947
        %1787 = vmatprep.subr.mxu0 0.0
        %1788 = vmatpush1.msra.mxu0 %v948
        %1789 = vmatprep.subr.mxu0 0.0
        %1790 = vmatpush1.msra.mxu0 %v949
        %1791 = vmatprep.subr.mxu0 0.0
        %1792 = vmatpush1.msra.mxu0 %v950
        %1793 = vmatprep.subr.mxu0 0.0
        %1794 = vmatpush1.msra.mxu0 %v951
        %1795 = vmatprep.subr.mxu0 0.0
        %1796 = vmatpush1.msra.mxu0 %v952
        %1797 = vmatprep.subr.mxu0 0.0
        %1798 = vmatpush1.msra.mxu0 %v953
        %1799 = vmatprep.subr.mxu0 0.0
        %1800 = vmatpush1.msra.mxu0 %v954
        %1801 = vmatprep.subr.mxu0 0.0
        %1802 = vmatpush1.msra.mxu0 %v955
        %1803 = vmatprep.subr.mxu0 0.0
        %1804 = vmatpush1.msra.mxu0 %v956
        %1805 = vmatprep.subr.mxu0 0.0
        %1806 = vmatpush1.msra.mxu0 %v957
        %1807 = vmatprep.subr.mxu0 0.0
        %1808 = vmatpush1.msra.mxu0 %v958
        %1809 = vmatprep.subr.mxu0 0.0
        %1810 = vmatpush1.msra.mxu0 %v959
        %1811 = vmatprep.subr.mxu0 0.0
        %1812 = vmatpush1.msra.mxu0 %v960
        %1813 = vmatprep.subr.mxu0 0.0
        %1814 = vmatpush1.msra.mxu0 %v961
        %1815 = vmatprep.subr.mxu0 0.0
        %1816 = vmatpush1.msra.mxu0 %v962
        %1817 = vmatprep.subr.mxu0 0.0
        %1818 = vmatpush1.msra.mxu0 %v963
        %1819 = vmatprep.subr.mxu0 0.0
        %1820 = vmatpush1.msra.mxu0 %v964
        %1821 = vmatprep.subr.mxu0 0.0
        %1822 = vmatpush1.msra.mxu0 %v965
        %1823 = vmatprep.subr.mxu0 0.0
        %1824 = vmatpush1.msra.mxu0 %v966
        %1825 = vmatprep.subr.mxu0 0.0
        %1826 = vmatpush1.msra.mxu0 %v967
        %1827 = vmatprep.subr.mxu0 0.0
        %1828 = vmatpush1.msra.mxu0 %v968
        %1829 = vmatprep.subr.mxu0 0.0
        %1830 = vmatpush1.msra.mxu0 %v969
        %1831 = vmatprep.subr.mxu0 0.0
        %1832 = vmatpush1.msra.mxu0 %v970
        %1833 = vmatprep.subr.mxu0 0.0
        %1834 = vmatpush1.msra.mxu0 %v971
        %1835 = vmatprep.subr.mxu0 0.0
        %1836 = vmatpush1.msra.mxu0 %v972
        %1837 = vmatprep.subr.mxu0 0.0
        %1838 = vmatpush1.msra.mxu0 %v973
        %1839 = vmatprep.mubr.f32.mxu0 %v638
        %1840 = vmatmul.mubr.f32.gmra.mrb[0].mxu0 %v637
        %v1841 = vpop.f32.mrb[0].mxu0
        %v1842 = vadd.f32 %v1518, %v1841
        %v1843 = vpop.f32.mrb[0].mxu0
        %1844 = vmatprep.mubr.f32.mxu0 %v641
        %1845 = vmatmul.mubr.f32.gmra.mrb[0].mxu0 %v640
        %v1846 = vpop.f32.mrb[0].mxu0
        %v1847 = vadd.f32 %v1523, %v1846
        %v1848 = vpop.f32.mrb[0].mxu0
        %1849 = vmatprep.mubr.f32.mxu0 %v644
        %1850 = vmatmul.mubr.f32.gmra.mrb[0].mxu0 %v643
        %v1851 = vpop.f32.mrb[0].mxu0
        %v1852 = vadd.f32 %v1528, %v1851
        %v1853 = vpop.f32.mrb[0].mxu0
        %1854 = vmatprep.mubr.f32.mxu0 %v647
        %1855 = vmatmul.mubr.f32.gmra.mrb[0].mxu0 %v646
        %v1856 = vpop.f32.mrb[0].mxu0
        %v1857 = vadd.f32 %v1533, %v1856
        %v1858 = vpop.f32.mrb[0].mxu0
        %1859 = vmatprep.mubr.f32.mxu0 %v650
        %1860 = vmatmul.mubr.f32.gmra.mrb[0].mxu0 %v649
        %v1861 = vpop.f32.mrb[0].mxu0
        %v1862 = vadd.f32 %v1538, %v1861
        %v1863 = vpop.f32.mrb[0].mxu0
        %1864 = vmatprep.mubr.f32.mxu0 %v653
        %1865 = vmatmul.mubr.f32.gmra.mrb[0].mxu0 %v652
        %v1866 = vpop.f32.mrb[0].mxu0
        %v1867 = vadd.f32 %v1543, %v1866
        %v1868 = vpop.f32.mrb[0].mxu0
        %1869 = vmatprep.mubr.f32.mxu0 %v656
        %1870 = vmatmul.mubr.f32.gmra.mrb[0].mxu0 %v655
        %v1871 = vpop.f32.mrb[0].mxu0
        %v1872 = vadd.f32 %v1548, %v1871
        %v1873 = vpop.f32.mrb[0].mxu0
        %1874 = vmatprep.mubr.f32.mxu0 %v659
        %1875 = vmatmul.mubr.f32.gmra.mrb[0].mxu0 %v658
        %v1876 = vpop.f32.mrb[0].mxu0
        %v1877 = vadd.f32 %v1553, %v1876
        %v1878 = vpop.f32.mrb[0].mxu0
        %1879 = vmatprep.mubr.f32.mxu0 %v662
        %1880 = vmatmul.mubr.f32.gmra.mrb[0].mxu0 %v661
        %v1881 = vpop.f32.mrb[0].mxu0
        %v1882 = vadd.f32 %v1558, %v1881
        %v1883 = vpop.f32.mrb[0].mxu0
        %1884 = vmatprep.mubr.f32.mxu0 %v665
        %1885 = vmatmul.mubr.f32.gmra.mrb[0].mxu0 %v664
        %v1886 = vpop.f32.mrb[0].mxu0
        %v1887 = vadd.f32 %v1563, %v1886
        %v1888 = vpop.f32.mrb[0].mxu0
        %1889 = vmatprep.mubr.f32.mxu0 %v668
        %1890 = vmatmul.mubr.f32.gmra.mrb[0].mxu0 %v667
        %v1891 = vpop.f32.mrb[0].mxu0
        %v1892 = vadd.f32 %v1568, %v1891
        %v1893 = vpop.f32.mrb[0].mxu0
        %1894 = vmatprep.mubr.f32.mxu0 %v671
        %1895 = vmatmul.mubr.f32.gmra.mrb[0].mxu0 %v670
        %v1896 = vpop.f32.mrb[0].mxu0
        %v1897 = vadd.f32 %v1573, %v1896
        %v1898 = vpop.f32.mrb[0].mxu0
        %1899 = vmatprep.mubr.f32.mxu0 %v674
        %1900 = vmatmul.mubr.f32.gmra.mrb[0].mxu0 %v673
        %v1901 = vpop.f32.mrb[0].mxu0
        %v1902 = vadd.f32 %v1578, %v1901
        %v1903 = vpop.f32.mrb[0].mxu0
        %1904 = vmatprep.mubr.f32.mxu0 %v677
        %1905 = vmatmul.mubr.f32.gmra.mrb[0].mxu0 %v676
        %v1906 = vpop.f32.mrb[0].mxu0
        %v1907 = vadd.f32 %v1583, %v1906
        %v1908 = vpop.f32.mrb[0].mxu0
        %1909 = vmatprep.mubr.f32.mxu0 %v680
        %1910 = vmatmul.mubr.f32.gmra.mrb[0].mxu0 %v679
        %v1911 = vpop.f32.mrb[0].mxu0
        %v1912 = vadd.f32 %v1588, %v1911
        %v1913 = vpop.f32.mrb[0].mxu0
        %1914 = vmatprep.mubr.f32.mxu0 %v683
        %1915 = vmatmul.mubr.f32.gmra.mrb[0].mxu0 %v682
        %v1916 = vpop.f32.mrb[0].mxu0
        %v1917 = vadd.f32 %v1593, %v1916
        %v1918 = vpop.f32.mrb[0].mxu0
        %1919 = vmatprep.mubr.f32.mxu0 %v686
        %1920 = vmatmul.mubr.f32.gmra.mrb[0].mxu0 %v685
        %v1921 = vpop.f32.mrb[0].mxu0
        %v1922 = vadd.f32 %v1598, %v1921
        %v1923 = vpop.f32.mrb[0].mxu0
        %1924 = vmatprep.mubr.f32.mxu0 %v689
        %1925 = vmatmul.mubr.f32.gmra.mrb[0].mxu0 %v688
        %v1926 = vpop.f32.mrb[0].mxu0
        %v1927 = vadd.f32 %v1603, %v1926
        %v1928 = vpop.f32.mrb[0].mxu0
        %1929 = vmatprep.mubr.f32.mxu0 %v692
        %1930 = vmatmul.mubr.f32.gmra.mrb[0].mxu0 %v691
        %v1931 = vpop.f32.mrb[0].mxu0
        %v1932 = vadd.f32 %v1608, %v1931
        %v1933 = vpop.f32.mrb[0].mxu0
        %1934 = vmatprep.mubr.f32.mxu0 %v695
        %1935 = vmatmul.mubr.f32.gmra.mrb[0].mxu0 %v694
        %v1936 = vpop.f32.mrb[0].mxu0
        %v1937 = vadd.f32 %v1613, %v1936
        %v1938 = vpop.f32.mrb[0].mxu0
        %1939 = vmatprep.mubr.f32.mxu0 %v698
        %1940 = vmatmul.mubr.f32.gmra.mrb[0].mxu0 %v697
        %v1941 = vpop.f32.mrb[0].mxu0
        %v1942 = vadd.f32 %v1618, %v1941
        %v1943 = vpop.f32.mrb[0].mxu0
        %1944 = vmatprep.mubr.f32.mxu0 %v701
        %1945 = vmatmul.mubr.f32.gmra.mrb[0].mxu0 %v700
        %v1946 = vpop.f32.mrb[0].mxu0
        %v1947 = vadd.f32 %v1623, %v1946
        %v1948 = vpop.f32.mrb[0].mxu0
        %1949 = vmatprep.mubr.f32.mxu0 %v704
        %1950 = vmatmul.mubr.f32.gmra.mrb[0].mxu0 %v703
        %v1951 = vpop.f32.mrb[0].mxu0
        %v1952 = vadd.f32 %v1628, %v1951
        %v1953 = vpop.f32.mrb[0].mxu0
        %1954 = vmatprep.mubr.f32.mxu0 %v707
        %1955 = vmatmul.mubr.f32.gmra.mrb[0].mxu0 %v706
        %v1956 = vpop.f32.mrb[0].mxu0
        %v1957 = vadd.f32 %v1633, %v1956
        %v1958 = vpop.f32.mrb[0].mxu0
        %1959 = vmatprep.mubr.f32.mxu0 %v710
        %1960 = vmatmul.mubr.f32.gmra.mrb[0].mxu0 %v709
        %v1961 = vpop.f32.mrb[0].mxu0
        %v1962 = vadd.f32 %v1638, %v1961
        %v1963 = vpop.f32.mrb[0].mxu0
        %1964 = vmatprep.mubr.f32.mxu0 %v713
        %1965 = vmatmul.mubr.f32.gmra.mrb[0].mxu0 %v712
        %v1966 = vpop.f32.mrb[0].mxu0
        %v1967 = vadd.f32 %v1643, %v1966
        %v1968 = vpop.f32.mrb[0].mxu0
        %1969 = vmatprep.mubr.f32.mxu0 %v716
        %1970 = vmatmul.mubr.f32.gmra.mrb[0].mxu0 %v715
        %v1971 = vpop.f32.mrb[0].mxu0
        %v1972 = vadd.f32 %v1648, %v1971
        %v1973 = vpop.f32.mrb[0].mxu0
        %1974 = vmatprep.mubr.f32.mxu0 %v719
        %1975 = vmatmul.mubr.f32.gmra.mrb[0].mxu0 %v718
        %v1976 = vpop.f32.mrb[0].mxu0
        %v1977 = vadd.f32 %v1653, %v1976
        %v1978 = vpop.f32.mrb[0].mxu0
        %1979 = vmatprep.mubr.f32.mxu0 %v722
        %1980 = vmatmul.mubr.f32.gmra.mrb[0].mxu0 %v721
        %v1981 = vpop.f32.mrb[0].mxu0
        %v1982 = vadd.f32 %v1658, %v1981
        %v1983 = vpop.f32.mrb[0].mxu0
        %1984 = vmatprep.mubr.f32.mxu0 %v725
        %1985 = vmatmul.mubr.f32.gmra.mrb[0].mxu0 %v724
        %v1986 = vpop.f32.mrb[0].mxu0
        %v1987 = vadd.f32 %v1663, %v1986
        %v1988 = vpop.f32.mrb[0].mxu0
        %1989 = vmatprep.mubr.f32.mxu0 %v728
        %1990 = vmatmul.mubr.f32.gmra.mrb[0].mxu0 %v727
        %v1991 = vpop.f32.mrb[0].mxu0
        %v1992 = vadd.f32 %v1668, %v1991
        %v1993 = vpop.f32.mrb[0].mxu0
        %1994 = vmatprep.mubr.f32.mxu0 %v731
        %1995 = vmatmul.mubr.f32.gmra.mrb[0].mxu0 %v730
        %v1996 = vpop.f32.mrb[0].mxu0
        %v1997 = vadd.f32 %v1673, %v1996
        %v1998 = vpop.f32.mrb[0].mxu0
        %1999 = vdwg.mxu0
        %2000 = vmatprep.subr.mxu0 0.0
        %2001 = vmatpush1.msra.mxu0 %v974
        %2002 = vmatprep.subr.mxu0 0.0
        %2003 = vmatpush1.msra.mxu0 %v975
        %2004 = vmatprep.subr.mxu0 0.0
        %2005 = vmatpush1.msra.mxu0 %v976
        %2006 = vmatprep.subr.mxu0 0.0
        %2007 = vmatpush1.msra.mxu0 %v977
        %2008 = vmatprep.subr.mxu0 0.0
        %2009 = vmatpush1.msra.mxu0 %v978
        %2010 = vmatprep.subr.mxu0 0.0
        %2011 = vmatpush1.msra.mxu0 %v979
        %2012 = vmatprep.subr.mxu0 0.0
        %2013 = vmatpush1.msra.mxu0 %v980
        %2014 = vmatprep.subr.mxu0 0.0
        %2015 = vmatpush1.msra.mxu0 %v981
        %2016 = vmatprep.subr.mxu0 0.0
        %2017 = vmatpush1.msra.mxu0 %v1773
        %2018 = vmatprep.subr.mxu0 0.0
        %2019 = vmatpush1.msra.mxu0 0.0
        %2020 = vmatprep.subr.mxu0 0.0
        %2021 = vmatpush1.msra.mxu0 0.0
        %2022 = vmatprep.subr.mxu0 0.0
        %2023 = vmatpush1.msra.mxu0 0.0
        %2024 = vmatprep.subr.mxu0 0.0
        %2025 = vmatpush1.msra.mxu0 0.0
        %2026 = vmatprep.subr.mxu0 0.0
        %2027 = vmatpush1.msra.mxu0 0.0
        %2028 = vmatprep.subr.mxu0 0.0
        %2029 = vmatpush1.msra.mxu0 0.0
        %2030 = vmatprep.subr.mxu0 0.0
        %2031 = vmatpush1.msra.mxu0 0.0
        %2032 = vmatprep.subr.mxu0 0.0
        %2033 = vmatpush1.msra.mxu0 0.0
        %2034 = vmatprep.subr.mxu0 0.0
        %2035 = vmatpush1.msra.mxu0 0.0
        %2036 = vmatprep.subr.mxu0 0.0
        %2037 = vmatpush1.msra.mxu0 0.0
        %2038 = vmatprep.subr.mxu0 0.0
        %2039 = vmatpush1.msra.mxu0 0.0
        %2040 = vmatprep.subr.mxu0 0.0
        %2041 = vmatpush1.msra.mxu0 0.0
        %2042 = vmatprep.subr.mxu0 0.0
        %2043 = vmatpush1.msra.mxu0 0.0
        %2044 = vmatprep.subr.mxu0 0.0
        %2045 = vmatpush1.msra.mxu0 0.0
        %2046 = vmatprep.subr.mxu0 0.0
        %2047 = vmatpush1.msra.mxu0 0.0
        %2048 = vmatprep.subr.mxu0 0.0
        %2049 = vmatpush1.msra.mxu0 0.0
        %2050 = vmatprep.subr.mxu0 0.0
        %2051 = vmatpush1.msra.mxu0 0.0
        %2052 = vmatprep.subr.mxu0 0.0
        %2053 = vmatpush1.msra.mxu0 0.0
        %2054 = vmatprep.subr.mxu0 0.0
        %2055 = vmatpush1.msra.mxu0 0.0
        %2056 = vmatprep.subr.mxu0 0.0
        %2057 = vmatpush1.msra.mxu0 0.0
        %2058 = vmatprep.subr.mxu0 0.0
        %2059 = vmatpush1.msra.mxu0 0.0
        %2060 = vmatprep.subr.mxu0 0.0
        %2061 = vmatpush1.msra.mxu0 0.0
        %2062 = vmatprep.subr.mxu0 0.0
        %2063 = vmatpush1.msra.mxu0 0.0
        %2064 = vmatprep.mubr.f32.mxu0 0.0
        %2065 = vmatmul.mubr.f32.gmra.mrb[0].mxu0 %v1677
        %v2066 = vpop.f32.mrb[0].mxu0
        %v2067 = vadd.f32 %v1842, %v2066
        %v2068 = vpop.f32.mrb[0].mxu0
        %2069 = vmatprep.mubr.f32.mxu0 0.0
        %2070 = vmatmul.mubr.f32.gmra.mrb[0].mxu0 %v1680
        %v2071 = vpop.f32.mrb[0].mxu0
        %v2072 = vadd.f32 %v1847, %v2071
        %v2073 = vpop.f32.mrb[0].mxu0
        %2074 = vmatprep.mubr.f32.mxu0 0.0
        %2075 = vmatmul.mubr.f32.gmra.mrb[0].mxu0 %v1683
        %v2076 = vpop.f32.mrb[0].mxu0
        %v2077 = vadd.f32 %v1852, %v2076
        %v2078 = vpop.f32.mrb[0].mxu0
        %2079 = vmatprep.mubr.f32.mxu0 0.0
        %2080 = vmatmul.mubr.f32.gmra.mrb[0].mxu0 %v1686
        %v2081 = vpop.f32.mrb[0].mxu0
        %v2082 = vadd.f32 %v1857, %v2081
        %v2083 = vpop.f32.mrb[0].mxu0
        %2084 = vmatprep.mubr.f32.mxu0 0.0
        %2085 = vmatmul.mubr.f32.gmra.mrb[0].mxu0 %v1689
        %v2086 = vpop.f32.mrb[0].mxu0
        %v2087 = vadd.f32 %v1862, %v2086
        %v2088 = vpop.f32.mrb[0].mxu0
        %2089 = vmatprep.mubr.f32.mxu0 0.0
        %2090 = vmatmul.mubr.f32.gmra.mrb[0].mxu0 %v1692
        %v2091 = vpop.f32.mrb[0].mxu0
        %v2092 = vadd.f32 %v1867, %v2091
        %v2093 = vpop.f32.mrb[0].mxu0
        %2094 = vmatprep.mubr.f32.mxu0 0.0
        %2095 = vmatmul.mubr.f32.gmra.mrb[0].mxu0 %v1695
        %v2096 = vpop.f32.mrb[0].mxu0
        %v2097 = vadd.f32 %v1872, %v2096
        %v2098 = vpop.f32.mrb[0].mxu0
        %2099 = vmatprep.mubr.f32.mxu0 0.0
        %2100 = vmatmul.mubr.f32.gmra.mrb[0].mxu0 %v1698
        %v2101 = vpop.f32.mrb[0].mxu0
        %v2102 = vadd.f32 %v1877, %v2101
        %v2103 = vpop.f32.mrb[0].mxu0
        %2104 = vmatprep.mubr.f32.mxu0 0.0
        %2105 = vmatmul.mubr.f32.gmra.mrb[0].mxu0 %v1701
        %v2106 = vpop.f32.mrb[0].mxu0
        %v2107 = vadd.f32 %v1882, %v2106
        %v2108 = vpop.f32.mrb[0].mxu0
        %2109 = vmatprep.mubr.f32.mxu0 0.0
        %2110 = vmatmul.mubr.f32.gmra.mrb[0].mxu0 %v1704
        %v2111 = vpop.f32.mrb[0].mxu0
        %v2112 = vadd.f32 %v1887, %v2111
        %v2113 = vpop.f32.mrb[0].mxu0
        %2114 = vmatprep.mubr.f32.mxu0 0.0
        %2115 = vmatmul.mubr.f32.gmra.mrb[0].mxu0 %v1707
        %v2116 = vpop.f32.mrb[0].mxu0
        %v2117 = vadd.f32 %v1892, %v2116
        %v2118 = vpop.f32.mrb[0].mxu0
        %2119 = vmatprep.mubr.f32.mxu0 0.0
        %2120 = vmatmul.mubr.f32.gmra.mrb[0].mxu0 %v1710
        %v2121 = vpop.f32.mrb[0].mxu0
        %v2122 = vadd.f32 %v1897, %v2121
        %v2123 = vpop.f32.mrb[0].mxu0
        %2124 = vmatprep.mubr.f32.mxu0 0.0
        %2125 = vmatmul.mubr.f32.gmra.mrb[0].mxu0 %v1713
        %v2126 = vpop.f32.mrb[0].mxu0
        %v2127 = vadd.f32 %v1902, %v2126
        %v2128 = vpop.f32.mrb[0].mxu0
        %2129 = vmatprep.mubr.f32.mxu0 0.0
        %2130 = vmatmul.mubr.f32.gmra.mrb[0].mxu0 %v1716
        %v2131 = vpop.f32.mrb[0].mxu0
        %v2132 = vadd.f32 %v1907, %v2131
        %v2133 = vpop.f32.mrb[0].mxu0
        %2134 = vmatprep.mubr.f32.mxu0 0.0
        %2135 = vmatmul.mubr.f32.gmra.mrb[0].mxu0 %v1719
        %v2136 = vpop.f32.mrb[0].mxu0
        %v2137 = vadd.f32 %v1912, %v2136
        %v2138 = vpop.f32.mrb[0].mxu0
        %2139 = vmatprep.mubr.f32.mxu0 0.0
        %2140 = vmatmul.mubr.f32.gmra.mrb[0].mxu0 %v1722
        %v2141 = vpop.f32.mrb[0].mxu0
        %v2142 = vadd.f32 %v1917, %v2141
        %v2143 = vpop.f32.mrb[0].mxu0
        %2144 = vmatprep.mubr.f32.mxu0 0.0
        %2145 = vmatmul.mubr.f32.gmra.mrb[0].mxu0 %v1725
        %v2146 = vpop.f32.mrb[0].mxu0
        %v2147 = vadd.f32 %v1922, %v2146
        %v2148 = vpop.f32.mrb[0].mxu0
        %2149 = vmatprep.mubr.f32.mxu0 0.0
        %2150 = vmatmul.mubr.f32.gmra.mrb[0].mxu0 %v1728
        %v2151 = vpop.f32.mrb[0].mxu0
        %v2152 = vadd.f32 %v1927, %v2151
        %v2153 = vpop.f32.mrb[0].mxu0
        %2154 = vmatprep.mubr.f32.mxu0 0.0
        %2155 = vmatmul.mubr.f32.gmra.mrb[0].mxu0 %v1731
        %v2156 = vpop.f32.mrb[0].mxu0
        %v2157 = vadd.f32 %v1932, %v2156
        %v2158 = vpop.f32.mrb[0].mxu0
        %2159 = vmatprep.mubr.f32.mxu0 0.0
        %2160 = vmatmul.mubr.f32.gmra.mrb[0].mxu0 %v1734
        %v2161 = vpop.f32.mrb[0].mxu0
        %v2162 = vadd.f32 %v1937, %v2161
        %v2163 = vpop.f32.mrb[0].mxu0
        %2164 = vmatprep.mubr.f32.mxu0 0.0
        %2165 = vmatmul.mubr.f32.gmra.mrb[0].mxu0 %v1737
        %v2166 = vpop.f32.mrb[0].mxu0
        %v2167 = vadd.f32 %v1942, %v2166
        %v2168 = vpop.f32.mrb[0].mxu0
        %2169 = vmatprep.mubr.f32.mxu0 0.0
        %2170 = vmatmul.mubr.f32.gmra.mrb[0].mxu0 %v1740
        %v2171 = vpop.f32.mrb[0].mxu0
        %v2172 = vadd.f32 %v1947, %v2171
        %v2173 = vpop.f32.mrb[0].mxu0
        %2174 = vmatprep.mubr.f32.mxu0 0.0
        %2175 = vmatmul.mubr.f32.gmra.mrb[0].mxu0 %v1743
        %v2176 = vpop.f32.mrb[0].mxu0
        %v2177 = vadd.f32 %v1952, %v2176
        %v2178 = vpop.f32.mrb[0].mxu0
        %2179 = vmatprep.mubr.f32.mxu0 0.0
        %2180 = vmatmul.mubr.f32.gmra.mrb[0].mxu0 %v1746
        %v2181 = vpop.f32.mrb[0].mxu0
        %v2182 = vadd.f32 %v1957, %v2181
        %v2183 = vpop.f32.mrb[0].mxu0
        %2184 = vmatprep.mubr.f32.mxu0 0.0
        %2185 = vmatmul.mubr.f32.gmra.mrb[0].mxu0 %v1749
        %v2186 = vpop.f32.mrb[0].mxu0
        %v2187 = vadd.f32 %v1962, %v2186
        %v2188 = vpop.f32.mrb[0].mxu0
        %2189 = vmatprep.mubr.f32.mxu0 0.0
        %2190 = vmatmul.mubr.f32.gmra.mrb[0].mxu0 %v1752
        %v2191 = vpop.f32.mrb[0].mxu0
        %v2192 = vadd.f32 %v1967, %v2191
        %v2193 = vpop.f32.mrb[0].mxu0
        %2194 = vmatprep.mubr.f32.mxu0 0.0
        %2195 = vmatmul.mubr.f32.gmra.mrb[0].mxu0 %v1755
        %v2196 = vpop.f32.mrb[0].mxu0
        %v2197 = vadd.f32 %v1972, %v2196
        %v2198 = vpop.f32.mrb[0].mxu0
        %2199 = vmatprep.mubr.f32.mxu0 0.0
        %2200 = vmatmul.mubr.f32.gmra.mrb[0].mxu0 %v1758
        %v2201 = vpop.f32.mrb[0].mxu0
        %v2202 = vadd.f32 %v1977, %v2201
        %v2203 = vpop.f32.mrb[0].mxu0
        %2204 = vmatprep.mubr.f32.mxu0 0.0
        %2205 = vmatmul.mubr.f32.gmra.mrb[0].mxu0 %v1761
        %v2206 = vpop.f32.mrb[0].mxu0
        %v2207 = vadd.f32 %v1982, %v2206
        %v2208 = vpop.f32.mrb[0].mxu0
        %2209 = vmatprep.mubr.f32.mxu0 0.0
        %2210 = vmatmul.mubr.f32.gmra.mrb[0].mxu0 %v1764
        %v2211 = vpop.f32.mrb[0].mxu0
        %v2212 = vadd.f32 %v1987, %v2211
        %v2213 = vpop.f32.mrb[0].mxu0
        %2214 = vmatprep.mubr.f32.mxu0 0.0
        %2215 = vmatmul.mubr.f32.gmra.mrb[0].mxu0 %v1767
        %v2216 = vpop.f32.mrb[0].mxu0
        %v2217 = vadd.f32 %v1992, %v2216
        %v2218 = vpop.f32.mrb[0].mxu0
        %2219 = vmatprep.mubr.f32.mxu0 0.0
        %2220 = vmatmul.mubr.f32.gmra.mrb[0].mxu0 %v1770
        %v2221 = vpop.f32.mrb[0].mxu0
        %v2222 = vadd.f32 %v1997, %v2221
        %v2223 = vpop.f32.mrb[0].mxu0
        %2224 = vdwg.mxu0
        %s2225 = scalar_lea.vmem [#allocation2], 1536
        %v2226 = vld [vmem:[%s2225] sm:$0xff]
        %v2227 = vld [vmem:[%s2225 + $0x8] sm:$0xff]
        %v2228 = vld [vmem:[%s2225 + $0x10] sm:$0xff]
        %v2229 = vld [vmem:[%s2225 + $0x18] sm:$0xff]
        %v2230 = vld [vmem:[%s2225 + $0x20] sm:$0xff]
        %v2231 = vld [vmem:[%s2225 + $0x28] sm:$0xff]
        %v2232 = vld [vmem:[%s2225 + $0x30] sm:$0xff]
        %v2233 = vld [vmem:[%s2225 + $0x38] sm:$0xff]
        %v2234 = vld [vmem:[%s2225 + $0x40] sm:$0xff]
        %v2235 = vld [vmem:[%s2225 + $0x48] sm:$0xff]
        %v2236 = vld [vmem:[%s2225 + $0x50] sm:$0xff]
        %v2237 = vld [vmem:[%s2225 + $0x58] sm:$0xff]
        %v2238 = vld [vmem:[%s2225 + $0x60] sm:$0xff]
        %v2239 = vld [vmem:[%s2225 + $0x68] sm:$0xff]
        %v2240 = vld [vmem:[%s2225 + $0x70] sm:$0xff]
        %v2241 = vld [vmem:[%s2225 + $0x78] sm:$0xff]
        %v2242 = vld [vmem:[%s2225 + $0x80] sm:$0xff]
        %v2243 = vld [vmem:[%s2225 + $0x88] sm:$0xff]
        %v2244 = vld [vmem:[%s2225 + $0x90] sm:$0xff]
        %v2245 = vld [vmem:[%s2225 + $0x98] sm:$0xff]
        %v2246 = vld [vmem:[%s2225 + $0xa0] sm:$0xff]
        %v2247 = vld [vmem:[%s2225 + $0xa8] sm:$0xff]
        %v2248 = vld [vmem:[%s2225 + $0xb0] sm:$0xff]
        %v2249 = vld [vmem:[%s2225 + $0xb8] sm:$0xff]
        %v2250 = vld [vmem:[%s2225 + $0xc0] sm:$0xff]
        %v2251 = vld [vmem:[%s2225 + $0xc8] sm:$0xff]
        %v2252 = vld [vmem:[%s2225 + $0xd0] sm:$0xff]
        %v2253 = vld [vmem:[%s2225 + $0xd8] sm:$0xff]
        %v2254 = vld [vmem:[%s2225 + $0xe0] sm:$0xff]
        %v2255 = vld [vmem:[%s2225 + $0xe8] sm:$0xff]
        %v2256 = vld [vmem:[%s2225 + $0xf0] sm:$0xff]
        %v2257 = vld [vmem:[%s2225 + $0xf8] sm:$0xff]
        %v2258 = vld [vmem:[%s2225 + $0x100] sm:$0xff]
        %v2259 = vld [vmem:[%s2225 + $0x108] sm:$0xff]
        %v2260 = vld [vmem:[%s2225 + $0x110] sm:$0xff]
        %v2261 = vld [vmem:[%s2225 + $0x118] sm:$0xff]
        %v2262 = vld [vmem:[%s2225 + $0x120] sm:$0xff]
        %v2263 = vld [vmem:[%s2225 + $0x128] sm:$0xff]
        %v2264 = vld [vmem:[%s2225 + $0x130] sm:$0xff]
        %v2265 = vld [vmem:[%s2225 + $0x138] sm:$0xff]
        %v2266 = vld [vmem:[%s2225 + $0x140] sm:$0xff]
        %v2267 = vld [vmem:[%s2225 + $0x148] sm:$0xff]
        %v2268 = vld [vmem:[%s2225 + $0x150] sm:$0xff]
        %v2269 = vld [vmem:[%s2225 + $0x158] sm:$0xff]
        %v2270 = vld [vmem:[%s2225 + $0x160] sm:$0xff]
        %v2271 = vld [vmem:[%s2225 + $0x168] sm:$0xff]
        %v2272 = vld [vmem:[%s2225 + $0x170] sm:$0xff]
        %v2273 = vld [vmem:[%s2225 + $0x178] sm:$0xff]
        %v2274 = vld [vmem:[%s2225 + $0x180] sm:$0xff]
        %v2275 = vld [vmem:[%s2225 + $0x188] sm:$0xff]
        %v2276 = vld [vmem:[%s2225 + $0x190] sm:$0xff]
        %v2277 = vld [vmem:[%s2225 + $0x198] sm:$0xff]
        %v2278 = vld [vmem:[%s2225 + $0x1a0] sm:$0xff]
        %v2279 = vld [vmem:[%s2225 + $0x1a8] sm:$0xff]
        %v2280 = vld [vmem:[%s2225 + $0x1b0] sm:$0xff]
        %v2281 = vld [vmem:[%s2225 + $0x1b8] sm:$0xff]
        %v2282 = vld [vmem:[%s2225 + $0x1c0] sm:$0xff]
        %v2283 = vld [vmem:[%s2225 + $0x1c8] sm:$0xff]
        %v2284 = vld [vmem:[%s2225 + $0x1d0] sm:$0xff]
        %v2285 = vld [vmem:[%s2225 + $0x1d8] sm:$0xff]
        %v2286 = vld [vmem:[%s2225 + $0x1e0] sm:$0xff]
        %v2287 = vld [vmem:[%s2225 + $0x1e8] sm:$0xff]
        %v2288 = vld [vmem:[%s2225 + $0x1f0] sm:$0xff]
        %v2289 = vld [vmem:[%s2225 + $0x1f8] sm:$0xff]
        %v2290 = vld [vmem:[%s2225 + $0x200] sm:$0xff]
        %v2291 = vld [vmem:[%s2225 + $0x208] sm:$0xff]
        %v2292 = vld [vmem:[%s2225 + $0x210] sm:$0xff]
        %v2293 = vld [vmem:[%s2225 + $0x218] sm:$0xff]
        %v2294 = vld [vmem:[%s2225 + $0x220] sm:$0xff]
        %v2295 = vld [vmem:[%s2225 + $0x228] sm:$0xff]
        %v2296 = vld [vmem:[%s2225 + $0x230] sm:$0xff]
        %v2297 = vld [vmem:[%s2225 + $0x238] sm:$0xff]
        %v2298 = vld [vmem:[%s2225 + $0x240] sm:$0xff]
        %v2299 = vld [vmem:[%s2225 + $0x248] sm:$0xff]
        %v2300 = vld [vmem:[%s2225 + $0x250] sm:$0xff]
        %v2301 = vld [vmem:[%s2225 + $0x258] sm:$0xff]
        %v2302 = vld [vmem:[%s2225 + $0x260] sm:$0xff]
        %v2303 = vld [vmem:[%s2225 + $0x268] sm:$0xff]
        %v2304 = vld [vmem:[%s2225 + $0x270] sm:$0xff]
        %v2305 = vld [vmem:[%s2225 + $0x278] sm:$0xff]
        %v2306 = vld [vmem:[%s2225 + $0x280] sm:$0xff]
        %v2307 = vld [vmem:[%s2225 + $0x288] sm:$0xff]
        %v2308 = vld [vmem:[%s2225 + $0x290] sm:$0xff]
        %v2309 = vld [vmem:[%s2225 + $0x298] sm:$0xff]
        %v2310 = vld [vmem:[%s2225 + $0x2a0] sm:$0xff]
        %v2311 = vld [vmem:[%s2225 + $0x2a8] sm:$0xff]
        %v2312 = vld [vmem:[%s2225 + $0x2b0] sm:$0xff]
        %v2313 = vld [vmem:[%s2225 + $0x2b8] sm:$0xff]
        %v2314 = vld [vmem:[%s2225 + $0x2c0] sm:$0xff]
        %v2315 = vld [vmem:[%s2225 + $0x2c8] sm:$0xff]
        %v2316 = vld [vmem:[%s2225 + $0x2d0] sm:$0xff]
        %v2317 = vld [vmem:[%s2225 + $0x2d8] sm:$0xff]
        %v2318 = vld [vmem:[%s2225 + $0x2e0] sm:$0xff]
        %v2319 = vld [vmem:[%s2225 + $0x2e8] sm:$0xff]
        %v2320 = vld [vmem:[%s2225 + $0x2f0] sm:$0xff]
        %v2321 = vld [vmem:[%s2225 + $0x2f8] sm:$0xff]
        %v2322 = vlaneseq
        %v2323 = vshrl.u32 %v2322, 7
        %v2324 = vsub.s32 2, %v2323
        %v2325 = vrot.slane %v635, %v2324
        %v2326 = vmul.f32 %v736, %v2325
        %v2327 = vmul.f32 %v741, %v2325
        %v2328 = vmul.f32 %v746, %v2325
        %v2329 = vmul.f32 %v751, %v2325
        %v2330 = vmul.f32 %v756, %v2325
        %v2331 = vmul.f32 %v761, %v2325
        %v2332 = vmul.f32 %v766, %v2325
        %v2333 = vmul.f32 %v771, %v2325
        %v2334 = vmul.f32 %v776, %v2325
        %v2335 = vmul.f32 %v781, %v2325
        %v2336 = vmul.f32 %v786, %v2325
        %v2337 = vmul.f32 %v791, %v2325
        %v2338 = vmul.f32 %v796, %v2325
        %v2339 = vmul.f32 %v801, %v2325
        %v2340 = vmul.f32 %v806, %v2325
        %v2341 = vmul.f32 %v811, %v2325
        %v2342 = vmul.f32 %v816, %v2325
        %v2343 = vmul.f32 %v821, %v2325
        %v2344 = vmul.f32 %v826, %v2325
        %v2345 = vmul.f32 %v831, %v2325
        %v2346 = vmul.f32 %v836, %v2325
        %v2347 = vmul.f32 %v841, %v2325
        %v2348 = vmul.f32 %v846, %v2325
        %v2349 = vmul.f32 %v851, %v2325
        %v2350 = vmul.f32 %v856, %v2325
        %v2351 = vmul.f32 %v861, %v2325
        %v2352 = vmul.f32 %v866, %v2325
        %v2353 = vmul.f32 %v871, %v2325
        %v2354 = vmul.f32 %v876, %v2325
        %v2355 = vmul.f32 %v881, %v2325
        %v2356 = vmul.f32 %v886, %v2325
        %v2357 = vmul.f32 %v891, %v2325
        %v2358 = vmul.f32 %v896, %v2325
        %v2359 = vmul.f32 %v901, %v2325
        %v2360 = vmul.f32 %v906, %v2325
        %v2361 = vmul.f32 %v911, %v2325
        %v2362 = vmul.f32 %v916, %v2325
        %v2363 = vmul.f32 %v921, %v2325
        %v2364 = vmul.f32 %v926, %v2325
        %v2365 = vmul.f32 %v931, %v2325
        %v2366 = vmul.f32 %v936, %v2325
        %v2368 = vsel %vm1125, %v2228, 0
        %v2371 = vsel %vm1125, %v2231, 0
        %v2374 = vsel %vm1125, %v2234, 0
        %v2377 = vsel %vm1125, %v2237, 0
        %v2380 = vsel %vm1125, %v2240, 0
        %v2383 = vsel %vm1125, %v2243, 0
        %v2386 = vsel %vm1125, %v2246, 0
        %v2389 = vsel %vm1125, %v2249, 0
        %v2392 = vsel %vm1125, %v2252, 0
        %v2395 = vsel %vm1125, %v2255, 0
        %v2398 = vsel %vm1125, %v2258, 0
        %v2401 = vsel %vm1125, %v2261, 0
        %v2404 = vsel %vm1125, %v2264, 0
        %v2407 = vsel %vm1125, %v2267, 0
        %v2410 = vsel %vm1125, %v2270, 0
        %v2413 = vsel %vm1125, %v2273, 0
        %v2416 = vsel %vm1125, %v2276, 0
        %v2419 = vsel %vm1125, %v2279, 0
        %v2422 = vsel %vm1125, %v2282, 0
        %v2425 = vsel %vm1125, %v2285, 0
        %v2428 = vsel %vm1125, %v2288, 0
        %v2431 = vsel %vm1125, %v2291, 0
        %v2434 = vsel %vm1125, %v2294, 0
        %v2437 = vsel %vm1125, %v2297, 0
        %v2440 = vsel %vm1125, %v2300, 0
        %v2443 = vsel %vm1125, %v2303, 0
        %v2446 = vsel %vm1125, %v2306, 0
        %v2449 = vsel %vm1125, %v2309, 0
        %v2452 = vsel %vm1125, %v2312, 0
        %v2455 = vsel %vm1125, %v2315, 0
        %v2458 = vsel %vm1125, %v2318, 0
        %v2461 = vsel %vm1125, %v2321, 0
        %v2464 = vsel %vm1222, %v2366, 0
        %2466 = vmatprep.subr.mxu0 0.0
        %2467 = vmatpush1.msra.mxu0 %v2326
        %2468 = vmatprep.subr.mxu0 0.0
        %2469 = vmatpush1.msra.mxu0 %v2327
        %2470 = vmatprep.subr.mxu0 0.0
        %2471 = vmatpush1.msra.mxu0 %v2328
        %2472 = vmatprep.subr.mxu0 0.0
        %2473 = vmatpush1.msra.mxu0 %v2329
        %2474 = vmatprep.subr.mxu0 0.0
        %2475 = vmatpush1.msra.mxu0 %v2330
        %2476 = vmatprep.subr.mxu0 0.0
        %2477 = vmatpush1.msra.mxu0 %v2331
        %2478 = vmatprep.subr.mxu0 0.0
        %2479 = vmatpush1.msra.mxu0 %v2332
        %2480 = vmatprep.subr.mxu0 0.0
        %2481 = vmatpush1.msra.mxu0 %v2333
        %2482 = vmatprep.subr.mxu0 0.0
        %2483 = vmatpush1.msra.mxu0 %v2334
        %2484 = vmatprep.subr.mxu0 0.0
        %2485 = vmatpush1.msra.mxu0 %v2335
        %2486 = vmatprep.subr.mxu0 0.0
        %2487 = vmatpush1.msra.mxu0 %v2336
        %2488 = vmatprep.subr.mxu0 0.0
        %2489 = vmatpush1.msra.mxu0 %v2337
        %2490 = vmatprep.subr.mxu0 0.0
        %2491 = vmatpush1.msra.mxu0 %v2338
        %2492 = vmatprep.subr.mxu0 0.0
        %2493 = vmatpush1.msra.mxu0 %v2339
        %2494 = vmatprep.subr.mxu0 0.0
        %2495 = vmatpush1.msra.mxu0 %v2340
        %2496 = vmatprep.subr.mxu0 0.0
        %2497 = vmatpush1.msra.mxu0 %v2341
        %2498 = vmatprep.subr.mxu0 0.0
        %2499 = vmatpush1.msra.mxu0 %v2342
        %2500 = vmatprep.subr.mxu0 0.0
        %2501 = vmatpush1.msra.mxu0 %v2343
        %2502 = vmatprep.subr.mxu0 0.0
        %2503 = vmatpush1.msra.mxu0 %v2344
        %2504 = vmatprep.subr.mxu0 0.0
        %2505 = vmatpush1.msra.mxu0 %v2345
        %2506 = vmatprep.subr.mxu0 0.0
        %2507 = vmatpush1.msra.mxu0 %v2346
        %2508 = vmatprep.subr.mxu0 0.0
        %2509 = vmatpush1.msra.mxu0 %v2347
        %2510 = vmatprep.subr.mxu0 0.0
        %2511 = vmatpush1.msra.mxu0 %v2348
        %2512 = vmatprep.subr.mxu0 0.0
        %2513 = vmatpush1.msra.mxu0 %v2349
        %2514 = vmatprep.subr.mxu0 0.0
        %2515 = vmatpush1.msra.mxu0 %v2350
        %2516 = vmatprep.subr.mxu0 0.0
        %2517 = vmatpush1.msra.mxu0 %v2351
        %2518 = vmatprep.subr.mxu0 0.0
        %2519 = vmatpush1.msra.mxu0 %v2352
        %2520 = vmatprep.subr.mxu0 0.0
        %2521 = vmatpush1.msra.mxu0 %v2353
        %2522 = vmatprep.subr.mxu0 0.0
        %2523 = vmatpush1.msra.mxu0 %v2354
        %2524 = vmatprep.subr.mxu0 0.0
        %2525 = vmatpush1.msra.mxu0 %v2355
        %2526 = vmatprep.subr.mxu0 0.0
        %2527 = vmatpush1.msra.mxu0 %v2356
        %2528 = vmatprep.subr.mxu0 0.0
        %2529 = vmatpush1.msra.mxu0 %v2357
        %2530 = vmatprep.mubr.f32.mxu0 %v2227
        %2531 = vmatmul.mubr.f32.gmra.mrb[0].mxu0 %v2226
        %v2532 = vpop.f32.mrb[0].mxu0
        %v2533 = vadd.f32 0.0, %v2532
        %v2534 = vpop.f32.mrb[0].mxu0
        %2535 = vmatprep.mubr.f32.mxu0 %v2230
        %2536 = vmatmul.mubr.f32.gmra.mrb[0].mxu0 %v2229
        %v2537 = vpop.f32.mrb[0].mxu0
        %v2538 = vadd.f32 0.0, %v2537
        %v2539 = vpop.f32.mrb[0].mxu0
        %2540 = vmatprep.mubr.f32.mxu0 %v2233
        %2541 = vmatmul.mubr.f32.gmra.mrb[0].mxu0 %v2232
        %v2542 = vpop.f32.mrb[0].mxu0
        %v2543 = vadd.f32 0.0, %v2542
        %v2544 = vpop.f32.mrb[0].mxu0
        %2545 = vmatprep.mubr.f32.mxu0 %v2236
        %2546 = vmatmul.mubr.f32.gmra.mrb[0].mxu0 %v2235
        %v2547 = vpop.f32.mrb[0].mxu0
        %v2548 = vadd.f32 0.0, %v2547
        %v2549 = vpop.f32.mrb[0].mxu0
        %2550 = vmatprep.mubr.f32.mxu0 %v2239
        %2551 = vmatmul.mubr.f32.gmra.mrb[0].mxu0 %v2238
        %v2552 = vpop.f32.mrb[0].mxu0
        %v2553 = vadd.f32 0.0, %v2552
        %v2554 = vpop.f32.mrb[0].mxu0
        %2555 = vmatprep.mubr.f32.mxu0 %v2242
        %2556 = vmatmul.mubr.f32.gmra.mrb[0].mxu0 %v2241
        %v2557 = vpop.f32.mrb[0].mxu0
        %v2558 = vadd.f32 0.0, %v2557
        %v2559 = vpop.f32.mrb[0].mxu0
        %2560 = vmatprep.mubr.f32.mxu0 %v2245
        %2561 = vmatmul.mubr.f32.gmra.mrb[0].mxu0 %v2244
        %v2562 = vpop.f32.mrb[0].mxu0
        %v2563 = vadd.f32 0.0, %v2562
        %v2564 = vpop.f32.mrb[0].mxu0
        %2565 = vmatprep.mubr.f32.mxu0 %v2248
        %2566 = vmatmul.mubr.f32.gmra.mrb[0].mxu0 %v2247
        %v2567 = vpop.f32.mrb[0].mxu0
        %v2568 = vadd.f32 0.0, %v2567
        %v2569 = vpop.f32.mrb[0].mxu0
        %2570 = vmatprep.mubr.f32.mxu0 %v2251
        %2571 = vmatmul.mubr.f32.gmra.mrb[0].mxu0 %v2250
        %v2572 = vpop.f32.mrb[0].mxu0
        %v2573 = vadd.f32 0.0, %v2572
        %v2574 = vpop.f32.mrb[0].mxu0
        %2575 = vmatprep.mubr.f32.mxu0 %v2254
        %2576 = vmatmul.mubr.f32.gmra.mrb[0].mxu0 %v2253
        %v2577 = vpop.f32.mrb[0].mxu0
        %v2578 = vadd.f32 0.0, %v2577
        %v2579 = vpop.f32.mrb[0].mxu0
        %2580 = vmatprep.mubr.f32.mxu0 %v2257
        %2581 = vmatmul.mubr.f32.gmra.mrb[0].mxu0 %v2256
        %v2582 = vpop.f32.mrb[0].mxu0
        %v2583 = vadd.f32 0.0, %v2582
        %v2584 = vpop.f32.mrb[0].mxu0
        %2585 = vmatprep.mubr.f32.mxu0 %v2260
        %2586 = vmatmul.mubr.f32.gmra.mrb[0].mxu0 %v2259
        %v2587 = vpop.f32.mrb[0].mxu0
        %v2588 = vadd.f32 0.0, %v2587
        %v2589 = vpop.f32.mrb[0].mxu0
        %2590 = vmatprep.mubr.f32.mxu0 %v2263
        %2591 = vmatmul.mubr.f32.gmra.mrb[0].mxu0 %v2262
        %v2592 = vpop.f32.mrb[0].mxu0
        %v2593 = vadd.f32 0.0, %v2592
        %v2594 = vpop.f32.mrb[0].mxu0
        %2595 = vmatprep.mubr.f32.mxu0 %v2266
        %2596 = vmatmul.mubr.f32.gmra.mrb[0].mxu0 %v2265
        %v2597 = vpop.f32.mrb[0].mxu0
        %v2598 = vadd.f32 0.0, %v2597
        %v2599 = vpop.f32.mrb[0].mxu0
        %2600 = vmatprep.mubr.f32.mxu0 %v2269
        %2601 = vmatmul.mubr.f32.gmra.mrb[0].mxu0 %v2268
        %v2602 = vpop.f32.mrb[0].mxu0
        %v2603 = vadd.f32 0.0, %v2602
        %v2604 = vpop.f32.mrb[0].mxu0
        %2605 = vmatprep.mubr.f32.mxu0 %v2272
        %2606 = vmatmul.mubr.f32.gmra.mrb[0].mxu0 %v2271
        %v2607 = vpop.f32.mrb[0].mxu0
        %v2608 = vadd.f32 0.0, %v2607
        %v2609 = vpop.f32.mrb[0].mxu0
        %2610 = vmatprep.mubr.f32.mxu0 %v2275
        %2611 = vmatmul.mubr.f32.gmra.mrb[0].mxu0 %v2274
        %v2612 = vpop.f32.mrb[0].mxu0
        %v2613 = vadd.f32 0.0, %v2612
        %v2614 = vpop.f32.mrb[0].mxu0
        %2615 = vmatprep.mubr.f32.mxu0 %v2278
        %2616 = vmatmul.mubr.f32.gmra.mrb[0].mxu0 %v2277
        %v2617 = vpop.f32.mrb[0].mxu0
        %v2618 = vadd.f32 0.0, %v2617
        %v2619 = vpop.f32.mrb[0].mxu0
        %2620 = vmatprep.mubr.f32.mxu0 %v2281
        %2621 = vmatmul.mubr.f32.gmra.mrb[0].mxu0 %v2280
        %v2622 = vpop.f32.mrb[0].mxu0
        %v2623 = vadd.f32 0.0, %v2622
        %v2624 = vpop.f32.mrb[0].mxu0
        %2625 = vmatprep.mubr.f32.mxu0 %v2284
        %2626 = vmatmul.mubr.f32.gmra.mrb[0].mxu0 %v2283
        %v2627 = vpop.f32.mrb[0].mxu0
        %v2628 = vadd.f32 0.0, %v2627
        %v2629 = vpop.f32.mrb[0].mxu0
        %2630 = vmatprep.mubr.f32.mxu0 %v2287
        %2631 = vmatmul.mubr.f32.gmra.mrb[0].mxu0 %v2286
        %v2632 = vpop.f32.mrb[0].mxu0
        %v2633 = vadd.f32 0.0, %v2632
        %v2634 = vpop.f32.mrb[0].mxu0
        %2635 = vmatprep.mubr.f32.mxu0 %v2290
        %2636 = vmatmul.mubr.f32.gmra.mrb[0].mxu0 %v2289
        %v2637 = vpop.f32.mrb[0].mxu0
        %v2638 = vadd.f32 0.0, %v2637
        %v2639 = vpop.f32.mrb[0].mxu0
        %2640 = vmatprep.mubr.f32.mxu0 %v2293
        %2641 = vmatmul.mubr.f32.gmra.mrb[0].mxu0 %v2292
        %v2642 = vpop.f32.mrb[0].mxu0
        %v2643 = vadd.f32 0.0, %v2642
        %v2644 = vpop.f32.mrb[0].mxu0
        %2645 = vmatprep.mubr.f32.mxu0 %v2296
        %2646 = vmatmul.mubr.f32.gmra.mrb[0].mxu0 %v2295
        %v2647 = vpop.f32.mrb[0].mxu0
        %v2648 = vadd.f32 0.0, %v2647
        %v2649 = vpop.f32.mrb[0].mxu0
        %2650 = vmatprep.mubr.f32.mxu0 %v2299
        %2651 = vmatmul.mubr.f32.gmra.mrb[0].mxu0 %v2298
        %v2652 = vpop.f32.mrb[0].mxu0
        %v2653 = vadd.f32 0.0, %v2652
        %v2654 = vpop.f32.mrb[0].mxu0
        %2655 = vmatprep.mubr.f32.mxu0 %v2302
        %2656 = vmatmul.mubr.f32.gmra.mrb[0].mxu0 %v2301
        %v2657 = vpop.f32.mrb[0].mxu0
        %v2658 = vadd.f32 0.0, %v2657
        %v2659 = vpop.f32.mrb[0].mxu0
        %2660 = vmatprep.mubr.f32.mxu0 %v2305
        %2661 = vmatmul.mubr.f32.gmra.mrb[0].mxu0 %v2304
        %v2662 = vpop.f32.mrb[0].mxu0
        %v2663 = vadd.f32 0.0, %v2662
        %v2664 = vpop.f32.mrb[0].mxu0
        %2665 = vmatprep.mubr.f32.mxu0 %v2308
        %2666 = vmatmul.mubr.f32.gmra.mrb[0].mxu0 %v2307
        %v2667 = vpop.f32.mrb[0].mxu0
        %v2668 = vadd.f32 0.0, %v2667
        %v2669 = vpop.f32.mrb[0].mxu0
        %2670 = vmatprep.mubr.f32.mxu0 %v2311
        %2671 = vmatmul.mubr.f32.gmra.mrb[0].mxu0 %v2310
        %v2672 = vpop.f32.mrb[0].mxu0
        %v2673 = vadd.f32 0.0, %v2672
        %v2674 = vpop.f32.mrb[0].mxu0
        %2675 = vmatprep.mubr.f32.mxu0 %v2314
        %2676 = vmatmul.mubr.f32.gmra.mrb[0].mxu0 %v2313
        %v2677 = vpop.f32.mrb[0].mxu0
        %v2678 = vadd.f32 0.0, %v2677
        %v2679 = vpop.f32.mrb[0].mxu0
        %2680 = vmatprep.mubr.f32.mxu0 %v2317
        %2681 = vmatmul.mubr.f32.gmra.mrb[0].mxu0 %v2316
        %v2682 = vpop.f32.mrb[0].mxu0
        %v2683 = vadd.f32 0.0, %v2682
        %v2684 = vpop.f32.mrb[0].mxu0
        %2685 = vmatprep.mubr.f32.mxu0 %v2320
        %2686 = vmatmul.mubr.f32.gmra.mrb[0].mxu0 %v2319
        %v2687 = vpop.f32.mrb[0].mxu0
        %v2688 = vadd.f32 0.0, %v2687
        %v2689 = vpop.f32.mrb[0].mxu0
        %2690 = vdwg.mxu0
        %2691 = vmatprep.subr.mxu0 0.0
        %2692 = vmatpush1.msra.mxu0 %v2358
        %2693 = vmatprep.subr.mxu0 0.0
        %2694 = vmatpush1.msra.mxu0 %v2359
        %2695 = vmatprep.subr.mxu0 0.0
        %2696 = vmatpush1.msra.mxu0 %v2360
        %2697 = vmatprep.subr.mxu0 0.0
        %2698 = vmatpush1.msra.mxu0 %v2361
        %2699 = vmatprep.subr.mxu0 0.0
        %2700 = vmatpush1.msra.mxu0 %v2362
        %2701 = vmatprep.subr.mxu0 0.0
        %2702 = vmatpush1.msra.mxu0 %v2363
        %2703 = vmatprep.subr.mxu0 0.0
        %2704 = vmatpush1.msra.mxu0 %v2364
        %2705 = vmatprep.subr.mxu0 0.0
        %2706 = vmatpush1.msra.mxu0 %v2365
        %2707 = vmatprep.subr.mxu0 0.0
        %2708 = vmatpush1.msra.mxu0 %v2464
        %2709 = vmatprep.subr.mxu0 0.0
        %2710 = vmatpush1.msra.mxu0 0.0
        %2711 = vmatprep.subr.mxu0 0.0
        %2712 = vmatpush1.msra.mxu0 0.0
        %2713 = vmatprep.subr.mxu0 0.0
        %2714 = vmatpush1.msra.mxu0 0.0
        %2715 = vmatprep.subr.mxu0 0.0
        %2716 = vmatpush1.msra.mxu0 0.0
        %2717 = vmatprep.subr.mxu0 0.0
        %2718 = vmatpush1.msra.mxu0 0.0
        %2719 = vmatprep.subr.mxu0 0.0
        %2720 = vmatpush1.msra.mxu0 0.0
        %2721 = vmatprep.subr.mxu0 0.0
        %2722 = vmatpush1.msra.mxu0 0.0
        %2723 = vmatprep.subr.mxu0 0.0
        %2724 = vmatpush1.msra.mxu0 0.0
        %2725 = vmatprep.subr.mxu0 0.0
        %2726 = vmatpush1.msra.mxu0 0.0
        %2727 = vmatprep.subr.mxu0 0.0
        %2728 = vmatpush1.msra.mxu0 0.0
        %2729 = vmatprep.subr.mxu0 0.0
        %2730 = vmatpush1.msra.mxu0 0.0
        %2731 = vmatprep.subr.mxu0 0.0
        %2732 = vmatpush1.msra.mxu0 0.0
        %2733 = vmatprep.subr.mxu0 0.0
        %2734 = vmatpush1.msra.mxu0 0.0
        %2735 = vmatprep.subr.mxu0 0.0
        %2736 = vmatpush1.msra.mxu0 0.0
        %2737 = vmatprep.subr.mxu0 0.0
        %2738 = vmatpush1.msra.mxu0 0.0
        %2739 = vmatprep.subr.mxu0 0.0
        %2740 = vmatpush1.msra.mxu0 0.0
        %2741 = vmatprep.subr.mxu0 0.0
        %2742 = vmatpush1.msra.mxu0 0.0
        %2743 = vmatprep.subr.mxu0 0.0
        %2744 = vmatpush1.msra.mxu0 0.0
        %2745 = vmatprep.subr.mxu0 0.0
        %2746 = vmatpush1.msra.mxu0 0.0
        %2747 = vmatprep.subr.mxu0 0.0
        %2748 = vmatpush1.msra.mxu0 0.0
        %2749 = vmatprep.subr.mxu0 0.0
        %2750 = vmatpush1.msra.mxu0 0.0
        %2751 = vmatprep.subr.mxu0 0.0
        %2752 = vmatpush1.msra.mxu0 0.0
        %2753 = vmatprep.subr.mxu0 0.0
        %2754 = vmatpush1.msra.mxu0 0.0
        %2755 = vmatprep.mubr.f32.mxu0 0.0
        %2756 = vmatmul.mubr.f32.gmra.mrb[0].mxu0 %v2368
        %v2757 = vpop.f32.mrb[0].mxu0
        %v2758 = vadd.f32 %v2533, %v2757
        %v2759 = vpop.f32.mrb[0].mxu0
        %2760 = vmatprep.mubr.f32.mxu0 0.0
        %2761 = vmatmul.mubr.f32.gmra.mrb[0].mxu0 %v2371
        %v2762 = vpop.f32.mrb[0].mxu0
        %v2763 = vadd.f32 %v2538, %v2762
        %v2764 = vpop.f32.mrb[0].mxu0
        %2765 = vmatprep.mubr.f32.mxu0 0.0
        %2766 = vmatmul.mubr.f32.gmra.mrb[0].mxu0 %v2374
        %v2767 = vpop.f32.mrb[0].mxu0
        %v2768 = vadd.f32 %v2543, %v2767
        %v2769 = vpop.f32.mrb[0].mxu0
        %2770 = vmatprep.mubr.f32.mxu0 0.0
        %2771 = vmatmul.mubr.f32.gmra.mrb[0].mxu0 %v2377
        %v2772 = vpop.f32.mrb[0].mxu0
        %v2773 = vadd.f32 %v2548, %v2772
        %v2774 = vpop.f32.mrb[0].mxu0
        %2775 = vmatprep.mubr.f32.mxu0 0.0
        %2776 = vmatmul.mubr.f32.gmra.mrb[0].mxu0 %v2380
        %v2777 = vpop.f32.mrb[0].mxu0
        %v2778 = vadd.f32 %v2553, %v2777
        %v2779 = vpop.f32.mrb[0].mxu0
        %2780 = vmatprep.mubr.f32.mxu0 0.0
        %2781 = vmatmul.mubr.f32.gmra.mrb[0].mxu0 %v2383
        %v2782 = vpop.f32.mrb[0].mxu0
        %v2783 = vadd.f32 %v2558, %v2782
        %v2784 = vpop.f32.mrb[0].mxu0
        %2785 = vmatprep.mubr.f32.mxu0 0.0
        %2786 = vmatmul.mubr.f32.gmra.mrb[0].mxu0 %v2386
        %v2787 = vpop.f32.mrb[0].mxu0
        %v2788 = vadd.f32 %v2563, %v2787
        %v2789 = vpop.f32.mrb[0].mxu0
        %2790 = vmatprep.mubr.f32.mxu0 0.0
        %2791 = vmatmul.mubr.f32.gmra.mrb[0].mxu0 %v2389
        %v2792 = vpop.f32.mrb[0].mxu0
        %v2793 = vadd.f32 %v2568, %v2792
        %v2794 = vpop.f32.mrb[0].mxu0
        %2795 = vmatprep.mubr.f32.mxu0 0.0
        %2796 = vmatmul.mubr.f32.gmra.mrb[0].mxu0 %v2392
        %v2797 = vpop.f32.mrb[0].mxu0
        %v2798 = vadd.f32 %v2573, %v2797
        %v2799 = vpop.f32.mrb[0].mxu0
        %2800 = vmatprep.mubr.f32.mxu0 0.0
        %2801 = vmatmul.mubr.f32.gmra.mrb[0].mxu0 %v2395
        %v2802 = vpop.f32.mrb[0].mxu0
        %v2803 = vadd.f32 %v2578, %v2802
        %v2804 = vpop.f32.mrb[0].mxu0
        %2805 = vmatprep.mubr.f32.mxu0 0.0
        %2806 = vmatmul.mubr.f32.gmra.mrb[0].mxu0 %v2398
        %v2807 = vpop.f32.mrb[0].mxu0
        %v2808 = vadd.f32 %v2583, %v2807
        %v2809 = vpop.f32.mrb[0].mxu0
        %2810 = vmatprep.mubr.f32.mxu0 0.0
        %2811 = vmatmul.mubr.f32.gmra.mrb[0].mxu0 %v2401
        %v2812 = vpop.f32.mrb[0].mxu0
        %v2813 = vadd.f32 %v2588, %v2812
        %v2814 = vpop.f32.mrb[0].mxu0
        %2815 = vmatprep.mubr.f32.mxu0 0.0
        %2816 = vmatmul.mubr.f32.gmra.mrb[0].mxu0 %v2404
        %v2817 = vpop.f32.mrb[0].mxu0
        %v2818 = vadd.f32 %v2593, %v2817
        %v2819 = vpop.f32.mrb[0].mxu0
        %2820 = vmatprep.mubr.f32.mxu0 0.0
        %2821 = vmatmul.mubr.f32.gmra.mrb[0].mxu0 %v2407
        %v2822 = vpop.f32.mrb[0].mxu0
        %v2823 = vadd.f32 %v2598, %v2822
        %v2824 = vpop.f32.mrb[0].mxu0
        %2825 = vmatprep.mubr.f32.mxu0 0.0
        %2826 = vmatmul.mubr.f32.gmra.mrb[0].mxu0 %v2410
        %v2827 = vpop.f32.mrb[0].mxu0
        %v2828 = vadd.f32 %v2603, %v2827
        %v2829 = vpop.f32.mrb[0].mxu0
        %2830 = vmatprep.mubr.f32.mxu0 0.0
        %2831 = vmatmul.mubr.f32.gmra.mrb[0].mxu0 %v2413
        %v2832 = vpop.f32.mrb[0].mxu0
        %v2833 = vadd.f32 %v2608, %v2832
        %v2834 = vpop.f32.mrb[0].mxu0
        %2835 = vmatprep.mubr.f32.mxu0 0.0
        %2836 = vmatmul.mubr.f32.gmra.mrb[0].mxu0 %v2416
        %v2837 = vpop.f32.mrb[0].mxu0
        %v2838 = vadd.f32 %v2613, %v2837
        %v2839 = vpop.f32.mrb[0].mxu0
        %2840 = vmatprep.mubr.f32.mxu0 0.0
        %2841 = vmatmul.mubr.f32.gmra.mrb[0].mxu0 %v2419
        %v2842 = vpop.f32.mrb[0].mxu0
        %v2843 = vadd.f32 %v2618, %v2842
        %v2844 = vpop.f32.mrb[0].mxu0
        %2845 = vmatprep.mubr.f32.mxu0 0.0
        %2846 = vmatmul.mubr.f32.gmra.mrb[0].mxu0 %v2422
        %v2847 = vpop.f32.mrb[0].mxu0
        %v2848 = vadd.f32 %v2623, %v2847
        %v2849 = vpop.f32.mrb[0].mxu0
        %2850 = vmatprep.mubr.f32.mxu0 0.0
        %2851 = vmatmul.mubr.f32.gmra.mrb[0].mxu0 %v2425
        %v2852 = vpop.f32.mrb[0].mxu0
        %v2853 = vadd.f32 %v2628, %v2852
        %v2854 = vpop.f32.mrb[0].mxu0
        %2855 = vmatprep.mubr.f32.mxu0 0.0
        %2856 = vmatmul.mubr.f32.gmra.mrb[0].mxu0 %v2428
        %v2857 = vpop.f32.mrb[0].mxu0
        %v2858 = vadd.f32 %v2633, %v2857
        %v2859 = vpop.f32.mrb[0].mxu0
        %2860 = vmatprep.mubr.f32.mxu0 0.0
        %2861 = vmatmul.mubr.f32.gmra.mrb[0].mxu0 %v2431
        %v2862 = vpop.f32.mrb[0].mxu0
        %v2863 = vadd.f32 %v2638, %v2862
        %v2864 = vpop.f32.mrb[0].mxu0
        %2865 = vmatprep.mubr.f32.mxu0 0.0
        %2866 = vmatmul.mubr.f32.gmra.mrb[0].mxu0 %v2434
        %v2867 = vpop.f32.mrb[0].mxu0
        %v2868 = vadd.f32 %v2643, %v2867
        %v2869 = vpop.f32.mrb[0].mxu0
        %2870 = vmatprep.mubr.f32.mxu0 0.0
        %2871 = vmatmul.mubr.f32.gmra.mrb[0].mxu0 %v2437
        %v2872 = vpop.f32.mrb[0].mxu0
        %v2873 = vadd.f32 %v2648, %v2872
        %v2874 = vpop.f32.mrb[0].mxu0
        %2875 = vmatprep.mubr.f32.mxu0 0.0
        %2876 = vmatmul.mubr.f32.gmra.mrb[0].mxu0 %v2440
        %v2877 = vpop.f32.mrb[0].mxu0
        %v2878 = vadd.f32 %v2653, %v2877
        %v2879 = vpop.f32.mrb[0].mxu0
        %2880 = vmatprep.mubr.f32.mxu0 0.0
        %2881 = vmatmul.mubr.f32.gmra.mrb[0].mxu0 %v2443
        %v2882 = vpop.f32.mrb[0].mxu0
        %v2883 = vadd.f32 %v2658, %v2882
        %v2884 = vpop.f32.mrb[0].mxu0
        %2885 = vmatprep.mubr.f32.mxu0 0.0
        %2886 = vmatmul.mubr.f32.gmra.mrb[0].mxu0 %v2446
        %v2887 = vpop.f32.mrb[0].mxu0
        %v2888 = vadd.f32 %v2663, %v2887
        %v2889 = vpop.f32.mrb[0].mxu0
        %2890 = vmatprep.mubr.f32.mxu0 0.0
        %2891 = vmatmul.mubr.f32.gmra.mrb[0].mxu0 %v2449
        %v2892 = vpop.f32.mrb[0].mxu0
        %v2893 = vadd.f32 %v2668, %v2892
        %v2894 = vpop.f32.mrb[0].mxu0
        %2895 = vmatprep.mubr.f32.mxu0 0.0
        %2896 = vmatmul.mubr.f32.gmra.mrb[0].mxu0 %v2452
        %v2897 = vpop.f32.mrb[0].mxu0
        %v2898 = vadd.f32 %v2673, %v2897
        %v2899 = vpop.f32.mrb[0].mxu0
        %2900 = vmatprep.mubr.f32.mxu0 0.0
        %2901 = vmatmul.mubr.f32.gmra.mrb[0].mxu0 %v2455
        %v2902 = vpop.f32.mrb[0].mxu0
        %v2903 = vadd.f32 %v2678, %v2902
        %v2904 = vpop.f32.mrb[0].mxu0
        %2905 = vmatprep.mubr.f32.mxu0 0.0
        %2906 = vmatmul.mubr.f32.gmra.mrb[0].mxu0 %v2458
        %v2907 = vpop.f32.mrb[0].mxu0
        %v2908 = vadd.f32 %v2683, %v2907
        %v2909 = vpop.f32.mrb[0].mxu0
        %2910 = vmatprep.mubr.f32.mxu0 0.0
        %2911 = vmatmul.mubr.f32.gmra.mrb[0].mxu0 %v2461
        %v2912 = vpop.f32.mrb[0].mxu0
        %v2913 = vadd.f32 %v2688, %v2912
        %v2914 = vpop.f32.mrb[0].mxu0
        %2915 = vdwg.mxu0
        %v2916 = vadd.f32 %v2067, %v2758
        %v2917 = vadd.f32 %v2072, %v2763
        %v2918 = vadd.f32 %v2077, %v2768
        %v2919 = vadd.f32 %v2082, %v2773
        %v2920 = vadd.f32 %v2087, %v2778
        %v2921 = vadd.f32 %v2092, %v2783
        %v2922 = vadd.f32 %v2097, %v2788
        %v2923 = vadd.f32 %v2102, %v2793
        %v2924 = vadd.f32 %v2107, %v2798
        %v2925 = vadd.f32 %v2112, %v2803
        %v2926 = vadd.f32 %v2117, %v2808
        %v2927 = vadd.f32 %v2122, %v2813
        %v2928 = vadd.f32 %v2127, %v2818
        %v2929 = vadd.f32 %v2132, %v2823
        %v2930 = vadd.f32 %v2137, %v2828
        %v2931 = vadd.f32 %v2142, %v2833
        %v2932 = vadd.f32 %v2147, %v2838
        %v2933 = vadd.f32 %v2152, %v2843
        %v2934 = vadd.f32 %v2157, %v2848
        %v2935 = vadd.f32 %v2162, %v2853
        %v2936 = vadd.f32 %v2167, %v2858
        %v2937 = vadd.f32 %v2172, %v2863
        %v2938 = vadd.f32 %v2177, %v2868
        %v2939 = vadd.f32 %v2182, %v2873
        %v2940 = vadd.f32 %v2187, %v2878
        %v2941 = vadd.f32 %v2192, %v2883
        %v2942 = vadd.f32 %v2197, %v2888
        %v2943 = vadd.f32 %v2202, %v2893
        %v2944 = vadd.f32 %v2207, %v2898
        %v2945 = vadd.f32 %v2212, %v2903
        %v2946 = vadd.f32 %v2217, %v2908
        %v2947 = vadd.f32 %v2222, %v2913
        %s2948 = scalar_lea.vmem [#allocation2], 2304
        %v2949 = vld [vmem:[%s2948] sm:$0xff]
        %v2950 = vld [vmem:[%s2948 + $0x8] sm:$0xff]
        %v2951 = vld [vmem:[%s2948 + $0x10] sm:$0xff]
        %v2952 = vld [vmem:[%s2948 + $0x18] sm:$0xff]
        %v2953 = vld [vmem:[%s2948 + $0x20] sm:$0xff]
        %v2954 = vld [vmem:[%s2948 + $0x28] sm:$0xff]
        %v2955 = vld [vmem:[%s2948 + $0x30] sm:$0xff]
        %v2956 = vld [vmem:[%s2948 + $0x38] sm:$0xff]
        %v2957 = vld [vmem:[%s2948 + $0x40] sm:$0xff]
        %v2958 = vld [vmem:[%s2948 + $0x48] sm:$0xff]
        %v2959 = vld [vmem:[%s2948 + $0x50] sm:$0xff]
        %v2960 = vld [vmem:[%s2948 + $0x58] sm:$0xff]
        %v2961 = vld [vmem:[%s2948 + $0x60] sm:$0xff]
        %v2962 = vld [vmem:[%s2948 + $0x68] sm:$0xff]
        %v2963 = vld [vmem:[%s2948 + $0x70] sm:$0xff]
        %v2964 = vld [vmem:[%s2948 + $0x78] sm:$0xff]
        %v2965 = vld [vmem:[%s2948 + $0x80] sm:$0xff]
        %v2966 = vld [vmem:[%s2948 + $0x88] sm:$0xff]
        %v2967 = vld [vmem:[%s2948 + $0x90] sm:$0xff]
        %v2968 = vld [vmem:[%s2948 + $0x98] sm:$0xff]
        %v2969 = vld [vmem:[%s2948 + $0xa0] sm:$0xff]
        %v2970 = vld [vmem:[%s2948 + $0xa8] sm:$0xff]
        %v2971 = vld [vmem:[%s2948 + $0xb0] sm:$0xff]
        %v2972 = vld [vmem:[%s2948 + $0xb8] sm:$0xff]
        %v2973 = vld [vmem:[%s2948 + $0xc0] sm:$0xff]
        %v2974 = vld [vmem:[%s2948 + $0xc8] sm:$0xff]
        %v2975 = vld [vmem:[%s2948 + $0xd0] sm:$0xff]
        %v2976 = vld [vmem:[%s2948 + $0xd8] sm:$0xff]
        %v2977 = vld [vmem:[%s2948 + $0xe0] sm:$0xff]
        %v2978 = vld [vmem:[%s2948 + $0xe8] sm:$0xff]
        %v2979 = vld [vmem:[%s2948 + $0xf0] sm:$0xff]
        %v2980 = vld [vmem:[%s2948 + $0xf8] sm:$0xff]
        %v2981 = vld [vmem:[%s2948 + $0x100] sm:$0xff]
        %v2982 = vld [vmem:[%s2948 + $0x108] sm:$0xff]
        %v2983 = vld [vmem:[%s2948 + $0x110] sm:$0xff]
        %v2984 = vld [vmem:[%s2948 + $0x118] sm:$0xff]
        %v2985 = vld [vmem:[%s2948 + $0x120] sm:$0xff]
        %v2986 = vld [vmem:[%s2948 + $0x128] sm:$0xff]
        %v2987 = vld [vmem:[%s2948 + $0x130] sm:$0xff]
        %v2988 = vld [vmem:[%s2948 + $0x138] sm:$0xff]
        %v2989 = vld [vmem:[%s2948 + $0x140] sm:$0xff]
        %v2990 = vld [vmem:[%s2948 + $0x148] sm:$0xff]
        %v2991 = vld [vmem:[%s2948 + $0x150] sm:$0xff]
        %v2992 = vld [vmem:[%s2948 + $0x158] sm:$0xff]
        %v2993 = vld [vmem:[%s2948 + $0x160] sm:$0xff]
        %v2994 = vld [vmem:[%s2948 + $0x168] sm:$0xff]
        %v2995 = vld [vmem:[%s2948 + $0x170] sm:$0xff]
        %v2996 = vld [vmem:[%s2948 + $0x178] sm:$0xff]
        %v2997 = vld [vmem:[%s2948 + $0x180] sm:$0xff]
        %v2998 = vld [vmem:[%s2948 + $0x188] sm:$0xff]
        %v2999 = vld [vmem:[%s2948 + $0x190] sm:$0xff]
        %v3000 = vld [vmem:[%s2948 + $0x198] sm:$0xff]
        %v3001 = vld [vmem:[%s2948 + $0x1a0] sm:$0xff]
        %v3002 = vld [vmem:[%s2948 + $0x1a8] sm:$0xff]
        %v3003 = vld [vmem:[%s2948 + $0x1b0] sm:$0xff]
        %v3004 = vld [vmem:[%s2948 + $0x1b8] sm:$0xff]
        %v3005 = vld [vmem:[%s2948 + $0x1c0] sm:$0xff]
        %v3006 = vld [vmem:[%s2948 + $0x1c8] sm:$0xff]
        %v3007 = vld [vmem:[%s2948 + $0x1d0] sm:$0xff]
        %v3008 = vld [vmem:[%s2948 + $0x1d8] sm:$0xff]
        %v3009 = vld [vmem:[%s2948 + $0x1e0] sm:$0xff]
        %v3010 = vld [vmem:[%s2948 + $0x1e8] sm:$0xff]
        %v3011 = vld [vmem:[%s2948 + $0x1f0] sm:$0xff]
        %v3012 = vld [vmem:[%s2948 + $0x1f8] sm:$0xff]
        %v3013 = vld [vmem:[%s2948 + $0x200] sm:$0xff]
        %v3014 = vld [vmem:[%s2948 + $0x208] sm:$0xff]
        %v3015 = vld [vmem:[%s2948 + $0x210] sm:$0xff]
        %v3016 = vld [vmem:[%s2948 + $0x218] sm:$0xff]
        %v3017 = vld [vmem:[%s2948 + $0x220] sm:$0xff]
        %v3018 = vld [vmem:[%s2948 + $0x228] sm:$0xff]
        %v3019 = vld [vmem:[%s2948 + $0x230] sm:$0xff]
        %v3020 = vld [vmem:[%s2948 + $0x238] sm:$0xff]
        %v3021 = vld [vmem:[%s2948 + $0x240] sm:$0xff]
        %v3022 = vld [vmem:[%s2948 + $0x248] sm:$0xff]
        %v3023 = vld [vmem:[%s2948 + $0x250] sm:$0xff]
        %v3024 = vld [vmem:[%s2948 + $0x258] sm:$0xff]
        %v3025 = vld [vmem:[%s2948 + $0x260] sm:$0xff]
        %v3026 = vld [vmem:[%s2948 + $0x268] sm:$0xff]
        %v3027 = vld [vmem:[%s2948 + $0x270] sm:$0xff]
        %v3028 = vld [vmem:[%s2948 + $0x278] sm:$0xff]
        %v3029 = vld [vmem:[%s2948 + $0x280] sm:$0xff]
        %v3030 = vld [vmem:[%s2948 + $0x288] sm:$0xff]
        %v3031 = vld [vmem:[%s2948 + $0x290] sm:$0xff]
        %v3032 = vld [vmem:[%s2948 + $0x298] sm:$0xff]
        %v3033 = vld [vmem:[%s2948 + $0x2a0] sm:$0xff]
        %v3034 = vld [vmem:[%s2948 + $0x2a8] sm:$0xff]
        %v3035 = vld [vmem:[%s2948 + $0x2b0] sm:$0xff]
        %v3036 = vld [vmem:[%s2948 + $0x2b8] sm:$0xff]
        %v3037 = vld [vmem:[%s2948 + $0x2c0] sm:$0xff]
        %v3038 = vld [vmem:[%s2948 + $0x2c8] sm:$0xff]
        %v3039 = vld [vmem:[%s2948 + $0x2d0] sm:$0xff]
        %v3040 = vld [vmem:[%s2948 + $0x2d8] sm:$0xff]
        %v3041 = vld [vmem:[%s2948 + $0x2e0] sm:$0xff]
        %v3042 = vld [vmem:[%s2948 + $0x2e8] sm:$0xff]
        %v3043 = vld [vmem:[%s2948 + $0x2f0] sm:$0xff]
        %v3044 = vld [vmem:[%s2948 + $0x2f8] sm:$0xff]
        %v3045 = vlaneseq
        %v3046 = vshrl.u32 %v3045, 7
        %v3047 = vsub.s32 3, %v3046
        %v3048 = vrot.slane %v635, %v3047
        %v3049 = vmul.f32 %v736, %v3048
        %v3050 = vmul.f32 %v741, %v3048
        %v3051 = vmul.f32 %v746, %v3048
        %v3052 = vmul.f32 %v751, %v3048
        %v3053 = vmul.f32 %v756, %v3048
        %v3054 = vmul.f32 %v761, %v3048
        %v3055 = vmul.f32 %v766, %v3048
        %v3056 = vmul.f32 %v771, %v3048
        %v3057 = vmul.f32 %v776, %v3048
        %v3058 = vmul.f32 %v781, %v3048
        %v3059 = vmul.f32 %v786, %v3048
        %v3060 = vmul.f32 %v791, %v3048
        %v3061 = vmul.f32 %v796, %v3048
        %v3062 = vmul.f32 %v801, %v3048
        %v3063 = vmul.f32 %v806, %v3048
        %v3064 = vmul.f32 %v811, %v3048
        %v3065 = vmul.f32 %v816, %v3048
        %v3066 = vmul.f32 %v821, %v3048
        %v3067 = vmul.f32 %v826, %v3048
        %v3068 = vmul.f32 %v831, %v3048
        %v3069 = vmul.f32 %v836, %v3048
        %v3070 = vmul.f32 %v841, %v3048
        %v3071 = vmul.f32 %v846, %v3048
        %v3072 = vmul.f32 %v851, %v3048
        %v3073 = vmul.f32 %v856, %v3048
        %v3074 = vmul.f32 %v861, %v3048
        %v3075 = vmul.f32 %v866, %v3048
        %v3076 = vmul.f32 %v871, %v3048
        %v3077 = vmul.f32 %v876, %v3048
        %v3078 = vmul.f32 %v881, %v3048
        %v3079 = vmul.f32 %v886, %v3048
        %v3080 = vmul.f32 %v891, %v3048
        %v3081 = vmul.f32 %v896, %v3048
        %v3082 = vmul.f32 %v901, %v3048
        %v3083 = vmul.f32 %v906, %v3048
        %v3084 = vmul.f32 %v911, %v3048
        %v3085 = vmul.f32 %v916, %v3048
        %v3086 = vmul.f32 %v921, %v3048
        %v3087 = vmul.f32 %v926, %v3048
        %v3088 = vmul.f32 %v931, %v3048
        %v3089 = vmul.f32 %v936, %v3048
        %v3091 = vsel %vm1125, %v2951, 0
        %v3094 = vsel %vm1125, %v2954, 0
        %v3097 = vsel %vm1125, %v2957, 0
        %v3100 = vsel %vm1125, %v2960, 0
        %v3103 = vsel %vm1125, %v2963, 0
        %v3106 = vsel %vm1125, %v2966, 0
        %v3109 = vsel %vm1125, %v2969, 0
        %v3112 = vsel %vm1125, %v2972, 0
        %v3115 = vsel %vm1125, %v2975, 0
        %v3118 = vsel %vm1125, %v2978, 0
        %v3121 = vsel %vm1125, %v2981, 0
        %v3124 = vsel %vm1125, %v2984, 0
        %v3127 = vsel %vm1125, %v2987, 0
        %v3130 = vsel %vm1125, %v2990, 0
        %v3133 = vsel %vm1125, %v2993, 0
        %v3136 = vsel %vm1125, %v2996, 0
        %v3139 = vsel %vm1125, %v2999, 0
        %v3142 = vsel %vm1125, %v3002, 0
        %v3145 = vsel %vm1125, %v3005, 0
        %v3148 = vsel %vm1125, %v3008, 0
        %v3151 = vsel %vm1125, %v3011, 0
        %v3154 = vsel %vm1125, %v3014, 0
        %v3157 = vsel %vm1125, %v3017, 0
        %v3160 = vsel %vm1125, %v3020, 0
        %v3163 = vsel %vm1125, %v3023, 0
        %v3166 = vsel %vm1125, %v3026, 0
        %v3169 = vsel %vm1125, %v3029, 0
        %v3172 = vsel %vm1125, %v3032, 0
        %v3175 = vsel %vm1125, %v3035, 0
        %v3178 = vsel %vm1125, %v3038, 0
        %v3181 = vsel %vm1125, %v3041, 0
        %v3184 = vsel %vm1125, %v3044, 0
        %v3187 = vsel %vm1222, %v3089, 0
        %3189 = vmatprep.subr.mxu0 0.0
        %3190 = vmatpush1.msra.mxu0 %v3049
        %3191 = vmatprep.subr.mxu0 0.0
        %3192 = vmatpush1.msra.mxu0 %v3050
        %3193 = vmatprep.subr.mxu0 0.0
        %3194 = vmatpush1.msra.mxu0 %v3051
        %3195 = vmatprep.subr.mxu0 0.0
        %3196 = vmatpush1.msra.mxu0 %v3052
        %3197 = vmatprep.subr.mxu0 0.0
        %3198 = vmatpush1.msra.mxu0 %v3053
        %3199 = vmatprep.subr.mxu0 0.0
        %3200 = vmatpush1.msra.mxu0 %v3054
        %3201 = vmatprep.subr.mxu0 0.0
        %3202 = vmatpush1.msra.mxu0 %v3055
        %3203 = vmatprep.subr.mxu0 0.0
        %3204 = vmatpush1.msra.mxu0 %v3056
        %3205 = vmatprep.subr.mxu0 0.0
        %3206 = vmatpush1.msra.mxu0 %v3057
        %3207 = vmatprep.subr.mxu0 0.0
        %3208 = vmatpush1.msra.mxu0 %v3058
        %3209 = vmatprep.subr.mxu0 0.0
        %3210 = vmatpush1.msra.mxu0 %v3059
        %3211 = vmatprep.subr.mxu0 0.0
        %3212 = vmatpush1.msra.mxu0 %v3060
        %3213 = vmatprep.subr.mxu0 0.0
        %3214 = vmatpush1.msra.mxu0 %v3061
        %3215 = vmatprep.subr.mxu0 0.0
        %3216 = vmatpush1.msra.mxu0 %v3062
        %3217 = vmatprep.subr.mxu0 0.0
        %3218 = vmatpush1.msra.mxu0 %v3063
        %3219 = vmatprep.subr.mxu0 0.0
        %3220 = vmatpush1.msra.mxu0 %v3064
        %3221 = vmatprep.subr.mxu0 0.0
        %3222 = vmatpush1.msra.mxu0 %v3065
        %3223 = vmatprep.subr.mxu0 0.0
        %3224 = vmatpush1.msra.mxu0 %v3066
        %3225 = vmatprep.subr.mxu0 0.0
        %3226 = vmatpush1.msra.mxu0 %v3067
        %3227 = vmatprep.subr.mxu0 0.0
        %3228 = vmatpush1.msra.mxu0 %v3068
        %3229 = vmatprep.subr.mxu0 0.0
        %3230 = vmatpush1.msra.mxu0 %v3069
        %3231 = vmatprep.subr.mxu0 0.0
        %3232 = vmatpush1.msra.mxu0 %v3070
        %3233 = vmatprep.subr.mxu0 0.0
        %3234 = vmatpush1.msra.mxu0 %v3071
        %3235 = vmatprep.subr.mxu0 0.0
        %3236 = vmatpush1.msra.mxu0 %v3072
        %3237 = vmatprep.subr.mxu0 0.0
        %3238 = vmatpush1.msra.mxu0 %v3073
        %3239 = vmatprep.subr.mxu0 0.0
        %3240 = vmatpush1.msra.mxu0 %v3074
        %3241 = vmatprep.subr.mxu0 0.0
        %3242 = vmatpush1.msra.mxu0 %v3075
        %3243 = vmatprep.subr.mxu0 0.0
        %3244 = vmatpush1.msra.mxu0 %v3076
        %3245 = vmatprep.subr.mxu0 0.0
        %3246 = vmatpush1.msra.mxu0 %v3077
        %3247 = vmatprep.subr.mxu0 0.0
        %3248 = vmatpush1.msra.mxu0 %v3078
        %3249 = vmatprep.subr.mxu0 0.0
        %3250 = vmatpush1.msra.mxu0 %v3079
        %3251 = vmatprep.subr.mxu0 0.0
        %3252 = vmatpush1.msra.mxu0 %v3080
        %3253 = vmatprep.mubr.f32.mxu0 %v2950
        %3254 = vmatmul.mubr.f32.gmra.mrb[0].mxu0 %v2949
        %v3255 = vpop.f32.mrb[0].mxu0
        %v3256 = vadd.f32 0.0, %v3255
        %v3257 = vpop.f32.mrb[0].mxu0
        %3258 = vmatprep.mubr.f32.mxu0 %v2953
        %3259 = vmatmul.mubr.f32.gmra.mrb[0].mxu0 %v2952
        %v3260 = vpop.f32.mrb[0].mxu0
        %v3261 = vadd.f32 0.0, %v3260
        %v3262 = vpop.f32.mrb[0].mxu0
        %3263 = vmatprep.mubr.f32.mxu0 %v2956
        %3264 = vmatmul.mubr.f32.gmra.mrb[0].mxu0 %v2955
        %v3265 = vpop.f32.mrb[0].mxu0
        %v3266 = vadd.f32 0.0, %v3265
        %v3267 = vpop.f32.mrb[0].mxu0
        %3268 = vmatprep.mubr.f32.mxu0 %v2959
        %3269 = vmatmul.mubr.f32.gmra.mrb[0].mxu0 %v2958
        %v3270 = vpop.f32.mrb[0].mxu0
        %v3271 = vadd.f32 0.0, %v3270
        %v3272 = vpop.f32.mrb[0].mxu0
        %3273 = vmatprep.mubr.f32.mxu0 %v2962
        %3274 = vmatmul.mubr.f32.gmra.mrb[0].mxu0 %v2961
        %v3275 = vpop.f32.mrb[0].mxu0
        %v3276 = vadd.f32 0.0, %v3275
        %v3277 = vpop.f32.mrb[0].mxu0
        %3278 = vmatprep.mubr.f32.mxu0 %v2965
        %3279 = vmatmul.mubr.f32.gmra.mrb[0].mxu0 %v2964
        %v3280 = vpop.f32.mrb[0].mxu0
        %v3281 = vadd.f32 0.0, %v3280
        %v3282 = vpop.f32.mrb[0].mxu0
        %3283 = vmatprep.mubr.f32.mxu0 %v2968
        %3284 = vmatmul.mubr.f32.gmra.mrb[0].mxu0 %v2967
        %v3285 = vpop.f32.mrb[0].mxu0
        %v3286 = vadd.f32 0.0, %v3285
        %v3287 = vpop.f32.mrb[0].mxu0
        %3288 = vmatprep.mubr.f32.mxu0 %v2971
        %3289 = vmatmul.mubr.f32.gmra.mrb[0].mxu0 %v2970
        %v3290 = vpop.f32.mrb[0].mxu0
        %v3291 = vadd.f32 0.0, %v3290
        %v3292 = vpop.f32.mrb[0].mxu0
        %3293 = vmatprep.mubr.f32.mxu0 %v2974
        %3294 = vmatmul.mubr.f32.gmra.mrb[0].mxu0 %v2973
        %v3295 = vpop.f32.mrb[0].mxu0
        %v3296 = vadd.f32 0.0, %v3295
        %v3297 = vpop.f32.mrb[0].mxu0
        %3298 = vmatprep.mubr.f32.mxu0 %v2977
        %3299 = vmatmul.mubr.f32.gmra.mrb[0].mxu0 %v2976
        %v3300 = vpop.f32.mrb[0].mxu0
        %v3301 = vadd.f32 0.0, %v3300
        %v3302 = vpop.f32.mrb[0].mxu0
        %3303 = vmatprep.mubr.f32.mxu0 %v2980
        %3304 = vmatmul.mubr.f32.gmra.mrb[0].mxu0 %v2979
        %v3305 = vpop.f32.mrb[0].mxu0
        %v3306 = vadd.f32 0.0, %v3305
        %v3307 = vpop.f32.mrb[0].mxu0
        %3308 = vmatprep.mubr.f32.mxu0 %v2983
        %3309 = vmatmul.mubr.f32.gmra.mrb[0].mxu0 %v2982
        %v3310 = vpop.f32.mrb[0].mxu0
        %v3311 = vadd.f32 0.0, %v3310
        %v3312 = vpop.f32.mrb[0].mxu0
        %3313 = vmatprep.mubr.f32.mxu0 %v2986
        %3314 = vmatmul.mubr.f32.gmra.mrb[0].mxu0 %v2985
        %v3315 = vpop.f32.mrb[0].mxu0
        %v3316 = vadd.f32 0.0, %v3315
        %v3317 = vpop.f32.mrb[0].mxu0
        %3318 = vmatprep.mubr.f32.mxu0 %v2989
        %3319 = vmatmul.mubr.f32.gmra.mrb[0].mxu0 %v2988
        %v3320 = vpop.f32.mrb[0].mxu0
        %v3321 = vadd.f32 0.0, %v3320
        %v3322 = vpop.f32.mrb[0].mxu0
        %3323 = vmatprep.mubr.f32.mxu0 %v2992
        %3324 = vmatmul.mubr.f32.gmra.mrb[0].mxu0 %v2991
        %v3325 = vpop.f32.mrb[0].mxu0
        %v3326 = vadd.f32 0.0, %v3325
        %v3327 = vpop.f32.mrb[0].mxu0
        %3328 = vmatprep.mubr.f32.mxu0 %v2995
        %3329 = vmatmul.mubr.f32.gmra.mrb[0].mxu0 %v2994
        %v3330 = vpop.f32.mrb[0].mxu0
        %v3331 = vadd.f32 0.0, %v3330
        %v3332 = vpop.f32.mrb[0].mxu0
        %3333 = vmatprep.mubr.f32.mxu0 %v2998
        %3334 = vmatmul.mubr.f32.gmra.mrb[0].mxu0 %v2997
        %v3335 = vpop.f32.mrb[0].mxu0
        %v3336 = vadd.f32 0.0, %v3335
        %v3337 = vpop.f32.mrb[0].mxu0
        %3338 = vmatprep.mubr.f32.mxu0 %v3001
        %3339 = vmatmul.mubr.f32.gmra.mrb[0].mxu0 %v3000
        %v3340 = vpop.f32.mrb[0].mxu0
        %v3341 = vadd.f32 0.0, %v3340
        %v3342 = vpop.f32.mrb[0].mxu0
        %3343 = vmatprep.mubr.f32.mxu0 %v3004
        %3344 = vmatmul.mubr.f32.gmra.mrb[0].mxu0 %v3003
        %v3345 = vpop.f32.mrb[0].mxu0
        %v3346 = vadd.f32 0.0, %v3345
        %v3347 = vpop.f32.mrb[0].mxu0
        %3348 = vmatprep.mubr.f32.mxu0 %v3007
        %3349 = vmatmul.mubr.f32.gmra.mrb[0].mxu0 %v3006
        %v3350 = vpop.f32.mrb[0].mxu0
        %v3351 = vadd.f32 0.0, %v3350
        %v3352 = vpop.f32.mrb[0].mxu0
        %3353 = vmatprep.mubr.f32.mxu0 %v3010
        %3354 = vmatmul.mubr.f32.gmra.mrb[0].mxu0 %v3009
        %v3355 = vpop.f32.mrb[0].mxu0
        %v3356 = vadd.f32 0.0, %v3355
        %v3357 = vpop.f32.mrb[0].mxu0
        %3358 = vmatprep.mubr.f32.mxu0 %v3013
        %3359 = vmatmul.mubr.f32.gmra.mrb[0].mxu0 %v3012
        %v3360 = vpop.f32.mrb[0].mxu0
        %v3361 = vadd.f32 0.0, %v3360
        %v3362 = vpop.f32.mrb[0].mxu0
        %3363 = vmatprep.mubr.f32.mxu0 %v3016
        %3364 = vmatmul.mubr.f32.gmra.mrb[0].mxu0 %v3015
        %v3365 = vpop.f32.mrb[0].mxu0
        %v3366 = vadd.f32 0.0, %v3365
        %v3367 = vpop.f32.mrb[0].mxu0
        %3368 = vmatprep.mubr.f32.mxu0 %v3019
        %3369 = vmatmul.mubr.f32.gmra.mrb[0].mxu0 %v3018
        %v3370 = vpop.f32.mrb[0].mxu0
        %v3371 = vadd.f32 0.0, %v3370
        %v3372 = vpop.f32.mrb[0].mxu0
        %3373 = vmatprep.mubr.f32.mxu0 %v3022
        %3374 = vmatmul.mubr.f32.gmra.mrb[0].mxu0 %v3021
        %v3375 = vpop.f32.mrb[0].mxu0
        %v3376 = vadd.f32 0.0, %v3375
        %v3377 = vpop.f32.mrb[0].mxu0
        %3378 = vmatprep.mubr.f32.mxu0 %v3025
        %3379 = vmatmul.mubr.f32.gmra.mrb[0].mxu0 %v3024
        %v3380 = vpop.f32.mrb[0].mxu0
        %v3381 = vadd.f32 0.0, %v3380
        %v3382 = vpop.f32.mrb[0].mxu0
        %3383 = vmatprep.mubr.f32.mxu0 %v3028
        %3384 = vmatmul.mubr.f32.gmra.mrb[0].mxu0 %v3027
        %v3385 = vpop.f32.mrb[0].mxu0
        %v3386 = vadd.f32 0.0, %v3385
        %v3387 = vpop.f32.mrb[0].mxu0
        %3388 = vmatprep.mubr.f32.mxu0 %v3031
        %3389 = vmatmul.mubr.f32.gmra.mrb[0].mxu0 %v3030
        %v3390 = vpop.f32.mrb[0].mxu0
        %v3391 = vadd.f32 0.0, %v3390
        %v3392 = vpop.f32.mrb[0].mxu0
        %3393 = vmatprep.mubr.f32.mxu0 %v3034
        %3394 = vmatmul.mubr.f32.gmra.mrb[0].mxu0 %v3033
        %v3395 = vpop.f32.mrb[0].mxu0
        %v3396 = vadd.f32 0.0, %v3395
        %v3397 = vpop.f32.mrb[0].mxu0
        %3398 = vmatprep.mubr.f32.mxu0 %v3037
        %3399 = vmatmul.mubr.f32.gmra.mrb[0].mxu0 %v3036
        %v3400 = vpop.f32.mrb[0].mxu0
        %v3401 = vadd.f32 0.0, %v3400
        %v3402 = vpop.f32.mrb[0].mxu0
        %3403 = vmatprep.mubr.f32.mxu0 %v3040
        %3404 = vmatmul.mubr.f32.gmra.mrb[0].mxu0 %v3039
        %v3405 = vpop.f32.mrb[0].mxu0
        %v3406 = vadd.f32 0.0, %v3405
        %v3407 = vpop.f32.mrb[0].mxu0
        %3408 = vmatprep.mubr.f32.mxu0 %v3043
        %3409 = vmatmul.mubr.f32.gmra.mrb[0].mxu0 %v3042
        %v3410 = vpop.f32.mrb[0].mxu0
        %v3411 = vadd.f32 0.0, %v3410
        %v3412 = vpop.f32.mrb[0].mxu0
        %3413 = vdwg.mxu0
        %3414 = vmatprep.subr.mxu0 0.0
        %3415 = vmatpush1.msra.mxu0 %v3081
        %3416 = vmatprep.subr.mxu0 0.0
        %3417 = vmatpush1.msra.mxu0 %v3082
        %3418 = vmatprep.subr.mxu0 0.0
        %3419 = vmatpush1.msra.mxu0 %v3083
        %3420 = vmatprep.subr.mxu0 0.0
        %3421 = vmatpush1.msra.mxu0 %v3084
        %3422 = vmatprep.subr.mxu0 0.0
        %3423 = vmatpush1.msra.mxu0 %v3085
        %3424 = vmatprep.subr.mxu0 0.0
        %3425 = vmatpush1.msra.mxu0 %v3086
        %3426 = vmatprep.subr.mxu0 0.0
        %3427 = vmatpush1.msra.mxu0 %v3087
        %3428 = vmatprep.subr.mxu0 0.0
        %3429 = vmatpush1.msra.mxu0 %v3088
        %3430 = vmatprep.subr.mxu0 0.0
        %3431 = vmatpush1.msra.mxu0 %v3187
        %3432 = vmatprep.subr.mxu0 0.0
        %3433 = vmatpush1.msra.mxu0 0.0
        %3434 = vmatprep.subr.mxu0 0.0
        %3435 = vmatpush1.msra.mxu0 0.0
        %3436 = vmatprep.subr.mxu0 0.0
        %3437 = vmatpush1.msra.mxu0 0.0
        %3438 = vmatprep.subr.mxu0 0.0
        %3439 = vmatpush1.msra.mxu0 0.0
        %3440 = vmatprep.subr.mxu0 0.0
        %3441 = vmatpush1.msra.mxu0 0.0
        %3442 = vmatprep.subr.mxu0 0.0
        %3443 = vmatpush1.msra.mxu0 0.0
        %3444 = vmatprep.subr.mxu0 0.0
        %3445 = vmatpush1.msra.mxu0 0.0
        %3446 = vmatprep.subr.mxu0 0.0
        %3447 = vmatpush1.msra.mxu0 0.0
        %3448 = vmatprep.subr.mxu0 0.0
        %3449 = vmatpush1.msra.mxu0 0.0
        %3450 = vmatprep.subr.mxu0 0.0
        %3451 = vmatpush1.msra.mxu0 0.0
        %3452 = vmatprep.subr.mxu0 0.0
        %3453 = vmatpush1.msra.mxu0 0.0
        %3454 = vmatprep.subr.mxu0 0.0
        %3455 = vmatpush1.msra.mxu0 0.0
        %3456 = vmatprep.subr.mxu0 0.0
        %3457 = vmatpush1.msra.mxu0 0.0
        %3458 = vmatprep.subr.mxu0 0.0
        %3459 = vmatpush1.msra.mxu0 0.0
        %3460 = vmatprep.subr.mxu0 0.0
        %3461 = vmatpush1.msra.mxu0 0.0
        %3462 = vmatprep.subr.mxu0 0.0
        %3463 = vmatpush1.msra.mxu0 0.0
        %3464 = vmatprep.subr.mxu0 0.0
        %3465 = vmatpush1.msra.mxu0 0.0
        %3466 = vmatprep.subr.mxu0 0.0
        %3467 = vmatpush1.msra.mxu0 0.0
        %3468 = vmatprep.subr.mxu0 0.0
        %3469 = vmatpush1.msra.mxu0 0.0
        %3470 = vmatprep.subr.mxu0 0.0
        %3471 = vmatpush1.msra.mxu0 0.0
        %3472 = vmatprep.subr.mxu0 0.0
        %3473 = vmatpush1.msra.mxu0 0.0
        %3474 = vmatprep.subr.mxu0 0.0
        %3475 = vmatpush1.msra.mxu0 0.0
        %3476 = vmatprep.subr.mxu0 0.0
        %3477 = vmatpush1.msra.mxu0 0.0
        %3478 = vmatprep.mubr.f32.mxu0 0.0
        %3479 = vmatmul.mubr.f32.gmra.mrb[0].mxu0 %v3091
        %v3480 = vpop.f32.mrb[0].mxu0
        %v3481 = vadd.f32 %v3256, %v3480
        %v3482 = vpop.f32.mrb[0].mxu0
        %3483 = vmatprep.mubr.f32.mxu0 0.0
        %3484 = vmatmul.mubr.f32.gmra.mrb[0].mxu0 %v3094
        %v3485 = vpop.f32.mrb[0].mxu0
        %v3486 = vadd.f32 %v3261, %v3485
        %v3487 = vpop.f32.mrb[0].mxu0
        %3488 = vmatprep.mubr.f32.mxu0 0.0
        %3489 = vmatmul.mubr.f32.gmra.mrb[0].mxu0 %v3097
        %v3490 = vpop.f32.mrb[0].mxu0
        %v3491 = vadd.f32 %v3266, %v3490
        %v3492 = vpop.f32.mrb[0].mxu0
        %3493 = vmatprep.mubr.f32.mxu0 0.0
        %3494 = vmatmul.mubr.f32.gmra.mrb[0].mxu0 %v3100
        %v3495 = vpop.f32.mrb[0].mxu0
        %v3496 = vadd.f32 %v3271, %v3495
        %v3497 = vpop.f32.mrb[0].mxu0
        %3498 = vmatprep.mubr.f32.mxu0 0.0
        %3499 = vmatmul.mubr.f32.gmra.mrb[0].mxu0 %v3103
        %v3500 = vpop.f32.mrb[0].mxu0
        %v3501 = vadd.f32 %v3276, %v3500
        %v3502 = vpop.f32.mrb[0].mxu0
        %3503 = vmatprep.mubr.f32.mxu0 0.0
        %3504 = vmatmul.mubr.f32.gmra.mrb[0].mxu0 %v3106
        %v3505 = vpop.f32.mrb[0].mxu0
        %v3506 = vadd.f32 %v3281, %v3505
        %v3507 = vpop.f32.mrb[0].mxu0
        %3508 = vmatprep.mubr.f32.mxu0 0.0
        %3509 = vmatmul.mubr.f32.gmra.mrb[0].mxu0 %v3109
        %v3510 = vpop.f32.mrb[0].mxu0
        %v3511 = vadd.f32 %v3286, %v3510
        %v3512 = vpop.f32.mrb[0].mxu0
        %3513 = vmatprep.mubr.f32.mxu0 0.0
        %3514 = vmatmul.mubr.f32.gmra.mrb[0].mxu0 %v3112
        %v3515 = vpop.f32.mrb[0].mxu0
        %v3516 = vadd.f32 %v3291, %v3515
        %v3517 = vpop.f32.mrb[0].mxu0
        %3518 = vmatprep.mubr.f32.mxu0 0.0
        %3519 = vmatmul.mubr.f32.gmra.mrb[0].mxu0 %v3115
        %v3520 = vpop.f32.mrb[0].mxu0
        %v3521 = vadd.f32 %v3296, %v3520
        %v3522 = vpop.f32.mrb[0].mxu0
        %3523 = vmatprep.mubr.f32.mxu0 0.0
        %3524 = vmatmul.mubr.f32.gmra.mrb[0].mxu0 %v3118
        %v3525 = vpop.f32.mrb[0].mxu0
        %v3526 = vadd.f32 %v3301, %v3525
        %v3527 = vpop.f32.mrb[0].mxu0
        %3528 = vmatprep.mubr.f32.mxu0 0.0
        %3529 = vmatmul.mubr.f32.gmra.mrb[0].mxu0 %v3121
        %v3530 = vpop.f32.mrb[0].mxu0
        %v3531 = vadd.f32 %v3306, %v3530
        %v3532 = vpop.f32.mrb[0].mxu0
        %3533 = vmatprep.mubr.f32.mxu0 0.0
        %3534 = vmatmul.mubr.f32.gmra.mrb[0].mxu0 %v3124
        %v3535 = vpop.f32.mrb[0].mxu0
        %v3536 = vadd.f32 %v3311, %v3535
        %v3537 = vpop.f32.mrb[0].mxu0
        %3538 = vmatprep.mubr.f32.mxu0 0.0
        %3539 = vmatmul.mubr.f32.gmra.mrb[0].mxu0 %v3127
        %v3540 = vpop.f32.mrb[0].mxu0
        %v3541 = vadd.f32 %v3316, %v3540
        %v3542 = vpop.f32.mrb[0].mxu0
        %3543 = vmatprep.mubr.f32.mxu0 0.0
        %3544 = vmatmul.mubr.f32.gmra.mrb[0].mxu0 %v3130
        %v3545 = vpop.f32.mrb[0].mxu0
        %v3546 = vadd.f32 %v3321, %v3545
        %v3547 = vpop.f32.mrb[0].mxu0
        %3548 = vmatprep.mubr.f32.mxu0 0.0
        %3549 = vmatmul.mubr.f32.gmra.mrb[0].mxu0 %v3133
        %v3550 = vpop.f32.mrb[0].mxu0
        %v3551 = vadd.f32 %v3326, %v3550
        %v3552 = vpop.f32.mrb[0].mxu0
        %3553 = vmatprep.mubr.f32.mxu0 0.0
        %3554 = vmatmul.mubr.f32.gmra.mrb[0].mxu0 %v3136
        %v3555 = vpop.f32.mrb[0].mxu0
        %v3556 = vadd.f32 %v3331, %v3555
        %v3557 = vpop.f32.mrb[0].mxu0
        %3558 = vmatprep.mubr.f32.mxu0 0.0
        %3559 = vmatmul.mubr.f32.gmra.mrb[0].mxu0 %v3139
        %v3560 = vpop.f32.mrb[0].mxu0
        %v3561 = vadd.f32 %v3336, %v3560
        %v3562 = vpop.f32.mrb[0].mxu0
        %3563 = vmatprep.mubr.f32.mxu0 0.0
        %3564 = vmatmul.mubr.f32.gmra.mrb[0].mxu0 %v3142
        %v3565 = vpop.f32.mrb[0].mxu0
        %v3566 = vadd.f32 %v3341, %v3565
        %v3567 = vpop.f32.mrb[0].mxu0
        %3568 = vmatprep.mubr.f32.mxu0 0.0
        %3569 = vmatmul.mubr.f32.gmra.mrb[0].mxu0 %v3145
        %v3570 = vpop.f32.mrb[0].mxu0
        %v3571 = vadd.f32 %v3346, %v3570
        %v3572 = vpop.f32.mrb[0].mxu0
        %3573 = vmatprep.mubr.f32.mxu0 0.0
        %3574 = vmatmul.mubr.f32.gmra.mrb[0].mxu0 %v3148
        %v3575 = vpop.f32.mrb[0].mxu0
        %v3576 = vadd.f32 %v3351, %v3575
        %v3577 = vpop.f32.mrb[0].mxu0
        %3578 = vmatprep.mubr.f32.mxu0 0.0
        %3579 = vmatmul.mubr.f32.gmra.mrb[0].mxu0 %v3151
        %v3580 = vpop.f32.mrb[0].mxu0
        %v3581 = vadd.f32 %v3356, %v3580
        %v3582 = vpop.f32.mrb[0].mxu0
        %3583 = vmatprep.mubr.f32.mxu0 0.0
        %3584 = vmatmul.mubr.f32.gmra.mrb[0].mxu0 %v3154
        %v3585 = vpop.f32.mrb[0].mxu0
        %v3586 = vadd.f32 %v3361, %v3585
        %v3587 = vpop.f32.mrb[0].mxu0
        %3588 = vmatprep.mubr.f32.mxu0 0.0
        %3589 = vmatmul.mubr.f32.gmra.mrb[0].mxu0 %v3157
        %v3590 = vpop.f32.mrb[0].mxu0
        %v3591 = vadd.f32 %v3366, %v3590
        %v3592 = vpop.f32.mrb[0].mxu0
        %3593 = vmatprep.mubr.f32.mxu0 0.0
        %3594 = vmatmul.mubr.f32.gmra.mrb[0].mxu0 %v3160
        %v3595 = vpop.f32.mrb[0].mxu0
        %v3596 = vadd.f32 %v3371, %v3595
        %v3597 = vpop.f32.mrb[0].mxu0
        %3598 = vmatprep.mubr.f32.mxu0 0.0
        %3599 = vmatmul.mubr.f32.gmra.mrb[0].mxu0 %v3163
        %v3600 = vpop.f32.mrb[0].mxu0
        %v3601 = vadd.f32 %v3376, %v3600
        %v3602 = vpop.f32.mrb[0].mxu0
        %3603 = vmatprep.mubr.f32.mxu0 0.0
        %3604 = vmatmul.mubr.f32.gmra.mrb[0].mxu0 %v3166
        %v3605 = vpop.f32.mrb[0].mxu0
        %v3606 = vadd.f32 %v3381, %v3605
        %v3607 = vpop.f32.mrb[0].mxu0
        %3608 = vmatprep.mubr.f32.mxu0 0.0
        %3609 = vmatmul.mubr.f32.gmra.mrb[0].mxu0 %v3169
        %v3610 = vpop.f32.mrb[0].mxu0
        %v3611 = vadd.f32 %v3386, %v3610
        %v3612 = vpop.f32.mrb[0].mxu0
        %3613 = vmatprep.mubr.f32.mxu0 0.0
        %3614 = vmatmul.mubr.f32.gmra.mrb[0].mxu0 %v3172
        %v3615 = vpop.f32.mrb[0].mxu0
        %v3616 = vadd.f32 %v3391, %v3615
        %v3617 = vpop.f32.mrb[0].mxu0
        %3618 = vmatprep.mubr.f32.mxu0 0.0
        %3619 = vmatmul.mubr.f32.gmra.mrb[0].mxu0 %v3175
        %v3620 = vpop.f32.mrb[0].mxu0
        %v3621 = vadd.f32 %v3396, %v3620
        %v3622 = vpop.f32.mrb[0].mxu0
        %3623 = vmatprep.mubr.f32.mxu0 0.0
        %3624 = vmatmul.mubr.f32.gmra.mrb[0].mxu0 %v3178
        %v3625 = vpop.f32.mrb[0].mxu0
        %v3626 = vadd.f32 %v3401, %v3625
        %v3627 = vpop.f32.mrb[0].mxu0
        %3628 = vmatprep.mubr.f32.mxu0 0.0
        %3629 = vmatmul.mubr.f32.gmra.mrb[0].mxu0 %v3181
        %v3630 = vpop.f32.mrb[0].mxu0
        %v3631 = vadd.f32 %v3406, %v3630
        %v3632 = vpop.f32.mrb[0].mxu0
        %3633 = vmatprep.mubr.f32.mxu0 0.0
        %3634 = vmatmul.mubr.f32.gmra.mrb[0].mxu0 %v3184
        %v3635 = vpop.f32.mrb[0].mxu0
        %v3636 = vadd.f32 %v3411, %v3635
        %v3637 = vpop.f32.mrb[0].mxu0
        %3638 = vdwg.mxu0
        %v3639 = vadd.f32 %v2916, %v3481
        %v3640 = vadd.f32 %v2917, %v3486
        %v3641 = vadd.f32 %v2918, %v3491
        %v3642 = vadd.f32 %v2919, %v3496
        %v3643 = vadd.f32 %v2920, %v3501
        %v3644 = vadd.f32 %v2921, %v3506
        %v3645 = vadd.f32 %v2922, %v3511
        %v3646 = vadd.f32 %v2923, %v3516
        %v3647 = vadd.f32 %v2924, %v3521
        %v3648 = vadd.f32 %v2925, %v3526
        %v3649 = vadd.f32 %v2926, %v3531
        %v3650 = vadd.f32 %v2927, %v3536
        %v3651 = vadd.f32 %v2928, %v3541
        %v3652 = vadd.f32 %v2929, %v3546
        %v3653 = vadd.f32 %v2930, %v3551
        %v3654 = vadd.f32 %v2931, %v3556
        %v3655 = vadd.f32 %v2932, %v3561
        %v3656 = vadd.f32 %v2933, %v3566
        %v3657 = vadd.f32 %v2934, %v3571
        %v3658 = vadd.f32 %v2935, %v3576
        %v3659 = vadd.f32 %v2936, %v3581
        %v3660 = vadd.f32 %v2937, %v3586
        %v3661 = vadd.f32 %v2938, %v3591
        %v3662 = vadd.f32 %v2939, %v3596
        %v3663 = vadd.f32 %v2940, %v3601
        %v3664 = vadd.f32 %v2941, %v3606
        %v3665 = vadd.f32 %v2942, %v3611
        %v3666 = vadd.f32 %v2943, %v3616
        %v3667 = vadd.f32 %v2944, %v3621
        %v3668 = vadd.f32 %v2945, %v3626
        %v3669 = vadd.f32 %v2946, %v3631
        %v3670 = vadd.f32 %v2947, %v3636
        %s3671 = scalar_lea.vmem [#allocation2], 3072
        %v3672 = vld [vmem:[%s3671] sm:$0xff]
        %v3673 = vld [vmem:[%s3671 + $0x8] sm:$0xff]
        %v3674 = vld [vmem:[%s3671 + $0x10] sm:$0xff]
        %v3675 = vld [vmem:[%s3671 + $0x18] sm:$0xff]
        %v3676 = vld [vmem:[%s3671 + $0x20] sm:$0xff]
        %v3677 = vld [vmem:[%s3671 + $0x28] sm:$0xff]
        %v3678 = vld [vmem:[%s3671 + $0x30] sm:$0xff]
        %v3679 = vld [vmem:[%s3671 + $0x38] sm:$0xff]
        %v3680 = vld [vmem:[%s3671 + $0x40] sm:$0xff]
        %v3681 = vld [vmem:[%s3671 + $0x48] sm:$0xff]
        %v3682 = vld [vmem:[%s3671 + $0x50] sm:$0xff]
        %v3683 = vld [vmem:[%s3671 + $0x58] sm:$0xff]
        %v3684 = vld [vmem:[%s3671 + $0x60] sm:$0xff]
        %v3685 = vld [vmem:[%s3671 + $0x68] sm:$0xff]
        %v3686 = vld [vmem:[%s3671 + $0x70] sm:$0xff]
        %v3687 = vld [vmem:[%s3671 + $0x78] sm:$0xff]
        %v3688 = vld [vmem:[%s3671 + $0x80] sm:$0xff]
        %v3689 = vld [vmem:[%s3671 + $0x88] sm:$0xff]
        %v3690 = vld [vmem:[%s3671 + $0x90] sm:$0xff]
        %v3691 = vld [vmem:[%s3671 + $0x98] sm:$0xff]
        %v3692 = vld [vmem:[%s3671 + $0xa0] sm:$0xff]
        %v3693 = vld [vmem:[%s3671 + $0xa8] sm:$0xff]
        %v3694 = vld [vmem:[%s3671 + $0xb0] sm:$0xff]
        %v3695 = vld [vmem:[%s3671 + $0xb8] sm:$0xff]
        %v3696 = vld [vmem:[%s3671 + $0xc0] sm:$0xff]
        %v3697 = vld [vmem:[%s3671 + $0xc8] sm:$0xff]
        %v3698 = vld [vmem:[%s3671 + $0xd0] sm:$0xff]
        %v3699 = vld [vmem:[%s3671 + $0xd8] sm:$0xff]
        %v3700 = vld [vmem:[%s3671 + $0xe0] sm:$0xff]
        %v3701 = vld [vmem:[%s3671 + $0xe8] sm:$0xff]
        %v3702 = vld [vmem:[%s3671 + $0xf0] sm:$0xff]
        %v3703 = vld [vmem:[%s3671 + $0xf8] sm:$0xff]
        %v3704 = vld [vmem:[%s3671 + $0x100] sm:$0xff]
        %v3705 = vld [vmem:[%s3671 + $0x108] sm:$0xff]
        %v3706 = vld [vmem:[%s3671 + $0x110] sm:$0xff]
        %v3707 = vld [vmem:[%s3671 + $0x118] sm:$0xff]
        %v3708 = vld [vmem:[%s3671 + $0x120] sm:$0xff]
        %v3709 = vld [vmem:[%s3671 + $0x128] sm:$0xff]
        %v3710 = vld [vmem:[%s3671 + $0x130] sm:$0xff]
        %v3711 = vld [vmem:[%s3671 + $0x138] sm:$0xff]
        %v3712 = vld [vmem:[%s3671 + $0x140] sm:$0xff]
        %v3713 = vld [vmem:[%s3671 + $0x148] sm:$0xff]
        %v3714 = vld [vmem:[%s3671 + $0x150] sm:$0xff]
        %v3715 = vld [vmem:[%s3671 + $0x158] sm:$0xff]
        %v3716 = vld [vmem:[%s3671 + $0x160] sm:$0xff]
        %v3717 = vld [vmem:[%s3671 + $0x168] sm:$0xff]
        %v3718 = vld [vmem:[%s3671 + $0x170] sm:$0xff]
        %v3719 = vld [vmem:[%s3671 + $0x178] sm:$0xff]
        %v3720 = vld [vmem:[%s3671 + $0x180] sm:$0xff]
        %v3721 = vld [vmem:[%s3671 + $0x188] sm:$0xff]
        %v3722 = vld [vmem:[%s3671 + $0x190] sm:$0xff]
        %v3723 = vld [vmem:[%s3671 + $0x198] sm:$0xff]
        %v3724 = vld [vmem:[%s3671 + $0x1a0] sm:$0xff]
        %v3725 = vld [vmem:[%s3671 + $0x1a8] sm:$0xff]
        %v3726 = vld [vmem:[%s3671 + $0x1b0] sm:$0xff]
        %v3727 = vld [vmem:[%s3671 + $0x1b8] sm:$0xff]
        %v3728 = vld [vmem:[%s3671 + $0x1c0] sm:$0xff]
        %v3729 = vld [vmem:[%s3671 + $0x1c8] sm:$0xff]
        %v3730 = vld [vmem:[%s3671 + $0x1d0] sm:$0xff]
        %v3731 = vld [vmem:[%s3671 + $0x1d8] sm:$0xff]
        %v3732 = vld [vmem:[%s3671 + $0x1e0] sm:$0xff]
        %v3733 = vld [vmem:[%s3671 + $0x1e8] sm:$0xff]
        %v3734 = vld [vmem:[%s3671 + $0x1f0] sm:$0xff]
        %v3735 = vld [vmem:[%s3671 + $0x1f8] sm:$0xff]
        %v3736 = vld [vmem:[%s3671 + $0x200] sm:$0xff]
        %v3737 = vld [vmem:[%s3671 + $0x208] sm:$0xff]
        %v3738 = vld [vmem:[%s3671 + $0x210] sm:$0xff]
        %v3739 = vld [vmem:[%s3671 + $0x218] sm:$0xff]
        %v3740 = vld [vmem:[%s3671 + $0x220] sm:$0xff]
        %v3741 = vld [vmem:[%s3671 + $0x228] sm:$0xff]
        %v3742 = vld [vmem:[%s3671 + $0x230] sm:$0xff]
        %v3743 = vld [vmem:[%s3671 + $0x238] sm:$0xff]
        %v3744 = vld [vmem:[%s3671 + $0x240] sm:$0xff]
        %v3745 = vld [vmem:[%s3671 + $0x248] sm:$0xff]
        %v3746 = vld [vmem:[%s3671 + $0x250] sm:$0xff]
        %v3747 = vld [vmem:[%s3671 + $0x258] sm:$0xff]
        %v3748 = vld [vmem:[%s3671 + $0x260] sm:$0xff]
        %v3749 = vld [vmem:[%s3671 + $0x268] sm:$0xff]
        %v3750 = vld [vmem:[%s3671 + $0x270] sm:$0xff]
        %v3751 = vld [vmem:[%s3671 + $0x278] sm:$0xff]
        %v3752 = vld [vmem:[%s3671 + $0x280] sm:$0xff]
        %v3753 = vld [vmem:[%s3671 + $0x288] sm:$0xff]
        %v3754 = vld [vmem:[%s3671 + $0x290] sm:$0xff]
        %v3755 = vld [vmem:[%s3671 + $0x298] sm:$0xff]
        %v3756 = vld [vmem:[%s3671 + $0x2a0] sm:$0xff]
        %v3757 = vld [vmem:[%s3671 + $0x2a8] sm:$0xff]
        %v3758 = vld [vmem:[%s3671 + $0x2b0] sm:$0xff]
        %v3759 = vld [vmem:[%s3671 + $0x2b8] sm:$0xff]
        %v3760 = vld [vmem:[%s3671 + $0x2c0] sm:$0xff]
        %v3761 = vld [vmem:[%s3671 + $0x2c8] sm:$0xff]
        %v3762 = vld [vmem:[%s3671 + $0x2d0] sm:$0xff]
        %v3763 = vld [vmem:[%s3671 + $0x2d8] sm:$0xff]
        %v3764 = vld [vmem:[%s3671 + $0x2e0] sm:$0xff]
        %v3765 = vld [vmem:[%s3671 + $0x2e8] sm:$0xff]
        %v3766 = vld [vmem:[%s3671 + $0x2f0] sm:$0xff]
        %v3767 = vld [vmem:[%s3671 + $0x2f8] sm:$0xff]
        %v3768 = vlaneseq
        %v3769 = vshrl.u32 %v3768, 7
        %v3770 = vsub.s32 4, %v3769
        %v3771 = vrot.slane %v635, %v3770
        %v3772 = vmul.f32 %v736, %v3771
        %v3773 = vmul.f32 %v741, %v3771
        %v3774 = vmul.f32 %v746, %v3771
        %v3775 = vmul.f32 %v751, %v3771
        %v3776 = vmul.f32 %v756, %v3771
        %v3777 = vmul.f32 %v761, %v3771
        %v3778 = vmul.f32 %v766, %v3771
        %v3779 = vmul.f32 %v771, %v3771
        %v3780 = vmul.f32 %v776, %v3771
        %v3781 = vmul.f32 %v781, %v3771
        %v3782 = vmul.f32 %v786, %v3771
        %v3783 = vmul.f32 %v791, %v3771
        %v3784 = vmul.f32 %v796, %v3771
        %v3785 = vmul.f32 %v801, %v3771
        %v3786 = vmul.f32 %v806, %v3771
        %v3787 = vmul.f32 %v811, %v3771
        %v3788 = vmul.f32 %v816, %v3771
        %v3789 = vmul.f32 %v821, %v3771
        %v3790 = vmul.f32 %v826, %v3771
        %v3791 = vmul.f32 %v831, %v3771
        %v3792 = vmul.f32 %v836, %v3771
        %v3793 = vmul.f32 %v841, %v3771
        %v3794 = vmul.f32 %v846, %v3771
        %v3795 = vmul.f32 %v851, %v3771
        %v3796 = vmul.f32 %v856, %v3771
        %v3797 = vmul.f32 %v861, %v3771
        %v3798 = vmul.f32 %v866, %v3771
        %v3799 = vmul.f32 %v871, %v3771
        %v3800 = vmul.f32 %v876, %v3771
        %v3801 = vmul.f32 %v881, %v3771
        %v3802 = vmul.f32 %v886, %v3771
        %v3803 = vmul.f32 %v891, %v3771
        %v3804 = vmul.f32 %v896, %v3771
        %v3805 = vmul.f32 %v901, %v3771
        %v3806 = vmul.f32 %v906, %v3771
        %v3807 = vmul.f32 %v911, %v3771
        %v3808 = vmul.f32 %v916, %v3771
        %v3809 = vmul.f32 %v921, %v3771
        %v3810 = vmul.f32 %v926, %v3771
        %v3811 = vmul.f32 %v931, %v3771
        %v3812 = vmul.f32 %v936, %v3771
        %v3814 = vsel %vm1125, %v3674, 0
        %v3817 = vsel %vm1125, %v3677, 0
        %v3820 = vsel %vm1125, %v3680, 0
        %v3823 = vsel %vm1125, %v3683, 0
        %v3826 = vsel %vm1125, %v3686, 0
        %v3829 = vsel %vm1125, %v3689, 0
        %v3832 = vsel %vm1125, %v3692, 0
        %v3835 = vsel %vm1125, %v3695, 0
        %v3838 = vsel %vm1125, %v3698, 0
        %v3841 = vsel %vm1125, %v3701, 0
        %v3844 = vsel %vm1125, %v3704, 0
        %v3847 = vsel %vm1125, %v3707, 0
        %v3850 = vsel %vm1125, %v3710, 0
        %v3853 = vsel %vm1125, %v3713, 0
        %v3856 = vsel %vm1125, %v3716, 0
        %v3859 = vsel %vm1125, %v3719, 0
        %v3862 = vsel %vm1125, %v3722, 0
        %v3865 = vsel %vm1125, %v3725, 0
        %v3868 = vsel %vm1125, %v3728, 0
        %v3871 = vsel %vm1125, %v3731, 0
        %v3874 = vsel %vm1125, %v3734, 0
        %v3877 = vsel %vm1125, %v3737, 0
        %v3880 = vsel %vm1125, %v3740, 0
        %v3883 = vsel %vm1125, %v3743, 0
        %v3886 = vsel %vm1125, %v3746, 0
        %v3889 = vsel %vm1125, %v3749, 0
        %v3892 = vsel %vm1125, %v3752, 0
        %v3895 = vsel %vm1125, %v3755, 0
        %v3898 = vsel %vm1125, %v3758, 0
        %v3901 = vsel %vm1125, %v3761, 0
        %v3904 = vsel %vm1125, %v3764, 0
        %v3907 = vsel %vm1125, %v3767, 0
        %v3910 = vsel %vm1222, %v3812, 0
        %3912 = vmatprep.subr.mxu0 0.0
        %3913 = vmatpush1.msra.mxu0 %v3772
        %3914 = vmatprep.subr.mxu0 0.0
        %3915 = vmatpush1.msra.mxu0 %v3773
        %3916 = vmatprep.subr.mxu0 0.0
        %3917 = vmatpush1.msra.mxu0 %v3774
        %3918 = vmatprep.subr.mxu0 0.0
        %3919 = vmatpush1.msra.mxu0 %v3775
        %3920 = vmatprep.subr.mxu0 0.0
        %3921 = vmatpush1.msra.mxu0 %v3776
        %3922 = vmatprep.subr.mxu0 0.0
        %3923 = vmatpush1.msra.mxu0 %v3777
        %3924 = vmatprep.subr.mxu0 0.0
        %3925 = vmatpush1.msra.mxu0 %v3778
        %3926 = vmatprep.subr.mxu0 0.0
        %3927 = vmatpush1.msra.mxu0 %v3779
        %3928 = vmatprep.subr.mxu0 0.0
        %3929 = vmatpush1.msra.mxu0 %v3780
        %3930 = vmatprep.subr.mxu0 0.0
        %3931 = vmatpush1.msra.mxu0 %v3781
        %3932 = vmatprep.subr.mxu0 0.0
        %3933 = vmatpush1.msra.mxu0 %v3782
        %3934 = vmatprep.subr.mxu0 0.0
        %3935 = vmatpush1.msra.mxu0 %v3783
        %3936 = vmatprep.subr.mxu0 0.0
        %3937 = vmatpush1.msra.mxu0 %v3784
        %3938 = vmatprep.subr.mxu0 0.0
        %3939 = vmatpush1.msra.mxu0 %v3785
        %3940 = vmatprep.subr.mxu0 0.0
        %3941 = vmatpush1.msra.mxu0 %v3786
        %3942 = vmatprep.subr.mxu0 0.0
        %3943 = vmatpush1.msra.mxu0 %v3787
        %3944 = vmatprep.subr.mxu0 0.0
        %3945 = vmatpush1.msra.mxu0 %v3788
        %3946 = vmatprep.subr.mxu0 0.0
        %3947 = vmatpush1.msra.mxu0 %v3789
        %3948 = vmatprep.subr.mxu0 0.0
        %3949 = vmatpush1.msra.mxu0 %v3790
        %3950 = vmatprep.subr.mxu0 0.0
        %3951 = vmatpush1.msra.mxu0 %v3791
        %3952 = vmatprep.subr.mxu0 0.0
        %3953 = vmatpush1.msra.mxu0 %v3792
        %3954 = vmatprep.subr.mxu0 0.0
        %3955 = vmatpush1.msra.mxu0 %v3793
        %3956 = vmatprep.subr.mxu0 0.0
        %3957 = vmatpush1.msra.mxu0 %v3794
        %3958 = vmatprep.subr.mxu0 0.0
        %3959 = vmatpush1.msra.mxu0 %v3795
        %3960 = vmatprep.subr.mxu0 0.0
        %3961 = vmatpush1.msra.mxu0 %v3796
        %3962 = vmatprep.subr.mxu0 0.0
        %3963 = vmatpush1.msra.mxu0 %v3797
        %3964 = vmatprep.subr.mxu0 0.0
        %3965 = vmatpush1.msra.mxu0 %v3798
        %3966 = vmatprep.subr.mxu0 0.0
        %3967 = vmatpush1.msra.mxu0 %v3799
        %3968 = vmatprep.subr.mxu0 0.0
        %3969 = vmatpush1.msra.mxu0 %v3800
        %3970 = vmatprep.subr.mxu0 0.0
        %3971 = vmatpush1.msra.mxu0 %v3801
        %3972 = vmatprep.subr.mxu0 0.0
        %3973 = vmatpush1.msra.mxu0 %v3802
        %3974 = vmatprep.subr.mxu0 0.0
        %3975 = vmatpush1.msra.mxu0 %v3803
        %3976 = vmatprep.mubr.f32.mxu0 %v3673
        %3977 = vmatmul.mubr.f32.gmra.mrb[0].mxu0 %v3672
        %v3978 = vpop.f32.mrb[0].mxu0
        %v3979 = vadd.f32 0.0, %v3978
        %v3980 = vpop.f32.mrb[0].mxu0
        %3981 = vmatprep.mubr.f32.mxu0 %v3676
        %3982 = vmatmul.mubr.f32.gmra.mrb[0].mxu0 %v3675
        %v3983 = vpop.f32.mrb[0].mxu0
        %v3984 = vadd.f32 0.0, %v3983
        %v3985 = vpop.f32.mrb[0].mxu0
        %3986 = vmatprep.mubr.f32.mxu0 %v3679
        %3987 = vmatmul.mubr.f32.gmra.mrb[0].mxu0 %v3678
        %v3988 = vpop.f32.mrb[0].mxu0
        %v3989 = vadd.f32 0.0, %v3988
        %v3990 = vpop.f32.mrb[0].mxu0
        %3991 = vmatprep.mubr.f32.mxu0 %v3682
        %3992 = vmatmul.mubr.f32.gmra.mrb[0].mxu0 %v3681
        %v3993 = vpop.f32.mrb[0].mxu0
        %v3994 = vadd.f32 0.0, %v3993
        %v3995 = vpop.f32.mrb[0].mxu0
        %3996 = vmatprep.mubr.f32.mxu0 %v3685
        %3997 = vmatmul.mubr.f32.gmra.mrb[0].mxu0 %v3684
        %v3998 = vpop.f32.mrb[0].mxu0
        %v3999 = vadd.f32 0.0, %v3998
        %v4000 = vpop.f32.mrb[0].mxu0
        %4001 = vmatprep.mubr.f32.mxu0 %v3688
        %4002 = vmatmul.mubr.f32.gmra.mrb[0].mxu0 %v3687
        %v4003 = vpop.f32.mrb[0].mxu0
        %v4004 = vadd.f32 0.0, %v4003
        %v4005 = vpop.f32.mrb[0].mxu0
        %4006 = vmatprep.mubr.f32.mxu0 %v3691
        %4007 = vmatmul.mubr.f32.gmra.mrb[0].mxu0 %v3690
        %v4008 = vpop.f32.mrb[0].mxu0
        %v4009 = vadd.f32 0.0, %v4008
        %v4010 = vpop.f32.mrb[0].mxu0
        %4011 = vmatprep.mubr.f32.mxu0 %v3694
        %4012 = vmatmul.mubr.f32.gmra.mrb[0].mxu0 %v3693
        %v4013 = vpop.f32.mrb[0].mxu0
        %v4014 = vadd.f32 0.0, %v4013
        %v4015 = vpop.f32.mrb[0].mxu0
        %4016 = vmatprep.mubr.f32.mxu0 %v3697
        %4017 = vmatmul.mubr.f32.gmra.mrb[0].mxu0 %v3696
        %v4018 = vpop.f32.mrb[0].mxu0
        %v4019 = vadd.f32 0.0, %v4018
        %v4020 = vpop.f32.mrb[0].mxu0
        %4021 = vmatprep.mubr.f32.mxu0 %v3700
        %4022 = vmatmul.mubr.f32.gmra.mrb[0].mxu0 %v3699
        %v4023 = vpop.f32.mrb[0].mxu0
        %v4024 = vadd.f32 0.0, %v4023
        %v4025 = vpop.f32.mrb[0].mxu0
        %4026 = vmatprep.mubr.f32.mxu0 %v3703
        %4027 = vmatmul.mubr.f32.gmra.mrb[0].mxu0 %v3702
        %v4028 = vpop.f32.mrb[0].mxu0
        %v4029 = vadd.f32 0.0, %v4028
        %v4030 = vpop.f32.mrb[0].mxu0
        %4031 = vmatprep.mubr.f32.mxu0 %v3706
        %4032 = vmatmul.mubr.f32.gmra.mrb[0].mxu0 %v3705
        %v4033 = vpop.f32.mrb[0].mxu0
        %v4034 = vadd.f32 0.0, %v4033
        %v4035 = vpop.f32.mrb[0].mxu0
        %4036 = vmatprep.mubr.f32.mxu0 %v3709
        %4037 = vmatmul.mubr.f32.gmra.mrb[0].mxu0 %v3708
        %v4038 = vpop.f32.mrb[0].mxu0
        %v4039 = vadd.f32 0.0, %v4038
        %v4040 = vpop.f32.mrb[0].mxu0
        %4041 = vmatprep.mubr.f32.mxu0 %v3712
        %4042 = vmatmul.mubr.f32.gmra.mrb[0].mxu0 %v3711
        %v4043 = vpop.f32.mrb[0].mxu0
        %v4044 = vadd.f32 0.0, %v4043
        %v4045 = vpop.f32.mrb[0].mxu0
        %4046 = vmatprep.mubr.f32.mxu0 %v3715
        %4047 = vmatmul.mubr.f32.gmra.mrb[0].mxu0 %v3714
        %v4048 = vpop.f32.mrb[0].mxu0
        %v4049 = vadd.f32 0.0, %v4048
        %v4050 = vpop.f32.mrb[0].mxu0
        %4051 = vmatprep.mubr.f32.mxu0 %v3718
        %4052 = vmatmul.mubr.f32.gmra.mrb[0].mxu0 %v3717
        %v4053 = vpop.f32.mrb[0].mxu0
        %v4054 = vadd.f32 0.0, %v4053
        %v4055 = vpop.f32.mrb[0].mxu0
        %4056 = vmatprep.mubr.f32.mxu0 %v3721
        %4057 = vmatmul.mubr.f32.gmra.mrb[0].mxu0 %v3720
        %v4058 = vpop.f32.mrb[0].mxu0
        %v4059 = vadd.f32 0.0, %v4058
        %v4060 = vpop.f32.mrb[0].mxu0
        %4061 = vmatprep.mubr.f32.mxu0 %v3724
        %4062 = vmatmul.mubr.f32.gmra.mrb[0].mxu0 %v3723
        %v4063 = vpop.f32.mrb[0].mxu0
        %v4064 = vadd.f32 0.0, %v4063
        %v4065 = vpop.f32.mrb[0].mxu0
        %4066 = vmatprep.mubr.f32.mxu0 %v3727
        %4067 = vmatmul.mubr.f32.gmra.mrb[0].mxu0 %v3726
        %v4068 = vpop.f32.mrb[0].mxu0
        %v4069 = vadd.f32 0.0, %v4068
        %v4070 = vpop.f32.mrb[0].mxu0
        %4071 = vmatprep.mubr.f32.mxu0 %v3730
        %4072 = vmatmul.mubr.f32.gmra.mrb[0].mxu0 %v3729
        %v4073 = vpop.f32.mrb[0].mxu0
        %v4074 = vadd.f32 0.0, %v4073
        %v4075 = vpop.f32.mrb[0].mxu0
        %4076 = vmatprep.mubr.f32.mxu0 %v3733
        %4077 = vmatmul.mubr.f32.gmra.mrb[0].mxu0 %v3732
        %v4078 = vpop.f32.mrb[0].mxu0
        %v4079 = vadd.f32 0.0, %v4078
        %v4080 = vpop.f32.mrb[0].mxu0
        %4081 = vmatprep.mubr.f32.mxu0 %v3736
        %4082 = vmatmul.mubr.f32.gmra.mrb[0].mxu0 %v3735
        %v4083 = vpop.f32.mrb[0].mxu0
        %v4084 = vadd.f32 0.0, %v4083
        %v4085 = vpop.f32.mrb[0].mxu0
        %4086 = vmatprep.mubr.f32.mxu0 %v3739
        %4087 = vmatmul.mubr.f32.gmra.mrb[0].mxu0 %v3738
        %v4088 = vpop.f32.mrb[0].mxu0
        %v4089 = vadd.f32 0.0, %v4088
        %v4090 = vpop.f32.mrb[0].mxu0
        %4091 = vmatprep.mubr.f32.mxu0 %v3742
        %4092 = vmatmul.mubr.f32.gmra.mrb[0].mxu0 %v3741
        %v4093 = vpop.f32.mrb[0].mxu0
        %v4094 = vadd.f32 0.0, %v4093
        %v4095 = vpop.f32.mrb[0].mxu0
        %4096 = vmatprep.mubr.f32.mxu0 %v3745
        %4097 = vmatmul.mubr.f32.gmra.mrb[0].mxu0 %v3744
        %v4098 = vpop.f32.mrb[0].mxu0
        %v4099 = vadd.f32 0.0, %v4098
        %v4100 = vpop.f32.mrb[0].mxu0
        %4101 = vmatprep.mubr.f32.mxu0 %v3748
        %4102 = vmatmul.mubr.f32.gmra.mrb[0].mxu0 %v3747
        %v4103 = vpop.f32.mrb[0].mxu0
        %v4104 = vadd.f32 0.0, %v4103
        %v4105 = vpop.f32.mrb[0].mxu0
        %4106 = vmatprep.mubr.f32.mxu0 %v3751
        %4107 = vmatmul.mubr.f32.gmra.mrb[0].mxu0 %v3750
        %v4108 = vpop.f32.mrb[0].mxu0
        %v4109 = vadd.f32 0.0, %v4108
        %v4110 = vpop.f32.mrb[0].mxu0
        %4111 = vmatprep.mubr.f32.mxu0 %v3754
        %4112 = vmatmul.mubr.f32.gmra.mrb[0].mxu0 %v3753
        %v4113 = vpop.f32.mrb[0].mxu0
        %v4114 = vadd.f32 0.0, %v4113
        %v4115 = vpop.f32.mrb[0].mxu0
        %4116 = vmatprep.mubr.f32.mxu0 %v3757
        %4117 = vmatmul.mubr.f32.gmra.mrb[0].mxu0 %v3756
        %v4118 = vpop.f32.mrb[0].mxu0
        %v4119 = vadd.f32 0.0, %v4118
        %v4120 = vpop.f32.mrb[0].mxu0
        %4121 = vmatprep.mubr.f32.mxu0 %v3760
        %4122 = vmatmul.mubr.f32.gmra.mrb[0].mxu0 %v3759
        %v4123 = vpop.f32.mrb[0].mxu0
        %v4124 = vadd.f32 0.0, %v4123
        %v4125 = vpop.f32.mrb[0].mxu0
        %4126 = vmatprep.mubr.f32.mxu0 %v3763
        %4127 = vmatmul.mubr.f32.gmra.mrb[0].mxu0 %v3762
        %v4128 = vpop.f32.mrb[0].mxu0
        %v4129 = vadd.f32 0.0, %v4128
        %v4130 = vpop.f32.mrb[0].mxu0
        %4131 = vmatprep.mubr.f32.mxu0 %v3766
        %4132 = vmatmul.mubr.f32.gmra.mrb[0].mxu0 %v3765
        %v4133 = vpop.f32.mrb[0].mxu0
        %v4134 = vadd.f32 0.0, %v4133
        %v4135 = vpop.f32.mrb[0].mxu0
        %4136 = vdwg.mxu0
        %4137 = vmatprep.subr.mxu0 0.0
        %4138 = vmatpush1.msra.mxu0 %v3804
        %4139 = vmatprep.subr.mxu0 0.0
        %4140 = vmatpush1.msra.mxu0 %v3805
        %4141 = vmatprep.subr.mxu0 0.0
        %4142 = vmatpush1.msra.mxu0 %v3806
        %4143 = vmatprep.subr.mxu0 0.0
        %4144 = vmatpush1.msra.mxu0 %v3807
        %4145 = vmatprep.subr.mxu0 0.0
        %4146 = vmatpush1.msra.mxu0 %v3808
        %4147 = vmatprep.subr.mxu0 0.0
        %4148 = vmatpush1.msra.mxu0 %v3809
        %4149 = vmatprep.subr.mxu0 0.0
        %4150 = vmatpush1.msra.mxu0 %v3810
        %4151 = vmatprep.subr.mxu0 0.0
        %4152 = vmatpush1.msra.mxu0 %v3811
        %4153 = vmatprep.subr.mxu0 0.0
        %4154 = vmatpush1.msra.mxu0 %v3910
        %4155 = vmatprep.subr.mxu0 0.0
        %4156 = vmatpush1.msra.mxu0 0.0
        %4157 = vmatprep.subr.mxu0 0.0
        %4158 = vmatpush1.msra.mxu0 0.0
        %4159 = vmatprep.subr.mxu0 0.0
        %4160 = vmatpush1.msra.mxu0 0.0
        %4161 = vmatprep.subr.mxu0 0.0
        %4162 = vmatpush1.msra.mxu0 0.0
        %4163 = vmatprep.subr.mxu0 0.0
        %4164 = vmatpush1.msra.mxu0 0.0
        %4165 = vmatprep.subr.mxu0 0.0
        %4166 = vmatpush1.msra.mxu0 0.0
        %4167 = vmatprep.subr.mxu0 0.0
        %4168 = vmatpush1.msra.mxu0 0.0
        %4169 = vmatprep.subr.mxu0 0.0
        %4170 = vmatpush1.msra.mxu0 0.0
        %4171 = vmatprep.subr.mxu0 0.0
        %4172 = vmatpush1.msra.mxu0 0.0
        %4173 = vmatprep.subr.mxu0 0.0
        %4174 = vmatpush1.msra.mxu0 0.0
        %4175 = vmatprep.subr.mxu0 0.0
        %4176 = vmatpush1.msra.mxu0 0.0
        %4177 = vmatprep.subr.mxu0 0.0
        %4178 = vmatpush1.msra.mxu0 0.0
        %4179 = vmatprep.subr.mxu0 0.0
        %4180 = vmatpush1.msra.mxu0 0.0
        %4181 = vmatprep.subr.mxu0 0.0
        %4182 = vmatpush1.msra.mxu0 0.0
        %4183 = vmatprep.subr.mxu0 0.0
        %4184 = vmatpush1.msra.mxu0 0.0
        %4185 = vmatprep.subr.mxu0 0.0
        %4186 = vmatpush1.msra.mxu0 0.0
        %4187 = vmatprep.subr.mxu0 0.0
        %4188 = vmatpush1.msra.mxu0 0.0
        %4189 = vmatprep.subr.mxu0 0.0
        %4190 = vmatpush1.msra.mxu0 0.0
        %4191 = vmatprep.subr.mxu0 0.0
        %4192 = vmatpush1.msra.mxu0 0.0
        %4193 = vmatprep.subr.mxu0 0.0
        %4194 = vmatpush1.msra.mxu0 0.0
        %4195 = vmatprep.subr.mxu0 0.0
        %4196 = vmatpush1.msra.mxu0 0.0
        %4197 = vmatprep.subr.mxu0 0.0
        %4198 = vmatpush1.msra.mxu0 0.0
        %4199 = vmatprep.subr.mxu0 0.0
        %4200 = vmatpush1.msra.mxu0 0.0
        %4201 = vmatprep.mubr.f32.mxu0 0.0
        %4202 = vmatmul.mubr.f32.gmra.mrb[0].mxu0 %v3814
        %v4203 = vpop.f32.mrb[0].mxu0
        %v4204 = vadd.f32 %v3979, %v4203
        %v4205 = vpop.f32.mrb[0].mxu0
        %4206 = vmatprep.mubr.f32.mxu0 0.0
        %4207 = vmatmul.mubr.f32.gmra.mrb[0].mxu0 %v3817
        %v4208 = vpop.f32.mrb[0].mxu0
        %v4209 = vadd.f32 %v3984, %v4208
        %v4210 = vpop.f32.mrb[0].mxu0
        %4211 = vmatprep.mubr.f32.mxu0 0.0
        %4212 = vmatmul.mubr.f32.gmra.mrb[0].mxu0 %v3820
        %v4213 = vpop.f32.mrb[0].mxu0
        %v4214 = vadd.f32 %v3989, %v4213
        %v4215 = vpop.f32.mrb[0].mxu0
        %4216 = vmatprep.mubr.f32.mxu0 0.0
        %4217 = vmatmul.mubr.f32.gmra.mrb[0].mxu0 %v3823
        %v4218 = vpop.f32.mrb[0].mxu0
        %v4219 = vadd.f32 %v3994, %v4218
        %v4220 = vpop.f32.mrb[0].mxu0
        %4221 = vmatprep.mubr.f32.mxu0 0.0
        %4222 = vmatmul.mubr.f32.gmra.mrb[0].mxu0 %v3826
        %v4223 = vpop.f32.mrb[0].mxu0
        %v4224 = vadd.f32 %v3999, %v4223
        %v4225 = vpop.f32.mrb[0].mxu0
        %4226 = vmatprep.mubr.f32.mxu0 0.0
        %4227 = vmatmul.mubr.f32.gmra.mrb[0].mxu0 %v3829
        %v4228 = vpop.f32.mrb[0].mxu0
        %v4229 = vadd.f32 %v4004, %v4228
        %v4230 = vpop.f32.mrb[0].mxu0
        %4231 = vmatprep.mubr.f32.mxu0 0.0
        %4232 = vmatmul.mubr.f32.gmra.mrb[0].mxu0 %v3832
        %v4233 = vpop.f32.mrb[0].mxu0
        %v4234 = vadd.f32 %v4009, %v4233
        %v4235 = vpop.f32.mrb[0].mxu0
        %4236 = vmatprep.mubr.f32.mxu0 0.0
        %4237 = vmatmul.mubr.f32.gmra.mrb[0].mxu0 %v3835
        %v4238 = vpop.f32.mrb[0].mxu0
        %v4239 = vadd.f32 %v4014, %v4238
        %v4240 = vpop.f32.mrb[0].mxu0
        %4241 = vmatprep.mubr.f32.mxu0 0.0
        %4242 = vmatmul.mubr.f32.gmra.mrb[0].mxu0 %v3838
        %v4243 = vpop.f32.mrb[0].mxu0
        %v4244 = vadd.f32 %v4019, %v4243
        %v4245 = vpop.f32.mrb[0].mxu0
        %4246 = vmatprep.mubr.f32.mxu0 0.0
        %4247 = vmatmul.mubr.f32.gmra.mrb[0].mxu0 %v3841
        %v4248 = vpop.f32.mrb[0].mxu0
        %v4249 = vadd.f32 %v4024, %v4248
        %v4250 = vpop.f32.mrb[0].mxu0
        %4251 = vmatprep.mubr.f32.mxu0 0.0
        %4252 = vmatmul.mubr.f32.gmra.mrb[0].mxu0 %v3844
        %v4253 = vpop.f32.mrb[0].mxu0
        %v4254 = vadd.f32 %v4029, %v4253
        %v4255 = vpop.f32.mrb[0].mxu0
        %4256 = vmatprep.mubr.f32.mxu0 0.0
        %4257 = vmatmul.mubr.f32.gmra.mrb[0].mxu0 %v3847
        %v4258 = vpop.f32.mrb[0].mxu0
        %v4259 = vadd.f32 %v4034, %v4258
        %v4260 = vpop.f32.mrb[0].mxu0
        %4261 = vmatprep.mubr.f32.mxu0 0.0
        %4262 = vmatmul.mubr.f32.gmra.mrb[0].mxu0 %v3850
        %v4263 = vpop.f32.mrb[0].mxu0
        %v4264 = vadd.f32 %v4039, %v4263
        %v4265 = vpop.f32.mrb[0].mxu0
        %4266 = vmatprep.mubr.f32.mxu0 0.0
        %4267 = vmatmul.mubr.f32.gmra.mrb[0].mxu0 %v3853
        %v4268 = vpop.f32.mrb[0].mxu0
        %v4269 = vadd.f32 %v4044, %v4268
        %v4270 = vpop.f32.mrb[0].mxu0
        %4271 = vmatprep.mubr.f32.mxu0 0.0
        %4272 = vmatmul.mubr.f32.gmra.mrb[0].mxu0 %v3856
        %v4273 = vpop.f32.mrb[0].mxu0
        %v4274 = vadd.f32 %v4049, %v4273
        %v4275 = vpop.f32.mrb[0].mxu0
        %4276 = vmatprep.mubr.f32.mxu0 0.0
        %4277 = vmatmul.mubr.f32.gmra.mrb[0].mxu0 %v3859
        %v4278 = vpop.f32.mrb[0].mxu0
        %v4279 = vadd.f32 %v4054, %v4278
        %v4280 = vpop.f32.mrb[0].mxu0
        %4281 = vmatprep.mubr.f32.mxu0 0.0
        %4282 = vmatmul.mubr.f32.gmra.mrb[0].mxu0 %v3862
        %v4283 = vpop.f32.mrb[0].mxu0
        %v4284 = vadd.f32 %v4059, %v4283
        %v4285 = vpop.f32.mrb[0].mxu0
        %4286 = vmatprep.mubr.f32.mxu0 0.0
        %4287 = vmatmul.mubr.f32.gmra.mrb[0].mxu0 %v3865
        %v4288 = vpop.f32.mrb[0].mxu0
        %v4289 = vadd.f32 %v4064, %v4288
        %v4290 = vpop.f32.mrb[0].mxu0
        %4291 = vmatprep.mubr.f32.mxu0 0.0
        %4292 = vmatmul.mubr.f32.gmra.mrb[0].mxu0 %v3868
        %v4293 = vpop.f32.mrb[0].mxu0
        %v4294 = vadd.f32 %v4069, %v4293
        %v4295 = vpop.f32.mrb[0].mxu0
        %4296 = vmatprep.mubr.f32.mxu0 0.0
        %4297 = vmatmul.mubr.f32.gmra.mrb[0].mxu0 %v3871
        %v4298 = vpop.f32.mrb[0].mxu0
        %v4299 = vadd.f32 %v4074, %v4298
        %v4300 = vpop.f32.mrb[0].mxu0
        %4301 = vmatprep.mubr.f32.mxu0 0.0
        %4302 = vmatmul.mubr.f32.gmra.mrb[0].mxu0 %v3874
        %v4303 = vpop.f32.mrb[0].mxu0
        %v4304 = vadd.f32 %v4079, %v4303
        %v4305 = vpop.f32.mrb[0].mxu0
        %4306 = vmatprep.mubr.f32.mxu0 0.0
        %4307 = vmatmul.mubr.f32.gmra.mrb[0].mxu0 %v3877
        %v4308 = vpop.f32.mrb[0].mxu0
        %v4309 = vadd.f32 %v4084, %v4308
        %v4310 = vpop.f32.mrb[0].mxu0
        %4311 = vmatprep.mubr.f32.mxu0 0.0
        %4312 = vmatmul.mubr.f32.gmra.mrb[0].mxu0 %v3880
        %v4313 = vpop.f32.mrb[0].mxu0
        %v4314 = vadd.f32 %v4089, %v4313
        %v4315 = vpop.f32.mrb[0].mxu0
        %4316 = vmatprep.mubr.f32.mxu0 0.0
        %4317 = vmatmul.mubr.f32.gmra.mrb[0].mxu0 %v3883
        %v4318 = vpop.f32.mrb[0].mxu0
        %v4319 = vadd.f32 %v4094, %v4318
        %v4320 = vpop.f32.mrb[0].mxu0
        %4321 = vmatprep.mubr.f32.mxu0 0.0
        %4322 = vmatmul.mubr.f32.gmra.mrb[0].mxu0 %v3886
        %v4323 = vpop.f32.mrb[0].mxu0
        %v4324 = vadd.f32 %v4099, %v4323
        %v4325 = vpop.f32.mrb[0].mxu0
        %4326 = vmatprep.mubr.f32.mxu0 0.0
        %4327 = vmatmul.mubr.f32.gmra.mrb[0].mxu0 %v3889
        %v4328 = vpop.f32.mrb[0].mxu0
        %v4329 = vadd.f32 %v4104, %v4328
        %v4330 = vpop.f32.mrb[0].mxu0
        %4331 = vmatprep.mubr.f32.mxu0 0.0
        %4332 = vmatmul.mubr.f32.gmra.mrb[0].mxu0 %v3892
        %v4333 = vpop.f32.mrb[0].mxu0
        %v4334 = vadd.f32 %v4109, %v4333
        %v4335 = vpop.f32.mrb[0].mxu0
        %4336 = vmatprep.mubr.f32.mxu0 0.0
        %4337 = vmatmul.mubr.f32.gmra.mrb[0].mxu0 %v3895
        %v4338 = vpop.f32.mrb[0].mxu0
        %v4339 = vadd.f32 %v4114, %v4338
        %v4340 = vpop.f32.mrb[0].mxu0
        %4341 = vmatprep.mubr.f32.mxu0 0.0
        %4342 = vmatmul.mubr.f32.gmra.mrb[0].mxu0 %v3898
        %v4343 = vpop.f32.mrb[0].mxu0
        %v4344 = vadd.f32 %v4119, %v4343
        %v4345 = vpop.f32.mrb[0].mxu0
        %4346 = vmatprep.mubr.f32.mxu0 0.0
        %4347 = vmatmul.mubr.f32.gmra.mrb[0].mxu0 %v3901
        %v4348 = vpop.f32.mrb[0].mxu0
        %v4349 = vadd.f32 %v4124, %v4348
        %v4350 = vpop.f32.mrb[0].mxu0
        %4351 = vmatprep.mubr.f32.mxu0 0.0
        %4352 = vmatmul.mubr.f32.gmra.mrb[0].mxu0 %v3904
        %v4353 = vpop.f32.mrb[0].mxu0
        %v4354 = vadd.f32 %v4129, %v4353
        %v4355 = vpop.f32.mrb[0].mxu0
        %4356 = vmatprep.mubr.f32.mxu0 0.0
        %4357 = vmatmul.mubr.f32.gmra.mrb[0].mxu0 %v3907
        %v4358 = vpop.f32.mrb[0].mxu0
        %v4359 = vadd.f32 %v4134, %v4358
        %v4360 = vpop.f32.mrb[0].mxu0
        %4361 = vdwg.mxu0
        %v4362 = vadd.f32 %v3639, %v4204
        %v4363 = vadd.f32 %v3640, %v4209
        %v4364 = vadd.f32 %v3641, %v4214
        %v4365 = vadd.f32 %v3642, %v4219
        %v4366 = vadd.f32 %v3643, %v4224
        %v4367 = vadd.f32 %v3644, %v4229
        %v4368 = vadd.f32 %v3645, %v4234
        %v4369 = vadd.f32 %v3646, %v4239
        %v4370 = vadd.f32 %v3647, %v4244
        %v4371 = vadd.f32 %v3648, %v4249
        %v4372 = vadd.f32 %v3649, %v4254
        %v4373 = vadd.f32 %v3650, %v4259
        %v4374 = vadd.f32 %v3651, %v4264
        %v4375 = vadd.f32 %v3652, %v4269
        %v4376 = vadd.f32 %v3653, %v4274
        %v4377 = vadd.f32 %v3654, %v4279
        %v4378 = vadd.f32 %v3655, %v4284
        %v4379 = vadd.f32 %v3656, %v4289
        %v4380 = vadd.f32 %v3657, %v4294
        %v4381 = vadd.f32 %v3658, %v4299
        %v4382 = vadd.f32 %v3659, %v4304
        %v4383 = vadd.f32 %v3660, %v4309
        %v4384 = vadd.f32 %v3661, %v4314
        %v4385 = vadd.f32 %v3662, %v4319
        %v4386 = vadd.f32 %v3663, %v4324
        %v4387 = vadd.f32 %v3664, %v4329
        %v4388 = vadd.f32 %v3665, %v4334
        %v4389 = vadd.f32 %v3666, %v4339
        %v4390 = vadd.f32 %v3667, %v4344
        %v4391 = vadd.f32 %v3668, %v4349
        %v4392 = vadd.f32 %v3669, %v4354
        %v4393 = vadd.f32 %v3670, %v4359
        %s4394 = scalar_lea.vmem [#allocation2], 3840
        %v4395 = vld [vmem:[%s4394] sm:$0xff]
        %v4396 = vld [vmem:[%s4394 + $0x8] sm:$0xff]
        %v4397 = vld [vmem:[%s4394 + $0x10] sm:$0xff]
        %v4398 = vld [vmem:[%s4394 + $0x18] sm:$0xff]
        %v4399 = vld [vmem:[%s4394 + $0x20] sm:$0xff]
        %v4400 = vld [vmem:[%s4394 + $0x28] sm:$0xff]
        %v4401 = vld [vmem:[%s4394 + $0x30] sm:$0xff]
        %v4402 = vld [vmem:[%s4394 + $0x38] sm:$0xff]
        %v4403 = vld [vmem:[%s4394 + $0x40] sm:$0xff]
        %v4404 = vld [vmem:[%s4394 + $0x48] sm:$0xff]
        %v4405 = vld [vmem:[%s4394 + $0x50] sm:$0xff]
        %v4406 = vld [vmem:[%s4394 + $0x58] sm:$0xff]
        %v4407 = vld [vmem:[%s4394 + $0x60] sm:$0xff]
        %v4408 = vld [vmem:[%s4394 + $0x68] sm:$0xff]
        %v4409 = vld [vmem:[%s4394 + $0x70] sm:$0xff]
        %v4410 = vld [vmem:[%s4394 + $0x78] sm:$0xff]
        %v4411 = vld [vmem:[%s4394 + $0x80] sm:$0xff]
        %v4412 = vld [vmem:[%s4394 + $0x88] sm:$0xff]
        %v4413 = vld [vmem:[%s4394 + $0x90] sm:$0xff]
        %v4414 = vld [vmem:[%s4394 + $0x98] sm:$0xff]
        %v4415 = vld [vmem:[%s4394 + $0xa0] sm:$0xff]
        %v4416 = vld [vmem:[%s4394 + $0xa8] sm:$0xff]
        %v4417 = vld [vmem:[%s4394 + $0xb0] sm:$0xff]
        %v4418 = vld [vmem:[%s4394 + $0xb8] sm:$0xff]
        %v4419 = vld [vmem:[%s4394 + $0xc0] sm:$0xff]
        %v4420 = vld [vmem:[%s4394 + $0xc8] sm:$0xff]
        %v4421 = vld [vmem:[%s4394 + $0xd0] sm:$0xff]
        %v4422 = vld [vmem:[%s4394 + $0xd8] sm:$0xff]
        %v4423 = vld [vmem:[%s4394 + $0xe0] sm:$0xff]
        %v4424 = vld [vmem:[%s4394 + $0xe8] sm:$0xff]
        %v4425 = vld [vmem:[%s4394 + $0xf0] sm:$0xff]
        %v4426 = vld [vmem:[%s4394 + $0xf8] sm:$0xff]
        %v4427 = vld [vmem:[%s4394 + $0x100] sm:$0xff]
        %v4428 = vld [vmem:[%s4394 + $0x108] sm:$0xff]
        %v4429 = vld [vmem:[%s4394 + $0x110] sm:$0xff]
        %v4430 = vld [vmem:[%s4394 + $0x118] sm:$0xff]
        %v4431 = vld [vmem:[%s4394 + $0x120] sm:$0xff]
        %v4432 = vld [vmem:[%s4394 + $0x128] sm:$0xff]
        %v4433 = vld [vmem:[%s4394 + $0x130] sm:$0xff]
        %v4434 = vld [vmem:[%s4394 + $0x138] sm:$0xff]
        %v4435 = vld [vmem:[%s4394 + $0x140] sm:$0xff]
        %v4436 = vld [vmem:[%s4394 + $0x148] sm:$0xff]
        %v4437 = vld [vmem:[%s4394 + $0x150] sm:$0xff]
        %v4438 = vld [vmem:[%s4394 + $0x158] sm:$0xff]
        %v4439 = vld [vmem:[%s4394 + $0x160] sm:$0xff]
        %v4440 = vld [vmem:[%s4394 + $0x168] sm:$0xff]
        %v4441 = vld [vmem:[%s4394 + $0x170] sm:$0xff]
        %v4442 = vld [vmem:[%s4394 + $0x178] sm:$0xff]
        %v4443 = vld [vmem:[%s4394 + $0x180] sm:$0xff]
        %v4444 = vld [vmem:[%s4394 + $0x188] sm:$0xff]
        %v4445 = vld [vmem:[%s4394 + $0x190] sm:$0xff]
        %v4446 = vld [vmem:[%s4394 + $0x198] sm:$0xff]
        %v4447 = vld [vmem:[%s4394 + $0x1a0] sm:$0xff]
        %v4448 = vld [vmem:[%s4394 + $0x1a8] sm:$0xff]
        %v4449 = vld [vmem:[%s4394 + $0x1b0] sm:$0xff]
        %v4450 = vld [vmem:[%s4394 + $0x1b8] sm:$0xff]
        %v4451 = vld [vmem:[%s4394 + $0x1c0] sm:$0xff]
        %v4452 = vld [vmem:[%s4394 + $0x1c8] sm:$0xff]
        %v4453 = vld [vmem:[%s4394 + $0x1d0] sm:$0xff]
        %v4454 = vld [vmem:[%s4394 + $0x1d8] sm:$0xff]
        %v4455 = vld [vmem:[%s4394 + $0x1e0] sm:$0xff]
        %v4456 = vld [vmem:[%s4394 + $0x1e8] sm:$0xff]
        %v4457 = vld [vmem:[%s4394 + $0x1f0] sm:$0xff]
        %v4458 = vld [vmem:[%s4394 + $0x1f8] sm:$0xff]
        %v4459 = vld [vmem:[%s4394 + $0x200] sm:$0xff]
        %v4460 = vld [vmem:[%s4394 + $0x208] sm:$0xff]
        %v4461 = vld [vmem:[%s4394 + $0x210] sm:$0xff]
        %v4462 = vld [vmem:[%s4394 + $0x218] sm:$0xff]
        %v4463 = vld [vmem:[%s4394 + $0x220] sm:$0xff]
        %v4464 = vld [vmem:[%s4394 + $0x228] sm:$0xff]
        %v4465 = vld [vmem:[%s4394 + $0x230] sm:$0xff]
        %v4466 = vld [vmem:[%s4394 + $0x238] sm:$0xff]
        %v4467 = vld [vmem:[%s4394 + $0x240] sm:$0xff]
        %v4468 = vld [vmem:[%s4394 + $0x248] sm:$0xff]
        %v4469 = vld [vmem:[%s4394 + $0x250] sm:$0xff]
        %v4470 = vld [vmem:[%s4394 + $0x258] sm:$0xff]
        %v4471 = vld [vmem:[%s4394 + $0x260] sm:$0xff]
        %v4472 = vld [vmem:[%s4394 + $0x268] sm:$0xff]
        %v4473 = vld [vmem:[%s4394 + $0x270] sm:$0xff]
        %v4474 = vld [vmem:[%s4394 + $0x278] sm:$0xff]
        %v4475 = vld [vmem:[%s4394 + $0x280] sm:$0xff]
        %v4476 = vld [vmem:[%s4394 + $0x288] sm:$0xff]
        %v4477 = vld [vmem:[%s4394 + $0x290] sm:$0xff]
        %v4478 = vld [vmem:[%s4394 + $0x298] sm:$0xff]
        %v4479 = vld [vmem:[%s4394 + $0x2a0] sm:$0xff]
        %v4480 = vld [vmem:[%s4394 + $0x2a8] sm:$0xff]
        %v4481 = vld [vmem:[%s4394 + $0x2b0] sm:$0xff]
        %v4482 = vld [vmem:[%s4394 + $0x2b8] sm:$0xff]
        %v4483 = vld [vmem:[%s4394 + $0x2c0] sm:$0xff]
        %v4484 = vld [vmem:[%s4394 + $0x2c8] sm:$0xff]
        %v4485 = vld [vmem:[%s4394 + $0x2d0] sm:$0xff]
        %v4486 = vld [vmem:[%s4394 + $0x2d8] sm:$0xff]
        %v4487 = vld [vmem:[%s4394 + $0x2e0] sm:$0xff]
        %v4488 = vld [vmem:[%s4394 + $0x2e8] sm:$0xff]
        %v4489 = vld [vmem:[%s4394 + $0x2f0] sm:$0xff]
        %v4490 = vld [vmem:[%s4394 + $0x2f8] sm:$0xff]
        %v4491 = vlaneseq
        %v4492 = vshrl.u32 %v4491, 7
        %v4493 = vsub.s32 5, %v4492
        %v4494 = vrot.slane %v635, %v4493
        %v4495 = vmul.f32 %v736, %v4494
        %v4496 = vmul.f32 %v741, %v4494
        %v4497 = vmul.f32 %v746, %v4494
        %v4498 = vmul.f32 %v751, %v4494
        %v4499 = vmul.f32 %v756, %v4494
        %v4500 = vmul.f32 %v761, %v4494
        %v4501 = vmul.f32 %v766, %v4494
        %v4502 = vmul.f32 %v771, %v4494
        %v4503 = vmul.f32 %v776, %v4494
        %v4504 = vmul.f32 %v781, %v4494
        %v4505 = vmul.f32 %v786, %v4494
        %v4506 = vmul.f32 %v791, %v4494
        %v4507 = vmul.f32 %v796, %v4494
        %v4508 = vmul.f32 %v801, %v4494
        %v4509 = vmul.f32 %v806, %v4494
        %v4510 = vmul.f32 %v811, %v4494
        %v4511 = vmul.f32 %v816, %v4494
        %v4512 = vmul.f32 %v821, %v4494
        %v4513 = vmul.f32 %v826, %v4494
        %v4514 = vmul.f32 %v831, %v4494
        %v4515 = vmul.f32 %v836, %v4494
        %v4516 = vmul.f32 %v841, %v4494
        %v4517 = vmul.f32 %v846, %v4494
        %v4518 = vmul.f32 %v851, %v4494
        %v4519 = vmul.f32 %v856, %v4494
        %v4520 = vmul.f32 %v861, %v4494
        %v4521 = vmul.f32 %v866, %v4494
        %v4522 = vmul.f32 %v871, %v4494
        %v4523 = vmul.f32 %v876, %v4494
        %v4524 = vmul.f32 %v881, %v4494
        %v4525 = vmul.f32 %v886, %v4494
        %v4526 = vmul.f32 %v891, %v4494
        %v4527 = vmul.f32 %v896, %v4494
        %v4528 = vmul.f32 %v901, %v4494
        %v4529 = vmul.f32 %v906, %v4494
        %v4530 = vmul.f32 %v911, %v4494
        %v4531 = vmul.f32 %v916, %v4494
        %v4532 = vmul.f32 %v921, %v4494
        %v4533 = vmul.f32 %v926, %v4494
        %v4534 = vmul.f32 %v931, %v4494
        %v4535 = vmul.f32 %v936, %v4494
        %v4537 = vsel %vm1125, %v4397, 0
        %v4540 = vsel %vm1125, %v4400, 0
        %v4543 = vsel %vm1125, %v4403, 0
        %v4546 = vsel %vm1125, %v4406, 0
        %v4549 = vsel %vm1125, %v4409, 0
        %v4552 = vsel %vm1125, %v4412, 0
        %v4555 = vsel %vm1125, %v4415, 0
        %v4558 = vsel %vm1125, %v4418, 0
        %v4561 = vsel %vm1125, %v4421, 0
        %v4564 = vsel %vm1125, %v4424, 0
        %v4567 = vsel %vm1125, %v4427, 0
        %v4570 = vsel %vm1125, %v4430, 0
        %v4573 = vsel %vm1125, %v4433, 0
        %v4576 = vsel %vm1125, %v4436, 0
        %v4579 = vsel %vm1125, %v4439, 0
        %v4582 = vsel %vm1125, %v4442, 0
        %v4585 = vsel %vm1125, %v4445, 0
        %v4588 = vsel %vm1125, %v4448, 0
        %v4591 = vsel %vm1125, %v4451, 0
        %v4594 = vsel %vm1125, %v4454, 0
        %v4597 = vsel %vm1125, %v4457, 0
        %v4600 = vsel %vm1125, %v4460, 0
        %v4603 = vsel %vm1125, %v4463, 0
        %v4606 = vsel %vm1125, %v4466, 0
        %v4609 = vsel %vm1125, %v4469, 0
        %v4612 = vsel %vm1125, %v4472, 0
        %v4615 = vsel %vm1125, %v4475, 0
        %v4618 = vsel %vm1125, %v4478, 0
        %v4621 = vsel %vm1125, %v4481, 0
        %v4624 = vsel %vm1125, %v4484, 0
        %v4627 = vsel %vm1125, %v4487, 0
        %v4630 = vsel %vm1125, %v4490, 0
        %v4633 = vsel %vm1222, %v4535, 0
        %4635 = vmatprep.subr.mxu0 0.0
        %4636 = vmatpush1.msra.mxu0 %v4495
        %4637 = vmatprep.subr.mxu0 0.0
        %4638 = vmatpush1.msra.mxu0 %v4496
        %4639 = vmatprep.subr.mxu0 0.0
        %4640 = vmatpush1.msra.mxu0 %v4497
        %4641 = vmatprep.subr.mxu0 0.0
        %4642 = vmatpush1.msra.mxu0 %v4498
        %4643 = vmatprep.subr.mxu0 0.0
        %4644 = vmatpush1.msra.mxu0 %v4499
        %4645 = vmatprep.subr.mxu0 0.0
        %4646 = vmatpush1.msra.mxu0 %v4500
        %4647 = vmatprep.subr.mxu0 0.0
        %4648 = vmatpush1.msra.mxu0 %v4501
        %4649 = vmatprep.subr.mxu0 0.0
        %4650 = vmatpush1.msra.mxu0 %v4502
        %4651 = vmatprep.subr.mxu0 0.0
        %4652 = vmatpush1.msra.mxu0 %v4503
        %4653 = vmatprep.subr.mxu0 0.0
        %4654 = vmatpush1.msra.mxu0 %v4504
        %4655 = vmatprep.subr.mxu0 0.0
        %4656 = vmatpush1.msra.mxu0 %v4505
        %4657 = vmatprep.subr.mxu0 0.0
        %4658 = vmatpush1.msra.mxu0 %v4506
        %4659 = vmatprep.subr.mxu0 0.0
        %4660 = vmatpush1.msra.mxu0 %v4507
        %4661 = vmatprep.subr.mxu0 0.0
        %4662 = vmatpush1.msra.mxu0 %v4508
        %4663 = vmatprep.subr.mxu0 0.0
        %4664 = vmatpush1.msra.mxu0 %v4509
        %4665 = vmatprep.subr.mxu0 0.0
        %4666 = vmatpush1.msra.mxu0 %v4510
        %4667 = vmatprep.subr.mxu0 0.0
        %4668 = vmatpush1.msra.mxu0 %v4511
        %4669 = vmatprep.subr.mxu0 0.0
        %4670 = vmatpush1.msra.mxu0 %v4512
        %4671 = vmatprep.subr.mxu0 0.0
        %4672 = vmatpush1.msra.mxu0 %v4513
        %4673 = vmatprep.subr.mxu0 0.0
        %4674 = vmatpush1.msra.mxu0 %v4514
        %4675 = vmatprep.subr.mxu0 0.0
        %4676 = vmatpush1.msra.mxu0 %v4515
        %4677 = vmatprep.subr.mxu0 0.0
        %4678 = vmatpush1.msra.mxu0 %v4516
        %4679 = vmatprep.subr.mxu0 0.0
        %4680 = vmatpush1.msra.mxu0 %v4517
        %4681 = vmatprep.subr.mxu0 0.0
        %4682 = vmatpush1.msra.mxu0 %v4518
        %4683 = vmatprep.subr.mxu0 0.0
        %4684 = vmatpush1.msra.mxu0 %v4519
        %4685 = vmatprep.subr.mxu0 0.0
        %4686 = vmatpush1.msra.mxu0 %v4520
        %4687 = vmatprep.subr.mxu0 0.0
        %4688 = vmatpush1.msra.mxu0 %v4521
        %4689 = vmatprep.subr.mxu0 0.0
        %4690 = vmatpush1.msra.mxu0 %v4522
        %4691 = vmatprep.subr.mxu0 0.0
        %4692 = vmatpush1.msra.mxu0 %v4523
        %4693 = vmatprep.subr.mxu0 0.0
        %4694 = vmatpush1.msra.mxu0 %v4524
        %4695 = vmatprep.subr.mxu0 0.0
        %4696 = vmatpush1.msra.mxu0 %v4525
        %4697 = vmatprep.subr.mxu0 0.0
        %4698 = vmatpush1.msra.mxu0 %v4526
        %4699 = vmatprep.mubr.f32.mxu0 %v4396
        %4700 = vmatmul.mubr.f32.gmra.mrb[0].mxu0 %v4395
        %v4701 = vpop.f32.mrb[0].mxu0
        %v4702 = vadd.f32 0.0, %v4701
        %v4703 = vpop.f32.mrb[0].mxu0
        %4704 = vmatprep.mubr.f32.mxu0 %v4399
        %4705 = vmatmul.mubr.f32.gmra.mrb[0].mxu0 %v4398
        %v4706 = vpop.f32.mrb[0].mxu0
        %v4707 = vadd.f32 0.0, %v4706
        %v4708 = vpop.f32.mrb[0].mxu0
        %4709 = vmatprep.mubr.f32.mxu0 %v4402
        %4710 = vmatmul.mubr.f32.gmra.mrb[0].mxu0 %v4401
        %v4711 = vpop.f32.mrb[0].mxu0
        %v4712 = vadd.f32 0.0, %v4711
        %v4713 = vpop.f32.mrb[0].mxu0
        %4714 = vmatprep.mubr.f32.mxu0 %v4405
        %4715 = vmatmul.mubr.f32.gmra.mrb[0].mxu0 %v4404
        %v4716 = vpop.f32.mrb[0].mxu0
        %v4717 = vadd.f32 0.0, %v4716
        %v4718 = vpop.f32.mrb[0].mxu0
        %4719 = vmatprep.mubr.f32.mxu0 %v4408
        %4720 = vmatmul.mubr.f32.gmra.mrb[0].mxu0 %v4407
        %v4721 = vpop.f32.mrb[0].mxu0
        %v4722 = vadd.f32 0.0, %v4721
        %v4723 = vpop.f32.mrb[0].mxu0
        %4724 = vmatprep.mubr.f32.mxu0 %v4411
        %4725 = vmatmul.mubr.f32.gmra.mrb[0].mxu0 %v4410
        %v4726 = vpop.f32.mrb[0].mxu0
        %v4727 = vadd.f32 0.0, %v4726
        %v4728 = vpop.f32.mrb[0].mxu0
        %4729 = vmatprep.mubr.f32.mxu0 %v4414
        %4730 = vmatmul.mubr.f32.gmra.mrb[0].mxu0 %v4413
        %v4731 = vpop.f32.mrb[0].mxu0
        %v4732 = vadd.f32 0.0, %v4731
        %v4733 = vpop.f32.mrb[0].mxu0
        %4734 = vmatprep.mubr.f32.mxu0 %v4417
        %4735 = vmatmul.mubr.f32.gmra.mrb[0].mxu0 %v4416
        %v4736 = vpop.f32.mrb[0].mxu0
        %v4737 = vadd.f32 0.0, %v4736
        %v4738 = vpop.f32.mrb[0].mxu0
        %4739 = vmatprep.mubr.f32.mxu0 %v4420
        %4740 = vmatmul.mubr.f32.gmra.mrb[0].mxu0 %v4419
        %v4741 = vpop.f32.mrb[0].mxu0
        %v4742 = vadd.f32 0.0, %v4741
        %v4743 = vpop.f32.mrb[0].mxu0
        %4744 = vmatprep.mubr.f32.mxu0 %v4423
        %4745 = vmatmul.mubr.f32.gmra.mrb[0].mxu0 %v4422
        %v4746 = vpop.f32.mrb[0].mxu0
        %v4747 = vadd.f32 0.0, %v4746
        %v4748 = vpop.f32.mrb[0].mxu0
        %4749 = vmatprep.mubr.f32.mxu0 %v4426
        %4750 = vmatmul.mubr.f32.gmra.mrb[0].mxu0 %v4425
        %v4751 = vpop.f32.mrb[0].mxu0
        %v4752 = vadd.f32 0.0, %v4751
        %v4753 = vpop.f32.mrb[0].mxu0
        %4754 = vmatprep.mubr.f32.mxu0 %v4429
        %4755 = vmatmul.mubr.f32.gmra.mrb[0].mxu0 %v4428
        %v4756 = vpop.f32.mrb[0].mxu0
        %v4757 = vadd.f32 0.0, %v4756
        %v4758 = vpop.f32.mrb[0].mxu0
        %4759 = vmatprep.mubr.f32.mxu0 %v4432
        %4760 = vmatmul.mubr.f32.gmra.mrb[0].mxu0 %v4431
        %v4761 = vpop.f32.mrb[0].mxu0
        %v4762 = vadd.f32 0.0, %v4761
        %v4763 = vpop.f32.mrb[0].mxu0
        %4764 = vmatprep.mubr.f32.mxu0 %v4435
        %4765 = vmatmul.mubr.f32.gmra.mrb[0].mxu0 %v4434
        %v4766 = vpop.f32.mrb[0].mxu0
        %v4767 = vadd.f32 0.0, %v4766
        %v4768 = vpop.f32.mrb[0].mxu0
        %4769 = vmatprep.mubr.f32.mxu0 %v4438
        %4770 = vmatmul.mubr.f32.gmra.mrb[0].mxu0 %v4437
        %v4771 = vpop.f32.mrb[0].mxu0
        %v4772 = vadd.f32 0.0, %v4771
        %v4773 = vpop.f32.mrb[0].mxu0
        %4774 = vmatprep.mubr.f32.mxu0 %v4441
        %4775 = vmatmul.mubr.f32.gmra.mrb[0].mxu0 %v4440
        %v4776 = vpop.f32.mrb[0].mxu0
        %v4777 = vadd.f32 0.0, %v4776
        %v4778 = vpop.f32.mrb[0].mxu0
        %4779 = vmatprep.mubr.f32.mxu0 %v4444
        %4780 = vmatmul.mubr.f32.gmra.mrb[0].mxu0 %v4443
        %v4781 = vpop.f32.mrb[0].mxu0
        %v4782 = vadd.f32 0.0, %v4781
        %v4783 = vpop.f32.mrb[0].mxu0
        %4784 = vmatprep.mubr.f32.mxu0 %v4447
        %4785 = vmatmul.mubr.f32.gmra.mrb[0].mxu0 %v4446
        %v4786 = vpop.f32.mrb[0].mxu0
        %v4787 = vadd.f32 0.0, %v4786
        %v4788 = vpop.f32.mrb[0].mxu0
        %4789 = vmatprep.mubr.f32.mxu0 %v4450
        %4790 = vmatmul.mubr.f32.gmra.mrb[0].mxu0 %v4449
        %v4791 = vpop.f32.mrb[0].mxu0
        %v4792 = vadd.f32 0.0, %v4791
        %v4793 = vpop.f32.mrb[0].mxu0
        %4794 = vmatprep.mubr.f32.mxu0 %v4453
        %4795 = vmatmul.mubr.f32.gmra.mrb[0].mxu0 %v4452
        %v4796 = vpop.f32.mrb[0].mxu0
        %v4797 = vadd.f32 0.0, %v4796
        %v4798 = vpop.f32.mrb[0].mxu0
        %4799 = vmatprep.mubr.f32.mxu0 %v4456
        %4800 = vmatmul.mubr.f32.gmra.mrb[0].mxu0 %v4455
        %v4801 = vpop.f32.mrb[0].mxu0
        %v4802 = vadd.f32 0.0, %v4801
        %v4803 = vpop.f32.mrb[0].mxu0
        %4804 = vmatprep.mubr.f32.mxu0 %v4459
        %4805 = vmatmul.mubr.f32.gmra.mrb[0].mxu0 %v4458
        %v4806 = vpop.f32.mrb[0].mxu0
        %v4807 = vadd.f32 0.0, %v4806
        %v4808 = vpop.f32.mrb[0].mxu0
        %4809 = vmatprep.mubr.f32.mxu0 %v4462
        %4810 = vmatmul.mubr.f32.gmra.mrb[0].mxu0 %v4461
        %v4811 = vpop.f32.mrb[0].mxu0
        %v4812 = vadd.f32 0.0, %v4811
        %v4813 = vpop.f32.mrb[0].mxu0
        %4814 = vmatprep.mubr.f32.mxu0 %v4465
        %4815 = vmatmul.mubr.f32.gmra.mrb[0].mxu0 %v4464
        %v4816 = vpop.f32.mrb[0].mxu0
        %v4817 = vadd.f32 0.0, %v4816
        %v4818 = vpop.f32.mrb[0].mxu0
        %4819 = vmatprep.mubr.f32.mxu0 %v4468
        %4820 = vmatmul.mubr.f32.gmra.mrb[0].mxu0 %v4467
        %v4821 = vpop.f32.mrb[0].mxu0
        %v4822 = vadd.f32 0.0, %v4821
        %v4823 = vpop.f32.mrb[0].mxu0
        %4824 = vmatprep.mubr.f32.mxu0 %v4471
        %4825 = vmatmul.mubr.f32.gmra.mrb[0].mxu0 %v4470
        %v4826 = vpop.f32.mrb[0].mxu0
        %v4827 = vadd.f32 0.0, %v4826
        %v4828 = vpop.f32.mrb[0].mxu0
        %4829 = vmatprep.mubr.f32.mxu0 %v4474
        %4830 = vmatmul.mubr.f32.gmra.mrb[0].mxu0 %v4473
        %v4831 = vpop.f32.mrb[0].mxu0
        %v4832 = vadd.f32 0.0, %v4831
        %v4833 = vpop.f32.mrb[0].mxu0
        %4834 = vmatprep.mubr.f32.mxu0 %v4477
        %4835 = vmatmul.mubr.f32.gmra.mrb[0].mxu0 %v4476
        %v4836 = vpop.f32.mrb[0].mxu0
        %v4837 = vadd.f32 0.0, %v4836
        %v4838 = vpop.f32.mrb[0].mxu0
        %4839 = vmatprep.mubr.f32.mxu0 %v4480
        %4840 = vmatmul.mubr.f32.gmra.mrb[0].mxu0 %v4479
        %v4841 = vpop.f32.mrb[0].mxu0
        %v4842 = vadd.f32 0.0, %v4841
        %v4843 = vpop.f32.mrb[0].mxu0
        %4844 = vmatprep.mubr.f32.mxu0 %v4483
        %4845 = vmatmul.mubr.f32.gmra.mrb[0].mxu0 %v4482
        %v4846 = vpop.f32.mrb[0].mxu0
        %v4847 = vadd.f32 0.0, %v4846
        %v4848 = vpop.f32.mrb[0].mxu0
        %4849 = vmatprep.mubr.f32.mxu0 %v4486
        %4850 = vmatmul.mubr.f32.gmra.mrb[0].mxu0 %v4485
        %v4851 = vpop.f32.mrb[0].mxu0
        %v4852 = vadd.f32 0.0, %v4851
        %v4853 = vpop.f32.mrb[0].mxu0
        %4854 = vmatprep.mubr.f32.mxu0 %v4489
        %4855 = vmatmul.mubr.f32.gmra.mrb[0].mxu0 %v4488
        %v4856 = vpop.f32.mrb[0].mxu0
        %v4857 = vadd.f32 0.0, %v4856
        %v4858 = vpop.f32.mrb[0].mxu0
        %4859 = vdwg.mxu0
        %4860 = vmatprep.subr.mxu0 0.0
        %4861 = vmatpush1.msra.mxu0 %v4527
        %4862 = vmatprep.subr.mxu0 0.0
        %4863 = vmatpush1.msra.mxu0 %v4528
        %4864 = vmatprep.subr.mxu0 0.0
        %4865 = vmatpush1.msra.mxu0 %v4529
        %4866 = vmatprep.subr.mxu0 0.0
        %4867 = vmatpush1.msra.mxu0 %v4530
        %4868 = vmatprep.subr.mxu0 0.0
        %4869 = vmatpush1.msra.mxu0 %v4531
        %4870 = vmatprep.subr.mxu0 0.0
        %4871 = vmatpush1.msra.mxu0 %v4532
        %4872 = vmatprep.subr.mxu0 0.0
        %4873 = vmatpush1.msra.mxu0 %v4533
        %4874 = vmatprep.subr.mxu0 0.0
        %4875 = vmatpush1.msra.mxu0 %v4534
        %4876 = vmatprep.subr.mxu0 0.0
        %4877 = vmatpush1.msra.mxu0 %v4633
        %4878 = vmatprep.subr.mxu0 0.0
        %4879 = vmatpush1.msra.mxu0 0.0
        %4880 = vmatprep.subr.mxu0 0.0
        %4881 = vmatpush1.msra.mxu0 0.0
        %4882 = vmatprep.subr.mxu0 0.0
        %4883 = vmatpush1.msra.mxu0 0.0
        %4884 = vmatprep.subr.mxu0 0.0
        %4885 = vmatpush1.msra.mxu0 0.0
        %4886 = vmatprep.subr.mxu0 0.0
        %4887 = vmatpush1.msra.mxu0 0.0
        %4888 = vmatprep.subr.mxu0 0.0
        %4889 = vmatpush1.msra.mxu0 0.0
        %4890 = vmatprep.subr.mxu0 0.0
        %4891 = vmatpush1.msra.mxu0 0.0
        %4892 = vmatprep.subr.mxu0 0.0
        %4893 = vmatpush1.msra.mxu0 0.0
        %4894 = vmatprep.subr.mxu0 0.0
        %4895 = vmatpush1.msra.mxu0 0.0
        %4896 = vmatprep.subr.mxu0 0.0
        %4897 = vmatpush1.msra.mxu0 0.0
        %4898 = vmatprep.subr.mxu0 0.0
        %4899 = vmatpush1.msra.mxu0 0.0
        %4900 = vmatprep.subr.mxu0 0.0
        %4901 = vmatpush1.msra.mxu0 0.0
        %4902 = vmatprep.subr.mxu0 0.0
        %4903 = vmatpush1.msra.mxu0 0.0
        %4904 = vmatprep.subr.mxu0 0.0
        %4905 = vmatpush1.msra.mxu0 0.0
        %4906 = vmatprep.subr.mxu0 0.0
        %4907 = vmatpush1.msra.mxu0 0.0
        %4908 = vmatprep.subr.mxu0 0.0
        %4909 = vmatpush1.msra.mxu0 0.0
        %4910 = vmatprep.subr.mxu0 0.0
        %4911 = vmatpush1.msra.mxu0 0.0
        %4912 = vmatprep.subr.mxu0 0.0
        %4913 = vmatpush1.msra.mxu0 0.0
        %4914 = vmatprep.subr.mxu0 0.0
        %4915 = vmatpush1.msra.mxu0 0.0
        %4916 = vmatprep.subr.mxu0 0.0
        %4917 = vmatpush1.msra.mxu0 0.0
        %4918 = vmatprep.subr.mxu0 0.0
        %4919 = vmatpush1.msra.mxu0 0.0
        %4920 = vmatprep.subr.mxu0 0.0
        %4921 = vmatpush1.msra.mxu0 0.0
        %4922 = vmatprep.subr.mxu0 0.0
        %4923 = vmatpush1.msra.mxu0 0.0
        %4924 = vmatprep.mubr.f32.mxu0 0.0
        %4925 = vmatmul.mubr.f32.gmra.mrb[0].mxu0 %v4537
        %v4926 = vpop.f32.mrb[0].mxu0
        %v4927 = vadd.f32 %v4702, %v4926
        %v4928 = vpop.f32.mrb[0].mxu0
        %4929 = vmatprep.mubr.f32.mxu0 0.0
        %4930 = vmatmul.mubr.f32.gmra.mrb[0].mxu0 %v4540
        %v4931 = vpop.f32.mrb[0].mxu0
        %v4932 = vadd.f32 %v4707, %v4931
        %v4933 = vpop.f32.mrb[0].mxu0
        %4934 = vmatprep.mubr.f32.mxu0 0.0
        %4935 = vmatmul.mubr.f32.gmra.mrb[0].mxu0 %v4543
        %v4936 = vpop.f32.mrb[0].mxu0
        %v4937 = vadd.f32 %v4712, %v4936
        %v4938 = vpop.f32.mrb[0].mxu0
        %4939 = vmatprep.mubr.f32.mxu0 0.0
        %4940 = vmatmul.mubr.f32.gmra.mrb[0].mxu0 %v4546
        %v4941 = vpop.f32.mrb[0].mxu0
        %v4942 = vadd.f32 %v4717, %v4941
        %v4943 = vpop.f32.mrb[0].mxu0
        %4944 = vmatprep.mubr.f32.mxu0 0.0
        %4945 = vmatmul.mubr.f32.gmra.mrb[0].mxu0 %v4549
        %v4946 = vpop.f32.mrb[0].mxu0
        %v4947 = vadd.f32 %v4722, %v4946
        %v4948 = vpop.f32.mrb[0].mxu0
        %4949 = vmatprep.mubr.f32.mxu0 0.0
        %4950 = vmatmul.mubr.f32.gmra.mrb[0].mxu0 %v4552
        %v4951 = vpop.f32.mrb[0].mxu0
        %v4952 = vadd.f32 %v4727, %v4951
        %v4953 = vpop.f32.mrb[0].mxu0
        %4954 = vmatprep.mubr.f32.mxu0 0.0
        %4955 = vmatmul.mubr.f32.gmra.mrb[0].mxu0 %v4555
        %v4956 = vpop.f32.mrb[0].mxu0
        %v4957 = vadd.f32 %v4732, %v4956
        %v4958 = vpop.f32.mrb[0].mxu0
        %4959 = vmatprep.mubr.f32.mxu0 0.0
        %4960 = vmatmul.mubr.f32.gmra.mrb[0].mxu0 %v4558
        %v4961 = vpop.f32.mrb[0].mxu0
        %v4962 = vadd.f32 %v4737, %v4961
        %v4963 = vpop.f32.mrb[0].mxu0
        %4964 = vmatprep.mubr.f32.mxu0 0.0
        %4965 = vmatmul.mubr.f32.gmra.mrb[0].mxu0 %v4561
        %v4966 = vpop.f32.mrb[0].mxu0
        %v4967 = vadd.f32 %v4742, %v4966
        %v4968 = vpop.f32.mrb[0].mxu0
        %4969 = vmatprep.mubr.f32.mxu0 0.0
        %4970 = vmatmul.mubr.f32.gmra.mrb[0].mxu0 %v4564
        %v4971 = vpop.f32.mrb[0].mxu0
        %v4972 = vadd.f32 %v4747, %v4971
        %v4973 = vpop.f32.mrb[0].mxu0
        %4974 = vmatprep.mubr.f32.mxu0 0.0
        %4975 = vmatmul.mubr.f32.gmra.mrb[0].mxu0 %v4567
        %v4976 = vpop.f32.mrb[0].mxu0
        %v4977 = vadd.f32 %v4752, %v4976
        %v4978 = vpop.f32.mrb[0].mxu0
        %4979 = vmatprep.mubr.f32.mxu0 0.0
        %4980 = vmatmul.mubr.f32.gmra.mrb[0].mxu0 %v4570
        %v4981 = vpop.f32.mrb[0].mxu0
        %v4982 = vadd.f32 %v4757, %v4981
        %v4983 = vpop.f32.mrb[0].mxu0
        %4984 = vmatprep.mubr.f32.mxu0 0.0
        %4985 = vmatmul.mubr.f32.gmra.mrb[0].mxu0 %v4573
        %v4986 = vpop.f32.mrb[0].mxu0
        %v4987 = vadd.f32 %v4762, %v4986
        %v4988 = vpop.f32.mrb[0].mxu0
        %4989 = vmatprep.mubr.f32.mxu0 0.0
        %4990 = vmatmul.mubr.f32.gmra.mrb[0].mxu0 %v4576
        %v4991 = vpop.f32.mrb[0].mxu0
        %v4992 = vadd.f32 %v4767, %v4991
        %v4993 = vpop.f32.mrb[0].mxu0
        %4994 = vmatprep.mubr.f32.mxu0 0.0
        %4995 = vmatmul.mubr.f32.gmra.mrb[0].mxu0 %v4579
        %v4996 = vpop.f32.mrb[0].mxu0
        %v4997 = vadd.f32 %v4772, %v4996
        %v4998 = vpop.f32.mrb[0].mxu0
        %4999 = vmatprep.mubr.f32.mxu0 0.0
        %5000 = vmatmul.mubr.f32.gmra.mrb[0].mxu0 %v4582
        %v5001 = vpop.f32.mrb[0].mxu0
        %v5002 = vadd.f32 %v4777, %v5001
        %v5003 = vpop.f32.mrb[0].mxu0
        %5004 = vmatprep.mubr.f32.mxu0 0.0
        %5005 = vmatmul.mubr.f32.gmra.mrb[0].mxu0 %v4585
        %v5006 = vpop.f32.mrb[0].mxu0
        %v5007 = vadd.f32 %v4782, %v5006
        %v5008 = vpop.f32.mrb[0].mxu0
        %5009 = vmatprep.mubr.f32.mxu0 0.0
        %5010 = vmatmul.mubr.f32.gmra.mrb[0].mxu0 %v4588
        %v5011 = vpop.f32.mrb[0].mxu0
        %v5012 = vadd.f32 %v4787, %v5011
        %v5013 = vpop.f32.mrb[0].mxu0
        %5014 = vmatprep.mubr.f32.mxu0 0.0
        %5015 = vmatmul.mubr.f32.gmra.mrb[0].mxu0 %v4591
        %v5016 = vpop.f32.mrb[0].mxu0
        %v5017 = vadd.f32 %v4792, %v5016
        %v5018 = vpop.f32.mrb[0].mxu0
        %5019 = vmatprep.mubr.f32.mxu0 0.0
        %5020 = vmatmul.mubr.f32.gmra.mrb[0].mxu0 %v4594
        %v5021 = vpop.f32.mrb[0].mxu0
        %v5022 = vadd.f32 %v4797, %v5021
        %v5023 = vpop.f32.mrb[0].mxu0
        %5024 = vmatprep.mubr.f32.mxu0 0.0
        %5025 = vmatmul.mubr.f32.gmra.mrb[0].mxu0 %v4597
        %v5026 = vpop.f32.mrb[0].mxu0
        %v5027 = vadd.f32 %v4802, %v5026
        %v5028 = vpop.f32.mrb[0].mxu0
        %5029 = vmatprep.mubr.f32.mxu0 0.0
        %5030 = vmatmul.mubr.f32.gmra.mrb[0].mxu0 %v4600
        %v5031 = vpop.f32.mrb[0].mxu0
        %v5032 = vadd.f32 %v4807, %v5031
        %v5033 = vpop.f32.mrb[0].mxu0
        %5034 = vmatprep.mubr.f32.mxu0 0.0
        %5035 = vmatmul.mubr.f32.gmra.mrb[0].mxu0 %v4603
        %v5036 = vpop.f32.mrb[0].mxu0
        %v5037 = vadd.f32 %v4812, %v5036
        %v5038 = vpop.f32.mrb[0].mxu0
        %5039 = vmatprep.mubr.f32.mxu0 0.0
        %5040 = vmatmul.mubr.f32.gmra.mrb[0].mxu0 %v4606
        %v5041 = vpop.f32.mrb[0].mxu0
        %v5042 = vadd.f32 %v4817, %v5041
        %v5043 = vpop.f32.mrb[0].mxu0
        %5044 = vmatprep.mubr.f32.mxu0 0.0
        %5045 = vmatmul.mubr.f32.gmra.mrb[0].mxu0 %v4609
        %v5046 = vpop.f32.mrb[0].mxu0
        %v5047 = vadd.f32 %v4822, %v5046
        %v5048 = vpop.f32.mrb[0].mxu0
        %5049 = vmatprep.mubr.f32.mxu0 0.0
        %5050 = vmatmul.mubr.f32.gmra.mrb[0].mxu0 %v4612
        %v5051 = vpop.f32.mrb[0].mxu0
        %v5052 = vadd.f32 %v4827, %v5051
        %v5053 = vpop.f32.mrb[0].mxu0
        %5054 = vmatprep.mubr.f32.mxu0 0.0
        %5055 = vmatmul.mubr.f32.gmra.mrb[0].mxu0 %v4615
        %v5056 = vpop.f32.mrb[0].mxu0
        %v5057 = vadd.f32 %v4832, %v5056
        %v5058 = vpop.f32.mrb[0].mxu0
        %5059 = vmatprep.mubr.f32.mxu0 0.0
        %5060 = vmatmul.mubr.f32.gmra.mrb[0].mxu0 %v4618
        %v5061 = vpop.f32.mrb[0].mxu0
        %v5062 = vadd.f32 %v4837, %v5061
        %v5063 = vpop.f32.mrb[0].mxu0
        %5064 = vmatprep.mubr.f32.mxu0 0.0
        %5065 = vmatmul.mubr.f32.gmra.mrb[0].mxu0 %v4621
        %v5066 = vpop.f32.mrb[0].mxu0
        %v5067 = vadd.f32 %v4842, %v5066
        %v5068 = vpop.f32.mrb[0].mxu0
        %5069 = vmatprep.mubr.f32.mxu0 0.0
        %5070 = vmatmul.mubr.f32.gmra.mrb[0].mxu0 %v4624
        %v5071 = vpop.f32.mrb[0].mxu0
        %v5072 = vadd.f32 %v4847, %v5071
        %v5073 = vpop.f32.mrb[0].mxu0
        %5074 = vmatprep.mubr.f32.mxu0 0.0
        %5075 = vmatmul.mubr.f32.gmra.mrb[0].mxu0 %v4627
        %v5076 = vpop.f32.mrb[0].mxu0
        %v5077 = vadd.f32 %v4852, %v5076
        %v5078 = vpop.f32.mrb[0].mxu0
        %5079 = vmatprep.mubr.f32.mxu0 0.0
        %5080 = vmatmul.mubr.f32.gmra.mrb[0].mxu0 %v4630
        %v5081 = vpop.f32.mrb[0].mxu0
        %v5082 = vadd.f32 %v4857, %v5081
        %v5083 = vpop.f32.mrb[0].mxu0
        %5084 = vdwg.mxu0
        %v5085 = vadd.f32 %v4362, %v4927
        %v5086 = vadd.f32 %v4363, %v4932
        %v5087 = vadd.f32 %v4364, %v4937
        %v5088 = vadd.f32 %v4365, %v4942
        %v5089 = vadd.f32 %v4366, %v4947
        %v5090 = vadd.f32 %v4367, %v4952
        %v5091 = vadd.f32 %v4368, %v4957
        %v5092 = vadd.f32 %v4369, %v4962
        %v5093 = vadd.f32 %v4370, %v4967
        %v5094 = vadd.f32 %v4371, %v4972
        %v5095 = vadd.f32 %v4372, %v4977
        %v5096 = vadd.f32 %v4373, %v4982
        %v5097 = vadd.f32 %v4374, %v4987
        %v5098 = vadd.f32 %v4375, %v4992
        %v5099 = vadd.f32 %v4376, %v4997
        %v5100 = vadd.f32 %v4377, %v5002
        %v5101 = vadd.f32 %v4378, %v5007
        %v5102 = vadd.f32 %v4379, %v5012
        %v5103 = vadd.f32 %v4380, %v5017
        %v5104 = vadd.f32 %v4381, %v5022
        %v5105 = vadd.f32 %v4382, %v5027
        %v5106 = vadd.f32 %v4383, %v5032
        %v5107 = vadd.f32 %v4384, %v5037
        %v5108 = vadd.f32 %v4385, %v5042
        %v5109 = vadd.f32 %v4386, %v5047
        %v5110 = vadd.f32 %v4387, %v5052
        %v5111 = vadd.f32 %v4388, %v5057
        %v5112 = vadd.f32 %v4389, %v5062
        %v5113 = vadd.f32 %v4390, %v5067
        %v5114 = vadd.f32 %v4391, %v5072
        %v5115 = vadd.f32 %v4392, %v5077
        %v5116 = vadd.f32 %v4393, %v5082
        %s5117 = scalar_lea.vmem [#allocation2], 4608
        %v5118 = vld [vmem:[%s5117] sm:$0xff]
        %v5119 = vld [vmem:[%s5117 + $0x8] sm:$0xff]
        %v5120 = vld [vmem:[%s5117 + $0x10] sm:$0xff]
        %v5121 = vld [vmem:[%s5117 + $0x18] sm:$0xff]
        %v5122 = vld [vmem:[%s5117 + $0x20] sm:$0xff]
        %v5123 = vld [vmem:[%s5117 + $0x28] sm:$0xff]
        %v5124 = vld [vmem:[%s5117 + $0x30] sm:$0xff]
        %v5125 = vld [vmem:[%s5117 + $0x38] sm:$0xff]
        %v5126 = vld [vmem:[%s5117 + $0x40] sm:$0xff]
        %v5127 = vld [vmem:[%s5117 + $0x48] sm:$0xff]
        %v5128 = vld [vmem:[%s5117 + $0x50] sm:$0xff]
        %v5129 = vld [vmem:[%s5117 + $0x58] sm:$0xff]
        %v5130 = vld [vmem:[%s5117 + $0x60] sm:$0xff]
        %v5131 = vld [vmem:[%s5117 + $0x68] sm:$0xff]
        %v5132 = vld [vmem:[%s5117 + $0x70] sm:$0xff]
        %v5133 = vld [vmem:[%s5117 + $0x78] sm:$0xff]
        %v5134 = vld [vmem:[%s5117 + $0x80] sm:$0xff]
        %v5135 = vld [vmem:[%s5117 + $0x88] sm:$0xff]
        %v5136 = vld [vmem:[%s5117 + $0x90] sm:$0xff]
        %v5137 = vld [vmem:[%s5117 + $0x98] sm:$0xff]
        %v5138 = vld [vmem:[%s5117 + $0xa0] sm:$0xff]
        %v5139 = vld [vmem:[%s5117 + $0xa8] sm:$0xff]
        %v5140 = vld [vmem:[%s5117 + $0xb0] sm:$0xff]
        %v5141 = vld [vmem:[%s5117 + $0xb8] sm:$0xff]
        %v5142 = vld [vmem:[%s5117 + $0xc0] sm:$0xff]
        %v5143 = vld [vmem:[%s5117 + $0xc8] sm:$0xff]
        %v5144 = vld [vmem:[%s5117 + $0xd0] sm:$0xff]
        %v5145 = vld [vmem:[%s5117 + $0xd8] sm:$0xff]
        %v5146 = vld [vmem:[%s5117 + $0xe0] sm:$0xff]
        %v5147 = vld [vmem:[%s5117 + $0xe8] sm:$0xff]
        %v5148 = vld [vmem:[%s5117 + $0xf0] sm:$0xff]
        %v5149 = vld [vmem:[%s5117 + $0xf8] sm:$0xff]
        %v5150 = vld [vmem:[%s5117 + $0x100] sm:$0xff]
        %v5151 = vld [vmem:[%s5117 + $0x108] sm:$0xff]
        %v5152 = vld [vmem:[%s5117 + $0x110] sm:$0xff]
        %v5153 = vld [vmem:[%s5117 + $0x118] sm:$0xff]
        %v5154 = vld [vmem:[%s5117 + $0x120] sm:$0xff]
        %v5155 = vld [vmem:[%s5117 + $0x128] sm:$0xff]
        %v5156 = vld [vmem:[%s5117 + $0x130] sm:$0xff]
        %v5157 = vld [vmem:[%s5117 + $0x138] sm:$0xff]
        %v5158 = vld [vmem:[%s5117 + $0x140] sm:$0xff]
        %v5159 = vld [vmem:[%s5117 + $0x148] sm:$0xff]
        %v5160 = vld [vmem:[%s5117 + $0x150] sm:$0xff]
        %v5161 = vld [vmem:[%s5117 + $0x158] sm:$0xff]
        %v5162 = vld [vmem:[%s5117 + $0x160] sm:$0xff]
        %v5163 = vld [vmem:[%s5117 + $0x168] sm:$0xff]
        %v5164 = vld [vmem:[%s5117 + $0x170] sm:$0xff]
        %v5165 = vld [vmem:[%s5117 + $0x178] sm:$0xff]
        %v5166 = vld [vmem:[%s5117 + $0x180] sm:$0xff]
        %v5167 = vld [vmem:[%s5117 + $0x188] sm:$0xff]
        %v5168 = vld [vmem:[%s5117 + $0x190] sm:$0xff]
        %v5169 = vld [vmem:[%s5117 + $0x198] sm:$0xff]
        %v5170 = vld [vmem:[%s5117 + $0x1a0] sm:$0xff]
        %v5171 = vld [vmem:[%s5117 + $0x1a8] sm:$0xff]
        %v5172 = vld [vmem:[%s5117 + $0x1b0] sm:$0xff]
        %v5173 = vld [vmem:[%s5117 + $0x1b8] sm:$0xff]
        %v5174 = vld [vmem:[%s5117 + $0x1c0] sm:$0xff]
        %v5175 = vld [vmem:[%s5117 + $0x1c8] sm:$0xff]
        %v5176 = vld [vmem:[%s5117 + $0x1d0] sm:$0xff]
        %v5177 = vld [vmem:[%s5117 + $0x1d8] sm:$0xff]
        %v5178 = vld [vmem:[%s5117 + $0x1e0] sm:$0xff]
        %v5179 = vld [vmem:[%s5117 + $0x1e8] sm:$0xff]
        %v5180 = vld [vmem:[%s5117 + $0x1f0] sm:$0xff]
        %v5181 = vld [vmem:[%s5117 + $0x1f8] sm:$0xff]
        %v5182 = vld [vmem:[%s5117 + $0x200] sm:$0xff]
        %v5183 = vld [vmem:[%s5117 + $0x208] sm:$0xff]
        %v5184 = vld [vmem:[%s5117 + $0x210] sm:$0xff]
        %v5185 = vld [vmem:[%s5117 + $0x218] sm:$0xff]
        %v5186 = vld [vmem:[%s5117 + $0x220] sm:$0xff]
        %v5187 = vld [vmem:[%s5117 + $0x228] sm:$0xff]
        %v5188 = vld [vmem:[%s5117 + $0x230] sm:$0xff]
        %v5189 = vld [vmem:[%s5117 + $0x238] sm:$0xff]
        %v5190 = vld [vmem:[%s5117 + $0x240] sm:$0xff]
        %v5191 = vld [vmem:[%s5117 + $0x248] sm:$0xff]
        %v5192 = vld [vmem:[%s5117 + $0x250] sm:$0xff]
        %v5193 = vld [vmem:[%s5117 + $0x258] sm:$0xff]
        %v5194 = vld [vmem:[%s5117 + $0x260] sm:$0xff]
        %v5195 = vld [vmem:[%s5117 + $0x268] sm:$0xff]
        %v5196 = vld [vmem:[%s5117 + $0x270] sm:$0xff]
        %v5197 = vld [vmem:[%s5117 + $0x278] sm:$0xff]
        %v5198 = vld [vmem:[%s5117 + $0x280] sm:$0xff]
        %v5199 = vld [vmem:[%s5117 + $0x288] sm:$0xff]
        %v5200 = vld [vmem:[%s5117 + $0x290] sm:$0xff]
        %v5201 = vld [vmem:[%s5117 + $0x298] sm:$0xff]
        %v5202 = vld [vmem:[%s5117 + $0x2a0] sm:$0xff]
        %v5203 = vld [vmem:[%s5117 + $0x2a8] sm:$0xff]
        %v5204 = vld [vmem:[%s5117 + $0x2b0] sm:$0xff]
        %v5205 = vld [vmem:[%s5117 + $0x2b8] sm:$0xff]
        %v5206 = vld [vmem:[%s5117 + $0x2c0] sm:$0xff]
        %v5207 = vld [vmem:[%s5117 + $0x2c8] sm:$0xff]
        %v5208 = vld [vmem:[%s5117 + $0x2d0] sm:$0xff]
        %v5209 = vld [vmem:[%s5117 + $0x2d8] sm:$0xff]
        %v5210 = vld [vmem:[%s5117 + $0x2e0] sm:$0xff]
        %v5211 = vld [vmem:[%s5117 + $0x2e8] sm:$0xff]
        %v5212 = vld [vmem:[%s5117 + $0x2f0] sm:$0xff]
        %v5213 = vld [vmem:[%s5117 + $0x2f8] sm:$0xff]
        %v5214 = vlaneseq
        %v5215 = vshrl.u32 %v5214, 7
        %v5216 = vsub.s32 6, %v5215
        %v5217 = vrot.slane %v635, %v5216
        %v5218 = vmul.f32 %v736, %v5217
        %v5219 = vmul.f32 %v741, %v5217
        %v5220 = vmul.f32 %v746, %v5217
        %v5221 = vmul.f32 %v751, %v5217
        %v5222 = vmul.f32 %v756, %v5217
        %v5223 = vmul.f32 %v761, %v5217
        %v5224 = vmul.f32 %v766, %v5217
        %v5225 = vmul.f32 %v771, %v5217
        %v5226 = vmul.f32 %v776, %v5217
        %v5227 = vmul.f32 %v781, %v5217
        %v5228 = vmul.f32 %v786, %v5217
        %v5229 = vmul.f32 %v791, %v5217
        %v5230 = vmul.f32 %v796, %v5217
        %v5231 = vmul.f32 %v801, %v5217
        %v5232 = vmul.f32 %v806, %v5217
        %v5233 = vmul.f32 %v811, %v5217
        %v5234 = vmul.f32 %v816, %v5217
        %v5235 = vmul.f32 %v821, %v5217
        %v5236 = vmul.f32 %v826, %v5217
        %v5237 = vmul.f32 %v831, %v5217
        %v5238 = vmul.f32 %v836, %v5217
        %v5239 = vmul.f32 %v841, %v5217
        %v5240 = vmul.f32 %v846, %v5217
        %v5241 = vmul.f32 %v851, %v5217
        %v5242 = vmul.f32 %v856, %v5217
        %v5243 = vmul.f32 %v861, %v5217
        %v5244 = vmul.f32 %v866, %v5217
        %v5245 = vmul.f32 %v871, %v5217
        %v5246 = vmul.f32 %v876, %v5217
        %v5247 = vmul.f32 %v881, %v5217
        %v5248 = vmul.f32 %v886, %v5217
        %v5249 = vmul.f32 %v891, %v5217
        %v5250 = vmul.f32 %v896, %v5217
        %v5251 = vmul.f32 %v901, %v5217
        %v5252 = vmul.f32 %v906, %v5217
        %v5253 = vmul.f32 %v911, %v5217
        %v5254 = vmul.f32 %v916, %v5217
        %v5255 = vmul.f32 %v921, %v5217
        %v5256 = vmul.f32 %v926, %v5217
        %v5257 = vmul.f32 %v931, %v5217
        %v5258 = vmul.f32 %v936, %v5217
        %v5260 = vsel %vm1125, %v5120, 0
        %v5263 = vsel %vm1125, %v5123, 0
        %v5266 = vsel %vm1125, %v5126, 0
        %v5269 = vsel %vm1125, %v5129, 0
        %v5272 = vsel %vm1125, %v5132, 0
        %v5275 = vsel %vm1125, %v5135, 0
        %v5278 = vsel %vm1125, %v5138, 0
        %v5281 = vsel %vm1125, %v5141, 0
        %v5284 = vsel %vm1125, %v5144, 0
        %v5287 = vsel %vm1125, %v5147, 0
        %v5290 = vsel %vm1125, %v5150, 0
        %v5293 = vsel %vm1125, %v5153, 0
        %v5296 = vsel %vm1125, %v5156, 0
        %v5299 = vsel %vm1125, %v5159, 0
        %v5302 = vsel %vm1125, %v5162, 0
        %v5305 = vsel %vm1125, %v5165, 0
        %v5308 = vsel %vm1125, %v5168, 0
        %v5311 = vsel %vm1125, %v5171, 0
        %v5314 = vsel %vm1125, %v5174, 0
        %v5317 = vsel %vm1125, %v5177, 0
        %v5320 = vsel %vm1125, %v5180, 0
        %v5323 = vsel %vm1125, %v5183, 0
        %v5326 = vsel %vm1125, %v5186, 0
        %v5329 = vsel %vm1125, %v5189, 0
        %v5332 = vsel %vm1125, %v5192, 0
        %v5335 = vsel %vm1125, %v5195, 0
        %v5338 = vsel %vm1125, %v5198, 0
        %v5341 = vsel %vm1125, %v5201, 0
        %v5344 = vsel %vm1125, %v5204, 0
        %v5347 = vsel %vm1125, %v5207, 0
        %v5350 = vsel %vm1125, %v5210, 0
        %v5353 = vsel %vm1125, %v5213, 0
        %v5356 = vsel %vm1222, %v5258, 0
        %5358 = vmatprep.subr.mxu0 0.0
        %5359 = vmatpush1.msra.mxu0 %v5218
        %5360 = vmatprep.subr.mxu0 0.0
        %5361 = vmatpush1.msra.mxu0 %v5219
        %5362 = vmatprep.subr.mxu0 0.0
        %5363 = vmatpush1.msra.mxu0 %v5220
        %5364 = vmatprep.subr.mxu0 0.0
        %5365 = vmatpush1.msra.mxu0 %v5221
        %5366 = vmatprep.subr.mxu0 0.0
        %5367 = vmatpush1.msra.mxu0 %v5222
        %5368 = vmatprep.subr.mxu0 0.0
        %5369 = vmatpush1.msra.mxu0 %v5223
        %5370 = vmatprep.subr.mxu0 0.0
        %5371 = vmatpush1.msra.mxu0 %v5224
        %5372 = vmatprep.subr.mxu0 0.0
        %5373 = vmatpush1.msra.mxu0 %v5225
        %5374 = vmatprep.subr.mxu0 0.0
        %5375 = vmatpush1.msra.mxu0 %v5226
        %5376 = vmatprep.subr.mxu0 0.0
        %5377 = vmatpush1.msra.mxu0 %v5227
        %5378 = vmatprep.subr.mxu0 0.0
        %5379 = vmatpush1.msra.mxu0 %v5228
        %5380 = vmatprep.subr.mxu0 0.0
        %5381 = vmatpush1.msra.mxu0 %v5229
        %5382 = vmatprep.subr.mxu0 0.0
        %5383 = vmatpush1.msra.mxu0 %v5230
        %5384 = vmatprep.subr.mxu0 0.0
        %5385 = vmatpush1.msra.mxu0 %v5231
        %5386 = vmatprep.subr.mxu0 0.0
        %5387 = vmatpush1.msra.mxu0 %v5232
        %5388 = vmatprep.subr.mxu0 0.0
        %5389 = vmatpush1.msra.mxu0 %v5233
        %5390 = vmatprep.subr.mxu0 0.0
        %5391 = vmatpush1.msra.mxu0 %v5234
        %5392 = vmatprep.subr.mxu0 0.0
        %5393 = vmatpush1.msra.mxu0 %v5235
        %5394 = vmatprep.subr.mxu0 0.0
        %5395 = vmatpush1.msra.mxu0 %v5236
        %5396 = vmatprep.subr.mxu0 0.0
        %5397 = vmatpush1.msra.mxu0 %v5237
        %5398 = vmatprep.subr.mxu0 0.0
        %5399 = vmatpush1.msra.mxu0 %v5238
        %5400 = vmatprep.subr.mxu0 0.0
        %5401 = vmatpush1.msra.mxu0 %v5239
        %5402 = vmatprep.subr.mxu0 0.0
        %5403 = vmatpush1.msra.mxu0 %v5240
        %5404 = vmatprep.subr.mxu0 0.0
        %5405 = vmatpush1.msra.mxu0 %v5241
        %5406 = vmatprep.subr.mxu0 0.0
        %5407 = vmatpush1.msra.mxu0 %v5242
        %5408 = vmatprep.subr.mxu0 0.0
        %5409 = vmatpush1.msra.mxu0 %v5243
        %5410 = vmatprep.subr.mxu0 0.0
        %5411 = vmatpush1.msra.mxu0 %v5244
        %5412 = vmatprep.subr.mxu0 0.0
        %5413 = vmatpush1.msra.mxu0 %v5245
        %5414 = vmatprep.subr.mxu0 0.0
        %5415 = vmatpush1.msra.mxu0 %v5246
        %5416 = vmatprep.subr.mxu0 0.0
        %5417 = vmatpush1.msra.mxu0 %v5247
        %5418 = vmatprep.subr.mxu0 0.0
        %5419 = vmatpush1.msra.mxu0 %v5248
        %5420 = vmatprep.subr.mxu0 0.0
        %5421 = vmatpush1.msra.mxu0 %v5249
        %5422 = vmatprep.mubr.f32.mxu0 %v5119
        %5423 = vmatmul.mubr.f32.gmra.mrb[0].mxu0 %v5118
        %v5424 = vpop.f32.mrb[0].mxu0
        %v5425 = vadd.f32 0.0, %v5424
        %v5426 = vpop.f32.mrb[0].mxu0
        %5427 = vmatprep.mubr.f32.mxu0 %v5122
        %5428 = vmatmul.mubr.f32.gmra.mrb[0].mxu0 %v5121
        %v5429 = vpop.f32.mrb[0].mxu0
        %v5430 = vadd.f32 0.0, %v5429
        %v5431 = vpop.f32.mrb[0].mxu0
        %5432 = vmatprep.mubr.f32.mxu0 %v5125
        %5433 = vmatmul.mubr.f32.gmra.mrb[0].mxu0 %v5124
        %v5434 = vpop.f32.mrb[0].mxu0
        %v5435 = vadd.f32 0.0, %v5434
        %v5436 = vpop.f32.mrb[0].mxu0
        %5437 = vmatprep.mubr.f32.mxu0 %v5128
        %5438 = vmatmul.mubr.f32.gmra.mrb[0].mxu0 %v5127
        %v5439 = vpop.f32.mrb[0].mxu0
        %v5440 = vadd.f32 0.0, %v5439
        %v5441 = vpop.f32.mrb[0].mxu0
        %5442 = vmatprep.mubr.f32.mxu0 %v5131
        %5443 = vmatmul.mubr.f32.gmra.mrb[0].mxu0 %v5130
        %v5444 = vpop.f32.mrb[0].mxu0
        %v5445 = vadd.f32 0.0, %v5444
        %v5446 = vpop.f32.mrb[0].mxu0
        %5447 = vmatprep.mubr.f32.mxu0 %v5134
        %5448 = vmatmul.mubr.f32.gmra.mrb[0].mxu0 %v5133
        %v5449 = vpop.f32.mrb[0].mxu0
        %v5450 = vadd.f32 0.0, %v5449
        %v5451 = vpop.f32.mrb[0].mxu0
        %5452 = vmatprep.mubr.f32.mxu0 %v5137
        %5453 = vmatmul.mubr.f32.gmra.mrb[0].mxu0 %v5136
        %v5454 = vpop.f32.mrb[0].mxu0
        %v5455 = vadd.f32 0.0, %v5454
        %v5456 = vpop.f32.mrb[0].mxu0
        %5457 = vmatprep.mubr.f32.mxu0 %v5140
        %5458 = vmatmul.mubr.f32.gmra.mrb[0].mxu0 %v5139
        %v5459 = vpop.f32.mrb[0].mxu0
        %v5460 = vadd.f32 0.0, %v5459
        %v5461 = vpop.f32.mrb[0].mxu0
        %5462 = vmatprep.mubr.f32.mxu0 %v5143
        %5463 = vmatmul.mubr.f32.gmra.mrb[0].mxu0 %v5142
        %v5464 = vpop.f32.mrb[0].mxu0
        %v5465 = vadd.f32 0.0, %v5464
        %v5466 = vpop.f32.mrb[0].mxu0
        %5467 = vmatprep.mubr.f32.mxu0 %v5146
        %5468 = vmatmul.mubr.f32.gmra.mrb[0].mxu0 %v5145
        %v5469 = vpop.f32.mrb[0].mxu0
        %v5470 = vadd.f32 0.0, %v5469
        %v5471 = vpop.f32.mrb[0].mxu0
        %5472 = vmatprep.mubr.f32.mxu0 %v5149
        %5473 = vmatmul.mubr.f32.gmra.mrb[0].mxu0 %v5148
        %v5474 = vpop.f32.mrb[0].mxu0
        %v5475 = vadd.f32 0.0, %v5474
        %v5476 = vpop.f32.mrb[0].mxu0
        %5477 = vmatprep.mubr.f32.mxu0 %v5152
        %5478 = vmatmul.mubr.f32.gmra.mrb[0].mxu0 %v5151
        %v5479 = vpop.f32.mrb[0].mxu0
        %v5480 = vadd.f32 0.0, %v5479
        %v5481 = vpop.f32.mrb[0].mxu0
        %5482 = vmatprep.mubr.f32.mxu0 %v5155
        %5483 = vmatmul.mubr.f32.gmra.mrb[0].mxu0 %v5154
        %v5484 = vpop.f32.mrb[0].mxu0
        %v5485 = vadd.f32 0.0, %v5484
        %v5486 = vpop.f32.mrb[0].mxu0
        %5487 = vmatprep.mubr.f32.mxu0 %v5158
        %5488 = vmatmul.mubr.f32.gmra.mrb[0].mxu0 %v5157
        %v5489 = vpop.f32.mrb[0].mxu0
        %v5490 = vadd.f32 0.0, %v5489
        %v5491 = vpop.f32.mrb[0].mxu0
        %5492 = vmatprep.mubr.f32.mxu0 %v5161
        %5493 = vmatmul.mubr.f32.gmra.mrb[0].mxu0 %v5160
        %v5494 = vpop.f32.mrb[0].mxu0
        %v5495 = vadd.f32 0.0, %v5494
        %v5496 = vpop.f32.mrb[0].mxu0
        %5497 = vmatprep.mubr.f32.mxu0 %v5164
        %5498 = vmatmul.mubr.f32.gmra.mrb[0].mxu0 %v5163
        %v5499 = vpop.f32.mrb[0].mxu0
        %v5500 = vadd.f32 0.0, %v5499
        %v5501 = vpop.f32.mrb[0].mxu0
        %5502 = vmatprep.mubr.f32.mxu0 %v5167
        %5503 = vmatmul.mubr.f32.gmra.mrb[0].mxu0 %v5166
        %v5504 = vpop.f32.mrb[0].mxu0
        %v5505 = vadd.f32 0.0, %v5504
        %v5506 = vpop.f32.mrb[0].mxu0
        %5507 = vmatprep.mubr.f32.mxu0 %v5170
        %5508 = vmatmul.mubr.f32.gmra.mrb[0].mxu0 %v5169
        %v5509 = vpop.f32.mrb[0].mxu0
        %v5510 = vadd.f32 0.0, %v5509
        %v5511 = vpop.f32.mrb[0].mxu0
        %5512 = vmatprep.mubr.f32.mxu0 %v5173
        %5513 = vmatmul.mubr.f32.gmra.mrb[0].mxu0 %v5172
        %v5514 = vpop.f32.mrb[0].mxu0
        %v5515 = vadd.f32 0.0, %v5514
        %v5516 = vpop.f32.mrb[0].mxu0
        %5517 = vmatprep.mubr.f32.mxu0 %v5176
        %5518 = vmatmul.mubr.f32.gmra.mrb[0].mxu0 %v5175
        %v5519 = vpop.f32.mrb[0].mxu0
        %v5520 = vadd.f32 0.0, %v5519
        %v5521 = vpop.f32.mrb[0].mxu0
        %5522 = vmatprep.mubr.f32.mxu0 %v5179
        %5523 = vmatmul.mubr.f32.gmra.mrb[0].mxu0 %v5178
        %v5524 = vpop.f32.mrb[0].mxu0
        %v5525 = vadd.f32 0.0, %v5524
        %v5526 = vpop.f32.mrb[0].mxu0
        %5527 = vmatprep.mubr.f32.mxu0 %v5182
        %5528 = vmatmul.mubr.f32.gmra.mrb[0].mxu0 %v5181
        %v5529 = vpop.f32.mrb[0].mxu0
        %v5530 = vadd.f32 0.0, %v5529
        %v5531 = vpop.f32.mrb[0].mxu0
        %5532 = vmatprep.mubr.f32.mxu0 %v5185
        %5533 = vmatmul.mubr.f32.gmra.mrb[0].mxu0 %v5184
        %v5534 = vpop.f32.mrb[0].mxu0
        %v5535 = vadd.f32 0.0, %v5534
        %v5536 = vpop.f32.mrb[0].mxu0
        %5537 = vmatprep.mubr.f32.mxu0 %v5188
        %5538 = vmatmul.mubr.f32.gmra.mrb[0].mxu0 %v5187
        %v5539 = vpop.f32.mrb[0].mxu0
        %v5540 = vadd.f32 0.0, %v5539
        %v5541 = vpop.f32.mrb[0].mxu0
        %5542 = vmatprep.mubr.f32.mxu0 %v5191
        %5543 = vmatmul.mubr.f32.gmra.mrb[0].mxu0 %v5190
        %v5544 = vpop.f32.mrb[0].mxu0
        %v5545 = vadd.f32 0.0, %v5544
        %v5546 = vpop.f32.mrb[0].mxu0
        %5547 = vmatprep.mubr.f32.mxu0 %v5194
        %5548 = vmatmul.mubr.f32.gmra.mrb[0].mxu0 %v5193
        %v5549 = vpop.f32.mrb[0].mxu0
        %v5550 = vadd.f32 0.0, %v5549
        %v5551 = vpop.f32.mrb[0].mxu0
        %5552 = vmatprep.mubr.f32.mxu0 %v5197
        %5553 = vmatmul.mubr.f32.gmra.mrb[0].mxu0 %v5196
        %v5554 = vpop.f32.mrb[0].mxu0
        %v5555 = vadd.f32 0.0, %v5554
        %v5556 = vpop.f32.mrb[0].mxu0
        %5557 = vmatprep.mubr.f32.mxu0 %v5200
        %5558 = vmatmul.mubr.f32.gmra.mrb[0].mxu0 %v5199
        %v5559 = vpop.f32.mrb[0].mxu0
        %v5560 = vadd.f32 0.0, %v5559
        %v5561 = vpop.f32.mrb[0].mxu0
        %5562 = vmatprep.mubr.f32.mxu0 %v5203
        %5563 = vmatmul.mubr.f32.gmra.mrb[0].mxu0 %v5202
        %v5564 = vpop.f32.mrb[0].mxu0
        %v5565 = vadd.f32 0.0, %v5564
        %v5566 = vpop.f32.mrb[0].mxu0
        %5567 = vmatprep.mubr.f32.mxu0 %v5206
        %5568 = vmatmul.mubr.f32.gmra.mrb[0].mxu0 %v5205
        %v5569 = vpop.f32.mrb[0].mxu0
        %v5570 = vadd.f32 0.0, %v5569
        %v5571 = vpop.f32.mrb[0].mxu0
        %5572 = vmatprep.mubr.f32.mxu0 %v5209
        %5573 = vmatmul.mubr.f32.gmra.mrb[0].mxu0 %v5208
        %v5574 = vpop.f32.mrb[0].mxu0
        %v5575 = vadd.f32 0.0, %v5574
        %v5576 = vpop.f32.mrb[0].mxu0
        %5577 = vmatprep.mubr.f32.mxu0 %v5212
        %5578 = vmatmul.mubr.f32.gmra.mrb[0].mxu0 %v5211
        %v5579 = vpop.f32.mrb[0].mxu0
        %v5580 = vadd.f32 0.0, %v5579
        %v5581 = vpop.f32.mrb[0].mxu0
        %5582 = vdwg.mxu0
        %5583 = vmatprep.subr.mxu0 0.0
        %5584 = vmatpush1.msra.mxu0 %v5250
        %5585 = vmatprep.subr.mxu0 0.0
        %5586 = vmatpush1.msra.mxu0 %v5251
        %5587 = vmatprep.subr.mxu0 0.0
        %5588 = vmatpush1.msra.mxu0 %v5252
        %5589 = vmatprep.subr.mxu0 0.0
        %5590 = vmatpush1.msra.mxu0 %v5253
        %5591 = vmatprep.subr.mxu0 0.0
        %5592 = vmatpush1.msra.mxu0 %v5254
        %5593 = vmatprep.subr.mxu0 0.0
        %5594 = vmatpush1.msra.mxu0 %v5255
        %5595 = vmatprep.subr.mxu0 0.0
        %5596 = vmatpush1.msra.mxu0 %v5256
        %5597 = vmatprep.subr.mxu0 0.0
        %5598 = vmatpush1.msra.mxu0 %v5257
        %5599 = vmatprep.subr.mxu0 0.0
        %5600 = vmatpush1.msra.mxu0 %v5356
        %5601 = vmatprep.subr.mxu0 0.0
        %5602 = vmatpush1.msra.mxu0 0.0
        %5603 = vmatprep.subr.mxu0 0.0
        %5604 = vmatpush1.msra.mxu0 0.0
        %5605 = vmatprep.subr.mxu0 0.0
        %5606 = vmatpush1.msra.mxu0 0.0
        %5607 = vmatprep.subr.mxu0 0.0
        %5608 = vmatpush1.msra.mxu0 0.0
        %5609 = vmatprep.subr.mxu0 0.0
        %5610 = vmatpush1.msra.mxu0 0.0
        %5611 = vmatprep.subr.mxu0 0.0
        %5612 = vmatpush1.msra.mxu0 0.0
        %5613 = vmatprep.subr.mxu0 0.0
        %5614 = vmatpush1.msra.mxu0 0.0
        %5615 = vmatprep.subr.mxu0 0.0
        %5616 = vmatpush1.msra.mxu0 0.0
        %5617 = vmatprep.subr.mxu0 0.0
        %5618 = vmatpush1.msra.mxu0 0.0
        %5619 = vmatprep.subr.mxu0 0.0
        %5620 = vmatpush1.msra.mxu0 0.0
        %5621 = vmatprep.subr.mxu0 0.0
        %5622 = vmatpush1.msra.mxu0 0.0
        %5623 = vmatprep.subr.mxu0 0.0
        %5624 = vmatpush1.msra.mxu0 0.0
        %5625 = vmatprep.subr.mxu0 0.0
        %5626 = vmatpush1.msra.mxu0 0.0
        %5627 = vmatprep.subr.mxu0 0.0
        %5628 = vmatpush1.msra.mxu0 0.0
        %5629 = vmatprep.subr.mxu0 0.0
        %5630 = vmatpush1.msra.mxu0 0.0
        %5631 = vmatprep.subr.mxu0 0.0
        %5632 = vmatpush1.msra.mxu0 0.0
        %5633 = vmatprep.subr.mxu0 0.0
        %5634 = vmatpush1.msra.mxu0 0.0
        %5635 = vmatprep.subr.mxu0 0.0
        %5636 = vmatpush1.msra.mxu0 0.0
        %5637 = vmatprep.subr.mxu0 0.0
        %5638 = vmatpush1.msra.mxu0 0.0
        %5639 = vmatprep.subr.mxu0 0.0
        %5640 = vmatpush1.msra.mxu0 0.0
        %5641 = vmatprep.subr.mxu0 0.0
        %5642 = vmatpush1.msra.mxu0 0.0
        %5643 = vmatprep.subr.mxu0 0.0
        %5644 = vmatpush1.msra.mxu0 0.0
        %5645 = vmatprep.subr.mxu0 0.0
        %5646 = vmatpush1.msra.mxu0 0.0
        %5647 = vmatprep.mubr.f32.mxu0 0.0
        %5648 = vmatmul.mubr.f32.gmra.mrb[0].mxu0 %v5260
        %v5649 = vpop.f32.mrb[0].mxu0
        %v5650 = vadd.f32 %v5425, %v5649
        %v5651 = vpop.f32.mrb[0].mxu0
        %5652 = vmatprep.mubr.f32.mxu0 0.0
        %5653 = vmatmul.mubr.f32.gmra.mrb[0].mxu0 %v5263
        %v5654 = vpop.f32.mrb[0].mxu0
        %v5655 = vadd.f32 %v5430, %v5654
        %v5656 = vpop.f32.mrb[0].mxu0
        %5657 = vmatprep.mubr.f32.mxu0 0.0
        %5658 = vmatmul.mubr.f32.gmra.mrb[0].mxu0 %v5266
        %v5659 = vpop.f32.mrb[0].mxu0
        %v5660 = vadd.f32 %v5435, %v5659
        %v5661 = vpop.f32.mrb[0].mxu0
        %5662 = vmatprep.mubr.f32.mxu0 0.0
        %5663 = vmatmul.mubr.f32.gmra.mrb[0].mxu0 %v5269
        %v5664 = vpop.f32.mrb[0].mxu0
        %v5665 = vadd.f32 %v5440, %v5664
        %v5666 = vpop.f32.mrb[0].mxu0
        %5667 = vmatprep.mubr.f32.mxu0 0.0
        %5668 = vmatmul.mubr.f32.gmra.mrb[0].mxu0 %v5272
        %v5669 = vpop.f32.mrb[0].mxu0
        %v5670 = vadd.f32 %v5445, %v5669
        %v5671 = vpop.f32.mrb[0].mxu0
        %5672 = vmatprep.mubr.f32.mxu0 0.0
        %5673 = vmatmul.mubr.f32.gmra.mrb[0].mxu0 %v5275
        %v5674 = vpop.f32.mrb[0].mxu0
        %v5675 = vadd.f32 %v5450, %v5674
        %v5676 = vpop.f32.mrb[0].mxu0
        %5677 = vmatprep.mubr.f32.mxu0 0.0
        %5678 = vmatmul.mubr.f32.gmra.mrb[0].mxu0 %v5278
        %v5679 = vpop.f32.mrb[0].mxu0
        %v5680 = vadd.f32 %v5455, %v5679
        %v5681 = vpop.f32.mrb[0].mxu0
        %5682 = vmatprep.mubr.f32.mxu0 0.0
        %5683 = vmatmul.mubr.f32.gmra.mrb[0].mxu0 %v5281
        %v5684 = vpop.f32.mrb[0].mxu0
        %v5685 = vadd.f32 %v5460, %v5684
        %v5686 = vpop.f32.mrb[0].mxu0
        %5687 = vmatprep.mubr.f32.mxu0 0.0
        %5688 = vmatmul.mubr.f32.gmra.mrb[0].mxu0 %v5284
        %v5689 = vpop.f32.mrb[0].mxu0
        %v5690 = vadd.f32 %v5465, %v5689
        %v5691 = vpop.f32.mrb[0].mxu0
        %5692 = vmatprep.mubr.f32.mxu0 0.0
        %5693 = vmatmul.mubr.f32.gmra.mrb[0].mxu0 %v5287
        %v5694 = vpop.f32.mrb[0].mxu0
        %v5695 = vadd.f32 %v5470, %v5694
        %v5696 = vpop.f32.mrb[0].mxu0
        %5697 = vmatprep.mubr.f32.mxu0 0.0
        %5698 = vmatmul.mubr.f32.gmra.mrb[0].mxu0 %v5290
        %v5699 = vpop.f32.mrb[0].mxu0
        %v5700 = vadd.f32 %v5475, %v5699
        %v5701 = vpop.f32.mrb[0].mxu0
        %5702 = vmatprep.mubr.f32.mxu0 0.0
        %5703 = vmatmul.mubr.f32.gmra.mrb[0].mxu0 %v5293
        %v5704 = vpop.f32.mrb[0].mxu0
        %v5705 = vadd.f32 %v5480, %v5704
        %v5706 = vpop.f32.mrb[0].mxu0
        %5707 = vmatprep.mubr.f32.mxu0 0.0
        %5708 = vmatmul.mubr.f32.gmra.mrb[0].mxu0 %v5296
        %v5709 = vpop.f32.mrb[0].mxu0
        %v5710 = vadd.f32 %v5485, %v5709
        %v5711 = vpop.f32.mrb[0].mxu0
        %5712 = vmatprep.mubr.f32.mxu0 0.0
        %5713 = vmatmul.mubr.f32.gmra.mrb[0].mxu0 %v5299
        %v5714 = vpop.f32.mrb[0].mxu0
        %v5715 = vadd.f32 %v5490, %v5714
        %v5716 = vpop.f32.mrb[0].mxu0
        %5717 = vmatprep.mubr.f32.mxu0 0.0
        %5718 = vmatmul.mubr.f32.gmra.mrb[0].mxu0 %v5302
        %v5719 = vpop.f32.mrb[0].mxu0
        %v5720 = vadd.f32 %v5495, %v5719
        %v5721 = vpop.f32.mrb[0].mxu0
        %5722 = vmatprep.mubr.f32.mxu0 0.0
        %5723 = vmatmul.mubr.f32.gmra.mrb[0].mxu0 %v5305
        %v5724 = vpop.f32.mrb[0].mxu0
        %v5725 = vadd.f32 %v5500, %v5724
        %v5726 = vpop.f32.mrb[0].mxu0
        %5727 = vmatprep.mubr.f32.mxu0 0.0
        %5728 = vmatmul.mubr.f32.gmra.mrb[0].mxu0 %v5308
        %v5729 = vpop.f32.mrb[0].mxu0
        %v5730 = vadd.f32 %v5505, %v5729
        %v5731 = vpop.f32.mrb[0].mxu0
        %5732 = vmatprep.mubr.f32.mxu0 0.0
        %5733 = vmatmul.mubr.f32.gmra.mrb[0].mxu0 %v5311
        %v5734 = vpop.f32.mrb[0].mxu0
        %v5735 = vadd.f32 %v5510, %v5734
        %v5736 = vpop.f32.mrb[0].mxu0
        %5737 = vmatprep.mubr.f32.mxu0 0.0
        %5738 = vmatmul.mubr.f32.gmra.mrb[0].mxu0 %v5314
        %v5739 = vpop.f32.mrb[0].mxu0
        %v5740 = vadd.f32 %v5515, %v5739
        %v5741 = vpop.f32.mrb[0].mxu0
        %5742 = vmatprep.mubr.f32.mxu0 0.0
        %5743 = vmatmul.mubr.f32.gmra.mrb[0].mxu0 %v5317
        %v5744 = vpop.f32.mrb[0].mxu0
        %v5745 = vadd.f32 %v5520, %v5744
        %v5746 = vpop.f32.mrb[0].mxu0
        %5747 = vmatprep.mubr.f32.mxu0 0.0
        %5748 = vmatmul.mubr.f32.gmra.mrb[0].mxu0 %v5320
        %v5749 = vpop.f32.mrb[0].mxu0
        %v5750 = vadd.f32 %v5525, %v5749
        %v5751 = vpop.f32.mrb[0].mxu0
        %5752 = vmatprep.mubr.f32.mxu0 0.0
        %5753 = vmatmul.mubr.f32.gmra.mrb[0].mxu0 %v5323
        %v5754 = vpop.f32.mrb[0].mxu0
        %v5755 = vadd.f32 %v5530, %v5754
        %v5756 = vpop.f32.mrb[0].mxu0
        %5757 = vmatprep.mubr.f32.mxu0 0.0
        %5758 = vmatmul.mubr.f32.gmra.mrb[0].mxu0 %v5326
        %v5759 = vpop.f32.mrb[0].mxu0
        %v5760 = vadd.f32 %v5535, %v5759
        %v5761 = vpop.f32.mrb[0].mxu0
        %5762 = vmatprep.mubr.f32.mxu0 0.0
        %5763 = vmatmul.mubr.f32.gmra.mrb[0].mxu0 %v5329
        %v5764 = vpop.f32.mrb[0].mxu0
        %v5765 = vadd.f32 %v5540, %v5764
        %v5766 = vpop.f32.mrb[0].mxu0
        %5767 = vmatprep.mubr.f32.mxu0 0.0
        %5768 = vmatmul.mubr.f32.gmra.mrb[0].mxu0 %v5332
        %v5769 = vpop.f32.mrb[0].mxu0
        %v5770 = vadd.f32 %v5545, %v5769
        %v5771 = vpop.f32.mrb[0].mxu0
        %5772 = vmatprep.mubr.f32.mxu0 0.0
        %5773 = vmatmul.mubr.f32.gmra.mrb[0].mxu0 %v5335
        %v5774 = vpop.f32.mrb[0].mxu0
        %v5775 = vadd.f32 %v5550, %v5774
        %v5776 = vpop.f32.mrb[0].mxu0
        %5777 = vmatprep.mubr.f32.mxu0 0.0
        %5778 = vmatmul.mubr.f32.gmra.mrb[0].mxu0 %v5338
        %v5779 = vpop.f32.mrb[0].mxu0
        %v5780 = vadd.f32 %v5555, %v5779
        %v5781 = vpop.f32.mrb[0].mxu0
        %5782 = vmatprep.mubr.f32.mxu0 0.0
        %5783 = vmatmul.mubr.f32.gmra.mrb[0].mxu0 %v5341
        %v5784 = vpop.f32.mrb[0].mxu0
        %v5785 = vadd.f32 %v5560, %v5784
        %v5786 = vpop.f32.mrb[0].mxu0
        %5787 = vmatprep.mubr.f32.mxu0 0.0
        %5788 = vmatmul.mubr.f32.gmra.mrb[0].mxu0 %v5344
        %v5789 = vpop.f32.mrb[0].mxu0
        %v5790 = vadd.f32 %v5565, %v5789
        %v5791 = vpop.f32.mrb[0].mxu0
        %5792 = vmatprep.mubr.f32.mxu0 0.0
        %5793 = vmatmul.mubr.f32.gmra.mrb[0].mxu0 %v5347
        %v5794 = vpop.f32.mrb[0].mxu0
        %v5795 = vadd.f32 %v5570, %v5794
        %v5796 = vpop.f32.mrb[0].mxu0
        %5797 = vmatprep.mubr.f32.mxu0 0.0
        %5798 = vmatmul.mubr.f32.gmra.mrb[0].mxu0 %v5350
        %v5799 = vpop.f32.mrb[0].mxu0
        %v5800 = vadd.f32 %v5575, %v5799
        %v5801 = vpop.f32.mrb[0].mxu0
        %5802 = vmatprep.mubr.f32.mxu0 0.0
        %5803 = vmatmul.mubr.f32.gmra.mrb[0].mxu0 %v5353
        %v5804 = vpop.f32.mrb[0].mxu0
        %v5805 = vadd.f32 %v5580, %v5804
        %v5806 = vpop.f32.mrb[0].mxu0
        %5807 = vdwg.mxu0
        %v5808 = vadd.f32 %v5085, %v5650
        %v5809 = vadd.f32 %v5086, %v5655
        %v5810 = vadd.f32 %v5087, %v5660
        %v5811 = vadd.f32 %v5088, %v5665
        %v5812 = vadd.f32 %v5089, %v5670
        %v5813 = vadd.f32 %v5090, %v5675
        %v5814 = vadd.f32 %v5091, %v5680
        %v5815 = vadd.f32 %v5092, %v5685
        %v5816 = vadd.f32 %v5093, %v5690
        %v5817 = vadd.f32 %v5094, %v5695
        %v5818 = vadd.f32 %v5095, %v5700
        %v5819 = vadd.f32 %v5096, %v5705
        %v5820 = vadd.f32 %v5097, %v5710
        %v5821 = vadd.f32 %v5098, %v5715
        %v5822 = vadd.f32 %v5099, %v5720
        %v5823 = vadd.f32 %v5100, %v5725
        %v5824 = vadd.f32 %v5101, %v5730
        %v5825 = vadd.f32 %v5102, %v5735
        %v5826 = vadd.f32 %v5103, %v5740
        %v5827 = vadd.f32 %v5104, %v5745
        %v5828 = vadd.f32 %v5105, %v5750
        %v5829 = vadd.f32 %v5106, %v5755
        %v5830 = vadd.f32 %v5107, %v5760
        %v5831 = vadd.f32 %v5108, %v5765
        %v5832 = vadd.f32 %v5109, %v5770
        %v5833 = vadd.f32 %v5110, %v5775
        %v5834 = vadd.f32 %v5111, %v5780
        %v5835 = vadd.f32 %v5112, %v5785
        %v5836 = vadd.f32 %v5113, %v5790
        %v5837 = vadd.f32 %v5114, %v5795
        %v5838 = vadd.f32 %v5115, %v5800
        %v5839 = vadd.f32 %v5116, %v5805
        %s5840 = scalar_lea.vmem [#allocation2], 5376
        %v5841 = vld [vmem:[%s5840] sm:$0xff]
        %v5842 = vld [vmem:[%s5840 + $0x8] sm:$0xff]
        %v5843 = vld [vmem:[%s5840 + $0x10] sm:$0xff]
        %v5844 = vld [vmem:[%s5840 + $0x18] sm:$0xff]
        %v5845 = vld [vmem:[%s5840 + $0x20] sm:$0xff]
        %v5846 = vld [vmem:[%s5840 + $0x28] sm:$0xff]
        %v5847 = vld [vmem:[%s5840 + $0x30] sm:$0xff]
        %v5848 = vld [vmem:[%s5840 + $0x38] sm:$0xff]
        %v5849 = vld [vmem:[%s5840 + $0x40] sm:$0xff]
        %v5850 = vld [vmem:[%s5840 + $0x48] sm:$0xff]
        %v5851 = vld [vmem:[%s5840 + $0x50] sm:$0xff]
        %v5852 = vld [vmem:[%s5840 + $0x58] sm:$0xff]
        %v5853 = vld [vmem:[%s5840 + $0x60] sm:$0xff]
        %v5854 = vld [vmem:[%s5840 + $0x68] sm:$0xff]
        %v5855 = vld [vmem:[%s5840 + $0x70] sm:$0xff]
        %v5856 = vld [vmem:[%s5840 + $0x78] sm:$0xff]
        %v5857 = vld [vmem:[%s5840 + $0x80] sm:$0xff]
        %v5858 = vld [vmem:[%s5840 + $0x88] sm:$0xff]
        %v5859 = vld [vmem:[%s5840 + $0x90] sm:$0xff]
        %v5860 = vld [vmem:[%s5840 + $0x98] sm:$0xff]
        %v5861 = vld [vmem:[%s5840 + $0xa0] sm:$0xff]
        %v5862 = vld [vmem:[%s5840 + $0xa8] sm:$0xff]
        %v5863 = vld [vmem:[%s5840 + $0xb0] sm:$0xff]
        %v5864 = vld [vmem:[%s5840 + $0xb8] sm:$0xff]
        %v5865 = vld [vmem:[%s5840 + $0xc0] sm:$0xff]
        %v5866 = vld [vmem:[%s5840 + $0xc8] sm:$0xff]
        %v5867 = vld [vmem:[%s5840 + $0xd0] sm:$0xff]
        %v5868 = vld [vmem:[%s5840 + $0xd8] sm:$0xff]
        %v5869 = vld [vmem:[%s5840 + $0xe0] sm:$0xff]
        %v5870 = vld [vmem:[%s5840 + $0xe8] sm:$0xff]
        %v5871 = vld [vmem:[%s5840 + $0xf0] sm:$0xff]
        %v5872 = vld [vmem:[%s5840 + $0xf8] sm:$0xff]
        %v5873 = vld [vmem:[%s5840 + $0x100] sm:$0xff]
        %v5874 = vld [vmem:[%s5840 + $0x108] sm:$0xff]
        %v5875 = vld [vmem:[%s5840 + $0x110] sm:$0xff]
        %v5876 = vld [vmem:[%s5840 + $0x118] sm:$0xff]
        %v5877 = vld [vmem:[%s5840 + $0x120] sm:$0xff]
        %v5878 = vld [vmem:[%s5840 + $0x128] sm:$0xff]
        %v5879 = vld [vmem:[%s5840 + $0x130] sm:$0xff]
        %v5880 = vld [vmem:[%s5840 + $0x138] sm:$0xff]
        %v5881 = vld [vmem:[%s5840 + $0x140] sm:$0xff]
        %v5882 = vld [vmem:[%s5840 + $0x148] sm:$0xff]
        %v5883 = vld [vmem:[%s5840 + $0x150] sm:$0xff]
        %v5884 = vld [vmem:[%s5840 + $0x158] sm:$0xff]
        %v5885 = vld [vmem:[%s5840 + $0x160] sm:$0xff]
        %v5886 = vld [vmem:[%s5840 + $0x168] sm:$0xff]
        %v5887 = vld [vmem:[%s5840 + $0x170] sm:$0xff]
        %v5888 = vld [vmem:[%s5840 + $0x178] sm:$0xff]
        %v5889 = vld [vmem:[%s5840 + $0x180] sm:$0xff]
        %v5890 = vld [vmem:[%s5840 + $0x188] sm:$0xff]
        %v5891 = vld [vmem:[%s5840 + $0x190] sm:$0xff]
        %v5892 = vld [vmem:[%s5840 + $0x198] sm:$0xff]
        %v5893 = vld [vmem:[%s5840 + $0x1a0] sm:$0xff]
        %v5894 = vld [vmem:[%s5840 + $0x1a8] sm:$0xff]
        %v5895 = vld [vmem:[%s5840 + $0x1b0] sm:$0xff]
        %v5896 = vld [vmem:[%s5840 + $0x1b8] sm:$0xff]
        %v5897 = vld [vmem:[%s5840 + $0x1c0] sm:$0xff]
        %v5898 = vld [vmem:[%s5840 + $0x1c8] sm:$0xff]
        %v5899 = vld [vmem:[%s5840 + $0x1d0] sm:$0xff]
        %v5900 = vld [vmem:[%s5840 + $0x1d8] sm:$0xff]
        %v5901 = vld [vmem:[%s5840 + $0x1e0] sm:$0xff]
        %v5902 = vld [vmem:[%s5840 + $0x1e8] sm:$0xff]
        %v5903 = vld [vmem:[%s5840 + $0x1f0] sm:$0xff]
        %v5904 = vld [vmem:[%s5840 + $0x1f8] sm:$0xff]
        %v5905 = vld [vmem:[%s5840 + $0x200] sm:$0xff]
        %v5906 = vld [vmem:[%s5840 + $0x208] sm:$0xff]
        %v5907 = vld [vmem:[%s5840 + $0x210] sm:$0xff]
        %v5908 = vld [vmem:[%s5840 + $0x218] sm:$0xff]
        %v5909 = vld [vmem:[%s5840 + $0x220] sm:$0xff]
        %v5910 = vld [vmem:[%s5840 + $0x228] sm:$0xff]
        %v5911 = vld [vmem:[%s5840 + $0x230] sm:$0xff]
        %v5912 = vld [vmem:[%s5840 + $0x238] sm:$0xff]
        %v5913 = vld [vmem:[%s5840 + $0x240] sm:$0xff]
        %v5914 = vld [vmem:[%s5840 + $0x248] sm:$0xff]
        %v5915 = vld [vmem:[%s5840 + $0x250] sm:$0xff]
        %v5916 = vld [vmem:[%s5840 + $0x258] sm:$0xff]
        %v5917 = vld [vmem:[%s5840 + $0x260] sm:$0xff]
        %v5918 = vld [vmem:[%s5840 + $0x268] sm:$0xff]
        %v5919 = vld [vmem:[%s5840 + $0x270] sm:$0xff]
        %v5920 = vld [vmem:[%s5840 + $0x278] sm:$0xff]
        %v5921 = vld [vmem:[%s5840 + $0x280] sm:$0xff]
        %v5922 = vld [vmem:[%s5840 + $0x288] sm:$0xff]
        %v5923 = vld [vmem:[%s5840 + $0x290] sm:$0xff]
        %v5924 = vld [vmem:[%s5840 + $0x298] sm:$0xff]
        %v5925 = vld [vmem:[%s5840 + $0x2a0] sm:$0xff]
        %v5926 = vld [vmem:[%s5840 + $0x2a8] sm:$0xff]
        %v5927 = vld [vmem:[%s5840 + $0x2b0] sm:$0xff]
        %v5928 = vld [vmem:[%s5840 + $0x2b8] sm:$0xff]
        %v5929 = vld [vmem:[%s5840 + $0x2c0] sm:$0xff]
        %v5930 = vld [vmem:[%s5840 + $0x2c8] sm:$0xff]
        %v5931 = vld [vmem:[%s5840 + $0x2d0] sm:$0xff]
        %v5932 = vld [vmem:[%s5840 + $0x2d8] sm:$0xff]
        %v5933 = vld [vmem:[%s5840 + $0x2e0] sm:$0xff]
        %v5934 = vld [vmem:[%s5840 + $0x2e8] sm:$0xff]
        %v5935 = vld [vmem:[%s5840 + $0x2f0] sm:$0xff]
        %v5936 = vld [vmem:[%s5840 + $0x2f8] sm:$0xff]
        %v5937 = vlaneseq
        %v5938 = vshrl.u32 %v5937, 7
        %v5939 = vsub.s32 7, %v5938
        %v5940 = vrot.slane %v635, %v5939
        %v5941 = vmul.f32 %v736, %v5940
        %v5942 = vmul.f32 %v741, %v5940
        %v5943 = vmul.f32 %v746, %v5940
        %v5944 = vmul.f32 %v751, %v5940
        %v5945 = vmul.f32 %v756, %v5940
        %v5946 = vmul.f32 %v761, %v5940
        %v5947 = vmul.f32 %v766, %v5940
        %v5948 = vmul.f32 %v771, %v5940
        %v5949 = vmul.f32 %v776, %v5940
        %v5950 = vmul.f32 %v781, %v5940
        %v5951 = vmul.f32 %v786, %v5940
        %v5952 = vmul.f32 %v791, %v5940
        %v5953 = vmul.f32 %v796, %v5940
        %v5954 = vmul.f32 %v801, %v5940
        %v5955 = vmul.f32 %v806, %v5940
        %v5956 = vmul.f32 %v811, %v5940
        %v5957 = vmul.f32 %v816, %v5940
        %v5958 = vmul.f32 %v821, %v5940
        %v5959 = vmul.f32 %v826, %v5940
        %v5960 = vmul.f32 %v831, %v5940
        %v5961 = vmul.f32 %v836, %v5940
        %v5962 = vmul.f32 %v841, %v5940
        %v5963 = vmul.f32 %v846, %v5940
        %v5964 = vmul.f32 %v851, %v5940
        %v5965 = vmul.f32 %v856, %v5940
        %v5966 = vmul.f32 %v861, %v5940
        %v5967 = vmul.f32 %v866, %v5940
        %v5968 = vmul.f32 %v871, %v5940
        %v5969 = vmul.f32 %v876, %v5940
        %v5970 = vmul.f32 %v881, %v5940
        %v5971 = vmul.f32 %v886, %v5940
        %v5972 = vmul.f32 %v891, %v5940
        %v5973 = vmul.f32 %v896, %v5940
        %v5974 = vmul.f32 %v901, %v5940
        %v5975 = vmul.f32 %v906, %v5940
        %v5976 = vmul.f32 %v911, %v5940
        %v5977 = vmul.f32 %v916, %v5940
        %v5978 = vmul.f32 %v921, %v5940
        %v5979 = vmul.f32 %v926, %v5940
        %v5980 = vmul.f32 %v931, %v5940
        %v5981 = vmul.f32 %v936, %v5940
        %v5983 = vsel %vm1125, %v5843, 0
        %v5986 = vsel %vm1125, %v5846, 0
        %v5989 = vsel %vm1125, %v5849, 0
        %v5992 = vsel %vm1125, %v5852, 0
        %v5995 = vsel %vm1125, %v5855, 0
        %v5998 = vsel %vm1125, %v5858, 0
        %v6001 = vsel %vm1125, %v5861, 0
        %v6004 = vsel %vm1125, %v5864, 0
        %v6007 = vsel %vm1125, %v5867, 0
        %v6010 = vsel %vm1125, %v5870, 0
        %v6013 = vsel %vm1125, %v5873, 0
        %v6016 = vsel %vm1125, %v5876, 0
        %v6019 = vsel %vm1125, %v5879, 0
        %v6022 = vsel %vm1125, %v5882, 0
        %v6025 = vsel %vm1125, %v5885, 0
        %v6028 = vsel %vm1125, %v5888, 0
        %v6031 = vsel %vm1125, %v5891, 0
        %v6034 = vsel %vm1125, %v5894, 0
        %v6037 = vsel %vm1125, %v5897, 0
        %v6040 = vsel %vm1125, %v5900, 0
        %v6043 = vsel %vm1125, %v5903, 0
        %v6046 = vsel %vm1125, %v5906, 0
        %v6049 = vsel %vm1125, %v5909, 0
        %v6052 = vsel %vm1125, %v5912, 0
        %v6055 = vsel %vm1125, %v5915, 0
        %v6058 = vsel %vm1125, %v5918, 0
        %v6061 = vsel %vm1125, %v5921, 0
        %v6064 = vsel %vm1125, %v5924, 0
        %v6067 = vsel %vm1125, %v5927, 0
        %v6070 = vsel %vm1125, %v5930, 0
        %v6073 = vsel %vm1125, %v5933, 0
        %v6076 = vsel %vm1125, %v5936, 0
        %v6079 = vsel %vm1222, %v5981, 0
        %6081 = vmatprep.subr.mxu0 0.0
        %6082 = vmatpush1.msra.mxu0 %v5941
        %6083 = vmatprep.subr.mxu0 0.0
        %6084 = vmatpush1.msra.mxu0 %v5942
        %6085 = vmatprep.subr.mxu0 0.0
        %6086 = vmatpush1.msra.mxu0 %v5943
        %6087 = vmatprep.subr.mxu0 0.0
        %6088 = vmatpush1.msra.mxu0 %v5944
        %6089 = vmatprep.subr.mxu0 0.0
        %6090 = vmatpush1.msra.mxu0 %v5945
        %6091 = vmatprep.subr.mxu0 0.0
        %6092 = vmatpush1.msra.mxu0 %v5946
        %6093 = vmatprep.subr.mxu0 0.0
        %6094 = vmatpush1.msra.mxu0 %v5947
        %6095 = vmatprep.subr.mxu0 0.0
        %6096 = vmatpush1.msra.mxu0 %v5948
        %6097 = vmatprep.subr.mxu0 0.0
        %6098 = vmatpush1.msra.mxu0 %v5949
        %6099 = vmatprep.subr.mxu0 0.0
        %6100 = vmatpush1.msra.mxu0 %v5950
        %6101 = vmatprep.subr.mxu0 0.0
        %6102 = vmatpush1.msra.mxu0 %v5951
        %6103 = vmatprep.subr.mxu0 0.0
        %6104 = vmatpush1.msra.mxu0 %v5952
        %6105 = vmatprep.subr.mxu0 0.0
        %6106 = vmatpush1.msra.mxu0 %v5953
        %6107 = vmatprep.subr.mxu0 0.0
        %6108 = vmatpush1.msra.mxu0 %v5954
        %6109 = vmatprep.subr.mxu0 0.0
        %6110 = vmatpush1.msra.mxu0 %v5955
        %6111 = vmatprep.subr.mxu0 0.0
        %6112 = vmatpush1.msra.mxu0 %v5956
        %6113 = vmatprep.subr.mxu0 0.0
        %6114 = vmatpush1.msra.mxu0 %v5957
        %6115 = vmatprep.subr.mxu0 0.0
        %6116 = vmatpush1.msra.mxu0 %v5958
        %6117 = vmatprep.subr.mxu0 0.0
        %6118 = vmatpush1.msra.mxu0 %v5959
        %6119 = vmatprep.subr.mxu0 0.0
        %6120 = vmatpush1.msra.mxu0 %v5960
        %6121 = vmatprep.subr.mxu0 0.0
        %6122 = vmatpush1.msra.mxu0 %v5961
        %6123 = vmatprep.subr.mxu0 0.0
        %6124 = vmatpush1.msra.mxu0 %v5962
        %6125 = vmatprep.subr.mxu0 0.0
        %6126 = vmatpush1.msra.mxu0 %v5963
        %6127 = vmatprep.subr.mxu0 0.0
        %6128 = vmatpush1.msra.mxu0 %v5964
        %6129 = vmatprep.subr.mxu0 0.0
        %6130 = vmatpush1.msra.mxu0 %v5965
        %6131 = vmatprep.subr.mxu0 0.0
        %6132 = vmatpush1.msra.mxu0 %v5966
        %6133 = vmatprep.subr.mxu0 0.0
        %6134 = vmatpush1.msra.mxu0 %v5967
        %6135 = vmatprep.subr.mxu0 0.0
        %6136 = vmatpush1.msra.mxu0 %v5968
        %6137 = vmatprep.subr.mxu0 0.0
        %6138 = vmatpush1.msra.mxu0 %v5969
        %6139 = vmatprep.subr.mxu0 0.0
        %6140 = vmatpush1.msra.mxu0 %v5970
        %6141 = vmatprep.subr.mxu0 0.0
        %6142 = vmatpush1.msra.mxu0 %v5971
        %6143 = vmatprep.subr.mxu0 0.0
        %6144 = vmatpush1.msra.mxu0 %v5972
        %6145 = vmatprep.mubr.f32.mxu0 %v5842
        %6146 = vmatmul.mubr.f32.gmra.mrb[0].mxu0 %v5841
        %v6147 = vpop.f32.mrb[0].mxu0
        %v6148 = vadd.f32 0.0, %v6147
        %v6149 = vpop.f32.mrb[0].mxu0
        %6150 = vmatprep.mubr.f32.mxu0 %v5845
        %6151 = vmatmul.mubr.f32.gmra.mrb[0].mxu0 %v5844
        %v6152 = vpop.f32.mrb[0].mxu0
        %v6153 = vadd.f32 0.0, %v6152
        %v6154 = vpop.f32.mrb[0].mxu0
        %6155 = vmatprep.mubr.f32.mxu0 %v5848
        %6156 = vmatmul.mubr.f32.gmra.mrb[0].mxu0 %v5847
        %v6157 = vpop.f32.mrb[0].mxu0
        %v6158 = vadd.f32 0.0, %v6157
        %v6159 = vpop.f32.mrb[0].mxu0
        %6160 = vmatprep.mubr.f32.mxu0 %v5851
        %6161 = vmatmul.mubr.f32.gmra.mrb[0].mxu0 %v5850
        %v6162 = vpop.f32.mrb[0].mxu0
        %v6163 = vadd.f32 0.0, %v6162
        %v6164 = vpop.f32.mrb[0].mxu0
        %6165 = vmatprep.mubr.f32.mxu0 %v5854
        %6166 = vmatmul.mubr.f32.gmra.mrb[0].mxu0 %v5853
        %v6167 = vpop.f32.mrb[0].mxu0
        %v6168 = vadd.f32 0.0, %v6167
        %v6169 = vpop.f32.mrb[0].mxu0
        %6170 = vmatprep.mubr.f32.mxu0 %v5857
        %6171 = vmatmul.mubr.f32.gmra.mrb[0].mxu0 %v5856
        %v6172 = vpop.f32.mrb[0].mxu0
        %v6173 = vadd.f32 0.0, %v6172
        %v6174 = vpop.f32.mrb[0].mxu0
        %6175 = vmatprep.mubr.f32.mxu0 %v5860
        %6176 = vmatmul.mubr.f32.gmra.mrb[0].mxu0 %v5859
        %v6177 = vpop.f32.mrb[0].mxu0
        %v6178 = vadd.f32 0.0, %v6177
        %v6179 = vpop.f32.mrb[0].mxu0
        %6180 = vmatprep.mubr.f32.mxu0 %v5863
        %6181 = vmatmul.mubr.f32.gmra.mrb[0].mxu0 %v5862
        %v6182 = vpop.f32.mrb[0].mxu0
        %v6183 = vadd.f32 0.0, %v6182
        %v6184 = vpop.f32.mrb[0].mxu0
        %6185 = vmatprep.mubr.f32.mxu0 %v5866
        %6186 = vmatmul.mubr.f32.gmra.mrb[0].mxu0 %v5865
        %v6187 = vpop.f32.mrb[0].mxu0
        %v6188 = vadd.f32 0.0, %v6187
        %v6189 = vpop.f32.mrb[0].mxu0
        %6190 = vmatprep.mubr.f32.mxu0 %v5869
        %6191 = vmatmul.mubr.f32.gmra.mrb[0].mxu0 %v5868
        %v6192 = vpop.f32.mrb[0].mxu0
        %v6193 = vadd.f32 0.0, %v6192
        %v6194 = vpop.f32.mrb[0].mxu0
        %6195 = vmatprep.mubr.f32.mxu0 %v5872
        %6196 = vmatmul.mubr.f32.gmra.mrb[0].mxu0 %v5871
        %v6197 = vpop.f32.mrb[0].mxu0
        %v6198 = vadd.f32 0.0, %v6197
        %v6199 = vpop.f32.mrb[0].mxu0
        %6200 = vmatprep.mubr.f32.mxu0 %v5875
        %6201 = vmatmul.mubr.f32.gmra.mrb[0].mxu0 %v5874
        %v6202 = vpop.f32.mrb[0].mxu0
        %v6203 = vadd.f32 0.0, %v6202
        %v6204 = vpop.f32.mrb[0].mxu0
        %6205 = vmatprep.mubr.f32.mxu0 %v5878
        %6206 = vmatmul.mubr.f32.gmra.mrb[0].mxu0 %v5877
        %v6207 = vpop.f32.mrb[0].mxu0
        %v6208 = vadd.f32 0.0, %v6207
        %v6209 = vpop.f32.mrb[0].mxu0
        %6210 = vmatprep.mubr.f32.mxu0 %v5881
        %6211 = vmatmul.mubr.f32.gmra.mrb[0].mxu0 %v5880
        %v6212 = vpop.f32.mrb[0].mxu0
        %v6213 = vadd.f32 0.0, %v6212
        %v6214 = vpop.f32.mrb[0].mxu0
        %6215 = vmatprep.mubr.f32.mxu0 %v5884
        %6216 = vmatmul.mubr.f32.gmra.mrb[0].mxu0 %v5883
        %v6217 = vpop.f32.mrb[0].mxu0
        %v6218 = vadd.f32 0.0, %v6217
        %v6219 = vpop.f32.mrb[0].mxu0
        %6220 = vmatprep.mubr.f32.mxu0 %v5887
        %6221 = vmatmul.mubr.f32.gmra.mrb[0].mxu0 %v5886
        %v6222 = vpop.f32.mrb[0].mxu0
        %v6223 = vadd.f32 0.0, %v6222
        %v6224 = vpop.f32.mrb[0].mxu0
        %6225 = vmatprep.mubr.f32.mxu0 %v5890
        %6226 = vmatmul.mubr.f32.gmra.mrb[0].mxu0 %v5889
        %v6227 = vpop.f32.mrb[0].mxu0
        %v6228 = vadd.f32 0.0, %v6227
        %v6229 = vpop.f32.mrb[0].mxu0
        %6230 = vmatprep.mubr.f32.mxu0 %v5893
        %6231 = vmatmul.mubr.f32.gmra.mrb[0].mxu0 %v5892
        %v6232 = vpop.f32.mrb[0].mxu0
        %v6233 = vadd.f32 0.0, %v6232
        %v6234 = vpop.f32.mrb[0].mxu0
        %6235 = vmatprep.mubr.f32.mxu0 %v5896
        %6236 = vmatmul.mubr.f32.gmra.mrb[0].mxu0 %v5895
        %v6237 = vpop.f32.mrb[0].mxu0
        %v6238 = vadd.f32 0.0, %v6237
        %v6239 = vpop.f32.mrb[0].mxu0
        %6240 = vmatprep.mubr.f32.mxu0 %v5899
        %6241 = vmatmul.mubr.f32.gmra.mrb[0].mxu0 %v5898
        %v6242 = vpop.f32.mrb[0].mxu0
        %v6243 = vadd.f32 0.0, %v6242
        %v6244 = vpop.f32.mrb[0].mxu0
        %6245 = vmatprep.mubr.f32.mxu0 %v5902
        %6246 = vmatmul.mubr.f32.gmra.mrb[0].mxu0 %v5901
        %v6247 = vpop.f32.mrb[0].mxu0
        %v6248 = vadd.f32 0.0, %v6247
        %v6249 = vpop.f32.mrb[0].mxu0
        %6250 = vmatprep.mubr.f32.mxu0 %v5905
        %6251 = vmatmul.mubr.f32.gmra.mrb[0].mxu0 %v5904
        %v6252 = vpop.f32.mrb[0].mxu0
        %v6253 = vadd.f32 0.0, %v6252
        %v6254 = vpop.f32.mrb[0].mxu0
        %6255 = vmatprep.mubr.f32.mxu0 %v5908
        %6256 = vmatmul.mubr.f32.gmra.mrb[0].mxu0 %v5907
        %v6257 = vpop.f32.mrb[0].mxu0
        %v6258 = vadd.f32 0.0, %v6257
        %v6259 = vpop.f32.mrb[0].mxu0
        %6260 = vmatprep.mubr.f32.mxu0 %v5911
        %6261 = vmatmul.mubr.f32.gmra.mrb[0].mxu0 %v5910
        %v6262 = vpop.f32.mrb[0].mxu0
        %v6263 = vadd.f32 0.0, %v6262
        %v6264 = vpop.f32.mrb[0].mxu0
        %6265 = vmatprep.mubr.f32.mxu0 %v5914
        %6266 = vmatmul.mubr.f32.gmra.mrb[0].mxu0 %v5913
        %v6267 = vpop.f32.mrb[0].mxu0
        %v6268 = vadd.f32 0.0, %v6267
        %v6269 = vpop.f32.mrb[0].mxu0
        %6270 = vmatprep.mubr.f32.mxu0 %v5917
        %6271 = vmatmul.mubr.f32.gmra.mrb[0].mxu0 %v5916
        %v6272 = vpop.f32.mrb[0].mxu0
        %v6273 = vadd.f32 0.0, %v6272
        %v6274 = vpop.f32.mrb[0].mxu0
        %6275 = vmatprep.mubr.f32.mxu0 %v5920
        %6276 = vmatmul.mubr.f32.gmra.mrb[0].mxu0 %v5919
        %v6277 = vpop.f32.mrb[0].mxu0
        %v6278 = vadd.f32 0.0, %v6277
        %v6279 = vpop.f32.mrb[0].mxu0
        %6280 = vmatprep.mubr.f32.mxu0 %v5923
        %6281 = vmatmul.mubr.f32.gmra.mrb[0].mxu0 %v5922
        %v6282 = vpop.f32.mrb[0].mxu0
        %v6283 = vadd.f32 0.0, %v6282
        %v6284 = vpop.f32.mrb[0].mxu0
        %6285 = vmatprep.mubr.f32.mxu0 %v5926
        %6286 = vmatmul.mubr.f32.gmra.mrb[0].mxu0 %v5925
        %v6287 = vpop.f32.mrb[0].mxu0
        %v6288 = vadd.f32 0.0, %v6287
        %v6289 = vpop.f32.mrb[0].mxu0
        %6290 = vmatprep.mubr.f32.mxu0 %v5929
        %6291 = vmatmul.mubr.f32.gmra.mrb[0].mxu0 %v5928
        %v6292 = vpop.f32.mrb[0].mxu0
        %v6293 = vadd.f32 0.0, %v6292
        %v6294 = vpop.f32.mrb[0].mxu0
        %6295 = vmatprep.mubr.f32.mxu0 %v5932
        %6296 = vmatmul.mubr.f32.gmra.mrb[0].mxu0 %v5931
        %v6297 = vpop.f32.mrb[0].mxu0
        %v6298 = vadd.f32 0.0, %v6297
        %v6299 = vpop.f32.mrb[0].mxu0
        %6300 = vmatprep.mubr.f32.mxu0 %v5935
        %6301 = vmatmul.mubr.f32.gmra.mrb[0].mxu0 %v5934
        %v6302 = vpop.f32.mrb[0].mxu0
        %v6303 = vadd.f32 0.0, %v6302
        %v6304 = vpop.f32.mrb[0].mxu0
        %6305 = vdwg.mxu0
        %6306 = vmatprep.subr.mxu0 0.0
        %6307 = vmatpush1.msra.mxu0 %v5973
        %6308 = vmatprep.subr.mxu0 0.0
        %6309 = vmatpush1.msra.mxu0 %v5974
        %6310 = vmatprep.subr.mxu0 0.0
        %6311 = vmatpush1.msra.mxu0 %v5975
        %6312 = vmatprep.subr.mxu0 0.0
        %6313 = vmatpush1.msra.mxu0 %v5976
        %6314 = vmatprep.subr.mxu0 0.0
        %6315 = vmatpush1.msra.mxu0 %v5977
        %6316 = vmatprep.subr.mxu0 0.0
        %6317 = vmatpush1.msra.mxu0 %v5978
        %6318 = vmatprep.subr.mxu0 0.0
        %6319 = vmatpush1.msra.mxu0 %v5979
        %6320 = vmatprep.subr.mxu0 0.0
        %6321 = vmatpush1.msra.mxu0 %v5980
        %6322 = vmatprep.subr.mxu0 0.0
        %6323 = vmatpush1.msra.mxu0 %v6079
        %6324 = vmatprep.subr.mxu0 0.0
        %6325 = vmatpush1.msra.mxu0 0.0
        %6326 = vmatprep.subr.mxu0 0.0
        %6327 = vmatpush1.msra.mxu0 0.0
        %6328 = vmatprep.subr.mxu0 0.0
        %6329 = vmatpush1.msra.mxu0 0.0
        %6330 = vmatprep.subr.mxu0 0.0
        %6331 = vmatpush1.msra.mxu0 0.0
        %6332 = vmatprep.subr.mxu0 0.0
        %6333 = vmatpush1.msra.mxu0 0.0
        %6334 = vmatprep.subr.mxu0 0.0
        %6335 = vmatpush1.msra.mxu0 0.0
        %6336 = vmatprep.subr.mxu0 0.0
        %6337 = vmatpush1.msra.mxu0 0.0
        %6338 = vmatprep.subr.mxu0 0.0
        %6339 = vmatpush1.msra.mxu0 0.0
        %6340 = vmatprep.subr.mxu0 0.0
        %6341 = vmatpush1.msra.mxu0 0.0
        %6342 = vmatprep.subr.mxu0 0.0
        %6343 = vmatpush1.msra.mxu0 0.0
        %6344 = vmatprep.subr.mxu0 0.0
        %6345 = vmatpush1.msra.mxu0 0.0
        %6346 = vmatprep.subr.mxu0 0.0
        %6347 = vmatpush1.msra.mxu0 0.0
        %6348 = vmatprep.subr.mxu0 0.0
        %6349 = vmatpush1.msra.mxu0 0.0
        %6350 = vmatprep.subr.mxu0 0.0
        %6351 = vmatpush1.msra.mxu0 0.0
        %6352 = vmatprep.subr.mxu0 0.0
        %6353 = vmatpush1.msra.mxu0 0.0
        %6354 = vmatprep.subr.mxu0 0.0
        %6355 = vmatpush1.msra.mxu0 0.0
        %6356 = vmatprep.subr.mxu0 0.0
        %6357 = vmatpush1.msra.mxu0 0.0
        %6358 = vmatprep.subr.mxu0 0.0
        %6359 = vmatpush1.msra.mxu0 0.0
        %6360 = vmatprep.subr.mxu0 0.0
        %6361 = vmatpush1.msra.mxu0 0.0
        %6362 = vmatprep.subr.mxu0 0.0
        %6363 = vmatpush1.msra.mxu0 0.0
        %6364 = vmatprep.subr.mxu0 0.0
        %6365 = vmatpush1.msra.mxu0 0.0
        %6366 = vmatprep.subr.mxu0 0.0
        %6367 = vmatpush1.msra.mxu0 0.0
        %6368 = vmatprep.subr.mxu0 0.0
        %6369 = vmatpush1.msra.mxu0 0.0
        %6370 = vmatprep.mubr.f32.mxu0 0.0
        %6371 = vmatmul.mubr.f32.gmra.mrb[0].mxu0 %v5983
        %v6372 = vpop.f32.mrb[0].mxu0
        %v6373 = vadd.f32 %v6148, %v6372
        %v6374 = vpop.f32.mrb[0].mxu0
        %6375 = vmatprep.mubr.f32.mxu0 0.0
        %6376 = vmatmul.mubr.f32.gmra.mrb[0].mxu0 %v5986
        %v6377 = vpop.f32.mrb[0].mxu0
        %v6378 = vadd.f32 %v6153, %v6377
        %v6379 = vpop.f32.mrb[0].mxu0
        %6380 = vmatprep.mubr.f32.mxu0 0.0
        %6381 = vmatmul.mubr.f32.gmra.mrb[0].mxu0 %v5989
        %v6382 = vpop.f32.mrb[0].mxu0
        %v6383 = vadd.f32 %v6158, %v6382
        %v6384 = vpop.f32.mrb[0].mxu0
        %6385 = vmatprep.mubr.f32.mxu0 0.0
        %6386 = vmatmul.mubr.f32.gmra.mrb[0].mxu0 %v5992
        %v6387 = vpop.f32.mrb[0].mxu0
        %v6388 = vadd.f32 %v6163, %v6387
        %v6389 = vpop.f32.mrb[0].mxu0
        %6390 = vmatprep.mubr.f32.mxu0 0.0
        %6391 = vmatmul.mubr.f32.gmra.mrb[0].mxu0 %v5995
        %v6392 = vpop.f32.mrb[0].mxu0
        %v6393 = vadd.f32 %v6168, %v6392
        %v6394 = vpop.f32.mrb[0].mxu0
        %6395 = vmatprep.mubr.f32.mxu0 0.0
        %6396 = vmatmul.mubr.f32.gmra.mrb[0].mxu0 %v5998
        %v6397 = vpop.f32.mrb[0].mxu0
        %v6398 = vadd.f32 %v6173, %v6397
        %v6399 = vpop.f32.mrb[0].mxu0
        %6400 = vmatprep.mubr.f32.mxu0 0.0
        %6401 = vmatmul.mubr.f32.gmra.mrb[0].mxu0 %v6001
        %v6402 = vpop.f32.mrb[0].mxu0
        %v6403 = vadd.f32 %v6178, %v6402
        %v6404 = vpop.f32.mrb[0].mxu0
        %6405 = vmatprep.mubr.f32.mxu0 0.0
        %6406 = vmatmul.mubr.f32.gmra.mrb[0].mxu0 %v6004
        %v6407 = vpop.f32.mrb[0].mxu0
        %v6408 = vadd.f32 %v6183, %v6407
        %v6409 = vpop.f32.mrb[0].mxu0
        %6410 = vmatprep.mubr.f32.mxu0 0.0
        %6411 = vmatmul.mubr.f32.gmra.mrb[0].mxu0 %v6007
        %v6412 = vpop.f32.mrb[0].mxu0
        %v6413 = vadd.f32 %v6188, %v6412
        %v6414 = vpop.f32.mrb[0].mxu0
        %6415 = vmatprep.mubr.f32.mxu0 0.0
        %6416 = vmatmul.mubr.f32.gmra.mrb[0].mxu0 %v6010
        %v6417 = vpop.f32.mrb[0].mxu0
        %v6418 = vadd.f32 %v6193, %v6417
        %v6419 = vpop.f32.mrb[0].mxu0
        %6420 = vmatprep.mubr.f32.mxu0 0.0
        %6421 = vmatmul.mubr.f32.gmra.mrb[0].mxu0 %v6013
        %v6422 = vpop.f32.mrb[0].mxu0
        %v6423 = vadd.f32 %v6198, %v6422
        %v6424 = vpop.f32.mrb[0].mxu0
        %6425 = vmatprep.mubr.f32.mxu0 0.0
        %6426 = vmatmul.mubr.f32.gmra.mrb[0].mxu0 %v6016
        %v6427 = vpop.f32.mrb[0].mxu0
        %v6428 = vadd.f32 %v6203, %v6427
        %v6429 = vpop.f32.mrb[0].mxu0
        %6430 = vmatprep.mubr.f32.mxu0 0.0
        %6431 = vmatmul.mubr.f32.gmra.mrb[0].mxu0 %v6019
        %v6432 = vpop.f32.mrb[0].mxu0
        %v6433 = vadd.f32 %v6208, %v6432
        %v6434 = vpop.f32.mrb[0].mxu0
        %6435 = vmatprep.mubr.f32.mxu0 0.0
        %6436 = vmatmul.mubr.f32.gmra.mrb[0].mxu0 %v6022
        %v6437 = vpop.f32.mrb[0].mxu0
        %v6438 = vadd.f32 %v6213, %v6437
        %v6439 = vpop.f32.mrb[0].mxu0
        %6440 = vmatprep.mubr.f32.mxu0 0.0
        %6441 = vmatmul.mubr.f32.gmra.mrb[0].mxu0 %v6025
        %v6442 = vpop.f32.mrb[0].mxu0
        %v6443 = vadd.f32 %v6218, %v6442
        %v6444 = vpop.f32.mrb[0].mxu0
        %6445 = vmatprep.mubr.f32.mxu0 0.0
        %6446 = vmatmul.mubr.f32.gmra.mrb[0].mxu0 %v6028
        %v6447 = vpop.f32.mrb[0].mxu0
        %v6448 = vadd.f32 %v6223, %v6447
        %v6449 = vpop.f32.mrb[0].mxu0
        %6450 = vmatprep.mubr.f32.mxu0 0.0
        %6451 = vmatmul.mubr.f32.gmra.mrb[0].mxu0 %v6031
        %v6452 = vpop.f32.mrb[0].mxu0
        %v6453 = vadd.f32 %v6228, %v6452
        %v6454 = vpop.f32.mrb[0].mxu0
        %6455 = vmatprep.mubr.f32.mxu0 0.0
        %6456 = vmatmul.mubr.f32.gmra.mrb[0].mxu0 %v6034
        %v6457 = vpop.f32.mrb[0].mxu0
        %v6458 = vadd.f32 %v6233, %v6457
        %v6459 = vpop.f32.mrb[0].mxu0
        %6460 = vmatprep.mubr.f32.mxu0 0.0
        %6461 = vmatmul.mubr.f32.gmra.mrb[0].mxu0 %v6037
        %v6462 = vpop.f32.mrb[0].mxu0
        %v6463 = vadd.f32 %v6238, %v6462
        %v6464 = vpop.f32.mrb[0].mxu0
        %6465 = vmatprep.mubr.f32.mxu0 0.0
        %6466 = vmatmul.mubr.f32.gmra.mrb[0].mxu0 %v6040
        %v6467 = vpop.f32.mrb[0].mxu0
        %v6468 = vadd.f32 %v6243, %v6467
        %v6469 = vpop.f32.mrb[0].mxu0
        %6470 = vmatprep.mubr.f32.mxu0 0.0
        %6471 = vmatmul.mubr.f32.gmra.mrb[0].mxu0 %v6043
        %v6472 = vpop.f32.mrb[0].mxu0
        %v6473 = vadd.f32 %v6248, %v6472
        %v6474 = vpop.f32.mrb[0].mxu0
        %6475 = vmatprep.mubr.f32.mxu0 0.0
        %6476 = vmatmul.mubr.f32.gmra.mrb[0].mxu0 %v6046
        %v6477 = vpop.f32.mrb[0].mxu0
        %v6478 = vadd.f32 %v6253, %v6477
        %v6479 = vpop.f32.mrb[0].mxu0
        %6480 = vmatprep.mubr.f32.mxu0 0.0
        %6481 = vmatmul.mubr.f32.gmra.mrb[0].mxu0 %v6049
        %v6482 = vpop.f32.mrb[0].mxu0
        %v6483 = vadd.f32 %v6258, %v6482
        %v6484 = vpop.f32.mrb[0].mxu0
        %6485 = vmatprep.mubr.f32.mxu0 0.0
        %6486 = vmatmul.mubr.f32.gmra.mrb[0].mxu0 %v6052
        %v6487 = vpop.f32.mrb[0].mxu0
        %v6488 = vadd.f32 %v6263, %v6487
        %v6489 = vpop.f32.mrb[0].mxu0
        %6490 = vmatprep.mubr.f32.mxu0 0.0
        %6491 = vmatmul.mubr.f32.gmra.mrb[0].mxu0 %v6055
        %v6492 = vpop.f32.mrb[0].mxu0
        %v6493 = vadd.f32 %v6268, %v6492
        %v6494 = vpop.f32.mrb[0].mxu0
        %6495 = vmatprep.mubr.f32.mxu0 0.0
        %6496 = vmatmul.mubr.f32.gmra.mrb[0].mxu0 %v6058
        %v6497 = vpop.f32.mrb[0].mxu0
        %v6498 = vadd.f32 %v6273, %v6497
        %v6499 = vpop.f32.mrb[0].mxu0
        %6500 = vmatprep.mubr.f32.mxu0 0.0
        %6501 = vmatmul.mubr.f32.gmra.mrb[0].mxu0 %v6061
        %v6502 = vpop.f32.mrb[0].mxu0
        %v6503 = vadd.f32 %v6278, %v6502
        %v6504 = vpop.f32.mrb[0].mxu0
        %6505 = vmatprep.mubr.f32.mxu0 0.0
        %6506 = vmatmul.mubr.f32.gmra.mrb[0].mxu0 %v6064
        %v6507 = vpop.f32.mrb[0].mxu0
        %v6508 = vadd.f32 %v6283, %v6507
        %v6509 = vpop.f32.mrb[0].mxu0
        %6510 = vmatprep.mubr.f32.mxu0 0.0
        %6511 = vmatmul.mubr.f32.gmra.mrb[0].mxu0 %v6067
        %v6512 = vpop.f32.mrb[0].mxu0
        %v6513 = vadd.f32 %v6288, %v6512
        %v6514 = vpop.f32.mrb[0].mxu0
        %6515 = vmatprep.mubr.f32.mxu0 0.0
        %6516 = vmatmul.mubr.f32.gmra.mrb[0].mxu0 %v6070
        %v6517 = vpop.f32.mrb[0].mxu0
        %v6518 = vadd.f32 %v6293, %v6517
        %v6519 = vpop.f32.mrb[0].mxu0
        %6520 = vmatprep.mubr.f32.mxu0 0.0
        %6521 = vmatmul.mubr.f32.gmra.mrb[0].mxu0 %v6073
        %v6522 = vpop.f32.mrb[0].mxu0
        %v6523 = vadd.f32 %v6298, %v6522
        %v6524 = vpop.f32.mrb[0].mxu0
        %6525 = vmatprep.mubr.f32.mxu0 0.0
        %6526 = vmatmul.mubr.f32.gmra.mrb[0].mxu0 %v6076
        %v6527 = vpop.f32.mrb[0].mxu0
        %v6528 = vadd.f32 %v6303, %v6527
        %v6529 = vpop.f32.mrb[0].mxu0
        %6530 = vdwg.mxu0
        %v6531 = vadd.f32 %v5808, %v6373
        %v6532 = vadd.f32 %v5809, %v6378
        %v6533 = vadd.f32 %v5810, %v6383
        %v6534 = vadd.f32 %v5811, %v6388
        %v6535 = vadd.f32 %v5812, %v6393
        %v6536 = vadd.f32 %v5813, %v6398
        %v6537 = vadd.f32 %v5814, %v6403
        %v6538 = vadd.f32 %v5815, %v6408
        %v6539 = vadd.f32 %v5816, %v6413
        %v6540 = vadd.f32 %v5817, %v6418
        %v6541 = vadd.f32 %v5818, %v6423
        %v6542 = vadd.f32 %v5819, %v6428
        %v6543 = vadd.f32 %v5820, %v6433
        %v6544 = vadd.f32 %v5821, %v6438
        %v6545 = vadd.f32 %v5822, %v6443
        %v6546 = vadd.f32 %v5823, %v6448
        %v6547 = vadd.f32 %v5824, %v6453
        %v6548 = vadd.f32 %v5825, %v6458
        %v6549 = vadd.f32 %v5826, %v6463
        %v6550 = vadd.f32 %v5827, %v6468
        %v6551 = vadd.f32 %v5828, %v6473
        %v6552 = vadd.f32 %v5829, %v6478
        %v6553 = vadd.f32 %v5830, %v6483
        %v6554 = vadd.f32 %v5831, %v6488
        %v6555 = vadd.f32 %v5832, %v6493
        %v6556 = vadd.f32 %v5833, %v6498
        %v6557 = vadd.f32 %v5834, %v6503
        %v6558 = vadd.f32 %v5835, %v6508
        %v6559 = vadd.f32 %v5836, %v6513
        %v6560 = vadd.f32 %v5837, %v6518
        %v6561 = vadd.f32 %v5838, %v6523
        %v6562 = vadd.f32 %v5839, %v6528
        %s6563 = scalar_lea.vmem [#allocation2], 6144
        %v6564 = vld [vmem:[%s6563] sm:$0xff]
        %v6565 = vld [vmem:[%s6563 + $0x8] sm:$0xff]
        %v6566 = vld [vmem:[%s6563 + $0x10] sm:$0xff]
        %v6567 = vld [vmem:[%s6563 + $0x18] sm:$0xff]
        %v6568 = vld [vmem:[%s6563 + $0x20] sm:$0xff]
        %v6569 = vld [vmem:[%s6563 + $0x28] sm:$0xff]
        %v6570 = vld [vmem:[%s6563 + $0x30] sm:$0xff]
        %v6571 = vld [vmem:[%s6563 + $0x38] sm:$0xff]
        %v6572 = vld [vmem:[%s6563 + $0x40] sm:$0xff]
        %v6573 = vld [vmem:[%s6563 + $0x48] sm:$0xff]
        %v6574 = vld [vmem:[%s6563 + $0x50] sm:$0xff]
        %v6575 = vld [vmem:[%s6563 + $0x58] sm:$0xff]
        %v6576 = vld [vmem:[%s6563 + $0x60] sm:$0xff]
        %v6577 = vld [vmem:[%s6563 + $0x68] sm:$0xff]
        %v6578 = vld [vmem:[%s6563 + $0x70] sm:$0xff]
        %v6579 = vld [vmem:[%s6563 + $0x78] sm:$0xff]
        %v6580 = vld [vmem:[%s6563 + $0x80] sm:$0xff]
        %v6581 = vld [vmem:[%s6563 + $0x88] sm:$0xff]
        %v6582 = vld [vmem:[%s6563 + $0x90] sm:$0xff]
        %v6583 = vld [vmem:[%s6563 + $0x98] sm:$0xff]
        %v6584 = vld [vmem:[%s6563 + $0xa0] sm:$0xff]
        %v6585 = vld [vmem:[%s6563 + $0xa8] sm:$0xff]
        %v6586 = vld [vmem:[%s6563 + $0xb0] sm:$0xff]
        %v6587 = vld [vmem:[%s6563 + $0xb8] sm:$0xff]
        %v6588 = vld [vmem:[%s6563 + $0xc0] sm:$0xff]
        %v6589 = vld [vmem:[%s6563 + $0xc8] sm:$0xff]
        %v6590 = vld [vmem:[%s6563 + $0xd0] sm:$0xff]
        %v6591 = vld [vmem:[%s6563 + $0xd8] sm:$0xff]
        %v6592 = vld [vmem:[%s6563 + $0xe0] sm:$0xff]
        %v6593 = vld [vmem:[%s6563 + $0xe8] sm:$0xff]
        %v6594 = vld [vmem:[%s6563 + $0xf0] sm:$0xff]
        %v6595 = vld [vmem:[%s6563 + $0xf8] sm:$0xff]
        %v6596 = vld [vmem:[%s6563 + $0x100] sm:$0xff]
        %v6597 = vld [vmem:[%s6563 + $0x108] sm:$0xff]
        %v6598 = vld [vmem:[%s6563 + $0x110] sm:$0xff]
        %v6599 = vld [vmem:[%s6563 + $0x118] sm:$0xff]
        %v6600 = vld [vmem:[%s6563 + $0x120] sm:$0xff]
        %v6601 = vld [vmem:[%s6563 + $0x128] sm:$0xff]
        %v6602 = vld [vmem:[%s6563 + $0x130] sm:$0xff]
        %v6603 = vld [vmem:[%s6563 + $0x138] sm:$0xff]
        %v6604 = vld [vmem:[%s6563 + $0x140] sm:$0xff]
        %v6605 = vld [vmem:[%s6563 + $0x148] sm:$0xff]
        %v6606 = vld [vmem:[%s6563 + $0x150] sm:$0xff]
        %v6607 = vld [vmem:[%s6563 + $0x158] sm:$0xff]
        %v6608 = vld [vmem:[%s6563 + $0x160] sm:$0xff]
        %v6609 = vld [vmem:[%s6563 + $0x168] sm:$0xff]
        %v6610 = vld [vmem:[%s6563 + $0x170] sm:$0xff]
        %v6611 = vld [vmem:[%s6563 + $0x178] sm:$0xff]
        %v6612 = vld [vmem:[%s6563 + $0x180] sm:$0xff]
        %v6613 = vld [vmem:[%s6563 + $0x188] sm:$0xff]
        %v6614 = vld [vmem:[%s6563 + $0x190] sm:$0xff]
        %v6615 = vld [vmem:[%s6563 + $0x198] sm:$0xff]
        %v6616 = vld [vmem:[%s6563 + $0x1a0] sm:$0xff]
        %v6617 = vld [vmem:[%s6563 + $0x1a8] sm:$0xff]
        %v6618 = vld [vmem:[%s6563 + $0x1b0] sm:$0xff]
        %v6619 = vld [vmem:[%s6563 + $0x1b8] sm:$0xff]
        %v6620 = vld [vmem:[%s6563 + $0x1c0] sm:$0xff]
        %v6621 = vld [vmem:[%s6563 + $0x1c8] sm:$0xff]
        %v6622 = vld [vmem:[%s6563 + $0x1d0] sm:$0xff]
        %v6623 = vld [vmem:[%s6563 + $0x1d8] sm:$0xff]
        %v6624 = vld [vmem:[%s6563 + $0x1e0] sm:$0xff]
        %v6625 = vld [vmem:[%s6563 + $0x1e8] sm:$0xff]
        %v6626 = vld [vmem:[%s6563 + $0x1f0] sm:$0xff]
        %v6627 = vld [vmem:[%s6563 + $0x1f8] sm:$0xff]
        %v6628 = vld [vmem:[%s6563 + $0x200] sm:$0xff]
        %v6629 = vld [vmem:[%s6563 + $0x208] sm:$0xff]
        %v6630 = vld [vmem:[%s6563 + $0x210] sm:$0xff]
        %v6631 = vld [vmem:[%s6563 + $0x218] sm:$0xff]
        %v6632 = vld [vmem:[%s6563 + $0x220] sm:$0xff]
        %v6633 = vld [vmem:[%s6563 + $0x228] sm:$0xff]
        %v6634 = vld [vmem:[%s6563 + $0x230] sm:$0xff]
        %v6635 = vld [vmem:[%s6563 + $0x238] sm:$0xff]
        %v6636 = vld [vmem:[%s6563 + $0x240] sm:$0xff]
        %v6637 = vld [vmem:[%s6563 + $0x248] sm:$0xff]
        %v6638 = vld [vmem:[%s6563 + $0x250] sm:$0xff]
        %v6639 = vld [vmem:[%s6563 + $0x258] sm:$0xff]
        %v6640 = vld [vmem:[%s6563 + $0x260] sm:$0xff]
        %v6641 = vld [vmem:[%s6563 + $0x268] sm:$0xff]
        %v6642 = vld [vmem:[%s6563 + $0x270] sm:$0xff]
        %v6643 = vld [vmem:[%s6563 + $0x278] sm:$0xff]
        %v6644 = vld [vmem:[%s6563 + $0x280] sm:$0xff]
        %v6645 = vld [vmem:[%s6563 + $0x288] sm:$0xff]
        %v6646 = vld [vmem:[%s6563 + $0x290] sm:$0xff]
        %v6647 = vld [vmem:[%s6563 + $0x298] sm:$0xff]
        %v6648 = vld [vmem:[%s6563 + $0x2a0] sm:$0xff]
        %v6649 = vld [vmem:[%s6563 + $0x2a8] sm:$0xff]
        %v6650 = vld [vmem:[%s6563 + $0x2b0] sm:$0xff]
        %v6651 = vld [vmem:[%s6563 + $0x2b8] sm:$0xff]
        %v6652 = vld [vmem:[%s6563 + $0x2c0] sm:$0xff]
        %v6653 = vld [vmem:[%s6563 + $0x2c8] sm:$0xff]
        %v6654 = vld [vmem:[%s6563 + $0x2d0] sm:$0xff]
        %v6655 = vld [vmem:[%s6563 + $0x2d8] sm:$0xff]
        %v6656 = vld [vmem:[%s6563 + $0x2e0] sm:$0xff]
        %v6657 = vld [vmem:[%s6563 + $0x2e8] sm:$0xff]
        %v6658 = vld [vmem:[%s6563 + $0x2f0] sm:$0xff]
        %v6659 = vld [vmem:[%s6563 + $0x2f8] sm:$0xff]
        %v6660 = vlaneseq
        %v6661 = vshrl.u32 %v6660, 7
        %v6662 = vsub.s32 0, %v6661
        %v6663 = vrot.slane %v636, %v6662
        %v6664 = vmul.f32 %v736, %v6663
        %v6665 = vmul.f32 %v741, %v6663
        %v6666 = vmul.f32 %v746, %v6663
        %v6667 = vmul.f32 %v751, %v6663
        %v6668 = vmul.f32 %v756, %v6663
        %v6669 = vmul.f32 %v761, %v6663
        %v6670 = vmul.f32 %v766, %v6663
        %v6671 = vmul.f32 %v771, %v6663
        %v6672 = vmul.f32 %v776, %v6663
        %v6673 = vmul.f32 %v781, %v6663
        %v6674 = vmul.f32 %v786, %v6663
        %v6675 = vmul.f32 %v791, %v6663
        %v6676 = vmul.f32 %v796, %v6663
        %v6677 = vmul.f32 %v801, %v6663
        %v6678 = vmul.f32 %v806, %v6663
        %v6679 = vmul.f32 %v811, %v6663
        %v6680 = vmul.f32 %v816, %v6663
        %v6681 = vmul.f32 %v821, %v6663
        %v6682 = vmul.f32 %v826, %v6663
        %v6683 = vmul.f32 %v831, %v6663
        %v6684 = vmul.f32 %v836, %v6663
        %v6685 = vmul.f32 %v841, %v6663
        %v6686 = vmul.f32 %v846, %v6663
        %v6687 = vmul.f32 %v851, %v6663
        %v6688 = vmul.f32 %v856, %v6663
        %v6689 = vmul.f32 %v861, %v6663
        %v6690 = vmul.f32 %v866, %v6663
        %v6691 = vmul.f32 %v871, %v6663
        %v6692 = vmul.f32 %v876, %v6663
        %v6693 = vmul.f32 %v881, %v6663
        %v6694 = vmul.f32 %v886, %v6663
        %v6695 = vmul.f32 %v891, %v6663
        %v6696 = vmul.f32 %v896, %v6663
        %v6697 = vmul.f32 %v901, %v6663
        %v6698 = vmul.f32 %v906, %v6663
        %v6699 = vmul.f32 %v911, %v6663
        %v6700 = vmul.f32 %v916, %v6663
        %v6701 = vmul.f32 %v921, %v6663
        %v6702 = vmul.f32 %v926, %v6663
        %v6703 = vmul.f32 %v931, %v6663
        %v6704 = vmul.f32 %v936, %v6663
        %v6706 = vsel %vm1125, %v6566, 0
        %v6709 = vsel %vm1125, %v6569, 0
        %v6712 = vsel %vm1125, %v6572, 0
        %v6715 = vsel %vm1125, %v6575, 0
        %v6718 = vsel %vm1125, %v6578, 0
        %v6721 = vsel %vm1125, %v6581, 0
        %v6724 = vsel %vm1125, %v6584, 0
        %v6727 = vsel %vm1125, %v6587, 0
        %v6730 = vsel %vm1125, %v6590, 0
        %v6733 = vsel %vm1125, %v6593, 0
        %v6736 = vsel %vm1125, %v6596, 0
        %v6739 = vsel %vm1125, %v6599, 0
        %v6742 = vsel %vm1125, %v6602, 0
        %v6745 = vsel %vm1125, %v6605, 0
        %v6748 = vsel %vm1125, %v6608, 0
        %v6751 = vsel %vm1125, %v6611, 0
        %v6754 = vsel %vm1125, %v6614, 0
        %v6757 = vsel %vm1125, %v6617, 0
        %v6760 = vsel %vm1125, %v6620, 0
        %v6763 = vsel %vm1125, %v6623, 0
        %v6766 = vsel %vm1125, %v6626, 0
        %v6769 = vsel %vm1125, %v6629, 0
        %v6772 = vsel %vm1125, %v6632, 0
        %v6775 = vsel %vm1125, %v6635, 0
        %v6778 = vsel %vm1125, %v6638, 0
        %v6781 = vsel %vm1125, %v6641, 0
        %v6784 = vsel %vm1125, %v6644, 0
        %v6787 = vsel %vm1125, %v6647, 0
        %v6790 = vsel %vm1125, %v6650, 0
        %v6793 = vsel %vm1125, %v6653, 0
        %v6796 = vsel %vm1125, %v6656, 0
        %v6799 = vsel %vm1125, %v6659, 0
        %v6802 = vsel %vm1222, %v6704, 0
        %6804 = vmatprep.subr.mxu0 0.0
        %6805 = vmatpush1.msra.mxu0 %v6664
        %6806 = vmatprep.subr.mxu0 0.0
        %6807 = vmatpush1.msra.mxu0 %v6665
        %6808 = vmatprep.subr.mxu0 0.0
        %6809 = vmatpush1.msra.mxu0 %v6666
        %6810 = vmatprep.subr.mxu0 0.0
        %6811 = vmatpush1.msra.mxu0 %v6667
        %6812 = vmatprep.subr.mxu0 0.0
        %6813 = vmatpush1.msra.mxu0 %v6668
        %6814 = vmatprep.subr.mxu0 0.0
        %6815 = vmatpush1.msra.mxu0 %v6669
        %6816 = vmatprep.subr.mxu0 0.0
        %6817 = vmatpush1.msra.mxu0 %v6670
        %6818 = vmatprep.subr.mxu0 0.0
        %6819 = vmatpush1.msra.mxu0 %v6671
        %6820 = vmatprep.subr.mxu0 0.0
        %6821 = vmatpush1.msra.mxu0 %v6672
        %6822 = vmatprep.subr.mxu0 0.0
        %6823 = vmatpush1.msra.mxu0 %v6673
        %6824 = vmatprep.subr.mxu0 0.0
        %6825 = vmatpush1.msra.mxu0 %v6674
        %6826 = vmatprep.subr.mxu0 0.0
        %6827 = vmatpush1.msra.mxu0 %v6675
        %6828 = vmatprep.subr.mxu0 0.0
        %6829 = vmatpush1.msra.mxu0 %v6676
        %6830 = vmatprep.subr.mxu0 0.0
        %6831 = vmatpush1.msra.mxu0 %v6677
        %6832 = vmatprep.subr.mxu0 0.0
        %6833 = vmatpush1.msra.mxu0 %v6678
        %6834 = vmatprep.subr.mxu0 0.0
        %6835 = vmatpush1.msra.mxu0 %v6679
        %6836 = vmatprep.subr.mxu0 0.0
        %6837 = vmatpush1.msra.mxu0 %v6680
        %6838 = vmatprep.subr.mxu0 0.0
        %6839 = vmatpush1.msra.mxu0 %v6681
        %6840 = vmatprep.subr.mxu0 0.0
        %6841 = vmatpush1.msra.mxu0 %v6682
        %6842 = vmatprep.subr.mxu0 0.0
        %6843 = vmatpush1.msra.mxu0 %v6683
        %6844 = vmatprep.subr.mxu0 0.0
        %6845 = vmatpush1.msra.mxu0 %v6684
        %6846 = vmatprep.subr.mxu0 0.0
        %6847 = vmatpush1.msra.mxu0 %v6685
        %6848 = vmatprep.subr.mxu0 0.0
        %6849 = vmatpush1.msra.mxu0 %v6686
        %6850 = vmatprep.subr.mxu0 0.0
        %6851 = vmatpush1.msra.mxu0 %v6687
        %6852 = vmatprep.subr.mxu0 0.0
        %6853 = vmatpush1.msra.mxu0 %v6688
        %6854 = vmatprep.subr.mxu0 0.0
        %6855 = vmatpush1.msra.mxu0 %v6689
        %6856 = vmatprep.subr.mxu0 0.0
        %6857 = vmatpush1.msra.mxu0 %v6690
        %6858 = vmatprep.subr.mxu0 0.0
        %6859 = vmatpush1.msra.mxu0 %v6691
        %6860 = vmatprep.subr.mxu0 0.0
        %6861 = vmatpush1.msra.mxu0 %v6692
        %6862 = vmatprep.subr.mxu0 0.0
        %6863 = vmatpush1.msra.mxu0 %v6693
        %6864 = vmatprep.subr.mxu0 0.0
        %6865 = vmatpush1.msra.mxu0 %v6694
        %6866 = vmatprep.subr.mxu0 0.0
        %6867 = vmatpush1.msra.mxu0 %v6695
        %6868 = vmatprep.mubr.f32.mxu0 %v6565
        %6869 = vmatmul.mubr.f32.gmra.mrb[0].mxu0 %v6564
        %v6870 = vpop.f32.mrb[0].mxu0
        %v6871 = vadd.f32 0.0, %v6870
        %v6872 = vpop.f32.mrb[0].mxu0
        %6873 = vmatprep.mubr.f32.mxu0 %v6568
        %6874 = vmatmul.mubr.f32.gmra.mrb[0].mxu0 %v6567
        %v6875 = vpop.f32.mrb[0].mxu0
        %v6876 = vadd.f32 0.0, %v6875
        %v6877 = vpop.f32.mrb[0].mxu0
        %6878 = vmatprep.mubr.f32.mxu0 %v6571
        %6879 = vmatmul.mubr.f32.gmra.mrb[0].mxu0 %v6570
        %v6880 = vpop.f32.mrb[0].mxu0
        %v6881 = vadd.f32 0.0, %v6880
        %v6882 = vpop.f32.mrb[0].mxu0
        %6883 = vmatprep.mubr.f32.mxu0 %v6574
        %6884 = vmatmul.mubr.f32.gmra.mrb[0].mxu0 %v6573
        %v6885 = vpop.f32.mrb[0].mxu0
        %v6886 = vadd.f32 0.0, %v6885
        %v6887 = vpop.f32.mrb[0].mxu0
        %6888 = vmatprep.mubr.f32.mxu0 %v6577
        %6889 = vmatmul.mubr.f32.gmra.mrb[0].mxu0 %v6576
        %v6890 = vpop.f32.mrb[0].mxu0
        %v6891 = vadd.f32 0.0, %v6890
        %v6892 = vpop.f32.mrb[0].mxu0
        %6893 = vmatprep.mubr.f32.mxu0 %v6580
        %6894 = vmatmul.mubr.f32.gmra.mrb[0].mxu0 %v6579
        %v6895 = vpop.f32.mrb[0].mxu0
        %v6896 = vadd.f32 0.0, %v6895
        %v6897 = vpop.f32.mrb[0].mxu0
        %6898 = vmatprep.mubr.f32.mxu0 %v6583
        %6899 = vmatmul.mubr.f32.gmra.mrb[0].mxu0 %v6582
        %v6900 = vpop.f32.mrb[0].mxu0
        %v6901 = vadd.f32 0.0, %v6900
        %v6902 = vpop.f32.mrb[0].mxu0
        %6903 = vmatprep.mubr.f32.mxu0 %v6586
        %6904 = vmatmul.mubr.f32.gmra.mrb[0].mxu0 %v6585
        %v6905 = vpop.f32.mrb[0].mxu0
        %v6906 = vadd.f32 0.0, %v6905
        %v6907 = vpop.f32.mrb[0].mxu0
        %6908 = vmatprep.mubr.f32.mxu0 %v6589
        %6909 = vmatmul.mubr.f32.gmra.mrb[0].mxu0 %v6588
        %v6910 = vpop.f32.mrb[0].mxu0
        %v6911 = vadd.f32 0.0, %v6910
        %v6912 = vpop.f32.mrb[0].mxu0
        %6913 = vmatprep.mubr.f32.mxu0 %v6592
        %6914 = vmatmul.mubr.f32.gmra.mrb[0].mxu0 %v6591
        %v6915 = vpop.f32.mrb[0].mxu0
        %v6916 = vadd.f32 0.0, %v6915
        %v6917 = vpop.f32.mrb[0].mxu0
        %6918 = vmatprep.mubr.f32.mxu0 %v6595
        %6919 = vmatmul.mubr.f32.gmra.mrb[0].mxu0 %v6594
        %v6920 = vpop.f32.mrb[0].mxu0
        %v6921 = vadd.f32 0.0, %v6920
        %v6922 = vpop.f32.mrb[0].mxu0
        %6923 = vmatprep.mubr.f32.mxu0 %v6598
        %6924 = vmatmul.mubr.f32.gmra.mrb[0].mxu0 %v6597
        %v6925 = vpop.f32.mrb[0].mxu0
        %v6926 = vadd.f32 0.0, %v6925
        %v6927 = vpop.f32.mrb[0].mxu0
        %6928 = vmatprep.mubr.f32.mxu0 %v6601
        %6929 = vmatmul.mubr.f32.gmra.mrb[0].mxu0 %v6600
        %v6930 = vpop.f32.mrb[0].mxu0
        %v6931 = vadd.f32 0.0, %v6930
        %v6932 = vpop.f32.mrb[0].mxu0
        %6933 = vmatprep.mubr.f32.mxu0 %v6604
        %6934 = vmatmul.mubr.f32.gmra.mrb[0].mxu0 %v6603
        %v6935 = vpop.f32.mrb[0].mxu0
        %v6936 = vadd.f32 0.0, %v6935
        %v6937 = vpop.f32.mrb[0].mxu0
        %6938 = vmatprep.mubr.f32.mxu0 %v6607
        %6939 = vmatmul.mubr.f32.gmra.mrb[0].mxu0 %v6606
        %v6940 = vpop.f32.mrb[0].mxu0
        %v6941 = vadd.f32 0.0, %v6940
        %v6942 = vpop.f32.mrb[0].mxu0
        %6943 = vmatprep.mubr.f32.mxu0 %v6610
        %6944 = vmatmul.mubr.f32.gmra.mrb[0].mxu0 %v6609
        %v6945 = vpop.f32.mrb[0].mxu0
        %v6946 = vadd.f32 0.0, %v6945
        %v6947 = vpop.f32.mrb[0].mxu0
        %6948 = vmatprep.mubr.f32.mxu0 %v6613
        %6949 = vmatmul.mubr.f32.gmra.mrb[0].mxu0 %v6612
        %v6950 = vpop.f32.mrb[0].mxu0
        %v6951 = vadd.f32 0.0, %v6950
        %v6952 = vpop.f32.mrb[0].mxu0
        %6953 = vmatprep.mubr.f32.mxu0 %v6616
        %6954 = vmatmul.mubr.f32.gmra.mrb[0].mxu0 %v6615
        %v6955 = vpop.f32.mrb[0].mxu0
        %v6956 = vadd.f32 0.0, %v6955
        %v6957 = vpop.f32.mrb[0].mxu0
        %6958 = vmatprep.mubr.f32.mxu0 %v6619
        %6959 = vmatmul.mubr.f32.gmra.mrb[0].mxu0 %v6618
        %v6960 = vpop.f32.mrb[0].mxu0
        %v6961 = vadd.f32 0.0, %v6960
        %v6962 = vpop.f32.mrb[0].mxu0
        %6963 = vmatprep.mubr.f32.mxu0 %v6622
        %6964 = vmatmul.mubr.f32.gmra.mrb[0].mxu0 %v6621
        %v6965 = vpop.f32.mrb[0].mxu0
        %v6966 = vadd.f32 0.0, %v6965
        %v6967 = vpop.f32.mrb[0].mxu0
        %6968 = vmatprep.mubr.f32.mxu0 %v6625
        %6969 = vmatmul.mubr.f32.gmra.mrb[0].mxu0 %v6624
        %v6970 = vpop.f32.mrb[0].mxu0
        %v6971 = vadd.f32 0.0, %v6970
        %v6972 = vpop.f32.mrb[0].mxu0
        %6973 = vmatprep.mubr.f32.mxu0 %v6628
        %6974 = vmatmul.mubr.f32.gmra.mrb[0].mxu0 %v6627
        %v6975 = vpop.f32.mrb[0].mxu0
        %v6976 = vadd.f32 0.0, %v6975
        %v6977 = vpop.f32.mrb[0].mxu0
        %6978 = vmatprep.mubr.f32.mxu0 %v6631
        %6979 = vmatmul.mubr.f32.gmra.mrb[0].mxu0 %v6630
        %v6980 = vpop.f32.mrb[0].mxu0
        %v6981 = vadd.f32 0.0, %v6980
        %v6982 = vpop.f32.mrb[0].mxu0
        %6983 = vmatprep.mubr.f32.mxu0 %v6634
        %6984 = vmatmul.mubr.f32.gmra.mrb[0].mxu0 %v6633
        %v6985 = vpop.f32.mrb[0].mxu0
        %v6986 = vadd.f32 0.0, %v6985
        %v6987 = vpop.f32.mrb[0].mxu0
        %6988 = vmatprep.mubr.f32.mxu0 %v6637
        %6989 = vmatmul.mubr.f32.gmra.mrb[0].mxu0 %v6636
        %v6990 = vpop.f32.mrb[0].mxu0
        %v6991 = vadd.f32 0.0, %v6990
        %v6992 = vpop.f32.mrb[0].mxu0
        %6993 = vmatprep.mubr.f32.mxu0 %v6640
        %6994 = vmatmul.mubr.f32.gmra.mrb[0].mxu0 %v6639
        %v6995 = vpop.f32.mrb[0].mxu0
        %v6996 = vadd.f32 0.0, %v6995
        %v6997 = vpop.f32.mrb[0].mxu0
        %6998 = vmatprep.mubr.f32.mxu0 %v6643
        %6999 = vmatmul.mubr.f32.gmra.mrb[0].mxu0 %v6642
        %v7000 = vpop.f32.mrb[0].mxu0
        %v7001 = vadd.f32 0.0, %v7000
        %v7002 = vpop.f32.mrb[0].mxu0
        %7003 = vmatprep.mubr.f32.mxu0 %v6646
        %7004 = vmatmul.mubr.f32.gmra.mrb[0].mxu0 %v6645
        %v7005 = vpop.f32.mrb[0].mxu0
        %v7006 = vadd.f32 0.0, %v7005
        %v7007 = vpop.f32.mrb[0].mxu0
        %7008 = vmatprep.mubr.f32.mxu0 %v6649
        %7009 = vmatmul.mubr.f32.gmra.mrb[0].mxu0 %v6648
        %v7010 = vpop.f32.mrb[0].mxu0
        %v7011 = vadd.f32 0.0, %v7010
        %v7012 = vpop.f32.mrb[0].mxu0
        %7013 = vmatprep.mubr.f32.mxu0 %v6652
        %7014 = vmatmul.mubr.f32.gmra.mrb[0].mxu0 %v6651
        %v7015 = vpop.f32.mrb[0].mxu0
        %v7016 = vadd.f32 0.0, %v7015
        %v7017 = vpop.f32.mrb[0].mxu0
        %7018 = vmatprep.mubr.f32.mxu0 %v6655
        %7019 = vmatmul.mubr.f32.gmra.mrb[0].mxu0 %v6654
        %v7020 = vpop.f32.mrb[0].mxu0
        %v7021 = vadd.f32 0.0, %v7020
        %v7022 = vpop.f32.mrb[0].mxu0
        %7023 = vmatprep.mubr.f32.mxu0 %v6658
        %7024 = vmatmul.mubr.f32.gmra.mrb[0].mxu0 %v6657
        %v7025 = vpop.f32.mrb[0].mxu0
        %v7026 = vadd.f32 0.0, %v7025
        %v7027 = vpop.f32.mrb[0].mxu0
        %7028 = vdwg.mxu0
        %7029 = vmatprep.subr.mxu0 0.0
        %7030 = vmatpush1.msra.mxu0 %v6696
        %7031 = vmatprep.subr.mxu0 0.0
        %7032 = vmatpush1.msra.mxu0 %v6697
        %7033 = vmatprep.subr.mxu0 0.0
        %7034 = vmatpush1.msra.mxu0 %v6698
        %7035 = vmatprep.subr.mxu0 0.0
        %7036 = vmatpush1.msra.mxu0 %v6699
        %7037 = vmatprep.subr.mxu0 0.0
        %7038 = vmatpush1.msra.mxu0 %v6700
        %7039 = vmatprep.subr.mxu0 0.0
        %7040 = vmatpush1.msra.mxu0 %v6701
        %7041 = vmatprep.subr.mxu0 0.0
        %7042 = vmatpush1.msra.mxu0 %v6702
        %7043 = vmatprep.subr.mxu0 0.0
        %7044 = vmatpush1.msra.mxu0 %v6703
        %7045 = vmatprep.subr.mxu0 0.0
        %7046 = vmatpush1.msra.mxu0 %v6802
        %7047 = vmatprep.subr.mxu0 0.0
        %7048 = vmatpush1.msra.mxu0 0.0
        %7049 = vmatprep.subr.mxu0 0.0
        %7050 = vmatpush1.msra.mxu0 0.0
        %7051 = vmatprep.subr.mxu0 0.0
        %7052 = vmatpush1.msra.mxu0 0.0
        %7053 = vmatprep.subr.mxu0 0.0
        %7054 = vmatpush1.msra.mxu0 0.0
        %7055 = vmatprep.subr.mxu0 0.0
        %7056 = vmatpush1.msra.mxu0 0.0
        %7057 = vmatprep.subr.mxu0 0.0
        %7058 = vmatpush1.msra.mxu0 0.0
        %7059 = vmatprep.subr.mxu0 0.0
        %7060 = vmatpush1.msra.mxu0 0.0
        %7061 = vmatprep.subr.mxu0 0.0
        %7062 = vmatpush1.msra.mxu0 0.0
        %7063 = vmatprep.subr.mxu0 0.0
        %7064 = vmatpush1.msra.mxu0 0.0
        %7065 = vmatprep.subr.mxu0 0.0
        %7066 = vmatpush1.msra.mxu0 0.0
        %7067 = vmatprep.subr.mxu0 0.0
        %7068 = vmatpush1.msra.mxu0 0.0
        %7069 = vmatprep.subr.mxu0 0.0
        %7070 = vmatpush1.msra.mxu0 0.0
        %7071 = vmatprep.subr.mxu0 0.0
        %7072 = vmatpush1.msra.mxu0 0.0
        %7073 = vmatprep.subr.mxu0 0.0
        %7074 = vmatpush1.msra.mxu0 0.0
        %7075 = vmatprep.subr.mxu0 0.0
        %7076 = vmatpush1.msra.mxu0 0.0
        %7077 = vmatprep.subr.mxu0 0.0
        %7078 = vmatpush1.msra.mxu0 0.0
        %7079 = vmatprep.subr.mxu0 0.0
        %7080 = vmatpush1.msra.mxu0 0.0
        %7081 = vmatprep.subr.mxu0 0.0
        %7082 = vmatpush1.msra.mxu0 0.0
        %7083 = vmatprep.subr.mxu0 0.0
        %7084 = vmatpush1.msra.mxu0 0.0
        %7085 = vmatprep.subr.mxu0 0.0
        %7086 = vmatpush1.msra.mxu0 0.0
        %7087 = vmatprep.subr.mxu0 0.0
        %7088 = vmatpush1.msra.mxu0 0.0
        %7089 = vmatprep.subr.mxu0 0.0
        %7090 = vmatpush1.msra.mxu0 0.0
        %7091 = vmatprep.subr.mxu0 0.0
        %7092 = vmatpush1.msra.mxu0 0.0
        %7093 = vmatprep.mubr.f32.mxu0 0.0
        %7094 = vmatmul.mubr.f32.gmra.mrb[0].mxu0 %v6706
        %v7095 = vpop.f32.mrb[0].mxu0
        %v7096 = vadd.f32 %v6871, %v7095
        %v7097 = vpop.f32.mrb[0].mxu0
        %7098 = vmatprep.mubr.f32.mxu0 0.0
        %7099 = vmatmul.mubr.f32.gmra.mrb[0].mxu0 %v6709
        %v7100 = vpop.f32.mrb[0].mxu0
        %v7101 = vadd.f32 %v6876, %v7100
        %v7102 = vpop.f32.mrb[0].mxu0
        %7103 = vmatprep.mubr.f32.mxu0 0.0
        %7104 = vmatmul.mubr.f32.gmra.mrb[0].mxu0 %v6712
        %v7105 = vpop.f32.mrb[0].mxu0
        %v7106 = vadd.f32 %v6881, %v7105
        %v7107 = vpop.f32.mrb[0].mxu0
        %7108 = vmatprep.mubr.f32.mxu0 0.0
        %7109 = vmatmul.mubr.f32.gmra.mrb[0].mxu0 %v6715
        %v7110 = vpop.f32.mrb[0].mxu0
        %v7111 = vadd.f32 %v6886, %v7110
        %v7112 = vpop.f32.mrb[0].mxu0
        %7113 = vmatprep.mubr.f32.mxu0 0.0
        %7114 = vmatmul.mubr.f32.gmra.mrb[0].mxu0 %v6718
        %v7115 = vpop.f32.mrb[0].mxu0
        %v7116 = vadd.f32 %v6891, %v7115
        %v7117 = vpop.f32.mrb[0].mxu0
        %7118 = vmatprep.mubr.f32.mxu0 0.0
        %7119 = vmatmul.mubr.f32.gmra.mrb[0].mxu0 %v6721
        %v7120 = vpop.f32.mrb[0].mxu0
        %v7121 = vadd.f32 %v6896, %v7120
        %v7122 = vpop.f32.mrb[0].mxu0
        %7123 = vmatprep.mubr.f32.mxu0 0.0
        %7124 = vmatmul.mubr.f32.gmra.mrb[0].mxu0 %v6724
        %v7125 = vpop.f32.mrb[0].mxu0
        %v7126 = vadd.f32 %v6901, %v7125
        %v7127 = vpop.f32.mrb[0].mxu0
        %7128 = vmatprep.mubr.f32.mxu0 0.0
        %7129 = vmatmul.mubr.f32.gmra.mrb[0].mxu0 %v6727
        %v7130 = vpop.f32.mrb[0].mxu0
        %v7131 = vadd.f32 %v6906, %v7130
        %v7132 = vpop.f32.mrb[0].mxu0
        %7133 = vmatprep.mubr.f32.mxu0 0.0
        %7134 = vmatmul.mubr.f32.gmra.mrb[0].mxu0 %v6730
        %v7135 = vpop.f32.mrb[0].mxu0
        %v7136 = vadd.f32 %v6911, %v7135
        %v7137 = vpop.f32.mrb[0].mxu0
        %7138 = vmatprep.mubr.f32.mxu0 0.0
        %7139 = vmatmul.mubr.f32.gmra.mrb[0].mxu0 %v6733
        %v7140 = vpop.f32.mrb[0].mxu0
        %v7141 = vadd.f32 %v6916, %v7140
        %v7142 = vpop.f32.mrb[0].mxu0
        %7143 = vmatprep.mubr.f32.mxu0 0.0
        %7144 = vmatmul.mubr.f32.gmra.mrb[0].mxu0 %v6736
        %v7145 = vpop.f32.mrb[0].mxu0
        %v7146 = vadd.f32 %v6921, %v7145
        %v7147 = vpop.f32.mrb[0].mxu0
        %7148 = vmatprep.mubr.f32.mxu0 0.0
        %7149 = vmatmul.mubr.f32.gmra.mrb[0].mxu0 %v6739
        %v7150 = vpop.f32.mrb[0].mxu0
        %v7151 = vadd.f32 %v6926, %v7150
        %v7152 = vpop.f32.mrb[0].mxu0
        %7153 = vmatprep.mubr.f32.mxu0 0.0
        %7154 = vmatmul.mubr.f32.gmra.mrb[0].mxu0 %v6742
        %v7155 = vpop.f32.mrb[0].mxu0
        %v7156 = vadd.f32 %v6931, %v7155
        %v7157 = vpop.f32.mrb[0].mxu0
        %7158 = vmatprep.mubr.f32.mxu0 0.0
        %7159 = vmatmul.mubr.f32.gmra.mrb[0].mxu0 %v6745
        %v7160 = vpop.f32.mrb[0].mxu0
        %v7161 = vadd.f32 %v6936, %v7160
        %v7162 = vpop.f32.mrb[0].mxu0
        %7163 = vmatprep.mubr.f32.mxu0 0.0
        %7164 = vmatmul.mubr.f32.gmra.mrb[0].mxu0 %v6748
        %v7165 = vpop.f32.mrb[0].mxu0
        %v7166 = vadd.f32 %v6941, %v7165
        %v7167 = vpop.f32.mrb[0].mxu0
        %7168 = vmatprep.mubr.f32.mxu0 0.0
        %7169 = vmatmul.mubr.f32.gmra.mrb[0].mxu0 %v6751
        %v7170 = vpop.f32.mrb[0].mxu0
        %v7171 = vadd.f32 %v6946, %v7170
        %v7172 = vpop.f32.mrb[0].mxu0
        %7173 = vmatprep.mubr.f32.mxu0 0.0
        %7174 = vmatmul.mubr.f32.gmra.mrb[0].mxu0 %v6754
        %v7175 = vpop.f32.mrb[0].mxu0
        %v7176 = vadd.f32 %v6951, %v7175
        %v7177 = vpop.f32.mrb[0].mxu0
        %7178 = vmatprep.mubr.f32.mxu0 0.0
        %7179 = vmatmul.mubr.f32.gmra.mrb[0].mxu0 %v6757
        %v7180 = vpop.f32.mrb[0].mxu0
        %v7181 = vadd.f32 %v6956, %v7180
        %v7182 = vpop.f32.mrb[0].mxu0
        %7183 = vmatprep.mubr.f32.mxu0 0.0
        %7184 = vmatmul.mubr.f32.gmra.mrb[0].mxu0 %v6760
        %v7185 = vpop.f32.mrb[0].mxu0
        %v7186 = vadd.f32 %v6961, %v7185
        %v7187 = vpop.f32.mrb[0].mxu0
        %7188 = vmatprep.mubr.f32.mxu0 0.0
        %7189 = vmatmul.mubr.f32.gmra.mrb[0].mxu0 %v6763
        %v7190 = vpop.f32.mrb[0].mxu0
        %v7191 = vadd.f32 %v6966, %v7190
        %v7192 = vpop.f32.mrb[0].mxu0
        %7193 = vmatprep.mubr.f32.mxu0 0.0
        %7194 = vmatmul.mubr.f32.gmra.mrb[0].mxu0 %v6766
        %v7195 = vpop.f32.mrb[0].mxu0
        %v7196 = vadd.f32 %v6971, %v7195
        %v7197 = vpop.f32.mrb[0].mxu0
        %7198 = vmatprep.mubr.f32.mxu0 0.0
        %7199 = vmatmul.mubr.f32.gmra.mrb[0].mxu0 %v6769
        %v7200 = vpop.f32.mrb[0].mxu0
        %v7201 = vadd.f32 %v6976, %v7200
        %v7202 = vpop.f32.mrb[0].mxu0
        %7203 = vmatprep.mubr.f32.mxu0 0.0
        %7204 = vmatmul.mubr.f32.gmra.mrb[0].mxu0 %v6772
        %v7205 = vpop.f32.mrb[0].mxu0
        %v7206 = vadd.f32 %v6981, %v7205
        %v7207 = vpop.f32.mrb[0].mxu0
        %7208 = vmatprep.mubr.f32.mxu0 0.0
        %7209 = vmatmul.mubr.f32.gmra.mrb[0].mxu0 %v6775
        %v7210 = vpop.f32.mrb[0].mxu0
        %v7211 = vadd.f32 %v6986, %v7210
        %v7212 = vpop.f32.mrb[0].mxu0
        %7213 = vmatprep.mubr.f32.mxu0 0.0
        %7214 = vmatmul.mubr.f32.gmra.mrb[0].mxu0 %v6778
        %v7215 = vpop.f32.mrb[0].mxu0
        %v7216 = vadd.f32 %v6991, %v7215
        %v7217 = vpop.f32.mrb[0].mxu0
        %7218 = vmatprep.mubr.f32.mxu0 0.0
        %7219 = vmatmul.mubr.f32.gmra.mrb[0].mxu0 %v6781
        %v7220 = vpop.f32.mrb[0].mxu0
        %v7221 = vadd.f32 %v6996, %v7220
        %v7222 = vpop.f32.mrb[0].mxu0
        %7223 = vmatprep.mubr.f32.mxu0 0.0
        %7224 = vmatmul.mubr.f32.gmra.mrb[0].mxu0 %v6784
        %v7225 = vpop.f32.mrb[0].mxu0
        %v7226 = vadd.f32 %v7001, %v7225
        %v7227 = vpop.f32.mrb[0].mxu0
        %7228 = vmatprep.mubr.f32.mxu0 0.0
        %7229 = vmatmul.mubr.f32.gmra.mrb[0].mxu0 %v6787
        %v7230 = vpop.f32.mrb[0].mxu0
        %v7231 = vadd.f32 %v7006, %v7230
        %v7232 = vpop.f32.mrb[0].mxu0
        %7233 = vmatprep.mubr.f32.mxu0 0.0
        %7234 = vmatmul.mubr.f32.gmra.mrb[0].mxu0 %v6790
        %v7235 = vpop.f32.mrb[0].mxu0
        %v7236 = vadd.f32 %v7011, %v7235
        %v7237 = vpop.f32.mrb[0].mxu0
        %7238 = vmatprep.mubr.f32.mxu0 0.0
        %7239 = vmatmul.mubr.f32.gmra.mrb[0].mxu0 %v6793
        %v7240 = vpop.f32.mrb[0].mxu0
        %v7241 = vadd.f32 %v7016, %v7240
        %v7242 = vpop.f32.mrb[0].mxu0
        %7243 = vmatprep.mubr.f32.mxu0 0.0
        %7244 = vmatmul.mubr.f32.gmra.mrb[0].mxu0 %v6796
        %v7245 = vpop.f32.mrb[0].mxu0
        %v7246 = vadd.f32 %v7021, %v7245
        %v7247 = vpop.f32.mrb[0].mxu0
        %7248 = vmatprep.mubr.f32.mxu0 0.0
        %7249 = vmatmul.mubr.f32.gmra.mrb[0].mxu0 %v6799
        %v7250 = vpop.f32.mrb[0].mxu0
        %v7251 = vadd.f32 %v7026, %v7250
        %v7252 = vpop.f32.mrb[0].mxu0
        %7253 = vdwg.mxu0
        %v7254 = vadd.f32 %v6531, %v7096
        %v7255 = vadd.f32 %v6532, %v7101
        %v7256 = vadd.f32 %v6533, %v7106
        %v7257 = vadd.f32 %v6534, %v7111
        %v7258 = vadd.f32 %v6535, %v7116
        %v7259 = vadd.f32 %v6536, %v7121
        %v7260 = vadd.f32 %v6537, %v7126
        %v7261 = vadd.f32 %v6538, %v7131
        %v7262 = vadd.f32 %v6539, %v7136
        %v7263 = vadd.f32 %v6540, %v7141
        %v7264 = vadd.f32 %v6541, %v7146
        %v7265 = vadd.f32 %v6542, %v7151
        %v7266 = vadd.f32 %v6543, %v7156
        %v7267 = vadd.f32 %v6544, %v7161
        %v7268 = vadd.f32 %v6545, %v7166
        %v7269 = vadd.f32 %v6546, %v7171
        %v7270 = vadd.f32 %v6547, %v7176
        %v7271 = vadd.f32 %v6548, %v7181
        %v7272 = vadd.f32 %v6549, %v7186
        %v7273 = vadd.f32 %v6550, %v7191
        %v7274 = vadd.f32 %v6551, %v7196
        %v7275 = vadd.f32 %v6552, %v7201
        %v7276 = vadd.f32 %v6553, %v7206
        %v7277 = vadd.f32 %v6554, %v7211
        %v7278 = vadd.f32 %v6555, %v7216
        %v7279 = vadd.f32 %v6556, %v7221
        %v7280 = vadd.f32 %v6557, %v7226
        %v7281 = vadd.f32 %v6558, %v7231
        %v7282 = vadd.f32 %v6559, %v7236
        %v7283 = vadd.f32 %v6560, %v7241
        %v7284 = vadd.f32 %v6561, %v7246
        %v7285 = vadd.f32 %v6562, %v7251
        %v7286 = vld [vmem:[%s7] sm:$0x1]
        %v7288 = vlaneseq
        %v7289 = vshrl.u32 %v7288, 7
        %v7290 = vsub.s32 0, %v7289
        %v7291 = vrot.slane %v7286, %v7290
        %v7293 = vadd.f32 %v7254, %v7291
        %v7294 = vadd.f32 %v7255, %v7291
        %v7295 = vadd.f32 %v7256, %v7291
        %v7296 = vadd.f32 %v7257, %v7291
        %v7297 = vadd.f32 %v7258, %v7291
        %v7298 = vadd.f32 %v7259, %v7291
        %v7299 = vadd.f32 %v7260, %v7291
        %v7300 = vadd.f32 %v7261, %v7291
        %v7301 = vadd.f32 %v7262, %v7291
        %v7302 = vadd.f32 %v7263, %v7291
        %v7303 = vadd.f32 %v7264, %v7291
        %v7304 = vadd.f32 %v7265, %v7291
        %v7305 = vadd.f32 %v7266, %v7291
        %v7306 = vadd.f32 %v7267, %v7291
        %v7307 = vadd.f32 %v7268, %v7291
        %v7308 = vadd.f32 %v7269, %v7291
        %v7309 = vadd.f32 %v7270, %v7291
        %v7310 = vadd.f32 %v7271, %v7291
        %v7311 = vadd.f32 %v7272, %v7291
        %v7312 = vadd.f32 %v7273, %v7291
        %v7313 = vadd.f32 %v7274, %v7291
        %v7314 = vadd.f32 %v7275, %v7291
        %v7315 = vadd.f32 %v7276, %v7291
        %v7316 = vadd.f32 %v7277, %v7291
        %v7317 = vadd.f32 %v7278, %v7291
        %v7318 = vadd.f32 %v7279, %v7291
        %v7319 = vadd.f32 %v7280, %v7291
        %v7320 = vadd.f32 %v7281, %v7291
        %v7321 = vadd.f32 %v7282, %v7291
        %v7322 = vadd.f32 %v7283, %v7291
        %v7323 = vadd.f32 %v7284, %v7291
        %v7324 = vadd.f32 %v7285, %v7291
        %v7325 = vmax.f32 %v7293, 0.0
        %v7326 = vmax.f32 %v7294, 0.0
        %v7327 = vmax.f32 %v7295, 0.0
        %v7328 = vmax.f32 %v7296, 0.0
        %v7329 = vmax.f32 %v7297, 0.0
        %v7330 = vmax.f32 %v7298, 0.0
        %v7331 = vmax.f32 %v7299, 0.0
        %v7332 = vmax.f32 %v7300, 0.0
        %v7333 = vmax.f32 %v7301, 0.0
        %v7334 = vmax.f32 %v7302, 0.0
        %v7335 = vmax.f32 %v7303, 0.0
        %v7336 = vmax.f32 %v7304, 0.0
        %v7337 = vmax.f32 %v7305, 0.0
        %v7338 = vmax.f32 %v7306, 0.0
        %v7339 = vmax.f32 %v7307, 0.0
        %v7340 = vmax.f32 %v7308, 0.0
        %v7341 = vmax.f32 %v7309, 0.0
        %v7342 = vmax.f32 %v7310, 0.0
        %v7343 = vmax.f32 %v7311, 0.0
        %v7344 = vmax.f32 %v7312, 0.0
        %v7345 = vmax.f32 %v7313, 0.0
        %v7346 = vmax.f32 %v7314, 0.0
        %v7347 = vmax.f32 %v7315, 0.0
        %v7348 = vmax.f32 %v7316, 0.0
        %v7349 = vmax.f32 %v7317, 0.0
        %v7350 = vmax.f32 %v7318, 0.0
        %v7351 = vmax.f32 %v7319, 0.0
        %v7352 = vmax.f32 %v7320, 0.0
        %v7353 = vmax.f32 %v7321, 0.0
        %v7354 = vmax.f32 %v7322, 0.0
        %v7355 = vmax.f32 %v7323, 0.0
        %v7356 = vmax.f32 %v7324, 0.0
        %v7357 = vld [vmem:[#allocation5] sm:$0xff]
        %v7358 = vld [vmem:[#allocation5 + $0x8] sm:$0xff]
        %v7359 = vld [vmem:[#allocation5 + $0x10] sm:$0xff]
        %v7360 = vld [vmem:[#allocation5 + $0x18] sm:$0xff]
        %v7361 = vld [vmem:[#allocation5 + $0x20] sm:$0xff]
        %v7362 = vld [vmem:[#allocation5 + $0x28] sm:$0xff]
        %v7363 = vld [vmem:[#allocation5 + $0x30] sm:$0xff]
        %v7364 = vld [vmem:[#allocation5 + $0x38] sm:$0xff]
        %v7365 = vld [vmem:[#allocation5 + $0x40] sm:$0xff]
        %v7366 = vld [vmem:[#allocation5 + $0x48] sm:$0xff]
        %v7367 = vld [vmem:[#allocation5 + $0x50] sm:$0xff]
        %v7368 = vld [vmem:[#allocation5 + $0x58] sm:$0xff]
        %v7369 = vld [vmem:[#allocation5 + $0x60] sm:$0xff]
        %v7370 = vld [vmem:[#allocation5 + $0x68] sm:$0xff]
        %v7371 = vld [vmem:[#allocation5 + $0x70] sm:$0xff]
        %v7372 = vld [vmem:[#allocation5 + $0x78] sm:$0xff]
        %v7373 = vld [vmem:[#allocation5 + $0x80] sm:$0xff]
        %v7374 = vld [vmem:[#allocation5 + $0x88] sm:$0xff]
        %v7375 = vld [vmem:[#allocation5 + $0x90] sm:$0xff]
        %v7376 = vld [vmem:[#allocation5 + $0x98] sm:$0xff]
        %v7377 = vld [vmem:[#allocation5 + $0xa0] sm:$0xff]
        %v7378 = vld [vmem:[#allocation5 + $0xa8] sm:$0xff]
        %v7379 = vld [vmem:[#allocation5 + $0xb0] sm:$0xff]
        %v7380 = vld [vmem:[#allocation5 + $0xb8] sm:$0xff]
        %v7381 = vld [vmem:[#allocation5 + $0xc0] sm:$0xf]
        %v7382 = vld [vmem:[#allocation5 + $0xc8] sm:$0xf]
        %7383 = vmatprep.subr.mxu0 0.0
        %7384 = vmatpush1.msra.mxu0 %v7325
        %7385 = vmatprep.subr.mxu0 0.0
        %7386 = vmatpush1.msra.mxu0 %v7326
        %7387 = vmatprep.subr.mxu0 0.0
        %7388 = vmatpush1.msra.mxu0 %v7327
        %7389 = vmatprep.subr.mxu0 0.0
        %7390 = vmatpush1.msra.mxu0 %v7328
        %7391 = vmatprep.subr.mxu0 0.0
        %7392 = vmatpush1.msra.mxu0 %v7329
        %7393 = vmatprep.subr.mxu0 0.0
        %7394 = vmatpush1.msra.mxu0 %v7330
        %7395 = vmatprep.subr.mxu0 0.0
        %7396 = vmatpush1.msra.mxu0 %v7331
        %7397 = vmatprep.subr.mxu0 0.0
        %7398 = vmatpush1.msra.mxu0 %v7332
        %7399 = vmatprep.subr.mxu0 0.0
        %7400 = vmatpush1.msra.mxu0 %v7333
        %7401 = vmatprep.subr.mxu0 0.0
        %7402 = vmatpush1.msra.mxu0 %v7334
        %7403 = vmatprep.subr.mxu0 0.0
        %7404 = vmatpush1.msra.mxu0 %v7335
        %7405 = vmatprep.subr.mxu0 0.0
        %7406 = vmatpush1.msra.mxu0 %v7336
        %7407 = vmatprep.subr.mxu0 0.0
        %7408 = vmatpush1.msra.mxu0 %v7337
        %7409 = vmatprep.subr.mxu0 0.0
        %7410 = vmatpush1.msra.mxu0 %v7338
        %7411 = vmatprep.subr.mxu0 0.0
        %7412 = vmatpush1.msra.mxu0 %v7339
        %7413 = vmatprep.subr.mxu0 0.0
        %7414 = vmatpush1.msra.mxu0 %v7340
        %7415 = vmatprep.subr.mxu0 0.0
        %7416 = vmatpush1.msra.mxu0 %v7341
        %7417 = vmatprep.subr.mxu0 0.0
        %7418 = vmatpush1.msra.mxu0 %v7342
        %7419 = vmatprep.subr.mxu0 0.0
        %7420 = vmatpush1.msra.mxu0 %v7343
        %7421 = vmatprep.subr.mxu0 0.0
        %7422 = vmatpush1.msra.mxu0 %v7344
        %7423 = vmatprep.subr.mxu0 0.0
        %7424 = vmatpush1.msra.mxu0 %v7345
        %7425 = vmatprep.subr.mxu0 0.0
        %7426 = vmatpush1.msra.mxu0 %v7346
        %7427 = vmatprep.subr.mxu0 0.0
        %7428 = vmatpush1.msra.mxu0 %v7347
        %7429 = vmatprep.subr.mxu0 0.0
        %7430 = vmatpush1.msra.mxu0 %v7348
        %7431 = vmatprep.subr.mxu0 0.0
        %7432 = vmatpush1.msra.mxu0 %v7349
        %7433 = vmatprep.subr.mxu0 0.0
        %7434 = vmatpush1.msra.mxu0 %v7350
        %7435 = vmatprep.subr.mxu0 0.0
        %7436 = vmatpush1.msra.mxu0 %v7351
        %7437 = vmatprep.subr.mxu0 0.0
        %7438 = vmatpush1.msra.mxu0 %v7352
        %7439 = vmatprep.subr.mxu0 0.0
        %7440 = vmatpush1.msra.mxu0 %v7353
        %7441 = vmatprep.subr.mxu0 0.0
        %7442 = vmatpush1.msra.mxu0 %v7354
        %7443 = vmatprep.subr.mxu0 0.0
        %7444 = vmatpush1.msra.mxu0 %v7355
        %7445 = vmatprep.subr.mxu0 0.0
        %7446 = vmatpush1.msra.mxu0 %v7356
        %7447 = vmatprep.mubr.f32.mxu0 %v7358
        %7448 = vmatmul.mubr.f32.gmra.mrb[0].mxu0 %v7357
        %v7449 = vpop.f32.mrb[0].mxu0
        %v7450 = vadd.f32 0.0, %v7449
        %v7451 = vpop.f32.mrb[0].mxu0
        %7452 = vmatprep.mubr.f32.mxu0 %v7360
        %7453 = vmatmul.mubr.f32.gmra.mrb[0].mxu0 %v7359
        %v7454 = vpop.f32.mrb[0].mxu0
        %v7455 = vadd.f32 0.0, %v7454
        %v7456 = vpop.f32.mrb[0].mxu0
        %7457 = vmatprep.mubr.f32.mxu0 %v7362
        %7458 = vmatmul.mubr.f32.gmra.mrb[0].mxu0 %v7361
        %v7459 = vpop.f32.mrb[0].mxu0
        %v7460 = vadd.f32 0.0, %v7459
        %v7461 = vpop.f32.mrb[0].mxu0
        %7462 = vmatprep.mubr.f32.mxu0 %v7364
        %7463 = vmatmul.mubr.f32.gmra.mrb[0].mxu0 %v7363
        %v7464 = vpop.f32.mrb[0].mxu0
        %v7465 = vadd.f32 0.0, %v7464
        %v7466 = vpop.f32.mrb[0].mxu0
        %7467 = vmatprep.mubr.f32.mxu0 %v7366
        %7468 = vmatmul.mubr.f32.gmra.mrb[0].mxu0 %v7365
        %v7469 = vpop.f32.mrb[0].mxu0
        %v7470 = vadd.f32 0.0, %v7469
        %v7471 = vpop.f32.mrb[0].mxu0
        %7472 = vmatprep.mubr.f32.mxu0 %v7368
        %7473 = vmatmul.mubr.f32.gmra.mrb[0].mxu0 %v7367
        %v7474 = vpop.f32.mrb[0].mxu0
        %v7475 = vadd.f32 0.0, %v7474
        %v7476 = vpop.f32.mrb[0].mxu0
        %7477 = vmatprep.mubr.f32.mxu0 %v7370
        %7478 = vmatmul.mubr.f32.gmra.mrb[0].mxu0 %v7369
        %v7479 = vpop.f32.mrb[0].mxu0
        %v7480 = vadd.f32 0.0, %v7479
        %v7481 = vpop.f32.mrb[0].mxu0
        %7482 = vmatprep.mubr.f32.mxu0 %v7372
        %7483 = vmatmul.mubr.f32.gmra.mrb[0].mxu0 %v7371
        %v7484 = vpop.f32.mrb[0].mxu0
        %v7485 = vadd.f32 0.0, %v7484
        %v7486 = vpop.f32.mrb[0].mxu0
        %7487 = vmatprep.mubr.f32.mxu0 %v7374
        %7488 = vmatmul.mubr.f32.gmra.mrb[0].mxu0 %v7373
        %v7489 = vpop.f32.mrb[0].mxu0
        %v7490 = vadd.f32 0.0, %v7489
        %v7491 = vpop.f32.mrb[0].mxu0
        %7492 = vmatprep.mubr.f32.mxu0 %v7376
        %7493 = vmatmul.mubr.f32.gmra.mrb[0].mxu0 %v7375
        %v7494 = vpop.f32.mrb[0].mxu0
        %v7495 = vadd.f32 0.0, %v7494
        %v7496 = vpop.f32.mrb[0].mxu0
        %7497 = vmatprep.mubr.f32.mxu0 %v7378
        %7498 = vmatmul.mubr.f32.gmra.mrb[0].mxu0 %v7377
        %v7499 = vpop.f32.mrb[0].mxu0
        %v7500 = vadd.f32 0.0, %v7499
        %v7501 = vpop.f32.mrb[0].mxu0
        %7502 = vmatprep.mubr.f32.mxu0 %v7380
        %7503 = vmatmul.mubr.f32.gmra.mrb[0].mxu0 %v7379
        %v7504 = vpop.f32.mrb[0].mxu0
        %v7505 = vadd.f32 0.0, %v7504
        %v7506 = vpop.f32.mrb[0].mxu0
        %7507 = vmatprep.mubr.f32.mxu0 %v7382
        %7508 = vmatmul.mubr.f32.gmra.mrb[0].mxu0 %v7381
        %v7509 = vpop.f32.mrb[0].mxu0
        %v7510 = vadd.f32 0.0, %v7509
        %v7511 = vpop.f32.mrb[0].mxu0
        %7512 = vdwg.mxu0
        %v7513 = vld [vmem:[#allocation7] sm:$0xff]
        %v7514 = vld [vmem:[#allocation7 + $0x8] sm:$0xff]
        %v7515 = vld [vmem:[#allocation7 + $0x10] sm:$0xff]
        %v7516 = vld [vmem:[#allocation7 + $0x18] sm:$0xff]
        %v7517 = vld [vmem:[#allocation7 + $0x20] sm:$0xff]
        %v7518 = vld [vmem:[#allocation7 + $0x28] sm:$0xff]
        %v7519 = vld [vmem:[#allocation7 + $0x30] sm:$0xff]
        %v7520 = vld [vmem:[#allocation7 + $0x38] sm:$0xff]
        %vm7521 = vcmask 818176
        %v7523 = vsel %vm7521, %v7513, 0
        %v7526 = vsel %vm7521, %v7514, 0
        %v7529 = vsel %vm7521, %v7515, 0
        %v7532 = vsel %vm7521, %v7516, 0
        %v7535 = vsel %vm7521, %v7517, 0
        %v7538 = vsel %vm7521, %v7518, 0
        %v7541 = vsel %vm7521, %v7519, 0
        %v7544 = vsel %vm7521, %v7520, 0
        %v7547 = vsel %vm1222, %v7510, 0
        %7549 = vmatprep.subr.mxu0 0.0
        %7550 = vmatpush1.msra.mxu0 %v7450
        %7551 = vmatprep.subr.mxu0 0.0
        %7552 = vmatpush1.msra.mxu0 %v7455
        %7553 = vmatprep.subr.mxu0 0.0
        %7554 = vmatpush1.msra.mxu0 %v7460
        %7555 = vmatprep.subr.mxu0 0.0
        %7556 = vmatpush1.msra.mxu0 %v7465
        %7557 = vmatprep.subr.mxu0 0.0
        %7558 = vmatpush1.msra.mxu0 %v7470
        %7559 = vmatprep.subr.mxu0 0.0
        %7560 = vmatpush1.msra.mxu0 %v7475
        %7561 = vmatprep.subr.mxu0 0.0
        %7562 = vmatpush1.msra.mxu0 %v7480
        %7563 = vmatprep.subr.mxu0 0.0
        %7564 = vmatpush1.msra.mxu0 %v7485
        %7565 = vmatprep.subr.mxu0 0.0
        %7566 = vmatpush1.msra.mxu0 %v7490
        %7567 = vmatprep.subr.mxu0 0.0
        %7568 = vmatpush1.msra.mxu0 %v7495
        %7569 = vmatprep.subr.mxu0 0.0
        %7570 = vmatpush1.msra.mxu0 %v7500
        %7571 = vmatprep.subr.mxu0 0.0
        %7572 = vmatpush1.msra.mxu0 %v7505
        %7573 = vmatprep.subr.mxu0 0.0
        %7574 = vmatpush1.msra.mxu0 %v7547
        %7575 = vmatprep.subr.mxu0 0.0
        %7576 = vmatpush1.msra.mxu0 0.0
        %7577 = vmatprep.subr.mxu0 0.0
        %7578 = vmatpush1.msra.mxu0 0.0
        %7579 = vmatprep.subr.mxu0 0.0
        %7580 = vmatpush1.msra.mxu0 0.0
        %7581 = vmatprep.subr.mxu0 0.0
        %7582 = vmatpush1.msra.mxu0 0.0
        %7583 = vmatprep.subr.mxu0 0.0
        %7584 = vmatpush1.msra.mxu0 0.0
        %7585 = vmatprep.subr.mxu0 0.0
        %7586 = vmatpush1.msra.mxu0 0.0
        %7587 = vmatprep.subr.mxu0 0.0
        %7588 = vmatpush1.msra.mxu0 0.0
        %7589 = vmatprep.subr.mxu0 0.0
        %7590 = vmatpush1.msra.mxu0 0.0
        %7591 = vmatprep.subr.mxu0 0.0
        %7592 = vmatpush1.msra.mxu0 0.0
        %7593 = vmatprep.subr.mxu0 0.0
        %7594 = vmatpush1.msra.mxu0 0.0
        %7595 = vmatprep.subr.mxu0 0.0
        %7596 = vmatpush1.msra.mxu0 0.0
        %7597 = vmatprep.subr.mxu0 0.0
        %7598 = vmatpush1.msra.mxu0 0.0
        %7599 = vmatprep.subr.mxu0 0.0
        %7600 = vmatpush1.msra.mxu0 0.0
        %7601 = vmatprep.subr.mxu0 0.0
        %7602 = vmatpush1.msra.mxu0 0.0
        %7603 = vmatprep.subr.mxu0 0.0
        %7604 = vmatpush1.msra.mxu0 0.0
        %7605 = vmatprep.subr.mxu0 0.0
        %7606 = vmatpush1.msra.mxu0 0.0
        %7607 = vmatprep.subr.mxu0 0.0
        %7608 = vmatpush1.msra.mxu0 0.0
        %7609 = vmatprep.subr.mxu0 0.0
        %7610 = vmatpush1.msra.mxu0 0.0
        %7611 = vmatprep.subr.mxu0 0.0
        %7612 = vmatpush1.msra.mxu0 0.0
        %7613 = vmatprep.mubr.f32.mxu0 0.0
        %7614 = vmatmul.mubr.f32.gmra.mrb[0].mxu0 %v7523
        %v7615 = vpop.f32.mrb[0].mxu0
        %v7616 = vadd.f32 0.0, %v7615
        %v7617 = vpop.f32.mrb[0].mxu0
        %7618 = vmatprep.mubr.f32.mxu0 0.0
        %7619 = vmatmul.mubr.f32.gmra.mrb[0].mxu0 %v7526
        %v7620 = vpop.f32.mrb[0].mxu0
        %v7621 = vadd.f32 0.0, %v7620
        %v7622 = vpop.f32.mrb[0].mxu0
        %7623 = vmatprep.mubr.f32.mxu0 0.0
        %7624 = vmatmul.mubr.f32.gmra.mrb[0].mxu0 %v7529
        %v7625 = vpop.f32.mrb[0].mxu0
        %v7626 = vadd.f32 0.0, %v7625
        %v7627 = vpop.f32.mrb[0].mxu0
        %7628 = vmatprep.mubr.f32.mxu0 0.0
        %7629 = vmatmul.mubr.f32.gmra.mrb[0].mxu0 %v7532
        %v7630 = vpop.f32.mrb[0].mxu0
        %v7631 = vadd.f32 0.0, %v7630
        %v7632 = vpop.f32.mrb[0].mxu0
        %7633 = vmatprep.mubr.f32.mxu0 0.0
        %7634 = vmatmul.mubr.f32.gmra.mrb[0].mxu0 %v7535
        %v7635 = vpop.f32.mrb[0].mxu0
        %v7636 = vadd.f32 0.0, %v7635
        %v7637 = vpop.f32.mrb[0].mxu0
        %7638 = vmatprep.mubr.f32.mxu0 0.0
        %7639 = vmatmul.mubr.f32.gmra.mrb[0].mxu0 %v7538
        %v7640 = vpop.f32.mrb[0].mxu0
        %v7641 = vadd.f32 0.0, %v7640
        %v7642 = vpop.f32.mrb[0].mxu0
        %7643 = vmatprep.mubr.f32.mxu0 0.0
        %7644 = vmatmul.mubr.f32.gmra.mrb[0].mxu0 %v7541
        %v7645 = vpop.f32.mrb[0].mxu0
        %v7646 = vadd.f32 0.0, %v7645
        %v7647 = vpop.f32.mrb[0].mxu0
        %7648 = vmatprep.mubr.f32.mxu0 0.0
        %7649 = vmatmul.mubr.f32.gmra.mrb[0].mxu0 %v7544
        %v7650 = vpop.f32.mrb[0].mxu0
        %v7651 = vadd.f32 0.0, %v7650
        %v7652 = vpop.f32.mrb[0].mxu0
        %7653 = vdwg.mxu0
        %v7654 = vld [vmem:[#allocation13] sm:$0xff]
        %s7655 = scalar_lea.vmem [#allocation7], 64
        %v7656 = vld [vmem:[%s7655] sm:$0xff]
        %v7657 = vld [vmem:[%s7655 + $0x8] sm:$0xff]
        %v7658 = vld [vmem:[%s7655 + $0x10] sm:$0xff]
        %v7659 = vld [vmem:[%s7655 + $0x18] sm:$0xff]
        %v7660 = vld [vmem:[%s7655 + $0x20] sm:$0xff]
        %v7661 = vld [vmem:[%s7655 + $0x28] sm:$0xff]
        %v7662 = vld [vmem:[%s7655 + $0x30] sm:$0xff]
        %v7663 = vld [vmem:[%s7655 + $0x38] sm:$0xff]
        %v7665 = vsel %vm7521, %v7656, 0
        %v7668 = vsel %vm7521, %v7657, 0
        %v7671 = vsel %vm7521, %v7658, 0
        %v7674 = vsel %vm7521, %v7659, 0
        %v7677 = vsel %vm7521, %v7660, 0
        %v7680 = vsel %vm7521, %v7661, 0
        %v7683 = vsel %vm7521, %v7662, 0
        %v7686 = vsel %vm7521, %v7663, 0
        %7688 = vmatprep.subr.mxu0 0.0
        %7689 = vmatpush1.msra.mxu0 %v7450
        %7690 = vmatprep.subr.mxu0 0.0
        %7691 = vmatpush1.msra.mxu0 %v7455
        %7692 = vmatprep.subr.mxu0 0.0
        %7693 = vmatpush1.msra.mxu0 %v7460
        %7694 = vmatprep.subr.mxu0 0.0
        %7695 = vmatpush1.msra.mxu0 %v7465
        %7696 = vmatprep.subr.mxu0 0.0
        %7697 = vmatpush1.msra.mxu0 %v7470
        %7698 = vmatprep.subr.mxu0 0.0
        %7699 = vmatpush1.msra.mxu0 %v7475
        %7700 = vmatprep.subr.mxu0 0.0
        %7701 = vmatpush1.msra.mxu0 %v7480
        %7702 = vmatprep.subr.mxu0 0.0
        %7703 = vmatpush1.msra.mxu0 %v7485
        %7704 = vmatprep.subr.mxu0 0.0
        %7705 = vmatpush1.msra.mxu0 %v7490
        %7706 = vmatprep.subr.mxu0 0.0
        %7707 = vmatpush1.msra.mxu0 %v7495
        %7708 = vmatprep.subr.mxu0 0.0
        %7709 = vmatpush1.msra.mxu0 %v7500
        %7710 = vmatprep.subr.mxu0 0.0
        %7711 = vmatpush1.msra.mxu0 %v7505
        %7712 = vmatprep.subr.mxu0 0.0
        %7713 = vmatpush1.msra.mxu0 %v7547
        %7714 = vmatprep.subr.mxu0 0.0
        %7715 = vmatpush1.msra.mxu0 0.0
        %7716 = vmatprep.subr.mxu0 0.0
        %7717 = vmatpush1.msra.mxu0 0.0
        %7718 = vmatprep.subr.mxu0 0.0
        %7719 = vmatpush1.msra.mxu0 0.0
        %7720 = vmatprep.subr.mxu0 0.0
        %7721 = vmatpush1.msra.mxu0 0.0
        %7722 = vmatprep.subr.mxu0 0.0
        %7723 = vmatpush1.msra.mxu0 0.0
        %7724 = vmatprep.subr.mxu0 0.0
        %7725 = vmatpush1.msra.mxu0 0.0
        %7726 = vmatprep.subr.mxu0 0.0
        %7727 = vmatpush1.msra.mxu0 0.0
        %7728 = vmatprep.subr.mxu0 0.0
        %7729 = vmatpush1.msra.mxu0 0.0
        %7730 = vmatprep.subr.mxu0 0.0
        %7731 = vmatpush1.msra.mxu0 0.0
        %7732 = vmatprep.subr.mxu0 0.0
        %7733 = vmatpush1.msra.mxu0 0.0
        %7734 = vmatprep.subr.mxu0 0.0
        %7735 = vmatpush1.msra.mxu0 0.0
        %7736 = vmatprep.subr.mxu0 0.0
        %7737 = vmatpush1.msra.mxu0 0.0
        %7738 = vmatprep.subr.mxu0 0.0
        %7739 = vmatpush1.msra.mxu0 0.0
        %7740 = vmatprep.subr.mxu0 0.0
        %7741 = vmatpush1.msra.mxu0 0.0
        %7742 = vmatprep.subr.mxu0 0.0
        %7743 = vmatpush1.msra.mxu0 0.0
        %7744 = vmatprep.subr.mxu0 0.0
        %7745 = vmatpush1.msra.mxu0 0.0
        %7746 = vmatprep.subr.mxu0 0.0
        %7747 = vmatpush1.msra.mxu0 0.0
        %7748 = vmatprep.subr.mxu0 0.0
        %7749 = vmatpush1.msra.mxu0 0.0
        %7750 = vmatprep.subr.mxu0 0.0
        %7751 = vmatpush1.msra.mxu0 0.0
        %7752 = vmatprep.mubr.f32.mxu0 0.0
        %7753 = vmatmul.mubr.f32.gmra.mrb[0].mxu0 %v7665
        %v7754 = vpop.f32.mrb[0].mxu0
        %v7755 = vadd.f32 0.0, %v7754
        %v7756 = vpop.f32.mrb[0].mxu0
        %7757 = vmatprep.mubr.f32.mxu0 0.0
        %7758 = vmatmul.mubr.f32.gmra.mrb[0].mxu0 %v7668
        %v7759 = vpop.f32.mrb[0].mxu0
        %v7760 = vadd.f32 0.0, %v7759
        %v7761 = vpop.f32.mrb[0].mxu0
        %7762 = vmatprep.mubr.f32.mxu0 0.0
        %7763 = vmatmul.mubr.f32.gmra.mrb[0].mxu0 %v7671
        %v7764 = vpop.f32.mrb[0].mxu0
        %v7765 = vadd.f32 0.0, %v7764
        %v7766 = vpop.f32.mrb[0].mxu0
        %7767 = vmatprep.mubr.f32.mxu0 0.0
        %7768 = vmatmul.mubr.f32.gmra.mrb[0].mxu0 %v7674
        %v7769 = vpop.f32.mrb[0].mxu0
        %v7770 = vadd.f32 0.0, %v7769
        %v7771 = vpop.f32.mrb[0].mxu0
        %7772 = vmatprep.mubr.f32.mxu0 0.0
        %7773 = vmatmul.mubr.f32.gmra.mrb[0].mxu0 %v7677
        %v7774 = vpop.f32.mrb[0].mxu0
        %v7775 = vadd.f32 0.0, %v7774
        %v7776 = vpop.f32.mrb[0].mxu0
        %7777 = vmatprep.mubr.f32.mxu0 0.0
        %7778 = vmatmul.mubr.f32.gmra.mrb[0].mxu0 %v7680
        %v7779 = vpop.f32.mrb[0].mxu0
        %v7780 = vadd.f32 0.0, %v7779
        %v7781 = vpop.f32.mrb[0].mxu0
        %7782 = vmatprep.mubr.f32.mxu0 0.0
        %7783 = vmatmul.mubr.f32.gmra.mrb[0].mxu0 %v7683
        %v7784 = vpop.f32.mrb[0].mxu0
        %v7785 = vadd.f32 0.0, %v7784
        %v7786 = vpop.f32.mrb[0].mxu0
        %7787 = vmatprep.mubr.f32.mxu0 0.0
        %7788 = vmatmul.mubr.f32.gmra.mrb[0].mxu0 %v7686
        %v7789 = vpop.f32.mrb[0].mxu0
        %v7790 = vadd.f32 0.0, %v7789
        %v7791 = vpop.f32.mrb[0].mxu0
        %7792 = vdwg.mxu0
        %s7793 = scalar_lea.vmem [#allocation13], 8
        %v7794 = vld [vmem:[%s7793] sm:$0xff]
        %vm7795 = vcmask 64512
        %v7797 = vsel %vm7795, %v7755, 0
        %v7800 = vsel %vm7795, %v7760, 0
        %v7803 = vsel %vm7795, %v7765, 0
        %v7806 = vsel %vm7795, %v7770, 0
        %v7809 = vsel %vm7795, %v7775, 0
        %v7812 = vsel %vm7795, %v7780, 0
        %v7815 = vsel %vm7795, %v7785, 0
        %v7818 = vsel %vm7795, %v7790, 0
        %7820 = vmatprep.subr.mxu0 0.0
        %7821 = vmatpush1.msra.mxu0 %v7794
        %7822 = vmatprep.subr.mxu0 0.0
        %7823 = vmatpush1.msra.mxu0 0.0
        %7824 = vmatprep.subr.mxu0 0.0
        %7825 = vmatpush1.msra.mxu0 0.0
        %7826 = vmatprep.subr.mxu0 0.0
        %7827 = vmatpush1.msra.mxu0 0.0
        %7828 = vmatprep.subr.mxu0 0.0
        %7829 = vmatpush1.msra.mxu0 0.0
        %7830 = vmatprep.subr.mxu0 0.0
        %7831 = vmatpush1.msra.mxu0 0.0
        %7832 = vmatprep.subr.mxu0 0.0
        %7833 = vmatpush1.msra.mxu0 0.0
        %7834 = vmatprep.subr.mxu0 0.0
        %7835 = vmatpush1.msra.mxu0 0.0
        %7836 = vmatprep.subr.mxu0 0.0
        %7837 = vmatpush1.msra.mxu0 0.0
        %7838 = vmatprep.subr.mxu0 0.0
        %7839 = vmatpush1.msra.mxu0 0.0
        %7840 = vmatprep.subr.mxu0 0.0
        %7841 = vmatpush1.msra.mxu0 0.0
        %7842 = vmatprep.subr.mxu0 0.0
        %7843 = vmatpush1.msra.mxu0 0.0
        %7844 = vmatprep.subr.mxu0 0.0
        %7845 = vmatpush1.msra.mxu0 0.0
        %7846 = vmatprep.subr.mxu0 0.0
        %7847 = vmatpush1.msra.mxu0 0.0
        %7848 = vmatprep.subr.mxu0 0.0
        %7849 = vmatpush1.msra.mxu0 0.0
        %7850 = vmatprep.subr.mxu0 0.0
        %7851 = vmatpush1.msra.mxu0 0.0
        %7852 = vmatprep.subr.mxu0 0.0
        %7853 = vmatpush1.msra.mxu0 0.0
        %7854 = vmatprep.subr.mxu0 0.0
        %7855 = vmatpush1.msra.mxu0 0.0
        %7856 = vmatprep.subr.mxu0 0.0
        %7857 = vmatpush1.msra.mxu0 0.0
        %7858 = vmatprep.subr.mxu0 0.0
        %7859 = vmatpush1.msra.mxu0 0.0
        %7860 = vmatprep.subr.mxu0 0.0
        %7861 = vmatpush1.msra.mxu0 0.0
        %7862 = vmatprep.subr.mxu0 0.0
        %7863 = vmatpush1.msra.mxu0 0.0
        %7864 = vmatprep.subr.mxu0 0.0
        %7865 = vmatpush1.msra.mxu0 0.0
        %7866 = vmatprep.subr.mxu0 0.0
        %7867 = vmatpush1.msra.mxu0 0.0
        %7868 = vmatprep.subr.mxu0 0.0
        %7869 = vmatpush1.msra.mxu0 0.0
        %7870 = vmatprep.subr.mxu0 0.0
        %7871 = vmatpush1.msra.mxu0 0.0
        %7872 = vmatprep.subr.mxu0 0.0
        %7873 = vmatpush1.msra.mxu0 0.0
        %7874 = vmatprep.subr.mxu0 0.0
        %7875 = vmatpush1.msra.mxu0 0.0
        %7876 = vmatprep.subr.mxu0 0.0
        %7877 = vmatpush1.msra.mxu0 0.0
        %7878 = vmatprep.subr.mxu0 0.0
        %7879 = vmatpush1.msra.mxu0 0.0
        %7880 = vmatprep.subr.mxu0 0.0
        %7881 = vmatpush1.msra.mxu0 0.0
        %7882 = vmatprep.subr.mxu0 0.0
        %7883 = vmatpush1.msra.mxu0 0.0
        %7884 = vmatprep.mubr.f32.mxu0 0.0
        %7885 = vmatmul.mubr.f32.gmra.mrb[0].mxu0 %v7797
        %v7886 = vpop.f32.mrb[0].mxu0
        %v7887 = vadd.f32 0.0, %v7886
        %v7888 = vpop.f32.mrb[0].mxu0
        %7889 = vmatprep.mubr.f32.mxu0 0.0
        %7890 = vmatmul.mubr.f32.gmra.mrb[0].mxu0 %v7800
        %v7891 = vpop.f32.mrb[0].mxu0
        %v7892 = vadd.f32 0.0, %v7891
        %v7893 = vpop.f32.mrb[0].mxu0
        %7894 = vmatprep.mubr.f32.mxu0 0.0
        %7895 = vmatmul.mubr.f32.gmra.mrb[0].mxu0 %v7803
        %v7896 = vpop.f32.mrb[0].mxu0
        %v7897 = vadd.f32 0.0, %v7896
        %v7898 = vpop.f32.mrb[0].mxu0
        %7899 = vmatprep.mubr.f32.mxu0 0.0
        %7900 = vmatmul.mubr.f32.gmra.mrb[0].mxu0 %v7806
        %v7901 = vpop.f32.mrb[0].mxu0
        %v7902 = vadd.f32 0.0, %v7901
        %v7903 = vpop.f32.mrb[0].mxu0
        %7904 = vmatprep.mubr.f32.mxu0 0.0
        %7905 = vmatmul.mubr.f32.gmra.mrb[0].mxu0 %v7809
        %v7906 = vpop.f32.mrb[0].mxu0
        %v7907 = vadd.f32 0.0, %v7906
        %v7908 = vpop.f32.mrb[0].mxu0
        %7909 = vmatprep.mubr.f32.mxu0 0.0
        %7910 = vmatmul.mubr.f32.gmra.mrb[0].mxu0 %v7812
        %v7911 = vpop.f32.mrb[0].mxu0
        %v7912 = vadd.f32 0.0, %v7911
        %v7913 = vpop.f32.mrb[0].mxu0
        %7914 = vmatprep.mubr.f32.mxu0 0.0
        %7915 = vmatmul.mubr.f32.gmra.mrb[0].mxu0 %v7815
        %v7916 = vpop.f32.mrb[0].mxu0
        %v7917 = vadd.f32 0.0, %v7916
        %v7918 = vpop.f32.mrb[0].mxu0
        %7919 = vmatprep.mubr.f32.mxu0 0.0
        %7920 = vmatmul.mubr.f32.gmra.mrb[0].mxu0 %v7818
        %v7921 = vpop.f32.mrb[0].mxu0
        %v7922 = vadd.f32 0.0, %v7921
        %v7923 = vpop.f32.mrb[0].mxu0
        %7924 = vdwg.mxu0
        %v7926 = vsel %vm7795, %v7616, 0
        %v7929 = vsel %vm7795, %v7621, 0
        %v7932 = vsel %vm7795, %v7626, 0
        %v7935 = vsel %vm7795, %v7631, 0
        %v7938 = vsel %vm7795, %v7636, 0
        %v7941 = vsel %vm7795, %v7641, 0
        %v7944 = vsel %vm7795, %v7646, 0
        %v7947 = vsel %vm7795, %v7651, 0
        %7949 = vmatprep.subr.mxu0 0.0
        %7950 = vmatpush1.msra.mxu0 %v7654
        %7951 = vmatprep.subr.mxu0 0.0
        %7952 = vmatpush1.msra.mxu0 0.0
        %7953 = vmatprep.subr.mxu0 0.0
        %7954 = vmatpush1.msra.mxu0 0.0
        %7955 = vmatprep.subr.mxu0 0.0
        %7956 = vmatpush1.msra.mxu0 0.0
        %7957 = vmatprep.subr.mxu0 0.0
        %7958 = vmatpush1.msra.mxu0 0.0
        %7959 = vmatprep.subr.mxu0 0.0
        %7960 = vmatpush1.msra.mxu0 0.0
        %7961 = vmatprep.subr.mxu0 0.0
        %7962 = vmatpush1.msra.mxu0 0.0
        %7963 = vmatprep.subr.mxu0 0.0
        %7964 = vmatpush1.msra.mxu0 0.0
        %7965 = vmatprep.subr.mxu0 0.0
        %7966 = vmatpush1.msra.mxu0 0.0
        %7967 = vmatprep.subr.mxu0 0.0
        %7968 = vmatpush1.msra.mxu0 0.0
        %7969 = vmatprep.subr.mxu0 0.0
        %7970 = vmatpush1.msra.mxu0 0.0
        %7971 = vmatprep.subr.mxu0 0.0
        %7972 = vmatpush1.msra.mxu0 0.0
        %7973 = vmatprep.subr.mxu0 0.0
        %7974 = vmatpush1.msra.mxu0 0.0
        %7975 = vmatprep.subr.mxu0 0.0
        %7976 = vmatpush1.msra.mxu0 0.0
        %7977 = vmatprep.subr.mxu0 0.0
        %7978 = vmatpush1.msra.mxu0 0.0
        %7979 = vmatprep.subr.mxu0 0.0
        %7980 = vmatpush1.msra.mxu0 0.0
        %7981 = vmatprep.subr.mxu0 0.0
        %7982 = vmatpush1.msra.mxu0 0.0
        %7983 = vmatprep.subr.mxu0 0.0
        %7984 = vmatpush1.msra.mxu0 0.0
        %7985 = vmatprep.subr.mxu0 0.0
        %7986 = vmatpush1.msra.mxu0 0.0
        %7987 = vmatprep.subr.mxu0 0.0
        %7988 = vmatpush1.msra.mxu0 0.0
        %7989 = vmatprep.subr.mxu0 0.0
        %7990 = vmatpush1.msra.mxu0 0.0
        %7991 = vmatprep.subr.mxu0 0.0
        %7992 = vmatpush1.msra.mxu0 0.0
        %7993 = vmatprep.subr.mxu0 0.0
        %7994 = vmatpush1.msra.mxu0 0.0
        %7995 = vmatprep.subr.mxu0 0.0
        %7996 = vmatpush1.msra.mxu0 0.0
        %7997 = vmatprep.subr.mxu0 0.0
        %7998 = vmatpush1.msra.mxu0 0.0
        %7999 = vmatprep.subr.mxu0 0.0
        %8000 = vmatpush1.msra.mxu0 0.0
        %8001 = vmatprep.subr.mxu0 0.0
        %8002 = vmatpush1.msra.mxu0 0.0
        %8003 = vmatprep.subr.mxu0 0.0
        %8004 = vmatpush1.msra.mxu0 0.0
        %8005 = vmatprep.subr.mxu0 0.0
        %8006 = vmatpush1.msra.mxu0 0.0
        %8007 = vmatprep.subr.mxu0 0.0
        %8008 = vmatpush1.msra.mxu0 0.0
        %8009 = vmatprep.subr.mxu0 0.0
        %8010 = vmatpush1.msra.mxu0 0.0
        %8011 = vmatprep.subr.mxu0 0.0
        %8012 = vmatpush1.msra.mxu0 0.0
        %8013 = vmatprep.mubr.f32.mxu0 0.0
        %8014 = vmatmul.mubr.f32.gmra.mrb[0].mxu0 %v7926
        %v8015 = vpop.f32.mrb[0].mxu0
        %v8016 = vadd.f32 %v7887, %v8015
        %v8017 = vpop.f32.mrb[0].mxu0
        %8018 = vmatprep.mubr.f32.mxu0 0.0
        %8019 = vmatmul.mubr.f32.gmra.mrb[0].mxu0 %v7929
        %v8020 = vpop.f32.mrb[0].mxu0
        %v8021 = vadd.f32 %v7892, %v8020
        %v8022 = vpop.f32.mrb[0].mxu0
        %8023 = vmatprep.mubr.f32.mxu0 0.0
        %8024 = vmatmul.mubr.f32.gmra.mrb[0].mxu0 %v7932
        %v8025 = vpop.f32.mrb[0].mxu0
        %v8026 = vadd.f32 %v7897, %v8025
        %v8027 = vpop.f32.mrb[0].mxu0
        %8028 = vmatprep.mubr.f32.mxu0 0.0
        %8029 = vmatmul.mubr.f32.gmra.mrb[0].mxu0 %v7935
        %v8030 = vpop.f32.mrb[0].mxu0
        %v8031 = vadd.f32 %v7902, %v8030
        %v8032 = vpop.f32.mrb[0].mxu0
        %8033 = vmatprep.mubr.f32.mxu0 0.0
        %8034 = vmatmul.mubr.f32.gmra.mrb[0].mxu0 %v7938
        %v8035 = vpop.f32.mrb[0].mxu0
        %v8036 = vadd.f32 %v7907, %v8035
        %v8037 = vpop.f32.mrb[0].mxu0
        %8038 = vmatprep.mubr.f32.mxu0 0.0
        %8039 = vmatmul.mubr.f32.gmra.mrb[0].mxu0 %v7941
        %v8040 = vpop.f32.mrb[0].mxu0
        %v8041 = vadd.f32 %v7912, %v8040
        %v8042 = vpop.f32.mrb[0].mxu0
        %8043 = vmatprep.mubr.f32.mxu0 0.0
        %8044 = vmatmul.mubr.f32.gmra.mrb[0].mxu0 %v7944
        %v8045 = vpop.f32.mrb[0].mxu0
        %v8046 = vadd.f32 %v7917, %v8045
        %v8047 = vpop.f32.mrb[0].mxu0
        %8048 = vmatprep.mubr.f32.mxu0 0.0
        %8049 = vmatmul.mubr.f32.gmra.mrb[0].mxu0 %v7947
        %v8050 = vpop.f32.mrb[0].mxu0
        %v8051 = vadd.f32 %v7922, %v8050
        %v8052 = vpop.f32.mrb[0].mxu0
        %8053 = vdwg.mxu0
        %s8054 = scalar_lea.vmem [#allocation7], 128
        %v8055 = vld [vmem:[%s8054] sm:$0xff]
        %v8056 = vld [vmem:[%s8054 + $0x8] sm:$0xff]
        %v8057 = vld [vmem:[%s8054 + $0x10] sm:$0xff]
        %v8058 = vld [vmem:[%s8054 + $0x18] sm:$0xff]
        %v8059 = vld [vmem:[%s8054 + $0x20] sm:$0xff]
        %v8060 = vld [vmem:[%s8054 + $0x28] sm:$0xff]
        %v8061 = vld [vmem:[%s8054 + $0x30] sm:$0xff]
        %v8062 = vld [vmem:[%s8054 + $0x38] sm:$0xff]
        %v8064 = vsel %vm7521, %v8055, 0
        %v8067 = vsel %vm7521, %v8056, 0
        %v8070 = vsel %vm7521, %v8057, 0
        %v8073 = vsel %vm7521, %v8058, 0
        %v8076 = vsel %vm7521, %v8059, 0
        %v8079 = vsel %vm7521, %v8060, 0
        %v8082 = vsel %vm7521, %v8061, 0
        %v8085 = vsel %vm7521, %v8062, 0
        %8087 = vmatprep.subr.mxu0 0.0
        %8088 = vmatpush1.msra.mxu0 %v7450
        %8089 = vmatprep.subr.mxu0 0.0
        %8090 = vmatpush1.msra.mxu0 %v7455
        %8091 = vmatprep.subr.mxu0 0.0
        %8092 = vmatpush1.msra.mxu0 %v7460
        %8093 = vmatprep.subr.mxu0 0.0
        %8094 = vmatpush1.msra.mxu0 %v7465
        %8095 = vmatprep.subr.mxu0 0.0
        %8096 = vmatpush1.msra.mxu0 %v7470
        %8097 = vmatprep.subr.mxu0 0.0
        %8098 = vmatpush1.msra.mxu0 %v7475
        %8099 = vmatprep.subr.mxu0 0.0
        %8100 = vmatpush1.msra.mxu0 %v7480
        %8101 = vmatprep.subr.mxu0 0.0
        %8102 = vmatpush1.msra.mxu0 %v7485
        %8103 = vmatprep.subr.mxu0 0.0
        %8104 = vmatpush1.msra.mxu0 %v7490
        %8105 = vmatprep.subr.mxu0 0.0
        %8106 = vmatpush1.msra.mxu0 %v7495
        %8107 = vmatprep.subr.mxu0 0.0
        %8108 = vmatpush1.msra.mxu0 %v7500
        %8109 = vmatprep.subr.mxu0 0.0
        %8110 = vmatpush1.msra.mxu0 %v7505
        %8111 = vmatprep.subr.mxu0 0.0
        %8112 = vmatpush1.msra.mxu0 %v7547
        %8113 = vmatprep.subr.mxu0 0.0
        %8114 = vmatpush1.msra.mxu0 0.0
        %8115 = vmatprep.subr.mxu0 0.0
        %8116 = vmatpush1.msra.mxu0 0.0
        %8117 = vmatprep.subr.mxu0 0.0
        %8118 = vmatpush1.msra.mxu0 0.0
        %8119 = vmatprep.subr.mxu0 0.0
        %8120 = vmatpush1.msra.mxu0 0.0
        %8121 = vmatprep.subr.mxu0 0.0
        %8122 = vmatpush1.msra.mxu0 0.0
        %8123 = vmatprep.subr.mxu0 0.0
        %8124 = vmatpush1.msra.mxu0 0.0
        %8125 = vmatprep.subr.mxu0 0.0
        %8126 = vmatpush1.msra.mxu0 0.0
        %8127 = vmatprep.subr.mxu0 0.0
        %8128 = vmatpush1.msra.mxu0 0.0
        %8129 = vmatprep.subr.mxu0 0.0
        %8130 = vmatpush1.msra.mxu0 0.0
        %8131 = vmatprep.subr.mxu0 0.0
        %8132 = vmatpush1.msra.mxu0 0.0
        %8133 = vmatprep.subr.mxu0 0.0
        %8134 = vmatpush1.msra.mxu0 0.0
        %8135 = vmatprep.subr.mxu0 0.0
        %8136 = vmatpush1.msra.mxu0 0.0
        %8137 = vmatprep.subr.mxu0 0.0
        %8138 = vmatpush1.msra.mxu0 0.0
        %8139 = vmatprep.subr.mxu0 0.0
        %8140 = vmatpush1.msra.mxu0 0.0
        %8141 = vmatprep.subr.mxu0 0.0
        %8142 = vmatpush1.msra.mxu0 0.0
        %8143 = vmatprep.subr.mxu0 0.0
        %8144 = vmatpush1.msra.mxu0 0.0
        %8145 = vmatprep.subr.mxu0 0.0
        %8146 = vmatpush1.msra.mxu0 0.0
        %8147 = vmatprep.subr.mxu0 0.0
        %8148 = vmatpush1.msra.mxu0 0.0
        %8149 = vmatprep.subr.mxu0 0.0
        %8150 = vmatpush1.msra.mxu0 0.0
        %8151 = vmatprep.mubr.f32.mxu0 0.0
        %8152 = vmatmul.mubr.f32.gmra.mrb[0].mxu0 %v8064
        %v8153 = vpop.f32.mrb[0].mxu0
        %v8154 = vadd.f32 0.0, %v8153
        %v8155 = vpop.f32.mrb[0].mxu0
        %8156 = vmatprep.mubr.f32.mxu0 0.0
        %8157 = vmatmul.mubr.f32.gmra.mrb[0].mxu0 %v8067
        %v8158 = vpop.f32.mrb[0].mxu0
        %v8159 = vadd.f32 0.0, %v8158
        %v8160 = vpop.f32.mrb[0].mxu0
        %8161 = vmatprep.mubr.f32.mxu0 0.0
        %8162 = vmatmul.mubr.f32.gmra.mrb[0].mxu0 %v8070
        %v8163 = vpop.f32.mrb[0].mxu0
        %v8164 = vadd.f32 0.0, %v8163
        %v8165 = vpop.f32.mrb[0].mxu0
        %8166 = vmatprep.mubr.f32.mxu0 0.0
        %8167 = vmatmul.mubr.f32.gmra.mrb[0].mxu0 %v8073
        %v8168 = vpop.f32.mrb[0].mxu0
        %v8169 = vadd.f32 0.0, %v8168
        %v8170 = vpop.f32.mrb[0].mxu0
        %8171 = vmatprep.mubr.f32.mxu0 0.0
        %8172 = vmatmul.mubr.f32.gmra.mrb[0].mxu0 %v8076
        %v8173 = vpop.f32.mrb[0].mxu0
        %v8174 = vadd.f32 0.0, %v8173
        %v8175 = vpop.f32.mrb[0].mxu0
        %8176 = vmatprep.mubr.f32.mxu0 0.0
        %8177 = vmatmul.mubr.f32.gmra.mrb[0].mxu0 %v8079
        %v8178 = vpop.f32.mrb[0].mxu0
        %v8179 = vadd.f32 0.0, %v8178
        %v8180 = vpop.f32.mrb[0].mxu0
        %8181 = vmatprep.mubr.f32.mxu0 0.0
        %8182 = vmatmul.mubr.f32.gmra.mrb[0].mxu0 %v8082
        %v8183 = vpop.f32.mrb[0].mxu0
        %v8184 = vadd.f32 0.0, %v8183
        %v8185 = vpop.f32.mrb[0].mxu0
        %8186 = vmatprep.mubr.f32.mxu0 0.0
        %8187 = vmatmul.mubr.f32.gmra.mrb[0].mxu0 %v8085
        %v8188 = vpop.f32.mrb[0].mxu0
        %v8189 = vadd.f32 0.0, %v8188
        %v8190 = vpop.f32.mrb[0].mxu0
        %8191 = vdwg.mxu0
        %s8192 = scalar_lea.vmem [#allocation13], 16
        %v8193 = vld [vmem:[%s8192] sm:$0xff]
        %v8195 = vsel %vm7795, %v8154, 0
        %v8198 = vsel %vm7795, %v8159, 0
        %v8201 = vsel %vm7795, %v8164, 0
        %v8204 = vsel %vm7795, %v8169, 0
        %v8207 = vsel %vm7795, %v8174, 0
        %v8210 = vsel %vm7795, %v8179, 0
        %v8213 = vsel %vm7795, %v8184, 0
        %v8216 = vsel %vm7795, %v8189, 0
        %8218 = vmatprep.subr.mxu0 0.0
        %8219 = vmatpush1.msra.mxu0 %v8193
        %8220 = vmatprep.subr.mxu0 0.0
        %8221 = vmatpush1.msra.mxu0 0.0
        %8222 = vmatprep.subr.mxu0 0.0
        %8223 = vmatpush1.msra.mxu0 0.0
        %8224 = vmatprep.subr.mxu0 0.0
        %8225 = vmatpush1.msra.mxu0 0.0
        %8226 = vmatprep.subr.mxu0 0.0
        %8227 = vmatpush1.msra.mxu0 0.0
        %8228 = vmatprep.subr.mxu0 0.0
        %8229 = vmatpush1.msra.mxu0 0.0
        %8230 = vmatprep.subr.mxu0 0.0
        %8231 = vmatpush1.msra.mxu0 0.0
        %8232 = vmatprep.subr.mxu0 0.0
        %8233 = vmatpush1.msra.mxu0 0.0
        %8234 = vmatprep.subr.mxu0 0.0
        %8235 = vmatpush1.msra.mxu0 0.0
        %8236 = vmatprep.subr.mxu0 0.0
        %8237 = vmatpush1.msra.mxu0 0.0
        %8238 = vmatprep.subr.mxu0 0.0
        %8239 = vmatpush1.msra.mxu0 0.0
        %8240 = vmatprep.subr.mxu0 0.0
        %8241 = vmatpush1.msra.mxu0 0.0
        %8242 = vmatprep.subr.mxu0 0.0
        %8243 = vmatpush1.msra.mxu0 0.0
        %8244 = vmatprep.subr.mxu0 0.0
        %8245 = vmatpush1.msra.mxu0 0.0
        %8246 = vmatprep.subr.mxu0 0.0
        %8247 = vmatpush1.msra.mxu0 0.0
        %8248 = vmatprep.subr.mxu0 0.0
        %8249 = vmatpush1.msra.mxu0 0.0
        %8250 = vmatprep.subr.mxu0 0.0
        %8251 = vmatpush1.msra.mxu0 0.0
        %8252 = vmatprep.subr.mxu0 0.0
        %8253 = vmatpush1.msra.mxu0 0.0
        %8254 = vmatprep.subr.mxu0 0.0
        %8255 = vmatpush1.msra.mxu0 0.0
        %8256 = vmatprep.subr.mxu0 0.0
        %8257 = vmatpush1.msra.mxu0 0.0
        %8258 = vmatprep.subr.mxu0 0.0
        %8259 = vmatpush1.msra.mxu0 0.0
        %8260 = vmatprep.subr.mxu0 0.0
        %8261 = vmatpush1.msra.mxu0 0.0
        %8262 = vmatprep.subr.mxu0 0.0
        %8263 = vmatpush1.msra.mxu0 0.0
        %8264 = vmatprep.subr.mxu0 0.0
        %8265 = vmatpush1.msra.mxu0 0.0
        %8266 = vmatprep.subr.mxu0 0.0
        %8267 = vmatpush1.msra.mxu0 0.0
        %8268 = vmatprep.subr.mxu0 0.0
        %8269 = vmatpush1.msra.mxu0 0.0
        %8270 = vmatprep.subr.mxu0 0.0
        %8271 = vmatpush1.msra.mxu0 0.0
        %8272 = vmatprep.subr.mxu0 0.0
        %8273 = vmatpush1.msra.mxu0 0.0
        %8274 = vmatprep.subr.mxu0 0.0
        %8275 = vmatpush1.msra.mxu0 0.0
        %8276 = vmatprep.subr.mxu0 0.0
        %8277 = vmatpush1.msra.mxu0 0.0
        %8278 = vmatprep.subr.mxu0 0.0
        %8279 = vmatpush1.msra.mxu0 0.0
        %8280 = vmatprep.subr.mxu0 0.0
        %8281 = vmatpush1.msra.mxu0 0.0
        %8282 = vmatprep.mubr.f32.mxu0 0.0
        %8283 = vmatmul.mubr.f32.gmra.mrb[0].mxu0 %v8195
        %v8284 = vpop.f32.mrb[0].mxu0
        %v8285 = vadd.f32 0.0, %v8284
        %v8286 = vpop.f32.mrb[0].mxu0
        %8287 = vmatprep.mubr.f32.mxu0 0.0
        %8288 = vmatmul.mubr.f32.gmra.mrb[0].mxu0 %v8198
        %v8289 = vpop.f32.mrb[0].mxu0
        %v8290 = vadd.f32 0.0, %v8289
        %v8291 = vpop.f32.mrb[0].mxu0
        %8292 = vmatprep.mubr.f32.mxu0 0.0
        %8293 = vmatmul.mubr.f32.gmra.mrb[0].mxu0 %v8201
        %v8294 = vpop.f32.mrb[0].mxu0
        %v8295 = vadd.f32 0.0, %v8294
        %v8296 = vpop.f32.mrb[0].mxu0
        %8297 = vmatprep.mubr.f32.mxu0 0.0
        %8298 = vmatmul.mubr.f32.gmra.mrb[0].mxu0 %v8204
        %v8299 = vpop.f32.mrb[0].mxu0
        %v8300 = vadd.f32 0.0, %v8299
        %v8301 = vpop.f32.mrb[0].mxu0
        %8302 = vmatprep.mubr.f32.mxu0 0.0
        %8303 = vmatmul.mubr.f32.gmra.mrb[0].mxu0 %v8207
        %v8304 = vpop.f32.mrb[0].mxu0
        %v8305 = vadd.f32 0.0, %v8304
        %v8306 = vpop.f32.mrb[0].mxu0
        %8307 = vmatprep.mubr.f32.mxu0 0.0
        %8308 = vmatmul.mubr.f32.gmra.mrb[0].mxu0 %v8210
        %v8309 = vpop.f32.mrb[0].mxu0
        %v8310 = vadd.f32 0.0, %v8309
        %v8311 = vpop.f32.mrb[0].mxu0
        %8312 = vmatprep.mubr.f32.mxu0 0.0
        %8313 = vmatmul.mubr.f32.gmra.mrb[0].mxu0 %v8213
        %v8314 = vpop.f32.mrb[0].mxu0
        %v8315 = vadd.f32 0.0, %v8314
        %v8316 = vpop.f32.mrb[0].mxu0
        %8317 = vmatprep.mubr.f32.mxu0 0.0
        %8318 = vmatmul.mubr.f32.gmra.mrb[0].mxu0 %v8216
        %v8319 = vpop.f32.mrb[0].mxu0
        %v8320 = vadd.f32 0.0, %v8319
        %v8321 = vpop.f32.mrb[0].mxu0
        %8322 = vdwg.mxu0
        %v8323 = vadd.f32 %v8016, %v8285
        %v8324 = vadd.f32 %v8021, %v8290
        %v8325 = vadd.f32 %v8026, %v8295
        %v8326 = vadd.f32 %v8031, %v8300
        %v8327 = vadd.f32 %v8036, %v8305
        %v8328 = vadd.f32 %v8041, %v8310
        %v8329 = vadd.f32 %v8046, %v8315
        %v8330 = vadd.f32 %v8051, %v8320
        %s8331 = scalar_lea.vmem [#allocation7], 192
        %v8332 = vld [vmem:[%s8331] sm:$0xff]
        %v8333 = vld [vmem:[%s8331 + $0x8] sm:$0xff]
        %v8334 = vld [vmem:[%s8331 + $0x10] sm:$0xff]
        %v8335 = vld [vmem:[%s8331 + $0x18] sm:$0xff]
        %v8336 = vld [vmem:[%s8331 + $0x20] sm:$0xff]
        %v8337 = vld [vmem:[%s8331 + $0x28] sm:$0xff]
        %v8338 = vld [vmem:[%s8331 + $0x30] sm:$0xff]
        %v8339 = vld [vmem:[%s8331 + $0x38] sm:$0xff]
        %v8341 = vsel %vm7521, %v8332, 0
        %v8344 = vsel %vm7521, %v8333, 0
        %v8347 = vsel %vm7521, %v8334, 0
        %v8350 = vsel %vm7521, %v8335, 0
        %v8353 = vsel %vm7521, %v8336, 0
        %v8356 = vsel %vm7521, %v8337, 0
        %v8359 = vsel %vm7521, %v8338, 0
        %v8362 = vsel %vm7521, %v8339, 0
        %8364 = vmatprep.subr.mxu0 0.0
        %8365 = vmatpush1.msra.mxu0 %v7450
        %8366 = vmatprep.subr.mxu0 0.0
        %8367 = vmatpush1.msra.mxu0 %v7455
        %8368 = vmatprep.subr.mxu0 0.0
        %8369 = vmatpush1.msra.mxu0 %v7460
        %8370 = vmatprep.subr.mxu0 0.0
        %8371 = vmatpush1.msra.mxu0 %v7465
        %8372 = vmatprep.subr.mxu0 0.0
        %8373 = vmatpush1.msra.mxu0 %v7470
        %8374 = vmatprep.subr.mxu0 0.0
        %8375 = vmatpush1.msra.mxu0 %v7475
        %8376 = vmatprep.subr.mxu0 0.0
        %8377 = vmatpush1.msra.mxu0 %v7480
        %8378 = vmatprep.subr.mxu0 0.0
        %8379 = vmatpush1.msra.mxu0 %v7485
        %8380 = vmatprep.subr.mxu0 0.0
        %8381 = vmatpush1.msra.mxu0 %v7490
        %8382 = vmatprep.subr.mxu0 0.0
        %8383 = vmatpush1.msra.mxu0 %v7495
        %8384 = vmatprep.subr.mxu0 0.0
        %8385 = vmatpush1.msra.mxu0 %v7500
        %8386 = vmatprep.subr.mxu0 0.0
        %8387 = vmatpush1.msra.mxu0 %v7505
        %8388 = vmatprep.subr.mxu0 0.0
        %8389 = vmatpush1.msra.mxu0 %v7547
        %8390 = vmatprep.subr.mxu0 0.0
        %8391 = vmatpush1.msra.mxu0 0.0
        %8392 = vmatprep.subr.mxu0 0.0
        %8393 = vmatpush1.msra.mxu0 0.0
        %8394 = vmatprep.subr.mxu0 0.0
        %8395 = vmatpush1.msra.mxu0 0.0
        %8396 = vmatprep.subr.mxu0 0.0
        %8397 = vmatpush1.msra.mxu0 0.0
        %8398 = vmatprep.subr.mxu0 0.0
        %8399 = vmatpush1.msra.mxu0 0.0
        %8400 = vmatprep.subr.mxu0 0.0
        %8401 = vmatpush1.msra.mxu0 0.0
        %8402 = vmatprep.subr.mxu0 0.0
        %8403 = vmatpush1.msra.mxu0 0.0
        %8404 = vmatprep.subr.mxu0 0.0
        %8405 = vmatpush1.msra.mxu0 0.0
        %8406 = vmatprep.subr.mxu0 0.0
        %8407 = vmatpush1.msra.mxu0 0.0
        %8408 = vmatprep.subr.mxu0 0.0
        %8409 = vmatpush1.msra.mxu0 0.0
        %8410 = vmatprep.subr.mxu0 0.0
        %8411 = vmatpush1.msra.mxu0 0.0
        %8412 = vmatprep.subr.mxu0 0.0
        %8413 = vmatpush1.msra.mxu0 0.0
        %8414 = vmatprep.subr.mxu0 0.0
        %8415 = vmatpush1.msra.mxu0 0.0
        %8416 = vmatprep.subr.mxu0 0.0
        %8417 = vmatpush1.msra.mxu0 0.0
        %8418 = vmatprep.subr.mxu0 0.0
        %8419 = vmatpush1.msra.mxu0 0.0
        %8420 = vmatprep.subr.mxu0 0.0
        %8421 = vmatpush1.msra.mxu0 0.0
        %8422 = vmatprep.subr.mxu0 0.0
        %8423 = vmatpush1.msra.mxu0 0.0
        %8424 = vmatprep.subr.mxu0 0.0
        %8425 = vmatpush1.msra.mxu0 0.0
        %8426 = vmatprep.subr.mxu0 0.0
        %8427 = vmatpush1.msra.mxu0 0.0
        %8428 = vmatprep.mubr.f32.mxu0 0.0
        %8429 = vmatmul.mubr.f32.gmra.mrb[0].mxu0 %v8341
        %v8430 = vpop.f32.mrb[0].mxu0
        %v8431 = vadd.f32 0.0, %v8430
        %v8432 = vpop.f32.mrb[0].mxu0
        %8433 = vmatprep.mubr.f32.mxu0 0.0
        %8434 = vmatmul.mubr.f32.gmra.mrb[0].mxu0 %v8344
        %v8435 = vpop.f32.mrb[0].mxu0
        %v8436 = vadd.f32 0.0, %v8435
        %v8437 = vpop.f32.mrb[0].mxu0
        %8438 = vmatprep.mubr.f32.mxu0 0.0
        %8439 = vmatmul.mubr.f32.gmra.mrb[0].mxu0 %v8347
        %v8440 = vpop.f32.mrb[0].mxu0
        %v8441 = vadd.f32 0.0, %v8440
        %v8442 = vpop.f32.mrb[0].mxu0
        %8443 = vmatprep.mubr.f32.mxu0 0.0
        %8444 = vmatmul.mubr.f32.gmra.mrb[0].mxu0 %v8350
        %v8445 = vpop.f32.mrb[0].mxu0
        %v8446 = vadd.f32 0.0, %v8445
        %v8447 = vpop.f32.mrb[0].mxu0
        %8448 = vmatprep.mubr.f32.mxu0 0.0
        %8449 = vmatmul.mubr.f32.gmra.mrb[0].mxu0 %v8353
        %v8450 = vpop.f32.mrb[0].mxu0
        %v8451 = vadd.f32 0.0, %v8450
        %v8452 = vpop.f32.mrb[0].mxu0
        %8453 = vmatprep.mubr.f32.mxu0 0.0
        %8454 = vmatmul.mubr.f32.gmra.mrb[0].mxu0 %v8356
        %v8455 = vpop.f32.mrb[0].mxu0
        %v8456 = vadd.f32 0.0, %v8455
        %v8457 = vpop.f32.mrb[0].mxu0
        %8458 = vmatprep.mubr.f32.mxu0 0.0
        %8459 = vmatmul.mubr.f32.gmra.mrb[0].mxu0 %v8359
        %v8460 = vpop.f32.mrb[0].mxu0
        %v8461 = vadd.f32 0.0, %v8460
        %v8462 = vpop.f32.mrb[0].mxu0
        %8463 = vmatprep.mubr.f32.mxu0 0.0
        %8464 = vmatmul.mubr.f32.gmra.mrb[0].mxu0 %v8362
        %v8465 = vpop.f32.mrb[0].mxu0
        %v8466 = vadd.f32 0.0, %v8465
        %v8467 = vpop.f32.mrb[0].mxu0
        %8468 = vdwg.mxu0
        %s8469 = scalar_lea.vmem [#allocation13], 24
        %v8470 = vld [vmem:[%s8469] sm:$0xff]
        %v8472 = vsel %vm7795, %v8431, 0
        %v8475 = vsel %vm7795, %v8436, 0
        %v8478 = vsel %vm7795, %v8441, 0
        %v8481 = vsel %vm7795, %v8446, 0
        %v8484 = vsel %vm7795, %v8451, 0
        %v8487 = vsel %vm7795, %v8456, 0
        %v8490 = vsel %vm7795, %v8461, 0
        %v8493 = vsel %vm7795, %v8466, 0
        %8495 = vmatprep.subr.mxu0 0.0
        %8496 = vmatpush1.msra.mxu0 %v8470
        %8497 = vmatprep.subr.mxu0 0.0
        %8498 = vmatpush1.msra.mxu0 0.0
        %8499 = vmatprep.subr.mxu0 0.0
        %8500 = vmatpush1.msra.mxu0 0.0
        %8501 = vmatprep.subr.mxu0 0.0
        %8502 = vmatpush1.msra.mxu0 0.0
        %8503 = vmatprep.subr.mxu0 0.0
        %8504 = vmatpush1.msra.mxu0 0.0
        %8505 = vmatprep.subr.mxu0 0.0
        %8506 = vmatpush1.msra.mxu0 0.0
        %8507 = vmatprep.subr.mxu0 0.0
        %8508 = vmatpush1.msra.mxu0 0.0
        %8509 = vmatprep.subr.mxu0 0.0
        %8510 = vmatpush1.msra.mxu0 0.0
        %8511 = vmatprep.subr.mxu0 0.0
        %8512 = vmatpush1.msra.mxu0 0.0
        %8513 = vmatprep.subr.mxu0 0.0
        %8514 = vmatpush1.msra.mxu0 0.0
        %8515 = vmatprep.subr.mxu0 0.0
        %8516 = vmatpush1.msra.mxu0 0.0
        %8517 = vmatprep.subr.mxu0 0.0
        %8518 = vmatpush1.msra.mxu0 0.0
        %8519 = vmatprep.subr.mxu0 0.0
        %8520 = vmatpush1.msra.mxu0 0.0
        %8521 = vmatprep.subr.mxu0 0.0
        %8522 = vmatpush1.msra.mxu0 0.0
        %8523 = vmatprep.subr.mxu0 0.0
        %8524 = vmatpush1.msra.mxu0 0.0
        %8525 = vmatprep.subr.mxu0 0.0
        %8526 = vmatpush1.msra.mxu0 0.0
        %8527 = vmatprep.subr.mxu0 0.0
        %8528 = vmatpush1.msra.mxu0 0.0
        %8529 = vmatprep.subr.mxu0 0.0
        %8530 = vmatpush1.msra.mxu0 0.0
        %8531 = vmatprep.subr.mxu0 0.0
        %8532 = vmatpush1.msra.mxu0 0.0
        %8533 = vmatprep.subr.mxu0 0.0
        %8534 = vmatpush1.msra.mxu0 0.0
        %8535 = vmatprep.subr.mxu0 0.0
        %8536 = vmatpush1.msra.mxu0 0.0
        %8537 = vmatprep.subr.mxu0 0.0
        %8538 = vmatpush1.msra.mxu0 0.0
        %8539 = vmatprep.subr.mxu0 0.0
        %8540 = vmatpush1.msra.mxu0 0.0
        %8541 = vmatprep.subr.mxu0 0.0
        %8542 = vmatpush1.msra.mxu0 0.0
        %8543 = vmatprep.subr.mxu0 0.0
        %8544 = vmatpush1.msra.mxu0 0.0
        %8545 = vmatprep.subr.mxu0 0.0
        %8546 = vmatpush1.msra.mxu0 0.0
        %8547 = vmatprep.subr.mxu0 0.0
        %8548 = vmatpush1.msra.mxu0 0.0
        %8549 = vmatprep.subr.mxu0 0.0
        %8550 = vmatpush1.msra.mxu0 0.0
        %8551 = vmatprep.subr.mxu0 0.0
        %8552 = vmatpush1.msra.mxu0 0.0
        %8553 = vmatprep.subr.mxu0 0.0
        %8554 = vmatpush1.msra.mxu0 0.0
        %8555 = vmatprep.subr.mxu0 0.0
        %8556 = vmatpush1.msra.mxu0 0.0
        %8557 = vmatprep.subr.mxu0 0.0
        %8558 = vmatpush1.msra.mxu0 0.0
        %8559 = vmatprep.mubr.f32.mxu0 0.0
        %8560 = vmatmul.mubr.f32.gmra.mrb[0].mxu0 %v8472
        %v8561 = vpop.f32.mrb[0].mxu0
        %v8562 = vadd.f32 0.0, %v8561
        %v8563 = vpop.f32.mrb[0].mxu0
        %8564 = vmatprep.mubr.f32.mxu0 0.0
        %8565 = vmatmul.mubr.f32.gmra.mrb[0].mxu0 %v8475
        %v8566 = vpop.f32.mrb[0].mxu0
        %v8567 = vadd.f32 0.0, %v8566
        %v8568 = vpop.f32.mrb[0].mxu0
        %8569 = vmatprep.mubr.f32.mxu0 0.0
        %8570 = vmatmul.mubr.f32.gmra.mrb[0].mxu0 %v8478
        %v8571 = vpop.f32.mrb[0].mxu0
        %v8572 = vadd.f32 0.0, %v8571
        %v8573 = vpop.f32.mrb[0].mxu0
        %8574 = vmatprep.mubr.f32.mxu0 0.0
        %8575 = vmatmul.mubr.f32.gmra.mrb[0].mxu0 %v8481
        %v8576 = vpop.f32.mrb[0].mxu0
        %v8577 = vadd.f32 0.0, %v8576
        %v8578 = vpop.f32.mrb[0].mxu0
        %8579 = vmatprep.mubr.f32.mxu0 0.0
        %8580 = vmatmul.mubr.f32.gmra.mrb[0].mxu0 %v8484
        %v8581 = vpop.f32.mrb[0].mxu0
        %v8582 = vadd.f32 0.0, %v8581
        %v8583 = vpop.f32.mrb[0].mxu0
        %8584 = vmatprep.mubr.f32.mxu0 0.0
        %8585 = vmatmul.mubr.f32.gmra.mrb[0].mxu0 %v8487
        %v8586 = vpop.f32.mrb[0].mxu0
        %v8587 = vadd.f32 0.0, %v8586
        %v8588 = vpop.f32.mrb[0].mxu0
        %8589 = vmatprep.mubr.f32.mxu0 0.0
        %8590 = vmatmul.mubr.f32.gmra.mrb[0].mxu0 %v8490
        %v8591 = vpop.f32.mrb[0].mxu0
        %v8592 = vadd.f32 0.0, %v8591
        %v8593 = vpop.f32.mrb[0].mxu0
        %8594 = vmatprep.mubr.f32.mxu0 0.0
        %8595 = vmatmul.mubr.f32.gmra.mrb[0].mxu0 %v8493
        %v8596 = vpop.f32.mrb[0].mxu0
        %v8597 = vadd.f32 0.0, %v8596
        %v8598 = vpop.f32.mrb[0].mxu0
        %8599 = vdwg.mxu0
        %v8600 = vadd.f32 %v8323, %v8562
        %v8601 = vadd.f32 %v8324, %v8567
        %v8602 = vadd.f32 %v8325, %v8572
        %v8603 = vadd.f32 %v8326, %v8577
        %v8604 = vadd.f32 %v8327, %v8582
        %v8605 = vadd.f32 %v8328, %v8587
        %v8606 = vadd.f32 %v8329, %v8592
        %v8607 = vadd.f32 %v8330, %v8597
        %s8608 = scalar_lea.vmem [#allocation7], 256
        %v8609 = vld [vmem:[%s8608] sm:$0xff]
        %v8610 = vld [vmem:[%s8608 + $0x8] sm:$0xff]
        %v8611 = vld [vmem:[%s8608 + $0x10] sm:$0xff]
        %v8612 = vld [vmem:[%s8608 + $0x18] sm:$0xff]
        %v8613 = vld [vmem:[%s8608 + $0x20] sm:$0xff]
        %v8614 = vld [vmem:[%s8608 + $0x28] sm:$0xff]
        %v8615 = vld [vmem:[%s8608 + $0x30] sm:$0xff]
        %v8616 = vld [vmem:[%s8608 + $0x38] sm:$0xff]
        %v8618 = vsel %vm7521, %v8609, 0
        %v8621 = vsel %vm7521, %v8610, 0
        %v8624 = vsel %vm7521, %v8611, 0
        %v8627 = vsel %vm7521, %v8612, 0
        %v8630 = vsel %vm7521, %v8613, 0
        %v8633 = vsel %vm7521, %v8614, 0
        %v8636 = vsel %vm7521, %v8615, 0
        %v8639 = vsel %vm7521, %v8616, 0
        %8641 = vmatprep.subr.mxu0 0.0
        %8642 = vmatpush1.msra.mxu0 %v7450
        %8643 = vmatprep.subr.mxu0 0.0
        %8644 = vmatpush1.msra.mxu0 %v7455
        %8645 = vmatprep.subr.mxu0 0.0
        %8646 = vmatpush1.msra.mxu0 %v7460
        %8647 = vmatprep.subr.mxu0 0.0
        %8648 = vmatpush1.msra.mxu0 %v7465
        %8649 = vmatprep.subr.mxu0 0.0
        %8650 = vmatpush1.msra.mxu0 %v7470
        %8651 = vmatprep.subr.mxu0 0.0
        %8652 = vmatpush1.msra.mxu0 %v7475
        %8653 = vmatprep.subr.mxu0 0.0
        %8654 = vmatpush1.msra.mxu0 %v7480
        %8655 = vmatprep.subr.mxu0 0.0
        %8656 = vmatpush1.msra.mxu0 %v7485
        %8657 = vmatprep.subr.mxu0 0.0
        %8658 = vmatpush1.msra.mxu0 %v7490
        %8659 = vmatprep.subr.mxu0 0.0
        %8660 = vmatpush1.msra.mxu0 %v7495
        %8661 = vmatprep.subr.mxu0 0.0
        %8662 = vmatpush1.msra.mxu0 %v7500
        %8663 = vmatprep.subr.mxu0 0.0
        %8664 = vmatpush1.msra.mxu0 %v7505
        %8665 = vmatprep.subr.mxu0 0.0
        %8666 = vmatpush1.msra.mxu0 %v7547
        %8667 = vmatprep.subr.mxu0 0.0
        %8668 = vmatpush1.msra.mxu0 0.0
        %8669 = vmatprep.subr.mxu0 0.0
        %8670 = vmatpush1.msra.mxu0 0.0
        %8671 = vmatprep.subr.mxu0 0.0
        %8672 = vmatpush1.msra.mxu0 0.0
        %8673 = vmatprep.subr.mxu0 0.0
        %8674 = vmatpush1.msra.mxu0 0.0
        %8675 = vmatprep.subr.mxu0 0.0
        %8676 = vmatpush1.msra.mxu0 0.0
        %8677 = vmatprep.subr.mxu0 0.0
        %8678 = vmatpush1.msra.mxu0 0.0
        %8679 = vmatprep.subr.mxu0 0.0
        %8680 = vmatpush1.msra.mxu0 0.0
        %8681 = vmatprep.subr.mxu0 0.0
        %8682 = vmatpush1.msra.mxu0 0.0
        %8683 = vmatprep.subr.mxu0 0.0
        %8684 = vmatpush1.msra.mxu0 0.0
        %8685 = vmatprep.subr.mxu0 0.0
        %8686 = vmatpush1.msra.mxu0 0.0
        %8687 = vmatprep.subr.mxu0 0.0
        %8688 = vmatpush1.msra.mxu0 0.0
        %8689 = vmatprep.subr.mxu0 0.0
        %8690 = vmatpush1.msra.mxu0 0.0
        %8691 = vmatprep.subr.mxu0 0.0
        %8692 = vmatpush1.msra.mxu0 0.0
        %8693 = vmatprep.subr.mxu0 0.0
        %8694 = vmatpush1.msra.mxu0 0.0
        %8695 = vmatprep.subr.mxu0 0.0
        %8696 = vmatpush1.msra.mxu0 0.0
        %8697 = vmatprep.subr.mxu0 0.0
        %8698 = vmatpush1.msra.mxu0 0.0
        %8699 = vmatprep.subr.mxu0 0.0
        %8700 = vmatpush1.msra.mxu0 0.0
        %8701 = vmatprep.subr.mxu0 0.0
        %8702 = vmatpush1.msra.mxu0 0.0
        %8703 = vmatprep.subr.mxu0 0.0
        %8704 = vmatpush1.msra.mxu0 0.0
        %8705 = vmatprep.mubr.f32.mxu0 0.0
        %8706 = vmatmul.mubr.f32.gmra.mrb[0].mxu0 %v8618
        %v8707 = vpop.f32.mrb[0].mxu0
        %v8708 = vadd.f32 0.0, %v8707
        %v8709 = vpop.f32.mrb[0].mxu0
        %8710 = vmatprep.mubr.f32.mxu0 0.0
        %8711 = vmatmul.mubr.f32.gmra.mrb[0].mxu0 %v8621
        %v8712 = vpop.f32.mrb[0].mxu0
        %v8713 = vadd.f32 0.0, %v8712
        %v8714 = vpop.f32.mrb[0].mxu0
        %8715 = vmatprep.mubr.f32.mxu0 0.0
        %8716 = vmatmul.mubr.f32.gmra.mrb[0].mxu0 %v8624
        %v8717 = vpop.f32.mrb[0].mxu0
        %v8718 = vadd.f32 0.0, %v8717
        %v8719 = vpop.f32.mrb[0].mxu0
        %8720 = vmatprep.mubr.f32.mxu0 0.0
        %8721 = vmatmul.mubr.f32.gmra.mrb[0].mxu0 %v8627
        %v8722 = vpop.f32.mrb[0].mxu0
        %v8723 = vadd.f32 0.0, %v8722
        %v8724 = vpop.f32.mrb[0].mxu0
        %8725 = vmatprep.mubr.f32.mxu0 0.0
        %8726 = vmatmul.mubr.f32.gmra.mrb[0].mxu0 %v8630
        %v8727 = vpop.f32.mrb[0].mxu0
        %v8728 = vadd.f32 0.0, %v8727
        %v8729 = vpop.f32.mrb[0].mxu0
        %8730 = vmatprep.mubr.f32.mxu0 0.0
        %8731 = vmatmul.mubr.f32.gmra.mrb[0].mxu0 %v8633
        %v8732 = vpop.f32.mrb[0].mxu0
        %v8733 = vadd.f32 0.0, %v8732
        %v8734 = vpop.f32.mrb[0].mxu0
        %8735 = vmatprep.mubr.f32.mxu0 0.0
        %8736 = vmatmul.mubr.f32.gmra.mrb[0].mxu0 %v8636
        %v8737 = vpop.f32.mrb[0].mxu0
        %v8738 = vadd.f32 0.0, %v8737
        %v8739 = vpop.f32.mrb[0].mxu0
        %8740 = vmatprep.mubr.f32.mxu0 0.0
        %8741 = vmatmul.mubr.f32.gmra.mrb[0].mxu0 %v8639
        %v8742 = vpop.f32.mrb[0].mxu0
        %v8743 = vadd.f32 0.0, %v8742
        %v8744 = vpop.f32.mrb[0].mxu0
        %8745 = vdwg.mxu0
        %s8746 = scalar_lea.vmem [#allocation13], 32
        %v8747 = vld [vmem:[%s8746] sm:$0xff]
        %v8749 = vsel %vm7795, %v8708, 0
        %v8752 = vsel %vm7795, %v8713, 0
        %v8755 = vsel %vm7795, %v8718, 0
        %v8758 = vsel %vm7795, %v8723, 0
        %v8761 = vsel %vm7795, %v8728, 0
        %v8764 = vsel %vm7795, %v8733, 0
        %v8767 = vsel %vm7795, %v8738, 0
        %v8770 = vsel %vm7795, %v8743, 0
        %8772 = vmatprep.subr.mxu0 0.0
        %8773 = vmatpush1.msra.mxu0 %v8747
        %8774 = vmatprep.subr.mxu0 0.0
        %8775 = vmatpush1.msra.mxu0 0.0
        %8776 = vmatprep.subr.mxu0 0.0
        %8777 = vmatpush1.msra.mxu0 0.0
        %8778 = vmatprep.subr.mxu0 0.0
        %8779 = vmatpush1.msra.mxu0 0.0
        %8780 = vmatprep.subr.mxu0 0.0
        %8781 = vmatpush1.msra.mxu0 0.0
        %8782 = vmatprep.subr.mxu0 0.0
        %8783 = vmatpush1.msra.mxu0 0.0
        %8784 = vmatprep.subr.mxu0 0.0
        %8785 = vmatpush1.msra.mxu0 0.0
        %8786 = vmatprep.subr.mxu0 0.0
        %8787 = vmatpush1.msra.mxu0 0.0
        %8788 = vmatprep.subr.mxu0 0.0
        %8789 = vmatpush1.msra.mxu0 0.0
        %8790 = vmatprep.subr.mxu0 0.0
        %8791 = vmatpush1.msra.mxu0 0.0
        %8792 = vmatprep.subr.mxu0 0.0
        %8793 = vmatpush1.msra.mxu0 0.0
        %8794 = vmatprep.subr.mxu0 0.0
        %8795 = vmatpush1.msra.mxu0 0.0
        %8796 = vmatprep.subr.mxu0 0.0
        %8797 = vmatpush1.msra.mxu0 0.0
        %8798 = vmatprep.subr.mxu0 0.0
        %8799 = vmatpush1.msra.mxu0 0.0
        %8800 = vmatprep.subr.mxu0 0.0
        %8801 = vmatpush1.msra.mxu0 0.0
        %8802 = vmatprep.subr.mxu0 0.0
        %8803 = vmatpush1.msra.mxu0 0.0
        %8804 = vmatprep.subr.mxu0 0.0
        %8805 = vmatpush1.msra.mxu0 0.0
        %8806 = vmatprep.subr.mxu0 0.0
        %8807 = vmatpush1.msra.mxu0 0.0
        %8808 = vmatprep.subr.mxu0 0.0
        %8809 = vmatpush1.msra.mxu0 0.0
        %8810 = vmatprep.subr.mxu0 0.0
        %8811 = vmatpush1.msra.mxu0 0.0
        %8812 = vmatprep.subr.mxu0 0.0
        %8813 = vmatpush1.msra.mxu0 0.0
        %8814 = vmatprep.subr.mxu0 0.0
        %8815 = vmatpush1.msra.mxu0 0.0
        %8816 = vmatprep.subr.mxu0 0.0
        %8817 = vmatpush1.msra.mxu0 0.0
        %8818 = vmatprep.subr.mxu0 0.0
        %8819 = vmatpush1.msra.mxu0 0.0
        %8820 = vmatprep.subr.mxu0 0.0
        %8821 = vmatpush1.msra.mxu0 0.0
        %8822 = vmatprep.subr.mxu0 0.0
        %8823 = vmatpush1.msra.mxu0 0.0
        %8824 = vmatprep.subr.mxu0 0.0
        %8825 = vmatpush1.msra.mxu0 0.0
        %8826 = vmatprep.subr.mxu0 0.0
        %8827 = vmatpush1.msra.mxu0 0.0
        %8828 = vmatprep.subr.mxu0 0.0
        %8829 = vmatpush1.msra.mxu0 0.0
        %8830 = vmatprep.subr.mxu0 0.0
        %8831 = vmatpush1.msra.mxu0 0.0
        %8832 = vmatprep.subr.mxu0 0.0
        %8833 = vmatpush1.msra.mxu0 0.0
        %8834 = vmatprep.subr.mxu0 0.0
        %8835 = vmatpush1.msra.mxu0 0.0
        %8836 = vmatprep.mubr.f32.mxu0 0.0
        %8837 = vmatmul.mubr.f32.gmra.mrb[0].mxu0 %v8749
        %v8838 = vpop.f32.mrb[0].mxu0
        %v8839 = vadd.f32 0.0, %v8838
        %v8840 = vpop.f32.mrb[0].mxu0
        %8841 = vmatprep.mubr.f32.mxu0 0.0
        %8842 = vmatmul.mubr.f32.gmra.mrb[0].mxu0 %v8752
        %v8843 = vpop.f32.mrb[0].mxu0
        %v8844 = vadd.f32 0.0, %v8843
        %v8845 = vpop.f32.mrb[0].mxu0
        %8846 = vmatprep.mubr.f32.mxu0 0.0
        %8847 = vmatmul.mubr.f32.gmra.mrb[0].mxu0 %v8755
        %v8848 = vpop.f32.mrb[0].mxu0
        %v8849 = vadd.f32 0.0, %v8848
        %v8850 = vpop.f32.mrb[0].mxu0
        %8851 = vmatprep.mubr.f32.mxu0 0.0
        %8852 = vmatmul.mubr.f32.gmra.mrb[0].mxu0 %v8758
        %v8853 = vpop.f32.mrb[0].mxu0
        %v8854 = vadd.f32 0.0, %v8853
        %v8855 = vpop.f32.mrb[0].mxu0
        %8856 = vmatprep.mubr.f32.mxu0 0.0
        %8857 = vmatmul.mubr.f32.gmra.mrb[0].mxu0 %v8761
        %v8858 = vpop.f32.mrb[0].mxu0
        %v8859 = vadd.f32 0.0, %v8858
        %v8860 = vpop.f32.mrb[0].mxu0
        %8861 = vmatprep.mubr.f32.mxu0 0.0
        %8862 = vmatmul.mubr.f32.gmra.mrb[0].mxu0 %v8764
        %v8863 = vpop.f32.mrb[0].mxu0
        %v8864 = vadd.f32 0.0, %v8863
        %v8865 = vpop.f32.mrb[0].mxu0
        %8866 = vmatprep.mubr.f32.mxu0 0.0
        %8867 = vmatmul.mubr.f32.gmra.mrb[0].mxu0 %v8767
        %v8868 = vpop.f32.mrb[0].mxu0
        %v8869 = vadd.f32 0.0, %v8868
        %v8870 = vpop.f32.mrb[0].mxu0
        %8871 = vmatprep.mubr.f32.mxu0 0.0
        %8872 = vmatmul.mubr.f32.gmra.mrb[0].mxu0 %v8770
        %v8873 = vpop.f32.mrb[0].mxu0
        %v8874 = vadd.f32 0.0, %v8873
        %v8875 = vpop.f32.mrb[0].mxu0
        %8876 = vdwg.mxu0
        %v8877 = vadd.f32 %v8600, %v8839
        %v8878 = vadd.f32 %v8601, %v8844
        %v8879 = vadd.f32 %v8602, %v8849
        %v8880 = vadd.f32 %v8603, %v8854
        %v8881 = vadd.f32 %v8604, %v8859
        %v8882 = vadd.f32 %v8605, %v8864
        %v8883 = vadd.f32 %v8606, %v8869
        %v8884 = vadd.f32 %v8607, %v8874
        %s8885 = scalar_lea.vmem [#allocation7], 320
        %v8886 = vld [vmem:[%s8885] sm:$0xff]
        %v8887 = vld [vmem:[%s8885 + $0x8] sm:$0xff]
        %v8888 = vld [vmem:[%s8885 + $0x10] sm:$0xff]
        %v8889 = vld [vmem:[%s8885 + $0x18] sm:$0xff]
        %v8890 = vld [vmem:[%s8885 + $0x20] sm:$0xff]
        %v8891 = vld [vmem:[%s8885 + $0x28] sm:$0xff]
        %v8892 = vld [vmem:[%s8885 + $0x30] sm:$0xff]
        %v8893 = vld [vmem:[%s8885 + $0x38] sm:$0xff]
        %v8895 = vsel %vm7521, %v8886, 0
        %v8898 = vsel %vm7521, %v8887, 0
        %v8901 = vsel %vm7521, %v8888, 0
        %v8904 = vsel %vm7521, %v8889, 0
        %v8907 = vsel %vm7521, %v8890, 0
        %v8910 = vsel %vm7521, %v8891, 0
        %v8913 = vsel %vm7521, %v8892, 0
        %v8916 = vsel %vm7521, %v8893, 0
        %8918 = vmatprep.subr.mxu0 0.0
        %8919 = vmatpush1.msra.mxu0 %v7450
        %8920 = vmatprep.subr.mxu0 0.0
        %8921 = vmatpush1.msra.mxu0 %v7455
        %8922 = vmatprep.subr.mxu0 0.0
        %8923 = vmatpush1.msra.mxu0 %v7460
        %8924 = vmatprep.subr.mxu0 0.0
        %8925 = vmatpush1.msra.mxu0 %v7465
        %8926 = vmatprep.subr.mxu0 0.0
        %8927 = vmatpush1.msra.mxu0 %v7470
        %8928 = vmatprep.subr.mxu0 0.0
        %8929 = vmatpush1.msra.mxu0 %v7475
        %8930 = vmatprep.subr.mxu0 0.0
        %8931 = vmatpush1.msra.mxu0 %v7480
        %8932 = vmatprep.subr.mxu0 0.0
        %8933 = vmatpush1.msra.mxu0 %v7485
        %8934 = vmatprep.subr.mxu0 0.0
        %8935 = vmatpush1.msra.mxu0 %v7490
        %8936 = vmatprep.subr.mxu0 0.0
        %8937 = vmatpush1.msra.mxu0 %v7495
        %8938 = vmatprep.subr.mxu0 0.0
        %8939 = vmatpush1.msra.mxu0 %v7500
        %8940 = vmatprep.subr.mxu0 0.0
        %8941 = vmatpush1.msra.mxu0 %v7505
        %8942 = vmatprep.subr.mxu0 0.0
        %8943 = vmatpush1.msra.mxu0 %v7547
        %8944 = vmatprep.subr.mxu0 0.0
        %8945 = vmatpush1.msra.mxu0 0.0
        %8946 = vmatprep.subr.mxu0 0.0
        %8947 = vmatpush1.msra.mxu0 0.0
        %8948 = vmatprep.subr.mxu0 0.0
        %8949 = vmatpush1.msra.mxu0 0.0
        %8950 = vmatprep.subr.mxu0 0.0
        %8951 = vmatpush1.msra.mxu0 0.0
        %8952 = vmatprep.subr.mxu0 0.0
        %8953 = vmatpush1.msra.mxu0 0.0
        %8954 = vmatprep.subr.mxu0 0.0
        %8955 = vmatpush1.msra.mxu0 0.0
        %8956 = vmatprep.subr.mxu0 0.0
        %8957 = vmatpush1.msra.mxu0 0.0
        %8958 = vmatprep.subr.mxu0 0.0
        %8959 = vmatpush1.msra.mxu0 0.0
        %8960 = vmatprep.subr.mxu0 0.0
        %8961 = vmatpush1.msra.mxu0 0.0
        %8962 = vmatprep.subr.mxu0 0.0
        %8963 = vmatpush1.msra.mxu0 0.0
        %8964 = vmatprep.subr.mxu0 0.0
        %8965 = vmatpush1.msra.mxu0 0.0
        %8966 = vmatprep.subr.mxu0 0.0
        %8967 = vmatpush1.msra.mxu0 0.0
        %8968 = vmatprep.subr.mxu0 0.0
        %8969 = vmatpush1.msra.mxu0 0.0
        %8970 = vmatprep.subr.mxu0 0.0
        %8971 = vmatpush1.msra.mxu0 0.0
        %8972 = vmatprep.subr.mxu0 0.0
        %8973 = vmatpush1.msra.mxu0 0.0
        %8974 = vmatprep.subr.mxu0 0.0
        %8975 = vmatpush1.msra.mxu0 0.0
        %8976 = vmatprep.subr.mxu0 0.0
        %8977 = vmatpush1.msra.mxu0 0.0
        %8978 = vmatprep.subr.mxu0 0.0
        %8979 = vmatpush1.msra.mxu0 0.0
        %8980 = vmatprep.subr.mxu0 0.0
        %8981 = vmatpush1.msra.mxu0 0.0
        %8982 = vmatprep.mubr.f32.mxu0 0.0
        %8983 = vmatmul.mubr.f32.gmra.mrb[0].mxu0 %v8895
        %v8984 = vpop.f32.mrb[0].mxu0
        %v8985 = vadd.f32 0.0, %v8984
        %v8986 = vpop.f32.mrb[0].mxu0
        %8987 = vmatprep.mubr.f32.mxu0 0.0
        %8988 = vmatmul.mubr.f32.gmra.mrb[0].mxu0 %v8898
        %v8989 = vpop.f32.mrb[0].mxu0
        %v8990 = vadd.f32 0.0, %v8989
        %v8991 = vpop.f32.mrb[0].mxu0
        %8992 = vmatprep.mubr.f32.mxu0 0.0
        %8993 = vmatmul.mubr.f32.gmra.mrb[0].mxu0 %v8901
        %v8994 = vpop.f32.mrb[0].mxu0
        %v8995 = vadd.f32 0.0, %v8994
        %v8996 = vpop.f32.mrb[0].mxu0
        %8997 = vmatprep.mubr.f32.mxu0 0.0
        %8998 = vmatmul.mubr.f32.gmra.mrb[0].mxu0 %v8904
        %v8999 = vpop.f32.mrb[0].mxu0
        %v9000 = vadd.f32 0.0, %v8999
        %v9001 = vpop.f32.mrb[0].mxu0
        %9002 = vmatprep.mubr.f32.mxu0 0.0
        %9003 = vmatmul.mubr.f32.gmra.mrb[0].mxu0 %v8907
        %v9004 = vpop.f32.mrb[0].mxu0
        %v9005 = vadd.f32 0.0, %v9004
        %v9006 = vpop.f32.mrb[0].mxu0
        %9007 = vmatprep.mubr.f32.mxu0 0.0
        %9008 = vmatmul.mubr.f32.gmra.mrb[0].mxu0 %v8910
        %v9009 = vpop.f32.mrb[0].mxu0
        %v9010 = vadd.f32 0.0, %v9009
        %v9011 = vpop.f32.mrb[0].mxu0
        %9012 = vmatprep.mubr.f32.mxu0 0.0
        %9013 = vmatmul.mubr.f32.gmra.mrb[0].mxu0 %v8913
        %v9014 = vpop.f32.mrb[0].mxu0
        %v9015 = vadd.f32 0.0, %v9014
        %v9016 = vpop.f32.mrb[0].mxu0
        %9017 = vmatprep.mubr.f32.mxu0 0.0
        %9018 = vmatmul.mubr.f32.gmra.mrb[0].mxu0 %v8916
        %v9019 = vpop.f32.mrb[0].mxu0
        %v9020 = vadd.f32 0.0, %v9019
        %v9021 = vpop.f32.mrb[0].mxu0
        %9022 = vdwg.mxu0
        %s9023 = scalar_lea.vmem [#allocation13], 40
        %v9024 = vld [vmem:[%s9023] sm:$0xff]
        %v9026 = vsel %vm7795, %v8985, 0
        %v9029 = vsel %vm7795, %v8990, 0
        %v9032 = vsel %vm7795, %v8995, 0
        %v9035 = vsel %vm7795, %v9000, 0
        %v9038 = vsel %vm7795, %v9005, 0
        %v9041 = vsel %vm7795, %v9010, 0
        %v9044 = vsel %vm7795, %v9015, 0
        %v9047 = vsel %vm7795, %v9020, 0
        %9049 = vmatprep.subr.mxu0 0.0
        %9050 = vmatpush1.msra.mxu0 %v9024
        %9051 = vmatprep.subr.mxu0 0.0
        %9052 = vmatpush1.msra.mxu0 0.0
        %9053 = vmatprep.subr.mxu0 0.0
        %9054 = vmatpush1.msra.mxu0 0.0
        %9055 = vmatprep.subr.mxu0 0.0
        %9056 = vmatpush1.msra.mxu0 0.0
        %9057 = vmatprep.subr.mxu0 0.0
        %9058 = vmatpush1.msra.mxu0 0.0
        %9059 = vmatprep.subr.mxu0 0.0
        %9060 = vmatpush1.msra.mxu0 0.0
        %9061 = vmatprep.subr.mxu0 0.0
        %9062 = vmatpush1.msra.mxu0 0.0
        %9063 = vmatprep.subr.mxu0 0.0
        %9064 = vmatpush1.msra.mxu0 0.0
        %9065 = vmatprep.subr.mxu0 0.0
        %9066 = vmatpush1.msra.mxu0 0.0
        %9067 = vmatprep.subr.mxu0 0.0
        %9068 = vmatpush1.msra.mxu0 0.0
        %9069 = vmatprep.subr.mxu0 0.0
        %9070 = vmatpush1.msra.mxu0 0.0
        %9071 = vmatprep.subr.mxu0 0.0
        %9072 = vmatpush1.msra.mxu0 0.0
        %9073 = vmatprep.subr.mxu0 0.0
        %9074 = vmatpush1.msra.mxu0 0.0
        %9075 = vmatprep.subr.mxu0 0.0
        %9076 = vmatpush1.msra.mxu0 0.0
        %9077 = vmatprep.subr.mxu0 0.0
        %9078 = vmatpush1.msra.mxu0 0.0
        %9079 = vmatprep.subr.mxu0 0.0
        %9080 = vmatpush1.msra.mxu0 0.0
        %9081 = vmatprep.subr.mxu0 0.0
        %9082 = vmatpush1.msra.mxu0 0.0
        %9083 = vmatprep.subr.mxu0 0.0
        %9084 = vmatpush1.msra.mxu0 0.0
        %9085 = vmatprep.subr.mxu0 0.0
        %9086 = vmatpush1.msra.mxu0 0.0
        %9087 = vmatprep.subr.mxu0 0.0
        %9088 = vmatpush1.msra.mxu0 0.0
        %9089 = vmatprep.subr.mxu0 0.0
        %9090 = vmatpush1.msra.mxu0 0.0
        %9091 = vmatprep.subr.mxu0 0.0
        %9092 = vmatpush1.msra.mxu0 0.0
        %9093 = vmatprep.subr.mxu0 0.0
        %9094 = vmatpush1.msra.mxu0 0.0
        %9095 = vmatprep.subr.mxu0 0.0
        %9096 = vmatpush1.msra.mxu0 0.0
        %9097 = vmatprep.subr.mxu0 0.0
        %9098 = vmatpush1.msra.mxu0 0.0
        %9099 = vmatprep.subr.mxu0 0.0
        %9100 = vmatpush1.msra.mxu0 0.0
        %9101 = vmatprep.subr.mxu0 0.0
        %9102 = vmatpush1.msra.mxu0 0.0
        %9103 = vmatprep.subr.mxu0 0.0
        %9104 = vmatpush1.msra.mxu0 0.0
        %9105 = vmatprep.subr.mxu0 0.0
        %9106 = vmatpush1.msra.mxu0 0.0
        %9107 = vmatprep.subr.mxu0 0.0
        %9108 = vmatpush1.msra.mxu0 0.0
        %9109 = vmatprep.subr.mxu0 0.0
        %9110 = vmatpush1.msra.mxu0 0.0
        %9111 = vmatprep.subr.mxu0 0.0
        %9112 = vmatpush1.msra.mxu0 0.0
        %9113 = vmatprep.mubr.f32.mxu0 0.0
        %9114 = vmatmul.mubr.f32.gmra.mrb[0].mxu0 %v9026
        %v9115 = vpop.f32.mrb[0].mxu0
        %v9116 = vadd.f32 0.0, %v9115
        %v9117 = vpop.f32.mrb[0].mxu0
        %9118 = vmatprep.mubr.f32.mxu0 0.0
        %9119 = vmatmul.mubr.f32.gmra.mrb[0].mxu0 %v9029
        %v9120 = vpop.f32.mrb[0].mxu0
        %v9121 = vadd.f32 0.0, %v9120
        %v9122 = vpop.f32.mrb[0].mxu0
        %9123 = vmatprep.mubr.f32.mxu0 0.0
        %9124 = vmatmul.mubr.f32.gmra.mrb[0].mxu0 %v9032
        %v9125 = vpop.f32.mrb[0].mxu0
        %v9126 = vadd.f32 0.0, %v9125
        %v9127 = vpop.f32.mrb[0].mxu0
        %9128 = vmatprep.mubr.f32.mxu0 0.0
        %9129 = vmatmul.mubr.f32.gmra.mrb[0].mxu0 %v9035
        %v9130 = vpop.f32.mrb[0].mxu0
        %v9131 = vadd.f32 0.0, %v9130
        %v9132 = vpop.f32.mrb[0].mxu0
        %9133 = vmatprep.mubr.f32.mxu0 0.0
        %9134 = vmatmul.mubr.f32.gmra.mrb[0].mxu0 %v9038
        %v9135 = vpop.f32.mrb[0].mxu0
        %v9136 = vadd.f32 0.0, %v9135
        %v9137 = vpop.f32.mrb[0].mxu0
        %9138 = vmatprep.mubr.f32.mxu0 0.0
        %9139 = vmatmul.mubr.f32.gmra.mrb[0].mxu0 %v9041
        %v9140 = vpop.f32.mrb[0].mxu0
        %v9141 = vadd.f32 0.0, %v9140
        %v9142 = vpop.f32.mrb[0].mxu0
        %9143 = vmatprep.mubr.f32.mxu0 0.0
        %9144 = vmatmul.mubr.f32.gmra.mrb[0].mxu0 %v9044
        %v9145 = vpop.f32.mrb[0].mxu0
        %v9146 = vadd.f32 0.0, %v9145
        %v9147 = vpop.f32.mrb[0].mxu0
        %9148 = vmatprep.mubr.f32.mxu0 0.0
        %9149 = vmatmul.mubr.f32.gmra.mrb[0].mxu0 %v9047
        %v9150 = vpop.f32.mrb[0].mxu0
        %v9151 = vadd.f32 0.0, %v9150
        %v9152 = vpop.f32.mrb[0].mxu0
        %9153 = vdwg.mxu0
        %v9154 = vadd.f32 %v8877, %v9116
        %v9155 = vadd.f32 %v8878, %v9121
        %v9156 = vadd.f32 %v8879, %v9126
        %v9157 = vadd.f32 %v8880, %v9131
        %v9158 = vadd.f32 %v8881, %v9136
        %v9159 = vadd.f32 %v8882, %v9141
        %v9160 = vadd.f32 %v8883, %v9146
        %v9161 = vadd.f32 %v8884, %v9151
        %s9162 = scalar_lea.vmem [#allocation7], 384
        %v9163 = vld [vmem:[%s9162] sm:$0xff]
        %v9164 = vld [vmem:[%s9162 + $0x8] sm:$0xff]
        %v9165 = vld [vmem:[%s9162 + $0x10] sm:$0xff]
        %v9166 = vld [vmem:[%s9162 + $0x18] sm:$0xff]
        %v9167 = vld [vmem:[%s9162 + $0x20] sm:$0xff]
        %v9168 = vld [vmem:[%s9162 + $0x28] sm:$0xff]
        %v9169 = vld [vmem:[%s9162 + $0x30] sm:$0xff]
        %v9170 = vld [vmem:[%s9162 + $0x38] sm:$0xff]
        %v9172 = vsel %vm7521, %v9163, 0
        %v9175 = vsel %vm7521, %v9164, 0
        %v9178 = vsel %vm7521, %v9165, 0
        %v9181 = vsel %vm7521, %v9166, 0
        %v9184 = vsel %vm7521, %v9167, 0
        %v9187 = vsel %vm7521, %v9168, 0
        %v9190 = vsel %vm7521, %v9169, 0
        %v9193 = vsel %vm7521, %v9170, 0
        %9195 = vmatprep.subr.mxu0 0.0
        %9196 = vmatpush1.msra.mxu0 %v7450
        %9197 = vmatprep.subr.mxu0 0.0
        %9198 = vmatpush1.msra.mxu0 %v7455
        %9199 = vmatprep.subr.mxu0 0.0
        %9200 = vmatpush1.msra.mxu0 %v7460
        %9201 = vmatprep.subr.mxu0 0.0
        %9202 = vmatpush1.msra.mxu0 %v7465
        %9203 = vmatprep.subr.mxu0 0.0
        %9204 = vmatpush1.msra.mxu0 %v7470
        %9205 = vmatprep.subr.mxu0 0.0
        %9206 = vmatpush1.msra.mxu0 %v7475
        %9207 = vmatprep.subr.mxu0 0.0
        %9208 = vmatpush1.msra.mxu0 %v7480
        %9209 = vmatprep.subr.mxu0 0.0
        %9210 = vmatpush1.msra.mxu0 %v7485
        %9211 = vmatprep.subr.mxu0 0.0
        %9212 = vmatpush1.msra.mxu0 %v7490
        %9213 = vmatprep.subr.mxu0 0.0
        %9214 = vmatpush1.msra.mxu0 %v7495
        %9215 = vmatprep.subr.mxu0 0.0
        %9216 = vmatpush1.msra.mxu0 %v7500
        %9217 = vmatprep.subr.mxu0 0.0
        %9218 = vmatpush1.msra.mxu0 %v7505
        %9219 = vmatprep.subr.mxu0 0.0
        %9220 = vmatpush1.msra.mxu0 %v7547
        %9221 = vmatprep.subr.mxu0 0.0
        %9222 = vmatpush1.msra.mxu0 0.0
        %9223 = vmatprep.subr.mxu0 0.0
        %9224 = vmatpush1.msra.mxu0 0.0
        %9225 = vmatprep.subr.mxu0 0.0
        %9226 = vmatpush1.msra.mxu0 0.0
        %9227 = vmatprep.subr.mxu0 0.0
        %9228 = vmatpush1.msra.mxu0 0.0
        %9229 = vmatprep.subr.mxu0 0.0
        %9230 = vmatpush1.msra.mxu0 0.0
        %9231 = vmatprep.subr.mxu0 0.0
        %9232 = vmatpush1.msra.mxu0 0.0
        %9233 = vmatprep.subr.mxu0 0.0
        %9234 = vmatpush1.msra.mxu0 0.0
        %9235 = vmatprep.subr.mxu0 0.0
        %9236 = vmatpush1.msra.mxu0 0.0
        %9237 = vmatprep.subr.mxu0 0.0
        %9238 = vmatpush1.msra.mxu0 0.0
        %9239 = vmatprep.subr.mxu0 0.0
        %9240 = vmatpush1.msra.mxu0 0.0
        %9241 = vmatprep.subr.mxu0 0.0
        %9242 = vmatpush1.msra.mxu0 0.0
        %9243 = vmatprep.subr.mxu0 0.0
        %9244 = vmatpush1.msra.mxu0 0.0
        %9245 = vmatprep.subr.mxu0 0.0
        %9246 = vmatpush1.msra.mxu0 0.0
        %9247 = vmatprep.subr.mxu0 0.0
        %9248 = vmatpush1.msra.mxu0 0.0
        %9249 = vmatprep.subr.mxu0 0.0
        %9250 = vmatpush1.msra.mxu0 0.0
        %9251 = vmatprep.subr.mxu0 0.0
        %9252 = vmatpush1.msra.mxu0 0.0
        %9253 = vmatprep.subr.mxu0 0.0
        %9254 = vmatpush1.msra.mxu0 0.0
        %9255 = vmatprep.subr.mxu0 0.0
        %9256 = vmatpush1.msra.mxu0 0.0
        %9257 = vmatprep.subr.mxu0 0.0
        %9258 = vmatpush1.msra.mxu0 0.0
        %9259 = vmatprep.mubr.f32.mxu0 0.0
        %9260 = vmatmul.mubr.f32.gmra.mrb[0].mxu0 %v9172
        %v9261 = vpop.f32.mrb[0].mxu0
        %v9262 = vadd.f32 0.0, %v9261
        %v9263 = vpop.f32.mrb[0].mxu0
        %9264 = vmatprep.mubr.f32.mxu0 0.0
        %9265 = vmatmul.mubr.f32.gmra.mrb[0].mxu0 %v9175
        %v9266 = vpop.f32.mrb[0].mxu0
        %v9267 = vadd.f32 0.0, %v9266
        %v9268 = vpop.f32.mrb[0].mxu0
        %9269 = vmatprep.mubr.f32.mxu0 0.0
        %9270 = vmatmul.mubr.f32.gmra.mrb[0].mxu0 %v9178
        %v9271 = vpop.f32.mrb[0].mxu0
        %v9272 = vadd.f32 0.0, %v9271
        %v9273 = vpop.f32.mrb[0].mxu0
        %9274 = vmatprep.mubr.f32.mxu0 0.0
        %9275 = vmatmul.mubr.f32.gmra.mrb[0].mxu0 %v9181
        %v9276 = vpop.f32.mrb[0].mxu0
        %v9277 = vadd.f32 0.0, %v9276
        %v9278 = vpop.f32.mrb[0].mxu0
        %9279 = vmatprep.mubr.f32.mxu0 0.0
        %9280 = vmatmul.mubr.f32.gmra.mrb[0].mxu0 %v9184
        %v9281 = vpop.f32.mrb[0].mxu0
        %v9282 = vadd.f32 0.0, %v9281
        %v9283 = vpop.f32.mrb[0].mxu0
        %9284 = vmatprep.mubr.f32.mxu0 0.0
        %9285 = vmatmul.mubr.f32.gmra.mrb[0].mxu0 %v9187
        %v9286 = vpop.f32.mrb[0].mxu0
        %v9287 = vadd.f32 0.0, %v9286
        %v9288 = vpop.f32.mrb[0].mxu0
        %9289 = vmatprep.mubr.f32.mxu0 0.0
        %9290 = vmatmul.mubr.f32.gmra.mrb[0].mxu0 %v9190
        %v9291 = vpop.f32.mrb[0].mxu0
        %v9292 = vadd.f32 0.0, %v9291
        %v9293 = vpop.f32.mrb[0].mxu0
        %9294 = vmatprep.mubr.f32.mxu0 0.0
        %9295 = vmatmul.mubr.f32.gmra.mrb[0].mxu0 %v9193
        %v9296 = vpop.f32.mrb[0].mxu0
        %v9297 = vadd.f32 0.0, %v9296
        %v9298 = vpop.f32.mrb[0].mxu0
        %9299 = vdwg.mxu0
        %s9300 = scalar_lea.vmem [#allocation13], 48
        %v9301 = vld [vmem:[%s9300] sm:$0xff]
        %v9303 = vsel %vm7795, %v9262, 0
        %v9306 = vsel %vm7795, %v9267, 0
        %v9309 = vsel %vm7795, %v9272, 0
        %v9312 = vsel %vm7795, %v9277, 0
        %v9315 = vsel %vm7795, %v9282, 0
        %v9318 = vsel %vm7795, %v9287, 0
        %v9321 = vsel %vm7795, %v9292, 0
        %v9324 = vsel %vm7795, %v9297, 0
        %9326 = vmatprep.subr.mxu0 0.0
        %9327 = vmatpush1.msra.mxu0 %v9301
        %9328 = vmatprep.subr.mxu0 0.0
        %9329 = vmatpush1.msra.mxu0 0.0
        %9330 = vmatprep.subr.mxu0 0.0
        %9331 = vmatpush1.msra.mxu0 0.0
        %9332 = vmatprep.subr.mxu0 0.0
        %9333 = vmatpush1.msra.mxu0 0.0
        %9334 = vmatprep.subr.mxu0 0.0
        %9335 = vmatpush1.msra.mxu0 0.0
        %9336 = vmatprep.subr.mxu0 0.0
        %9337 = vmatpush1.msra.mxu0 0.0
        %9338 = vmatprep.subr.mxu0 0.0
        %9339 = vmatpush1.msra.mxu0 0.0
        %9340 = vmatprep.subr.mxu0 0.0
        %9341 = vmatpush1.msra.mxu0 0.0
        %9342 = vmatprep.subr.mxu0 0.0
        %9343 = vmatpush1.msra.mxu0 0.0
        %9344 = vmatprep.subr.mxu0 0.0
        %9345 = vmatpush1.msra.mxu0 0.0
        %9346 = vmatprep.subr.mxu0 0.0
        %9347 = vmatpush1.msra.mxu0 0.0
        %9348 = vmatprep.subr.mxu0 0.0
        %9349 = vmatpush1.msra.mxu0 0.0
        %9350 = vmatprep.subr.mxu0 0.0
        %9351 = vmatpush1.msra.mxu0 0.0
        %9352 = vmatprep.subr.mxu0 0.0
        %9353 = vmatpush1.msra.mxu0 0.0
        %9354 = vmatprep.subr.mxu0 0.0
        %9355 = vmatpush1.msra.mxu0 0.0
        %9356 = vmatprep.subr.mxu0 0.0
        %9357 = vmatpush1.msra.mxu0 0.0
        %9358 = vmatprep.subr.mxu0 0.0
        %9359 = vmatpush1.msra.mxu0 0.0
        %9360 = vmatprep.subr.mxu0 0.0
        %9361 = vmatpush1.msra.mxu0 0.0
        %9362 = vmatprep.subr.mxu0 0.0
        %9363 = vmatpush1.msra.mxu0 0.0
        %9364 = vmatprep.subr.mxu0 0.0
        %9365 = vmatpush1.msra.mxu0 0.0
        %9366 = vmatprep.subr.mxu0 0.0
        %9367 = vmatpush1.msra.mxu0 0.0
        %9368 = vmatprep.subr.mxu0 0.0
        %9369 = vmatpush1.msra.mxu0 0.0
        %9370 = vmatprep.subr.mxu0 0.0
        %9371 = vmatpush1.msra.mxu0 0.0
        %9372 = vmatprep.subr.mxu0 0.0
        %9373 = vmatpush1.msra.mxu0 0.0
        %9374 = vmatprep.subr.mxu0 0.0
        %9375 = vmatpush1.msra.mxu0 0.0
        %9376 = vmatprep.subr.mxu0 0.0
        %9377 = vmatpush1.msra.mxu0 0.0
        %9378 = vmatprep.subr.mxu0 0.0
        %9379 = vmatpush1.msra.mxu0 0.0
        %9380 = vmatprep.subr.mxu0 0.0
        %9381 = vmatpush1.msra.mxu0 0.0
        %9382 = vmatprep.subr.mxu0 0.0
        %9383 = vmatpush1.msra.mxu0 0.0
        %9384 = vmatprep.subr.mxu0 0.0
        %9385 = vmatpush1.msra.mxu0 0.0
        %9386 = vmatprep.subr.mxu0 0.0
        %9387 = vmatpush1.msra.mxu0 0.0
        %9388 = vmatprep.subr.mxu0 0.0
        %9389 = vmatpush1.msra.mxu0 0.0
        %9390 = vmatprep.mubr.f32.mxu0 0.0
        %9391 = vmatmul.mubr.f32.gmra.mrb[0].mxu0 %v9303
        %v9392 = vpop.f32.mrb[0].mxu0
        %v9393 = vadd.f32 0.0, %v9392
        %v9394 = vpop.f32.mrb[0].mxu0
        %9395 = vmatprep.mubr.f32.mxu0 0.0
        %9396 = vmatmul.mubr.f32.gmra.mrb[0].mxu0 %v9306
        %v9397 = vpop.f32.mrb[0].mxu0
        %v9398 = vadd.f32 0.0, %v9397
        %v9399 = vpop.f32.mrb[0].mxu0
        %9400 = vmatprep.mubr.f32.mxu0 0.0
        %9401 = vmatmul.mubr.f32.gmra.mrb[0].mxu0 %v9309
        %v9402 = vpop.f32.mrb[0].mxu0
        %v9403 = vadd.f32 0.0, %v9402
        %v9404 = vpop.f32.mrb[0].mxu0
        %9405 = vmatprep.mubr.f32.mxu0 0.0
        %9406 = vmatmul.mubr.f32.gmra.mrb[0].mxu0 %v9312
        %v9407 = vpop.f32.mrb[0].mxu0
        %v9408 = vadd.f32 0.0, %v9407
        %v9409 = vpop.f32.mrb[0].mxu0
        %9410 = vmatprep.mubr.f32.mxu0 0.0
        %9411 = vmatmul.mubr.f32.gmra.mrb[0].mxu0 %v9315
        %v9412 = vpop.f32.mrb[0].mxu0
        %v9413 = vadd.f32 0.0, %v9412
        %v9414 = vpop.f32.mrb[0].mxu0
        %9415 = vmatprep.mubr.f32.mxu0 0.0
        %9416 = vmatmul.mubr.f32.gmra.mrb[0].mxu0 %v9318
        %v9417 = vpop.f32.mrb[0].mxu0
        %v9418 = vadd.f32 0.0, %v9417
        %v9419 = vpop.f32.mrb[0].mxu0
        %9420 = vmatprep.mubr.f32.mxu0 0.0
        %9421 = vmatmul.mubr.f32.gmra.mrb[0].mxu0 %v9321
        %v9422 = vpop.f32.mrb[0].mxu0
        %v9423 = vadd.f32 0.0, %v9422
        %v9424 = vpop.f32.mrb[0].mxu0
        %9425 = vmatprep.mubr.f32.mxu0 0.0
        %9426 = vmatmul.mubr.f32.gmra.mrb[0].mxu0 %v9324
        %v9427 = vpop.f32.mrb[0].mxu0
        %v9428 = vadd.f32 0.0, %v9427
        %v9429 = vpop.f32.mrb[0].mxu0
        %9430 = vdwg.mxu0
        %v9431 = vadd.f32 %v9154, %v9393
        %v9432 = vadd.f32 %v9155, %v9398
        %v9433 = vadd.f32 %v9156, %v9403
        %v9434 = vadd.f32 %v9157, %v9408
        %v9435 = vadd.f32 %v9158, %v9413
        %v9436 = vadd.f32 %v9159, %v9418
        %v9437 = vadd.f32 %v9160, %v9423
        %v9438 = vadd.f32 %v9161, %v9428
        %s9439 = scalar_lea.vmem [#allocation7], 448
        %v9440 = vld [vmem:[%s9439] sm:$0xff]
        %v9441 = vld [vmem:[%s9439 + $0x8] sm:$0xff]
        %v9442 = vld [vmem:[%s9439 + $0x10] sm:$0xff]
        %v9443 = vld [vmem:[%s9439 + $0x18] sm:$0xff]
        %v9444 = vld [vmem:[%s9439 + $0x20] sm:$0xff]
        %v9445 = vld [vmem:[%s9439 + $0x28] sm:$0xff]
        %v9446 = vld [vmem:[%s9439 + $0x30] sm:$0xff]
        %v9447 = vld [vmem:[%s9439 + $0x38] sm:$0xff]
        %v9449 = vsel %vm7521, %v9440, 0
        %v9452 = vsel %vm7521, %v9441, 0
        %v9455 = vsel %vm7521, %v9442, 0
        %v9458 = vsel %vm7521, %v9443, 0
        %v9461 = vsel %vm7521, %v9444, 0
        %v9464 = vsel %vm7521, %v9445, 0
        %v9467 = vsel %vm7521, %v9446, 0
        %v9470 = vsel %vm7521, %v9447, 0
        %9472 = vmatprep.subr.mxu0 0.0
        %9473 = vmatpush1.msra.mxu0 %v7450
        %9474 = vmatprep.subr.mxu0 0.0
        %9475 = vmatpush1.msra.mxu0 %v7455
        %9476 = vmatprep.subr.mxu0 0.0
        %9477 = vmatpush1.msra.mxu0 %v7460
        %9478 = vmatprep.subr.mxu0 0.0
        %9479 = vmatpush1.msra.mxu0 %v7465
        %9480 = vmatprep.subr.mxu0 0.0
        %9481 = vmatpush1.msra.mxu0 %v7470
        %9482 = vmatprep.subr.mxu0 0.0
        %9483 = vmatpush1.msra.mxu0 %v7475
        %9484 = vmatprep.subr.mxu0 0.0
        %9485 = vmatpush1.msra.mxu0 %v7480
        %9486 = vmatprep.subr.mxu0 0.0
        %9487 = vmatpush1.msra.mxu0 %v7485
        %9488 = vmatprep.subr.mxu0 0.0
        %9489 = vmatpush1.msra.mxu0 %v7490
        %9490 = vmatprep.subr.mxu0 0.0
        %9491 = vmatpush1.msra.mxu0 %v7495
        %9492 = vmatprep.subr.mxu0 0.0
        %9493 = vmatpush1.msra.mxu0 %v7500
        %9494 = vmatprep.subr.mxu0 0.0
        %9495 = vmatpush1.msra.mxu0 %v7505
        %9496 = vmatprep.subr.mxu0 0.0
        %9497 = vmatpush1.msra.mxu0 %v7547
        %9498 = vmatprep.subr.mxu0 0.0
        %9499 = vmatpush1.msra.mxu0 0.0
        %9500 = vmatprep.subr.mxu0 0.0
        %9501 = vmatpush1.msra.mxu0 0.0
        %9502 = vmatprep.subr.mxu0 0.0
        %9503 = vmatpush1.msra.mxu0 0.0
        %9504 = vmatprep.subr.mxu0 0.0
        %9505 = vmatpush1.msra.mxu0 0.0
        %9506 = vmatprep.subr.mxu0 0.0
        %9507 = vmatpush1.msra.mxu0 0.0
        %9508 = vmatprep.subr.mxu0 0.0
        %9509 = vmatpush1.msra.mxu0 0.0
        %9510 = vmatprep.subr.mxu0 0.0
        %9511 = vmatpush1.msra.mxu0 0.0
        %9512 = vmatprep.subr.mxu0 0.0
        %9513 = vmatpush1.msra.mxu0 0.0
        %9514 = vmatprep.subr.mxu0 0.0
        %9515 = vmatpush1.msra.mxu0 0.0
        %9516 = vmatprep.subr.mxu0 0.0
        %9517 = vmatpush1.msra.mxu0 0.0
        %9518 = vmatprep.subr.mxu0 0.0
        %9519 = vmatpush1.msra.mxu0 0.0
        %9520 = vmatprep.subr.mxu0 0.0
        %9521 = vmatpush1.msra.mxu0 0.0
        %9522 = vmatprep.subr.mxu0 0.0
        %9523 = vmatpush1.msra.mxu0 0.0
        %9524 = vmatprep.subr.mxu0 0.0
        %9525 = vmatpush1.msra.mxu0 0.0
        %9526 = vmatprep.subr.mxu0 0.0
        %9527 = vmatpush1.msra.mxu0 0.0
        %9528 = vmatprep.subr.mxu0 0.0
        %9529 = vmatpush1.msra.mxu0 0.0
        %9530 = vmatprep.subr.mxu0 0.0
        %9531 = vmatpush1.msra.mxu0 0.0
        %9532 = vmatprep.subr.mxu0 0.0
        %9533 = vmatpush1.msra.mxu0 0.0
        %9534 = vmatprep.subr.mxu0 0.0
        %9535 = vmatpush1.msra.mxu0 0.0
        %9536 = vmatprep.mubr.f32.mxu0 0.0
        %9537 = vmatmul.mubr.f32.gmra.mrb[0].mxu0 %v9449
        %v9538 = vpop.f32.mrb[0].mxu0
        %v9539 = vadd.f32 0.0, %v9538
        %v9540 = vpop.f32.mrb[0].mxu0
        %9541 = vmatprep.mubr.f32.mxu0 0.0
        %9542 = vmatmul.mubr.f32.gmra.mrb[0].mxu0 %v9452
        %v9543 = vpop.f32.mrb[0].mxu0
        %v9544 = vadd.f32 0.0, %v9543
        %v9545 = vpop.f32.mrb[0].mxu0
        %9546 = vmatprep.mubr.f32.mxu0 0.0
        %9547 = vmatmul.mubr.f32.gmra.mrb[0].mxu0 %v9455
        %v9548 = vpop.f32.mrb[0].mxu0
        %v9549 = vadd.f32 0.0, %v9548
        %v9550 = vpop.f32.mrb[0].mxu0
        %9551 = vmatprep.mubr.f32.mxu0 0.0
        %9552 = vmatmul.mubr.f32.gmra.mrb[0].mxu0 %v9458
        %v9553 = vpop.f32.mrb[0].mxu0
        %v9554 = vadd.f32 0.0, %v9553
        %v9555 = vpop.f32.mrb[0].mxu0
        %9556 = vmatprep.mubr.f32.mxu0 0.0
        %9557 = vmatmul.mubr.f32.gmra.mrb[0].mxu0 %v9461
        %v9558 = vpop.f32.mrb[0].mxu0
        %v9559 = vadd.f32 0.0, %v9558
        %v9560 = vpop.f32.mrb[0].mxu0
        %9561 = vmatprep.mubr.f32.mxu0 0.0
        %9562 = vmatmul.mubr.f32.gmra.mrb[0].mxu0 %v9464
        %v9563 = vpop.f32.mrb[0].mxu0
        %v9564 = vadd.f32 0.0, %v9563
        %v9565 = vpop.f32.mrb[0].mxu0
        %9566 = vmatprep.mubr.f32.mxu0 0.0
        %9567 = vmatmul.mubr.f32.gmra.mrb[0].mxu0 %v9467
        %v9568 = vpop.f32.mrb[0].mxu0
        %v9569 = vadd.f32 0.0, %v9568
        %v9570 = vpop.f32.mrb[0].mxu0
        %9571 = vmatprep.mubr.f32.mxu0 0.0
        %9572 = vmatmul.mubr.f32.gmra.mrb[0].mxu0 %v9470
        %v9573 = vpop.f32.mrb[0].mxu0
        %v9574 = vadd.f32 0.0, %v9573
        %v9575 = vpop.f32.mrb[0].mxu0
        %9576 = vdwg.mxu0
        %s9577 = scalar_lea.vmem [#allocation13], 56
        %v9578 = vld [vmem:[%s9577] sm:$0xff]
        %v9580 = vsel %vm7795, %v9539, 0
        %v9583 = vsel %vm7795, %v9544, 0
        %v9586 = vsel %vm7795, %v9549, 0
        %v9589 = vsel %vm7795, %v9554, 0
        %v9592 = vsel %vm7795, %v9559, 0
        %v9595 = vsel %vm7795, %v9564, 0
        %v9598 = vsel %vm7795, %v9569, 0
        %v9601 = vsel %vm7795, %v9574, 0
        %9603 = vmatprep.subr.mxu0 0.0
        %9604 = vmatpush1.msra.mxu0 %v9578
        %9605 = vmatprep.subr.mxu0 0.0
        %9606 = vmatpush1.msra.mxu0 0.0
        %9607 = vmatprep.subr.mxu0 0.0
        %9608 = vmatpush1.msra.mxu0 0.0
        %9609 = vmatprep.subr.mxu0 0.0
        %9610 = vmatpush1.msra.mxu0 0.0
        %9611 = vmatprep.subr.mxu0 0.0
        %9612 = vmatpush1.msra.mxu0 0.0
        %9613 = vmatprep.subr.mxu0 0.0
        %9614 = vmatpush1.msra.mxu0 0.0
        %9615 = vmatprep.subr.mxu0 0.0
        %9616 = vmatpush1.msra.mxu0 0.0
        %9617 = vmatprep.subr.mxu0 0.0
        %9618 = vmatpush1.msra.mxu0 0.0
        %9619 = vmatprep.subr.mxu0 0.0
        %9620 = vmatpush1.msra.mxu0 0.0
        %9621 = vmatprep.subr.mxu0 0.0
        %9622 = vmatpush1.msra.mxu0 0.0
        %9623 = vmatprep.subr.mxu0 0.0
        %9624 = vmatpush1.msra.mxu0 0.0
        %9625 = vmatprep.subr.mxu0 0.0
        %9626 = vmatpush1.msra.mxu0 0.0
        %9627 = vmatprep.subr.mxu0 0.0
        %9628 = vmatpush1.msra.mxu0 0.0
        %9629 = vmatprep.subr.mxu0 0.0
        %9630 = vmatpush1.msra.mxu0 0.0
        %9631 = vmatprep.subr.mxu0 0.0
        %9632 = vmatpush1.msra.mxu0 0.0
        %9633 = vmatprep.subr.mxu0 0.0
        %9634 = vmatpush1.msra.mxu0 0.0
        %9635 = vmatprep.subr.mxu0 0.0
        %9636 = vmatpush1.msra.mxu0 0.0
        %9637 = vmatprep.subr.mxu0 0.0
        %9638 = vmatpush1.msra.mxu0 0.0
        %9639 = vmatprep.subr.mxu0 0.0
        %9640 = vmatpush1.msra.mxu0 0.0
        %9641 = vmatprep.subr.mxu0 0.0
        %9642 = vmatpush1.msra.mxu0 0.0
        %9643 = vmatprep.subr.mxu0 0.0
        %9644 = vmatpush1.msra.mxu0 0.0
        %9645 = vmatprep.subr.mxu0 0.0
        %9646 = vmatpush1.msra.mxu0 0.0
        %9647 = vmatprep.subr.mxu0 0.0
        %9648 = vmatpush1.msra.mxu0 0.0
        %9649 = vmatprep.subr.mxu0 0.0
        %9650 = vmatpush1.msra.mxu0 0.0
        %9651 = vmatprep.subr.mxu0 0.0
        %9652 = vmatpush1.msra.mxu0 0.0
        %9653 = vmatprep.subr.mxu0 0.0
        %9654 = vmatpush1.msra.mxu0 0.0
        %9655 = vmatprep.subr.mxu0 0.0
        %9656 = vmatpush1.msra.mxu0 0.0
        %9657 = vmatprep.subr.mxu0 0.0
        %9658 = vmatpush1.msra.mxu0 0.0
        %9659 = vmatprep.subr.mxu0 0.0
        %9660 = vmatpush1.msra.mxu0 0.0
        %9661 = vmatprep.subr.mxu0 0.0
        %9662 = vmatpush1.msra.mxu0 0.0
        %9663 = vmatprep.subr.mxu0 0.0
        %9664 = vmatpush1.msra.mxu0 0.0
        %9665 = vmatprep.subr.mxu0 0.0
        %9666 = vmatpush1.msra.mxu0 0.0
        %9667 = vmatprep.mubr.f32.mxu0 0.0
        %9668 = vmatmul.mubr.f32.gmra.mrb[0].mxu0 %v9580
        %v9669 = vpop.f32.mrb[0].mxu0
        %v9670 = vadd.f32 0.0, %v9669
        %v9671 = vpop.f32.mrb[0].mxu0
        %9672 = vmatprep.mubr.f32.mxu0 0.0
        %9673 = vmatmul.mubr.f32.gmra.mrb[0].mxu0 %v9583
        %v9674 = vpop.f32.mrb[0].mxu0
        %v9675 = vadd.f32 0.0, %v9674
        %v9676 = vpop.f32.mrb[0].mxu0
        %9677 = vmatprep.mubr.f32.mxu0 0.0
        %9678 = vmatmul.mubr.f32.gmra.mrb[0].mxu0 %v9586
        %v9679 = vpop.f32.mrb[0].mxu0
        %v9680 = vadd.f32 0.0, %v9679
        %v9681 = vpop.f32.mrb[0].mxu0
        %9682 = vmatprep.mubr.f32.mxu0 0.0
        %9683 = vmatmul.mubr.f32.gmra.mrb[0].mxu0 %v9589
        %v9684 = vpop.f32.mrb[0].mxu0
        %v9685 = vadd.f32 0.0, %v9684
        %v9686 = vpop.f32.mrb[0].mxu0
        %9687 = vmatprep.mubr.f32.mxu0 0.0
        %9688 = vmatmul.mubr.f32.gmra.mrb[0].mxu0 %v9592
        %v9689 = vpop.f32.mrb[0].mxu0
        %v9690 = vadd.f32 0.0, %v9689
        %v9691 = vpop.f32.mrb[0].mxu0
        %9692 = vmatprep.mubr.f32.mxu0 0.0
        %9693 = vmatmul.mubr.f32.gmra.mrb[0].mxu0 %v9595
        %v9694 = vpop.f32.mrb[0].mxu0
        %v9695 = vadd.f32 0.0, %v9694
        %v9696 = vpop.f32.mrb[0].mxu0
        %9697 = vmatprep.mubr.f32.mxu0 0.0
        %9698 = vmatmul.mubr.f32.gmra.mrb[0].mxu0 %v9598
        %v9699 = vpop.f32.mrb[0].mxu0
        %v9700 = vadd.f32 0.0, %v9699
        %v9701 = vpop.f32.mrb[0].mxu0
        %9702 = vmatprep.mubr.f32.mxu0 0.0
        %9703 = vmatmul.mubr.f32.gmra.mrb[0].mxu0 %v9601
        %v9704 = vpop.f32.mrb[0].mxu0
        %v9705 = vadd.f32 0.0, %v9704
        %v9706 = vpop.f32.mrb[0].mxu0
        %9707 = vdwg.mxu0
        %v9708 = vadd.f32 %v9431, %v9670
        %v9709 = vadd.f32 %v9432, %v9675
        %v9710 = vadd.f32 %v9433, %v9680
        %v9711 = vadd.f32 %v9434, %v9685
        %v9712 = vadd.f32 %v9435, %v9690
        %v9713 = vadd.f32 %v9436, %v9695
        %v9714 = vadd.f32 %v9437, %v9700
        %v9715 = vadd.f32 %v9438, %v9705
        %s9716 = scalar_lea.vmem [#allocation7], 512
        %v9717 = vld [vmem:[%s9716] sm:$0xff]
        %v9718 = vld [vmem:[%s9716 + $0x8] sm:$0xff]
        %v9719 = vld [vmem:[%s9716 + $0x10] sm:$0xff]
        %v9720 = vld [vmem:[%s9716 + $0x18] sm:$0xff]
        %v9721 = vld [vmem:[%s9716 + $0x20] sm:$0xff]
        %v9722 = vld [vmem:[%s9716 + $0x28] sm:$0xff]
        %v9723 = vld [vmem:[%s9716 + $0x30] sm:$0xff]
        %v9724 = vld [vmem:[%s9716 + $0x38] sm:$0xff]
        %v9726 = vsel %vm7521, %v9717, 0
        %v9729 = vsel %vm7521, %v9718, 0
        %v9732 = vsel %vm7521, %v9719, 0
        %v9735 = vsel %vm7521, %v9720, 0
        %v9738 = vsel %vm7521, %v9721, 0
        %v9741 = vsel %vm7521, %v9722, 0
        %v9744 = vsel %vm7521, %v9723, 0
        %v9747 = vsel %vm7521, %v9724, 0
        %9749 = vmatprep.subr.mxu0 0.0
        %9750 = vmatpush1.msra.mxu0 %v7450
        %9751 = vmatprep.subr.mxu0 0.0
        %9752 = vmatpush1.msra.mxu0 %v7455
        %9753 = vmatprep.subr.mxu0 0.0
        %9754 = vmatpush1.msra.mxu0 %v7460
        %9755 = vmatprep.subr.mxu0 0.0
        %9756 = vmatpush1.msra.mxu0 %v7465
        %9757 = vmatprep.subr.mxu0 0.0
        %9758 = vmatpush1.msra.mxu0 %v7470
        %9759 = vmatprep.subr.mxu0 0.0
        %9760 = vmatpush1.msra.mxu0 %v7475
        %9761 = vmatprep.subr.mxu0 0.0
        %9762 = vmatpush1.msra.mxu0 %v7480
        %9763 = vmatprep.subr.mxu0 0.0
        %9764 = vmatpush1.msra.mxu0 %v7485
        %9765 = vmatprep.subr.mxu0 0.0
        %9766 = vmatpush1.msra.mxu0 %v7490
        %9767 = vmatprep.subr.mxu0 0.0
        %9768 = vmatpush1.msra.mxu0 %v7495
        %9769 = vmatprep.subr.mxu0 0.0
        %9770 = vmatpush1.msra.mxu0 %v7500
        %9771 = vmatprep.subr.mxu0 0.0
        %9772 = vmatpush1.msra.mxu0 %v7505
        %9773 = vmatprep.subr.mxu0 0.0
        %9774 = vmatpush1.msra.mxu0 %v7547
        %9775 = vmatprep.subr.mxu0 0.0
        %9776 = vmatpush1.msra.mxu0 0.0
        %9777 = vmatprep.subr.mxu0 0.0
        %9778 = vmatpush1.msra.mxu0 0.0
        %9779 = vmatprep.subr.mxu0 0.0
        %9780 = vmatpush1.msra.mxu0 0.0
        %9781 = vmatprep.subr.mxu0 0.0
        %9782 = vmatpush1.msra.mxu0 0.0
        %9783 = vmatprep.subr.mxu0 0.0
        %9784 = vmatpush1.msra.mxu0 0.0
        %9785 = vmatprep.subr.mxu0 0.0
        %9786 = vmatpush1.msra.mxu0 0.0
        %9787 = vmatprep.subr.mxu0 0.0
        %9788 = vmatpush1.msra.mxu0 0.0
        %9789 = vmatprep.subr.mxu0 0.0
        %9790 = vmatpush1.msra.mxu0 0.0
        %9791 = vmatprep.subr.mxu0 0.0
        %9792 = vmatpush1.msra.mxu0 0.0
        %9793 = vmatprep.subr.mxu0 0.0
        %9794 = vmatpush1.msra.mxu0 0.0
        %9795 = vmatprep.subr.mxu0 0.0
        %9796 = vmatpush1.msra.mxu0 0.0
        %9797 = vmatprep.subr.mxu0 0.0
        %9798 = vmatpush1.msra.mxu0 0.0
        %9799 = vmatprep.subr.mxu0 0.0
        %9800 = vmatpush1.msra.mxu0 0.0
        %9801 = vmatprep.subr.mxu0 0.0
        %9802 = vmatpush1.msra.mxu0 0.0
        %9803 = vmatprep.subr.mxu0 0.0
        %9804 = vmatpush1.msra.mxu0 0.0
        %9805 = vmatprep.subr.mxu0 0.0
        %9806 = vmatpush1.msra.mxu0 0.0
        %9807 = vmatprep.subr.mxu0 0.0
        %9808 = vmatpush1.msra.mxu0 0.0
        %9809 = vmatprep.subr.mxu0 0.0
        %9810 = vmatpush1.msra.mxu0 0.0
        %9811 = vmatprep.subr.mxu0 0.0
        %9812 = vmatpush1.msra.mxu0 0.0
        %9813 = vmatprep.mubr.f32.mxu0 0.0
        %9814 = vmatmul.mubr.f32.gmra.mrb[0].mxu0 %v9726
        %v9815 = vpop.f32.mrb[0].mxu0
        %v9816 = vadd.f32 0.0, %v9815
        %v9817 = vpop.f32.mrb[0].mxu0
        %9818 = vmatprep.mubr.f32.mxu0 0.0
        %9819 = vmatmul.mubr.f32.gmra.mrb[0].mxu0 %v9729
        %v9820 = vpop.f32.mrb[0].mxu0
        %v9821 = vadd.f32 0.0, %v9820
        %v9822 = vpop.f32.mrb[0].mxu0
        %9823 = vmatprep.mubr.f32.mxu0 0.0
        %9824 = vmatmul.mubr.f32.gmra.mrb[0].mxu0 %v9732
        %v9825 = vpop.f32.mrb[0].mxu0
        %v9826 = vadd.f32 0.0, %v9825
        %v9827 = vpop.f32.mrb[0].mxu0
        %9828 = vmatprep.mubr.f32.mxu0 0.0
        %9829 = vmatmul.mubr.f32.gmra.mrb[0].mxu0 %v9735
        %v9830 = vpop.f32.mrb[0].mxu0
        %v9831 = vadd.f32 0.0, %v9830
        %v9832 = vpop.f32.mrb[0].mxu0
        %9833 = vmatprep.mubr.f32.mxu0 0.0
        %9834 = vmatmul.mubr.f32.gmra.mrb[0].mxu0 %v9738
        %v9835 = vpop.f32.mrb[0].mxu0
        %v9836 = vadd.f32 0.0, %v9835
        %v9837 = vpop.f32.mrb[0].mxu0
        %9838 = vmatprep.mubr.f32.mxu0 0.0
        %9839 = vmatmul.mubr.f32.gmra.mrb[0].mxu0 %v9741
        %v9840 = vpop.f32.mrb[0].mxu0
        %v9841 = vadd.f32 0.0, %v9840
        %v9842 = vpop.f32.mrb[0].mxu0
        %9843 = vmatprep.mubr.f32.mxu0 0.0
        %9844 = vmatmul.mubr.f32.gmra.mrb[0].mxu0 %v9744
        %v9845 = vpop.f32.mrb[0].mxu0
        %v9846 = vadd.f32 0.0, %v9845
        %v9847 = vpop.f32.mrb[0].mxu0
        %9848 = vmatprep.mubr.f32.mxu0 0.0
        %9849 = vmatmul.mubr.f32.gmra.mrb[0].mxu0 %v9747
        %v9850 = vpop.f32.mrb[0].mxu0
        %v9851 = vadd.f32 0.0, %v9850
        %v9852 = vpop.f32.mrb[0].mxu0
        %9853 = vdwg.mxu0
        %s9854 = scalar_lea.vmem [#allocation13], 64
        %v9855 = vld [vmem:[%s9854] sm:$0xff]
        %v9857 = vsel %vm7795, %v9816, 0
        %v9860 = vsel %vm7795, %v9821, 0
        %v9863 = vsel %vm7795, %v9826, 0
        %v9866 = vsel %vm7795, %v9831, 0
        %v9869 = vsel %vm7795, %v9836, 0
        %v9872 = vsel %vm7795, %v9841, 0
        %v9875 = vsel %vm7795, %v9846, 0
        %v9878 = vsel %vm7795, %v9851, 0
        %9880 = vmatprep.subr.mxu0 0.0
        %9881 = vmatpush1.msra.mxu0 %v9855
        %9882 = vmatprep.subr.mxu0 0.0
        %9883 = vmatpush1.msra.mxu0 0.0
        %9884 = vmatprep.subr.mxu0 0.0
        %9885 = vmatpush1.msra.mxu0 0.0
        %9886 = vmatprep.subr.mxu0 0.0
        %9887 = vmatpush1.msra.mxu0 0.0
        %9888 = vmatprep.subr.mxu0 0.0
        %9889 = vmatpush1.msra.mxu0 0.0
        %9890 = vmatprep.subr.mxu0 0.0
        %9891 = vmatpush1.msra.mxu0 0.0
        %9892 = vmatprep.subr.mxu0 0.0
        %9893 = vmatpush1.msra.mxu0 0.0
        %9894 = vmatprep.subr.mxu0 0.0
        %9895 = vmatpush1.msra.mxu0 0.0
        %9896 = vmatprep.subr.mxu0 0.0
        %9897 = vmatpush1.msra.mxu0 0.0
        %9898 = vmatprep.subr.mxu0 0.0
        %9899 = vmatpush1.msra.mxu0 0.0
        %9900 = vmatprep.subr.mxu0 0.0
        %9901 = vmatpush1.msra.mxu0 0.0
        %9902 = vmatprep.subr.mxu0 0.0
        %9903 = vmatpush1.msra.mxu0 0.0
        %9904 = vmatprep.subr.mxu0 0.0
        %9905 = vmatpush1.msra.mxu0 0.0
        %9906 = vmatprep.subr.mxu0 0.0
        %9907 = vmatpush1.msra.mxu0 0.0
        %9908 = vmatprep.subr.mxu0 0.0
        %9909 = vmatpush1.msra.mxu0 0.0
        %9910 = vmatprep.subr.mxu0 0.0
        %9911 = vmatpush1.msra.mxu0 0.0
        %9912 = vmatprep.subr.mxu0 0.0
        %9913 = vmatpush1.msra.mxu0 0.0
        %9914 = vmatprep.subr.mxu0 0.0
        %9915 = vmatpush1.msra.mxu0 0.0
        %9916 = vmatprep.subr.mxu0 0.0
        %9917 = vmatpush1.msra.mxu0 0.0
        %9918 = vmatprep.subr.mxu0 0.0
        %9919 = vmatpush1.msra.mxu0 0.0
        %9920 = vmatprep.subr.mxu0 0.0
        %9921 = vmatpush1.msra.mxu0 0.0
        %9922 = vmatprep.subr.mxu0 0.0
        %9923 = vmatpush1.msra.mxu0 0.0
        %9924 = vmatprep.subr.mxu0 0.0
        %9925 = vmatpush1.msra.mxu0 0.0
        %9926 = vmatprep.subr.mxu0 0.0
        %9927 = vmatpush1.msra.mxu0 0.0
        %9928 = vmatprep.subr.mxu0 0.0
        %9929 = vmatpush1.msra.mxu0 0.0
        %9930 = vmatprep.subr.mxu0 0.0
        %9931 = vmatpush1.msra.mxu0 0.0
        %9932 = vmatprep.subr.mxu0 0.0
        %9933 = vmatpush1.msra.mxu0 0.0
        %9934 = vmatprep.subr.mxu0 0.0
        %9935 = vmatpush1.msra.mxu0 0.0
        %9936 = vmatprep.subr.mxu0 0.0
        %9937 = vmatpush1.msra.mxu0 0.0
        %9938 = vmatprep.subr.mxu0 0.0
        %9939 = vmatpush1.msra.mxu0 0.0
        %9940 = vmatprep.subr.mxu0 0.0
        %9941 = vmatpush1.msra.mxu0 0.0
        %9942 = vmatprep.subr.mxu0 0.0
        %9943 = vmatpush1.msra.mxu0 0.0
        %9944 = vmatprep.mubr.f32.mxu0 0.0
        %9945 = vmatmul.mubr.f32.gmra.mrb[0].mxu0 %v9857
        %v9946 = vpop.f32.mrb[0].mxu0
        %v9947 = vadd.f32 0.0, %v9946
        %v9948 = vpop.f32.mrb[0].mxu0
        %9949 = vmatprep.mubr.f32.mxu0 0.0
        %9950 = vmatmul.mubr.f32.gmra.mrb[0].mxu0 %v9860
        %v9951 = vpop.f32.mrb[0].mxu0
        %v9952 = vadd.f32 0.0, %v9951
        %v9953 = vpop.f32.mrb[0].mxu0
        %9954 = vmatprep.mubr.f32.mxu0 0.0
        %9955 = vmatmul.mubr.f32.gmra.mrb[0].mxu0 %v9863
        %v9956 = vpop.f32.mrb[0].mxu0
        %v9957 = vadd.f32 0.0, %v9956
        %v9958 = vpop.f32.mrb[0].mxu0
        %9959 = vmatprep.mubr.f32.mxu0 0.0
        %9960 = vmatmul.mubr.f32.gmra.mrb[0].mxu0 %v9866
        %v9961 = vpop.f32.mrb[0].mxu0
        %v9962 = vadd.f32 0.0, %v9961
        %v9963 = vpop.f32.mrb[0].mxu0
        %9964 = vmatprep.mubr.f32.mxu0 0.0
        %9965 = vmatmul.mubr.f32.gmra.mrb[0].mxu0 %v9869
        %v9966 = vpop.f32.mrb[0].mxu0
        %v9967 = vadd.f32 0.0, %v9966
        %v9968 = vpop.f32.mrb[0].mxu0
        %9969 = vmatprep.mubr.f32.mxu0 0.0
        %9970 = vmatmul.mubr.f32.gmra.mrb[0].mxu0 %v9872
        %v9971 = vpop.f32.mrb[0].mxu0
        %v9972 = vadd.f32 0.0, %v9971
        %v9973 = vpop.f32.mrb[0].mxu0
        %9974 = vmatprep.mubr.f32.mxu0 0.0
        %9975 = vmatmul.mubr.f32.gmra.mrb[0].mxu0 %v9875
        %v9976 = vpop.f32.mrb[0].mxu0
        %v9977 = vadd.f32 0.0, %v9976
        %v9978 = vpop.f32.mrb[0].mxu0
        %9979 = vmatprep.mubr.f32.mxu0 0.0
        %9980 = vmatmul.mubr.f32.gmra.mrb[0].mxu0 %v9878
        %v9981 = vpop.f32.mrb[0].mxu0
        %v9982 = vadd.f32 0.0, %v9981
        %v9983 = vpop.f32.mrb[0].mxu0
        %9984 = vdwg.mxu0
        %v9985 = vadd.f32 %v9708, %v9947
        %v9986 = vadd.f32 %v9709, %v9952
        %v9987 = vadd.f32 %v9710, %v9957
        %v9988 = vadd.f32 %v9711, %v9962
        %v9989 = vadd.f32 %v9712, %v9967
        %v9990 = vadd.f32 %v9713, %v9972
        %v9991 = vadd.f32 %v9714, %v9977
        %v9992 = vadd.f32 %v9715, %v9982
        %v9993 = vld [vmem:[%s9] sm:$0x1]
        %v9995 = vlaneseq
        %v9996 = vshrl.u32 %v9995, 7
        %v9997 = vsub.s32 0, %v9996
        %v9998 = vrot.slane %v9993, %v9997
        %v10000 = vadd.f32 %v9985, %v9998
        %v10001 = vadd.f32 %v9986, %v9998
        %v10002 = vadd.f32 %v9987, %v9998
        %v10003 = vadd.f32 %v9988, %v9998
        %v10004 = vadd.f32 %v9989, %v9998
        %v10005 = vadd.f32 %v9990, %v9998
        %v10006 = vadd.f32 %v9991, %v9998
        %v10007 = vadd.f32 %v9992, %v9998
        %v10008 = vmax.f32 %v10000, 0.0
        %v10009 = vmax.f32 %v10001, 0.0
        %v10010 = vmax.f32 %v10002, 0.0
        %v10011 = vmax.f32 %v10003, 0.0
        %v10012 = vmax.f32 %v10004, 0.0
        %v10013 = vmax.f32 %v10005, 0.0
        %v10014 = vmax.f32 %v10006, 0.0
        %v10015 = vmax.f32 %v10007, 0.0
        %v10016 = vld [vmem:[#allocation8] sm:$0xff]
        %v10017 = vld [vmem:[#allocation8 + $0x8] sm:$0xff]
        %vm10018 = vcmask 523264
        %v10020 = vsel %vm10018, %v10016, 0
        %v10023 = vsel %vm10018, %v10017, 0
        %10025 = vmatprep.subr.mxu0 0.0
        %10026 = vmatpush1.msra.mxu0 %v10008
        %10027 = vmatprep.subr.mxu0 0.0
        %10028 = vmatpush1.msra.mxu0 %v10009
        %10029 = vmatprep.subr.mxu0 0.0
        %10030 = vmatpush1.msra.mxu0 %v10010
        %10031 = vmatprep.subr.mxu0 0.0
        %10032 = vmatpush1.msra.mxu0 %v10011
        %10033 = vmatprep.subr.mxu0 0.0
        %10034 = vmatpush1.msra.mxu0 %v10012
        %10035 = vmatprep.subr.mxu0 0.0
        %10036 = vmatpush1.msra.mxu0 %v10013
        %10037 = vmatprep.subr.mxu0 0.0
        %10038 = vmatpush1.msra.mxu0 %v10014
        %10039 = vmatprep.subr.mxu0 0.0
        %10040 = vmatpush1.msra.mxu0 %v10015
        %10041 = vmatprep.subr.mxu0 0.0
        %10042 = vmatpush1.msra.mxu0 0.0
        %10043 = vmatprep.subr.mxu0 0.0
        %10044 = vmatpush1.msra.mxu0 0.0
        %10045 = vmatprep.subr.mxu0 0.0
        %10046 = vmatpush1.msra.mxu0 0.0
        %10047 = vmatprep.subr.mxu0 0.0
        %10048 = vmatpush1.msra.mxu0 0.0
        %10049 = vmatprep.subr.mxu0 0.0
        %10050 = vmatpush1.msra.mxu0 0.0
        %10051 = vmatprep.subr.mxu0 0.0
        %10052 = vmatpush1.msra.mxu0 0.0
        %10053 = vmatprep.subr.mxu0 0.0
        %10054 = vmatpush1.msra.mxu0 0.0
        %10055 = vmatprep.subr.mxu0 0.0
        %10056 = vmatpush1.msra.mxu0 0.0
        %10057 = vmatprep.subr.mxu0 0.0
        %10058 = vmatpush1.msra.mxu0 0.0
        %10059 = vmatprep.subr.mxu0 0.0
        %10060 = vmatpush1.msra.mxu0 0.0
        %10061 = vmatprep.subr.mxu0 0.0
        %10062 = vmatpush1.msra.mxu0 0.0
        %10063 = vmatprep.subr.mxu0 0.0
        %10064 = vmatpush1.msra.mxu0 0.0
        %10065 = vmatprep.subr.mxu0 0.0
        %10066 = vmatpush1.msra.mxu0 0.0
        %10067 = vmatprep.subr.mxu0 0.0
        %10068 = vmatpush1.msra.mxu0 0.0
        %10069 = vmatprep.subr.mxu0 0.0
        %10070 = vmatpush1.msra.mxu0 0.0
        %10071 = vmatprep.subr.mxu0 0.0
        %10072 = vmatpush1.msra.mxu0 0.0
        %10073 = vmatprep.subr.mxu0 0.0
        %10074 = vmatpush1.msra.mxu0 0.0
        %10075 = vmatprep.subr.mxu0 0.0
        %10076 = vmatpush1.msra.mxu0 0.0
        %10077 = vmatprep.subr.mxu0 0.0
        %10078 = vmatpush1.msra.mxu0 0.0
        %10079 = vmatprep.subr.mxu0 0.0
        %10080 = vmatpush1.msra.mxu0 0.0
        %10081 = vmatprep.subr.mxu0 0.0
        %10082 = vmatpush1.msra.mxu0 0.0
        %10083 = vmatprep.subr.mxu0 0.0
        %10084 = vmatpush1.msra.mxu0 0.0
        %10085 = vmatprep.subr.mxu0 0.0
        %10086 = vmatpush1.msra.mxu0 0.0
        %10087 = vmatprep.subr.mxu0 0.0
        %10088 = vmatpush1.msra.mxu0 0.0
        %10089 = vmatprep.mubr.f32.mxu0 0.0
        %10090 = vmatmul.mubr.f32.gmra.mrb[0].mxu0 %v10020
        %v10091 = vpop.f32.mrb[0].mxu0
        %v10092 = vadd.f32 0.0, %v10091
        %v10093 = vpop.f32.mrb[0].mxu0
        %10094 = vmatprep.mubr.f32.mxu0 0.0
        %10095 = vmatmul.mubr.f32.gmra.mrb[0].mxu0 %v10023
        %v10096 = vpop.f32.mrb[0].mxu0
        %v10097 = vadd.f32 0.0, %v10096
        %v10098 = vpop.f32.mrb[0].mxu0
        %10099 = vdwg.mxu0
        %v10100 = vld [vmem:[#allocation10] sm:$0xf]
        %vm10101 = vcmask 130048
        %v10103 = vsel %vm10101, %v10100, 0
        %10105 = vmatprep.subr.mxu0 0.0
        %10106 = vmatpush1.msra.mxu0 %v10092
        %10107 = vmatprep.subr.mxu0 0.0
        %10108 = vmatpush1.msra.mxu0 %v10097
        %10109 = vmatprep.subr.mxu0 0.0
        %10110 = vmatpush1.msra.mxu0 0.0
        %10111 = vmatprep.subr.mxu0 0.0
        %10112 = vmatpush1.msra.mxu0 0.0
        %10113 = vmatprep.subr.mxu0 0.0
        %10114 = vmatpush1.msra.mxu0 0.0
        %10115 = vmatprep.subr.mxu0 0.0
        %10116 = vmatpush1.msra.mxu0 0.0
        %10117 = vmatprep.subr.mxu0 0.0
        %10118 = vmatpush1.msra.mxu0 0.0
        %10119 = vmatprep.subr.mxu0 0.0
        %10120 = vmatpush1.msra.mxu0 0.0
        %10121 = vmatprep.subr.mxu0 0.0
        %10122 = vmatpush1.msra.mxu0 0.0
        %10123 = vmatprep.subr.mxu0 0.0
        %10124 = vmatpush1.msra.mxu0 0.0
        %10125 = vmatprep.subr.mxu0 0.0
        %10126 = vmatpush1.msra.mxu0 0.0
        %10127 = vmatprep.subr.mxu0 0.0
        %10128 = vmatpush1.msra.mxu0 0.0
        %10129 = vmatprep.subr.mxu0 0.0
        %10130 = vmatpush1.msra.mxu0 0.0
        %10131 = vmatprep.subr.mxu0 0.0
        %10132 = vmatpush1.msra.mxu0 0.0
        %10133 = vmatprep.subr.mxu0 0.0
        %10134 = vmatpush1.msra.mxu0 0.0
        %10135 = vmatprep.subr.mxu0 0.0
        %10136 = vmatpush1.msra.mxu0 0.0
        %10137 = vmatprep.subr.mxu0 0.0
        %10138 = vmatpush1.msra.mxu0 0.0
        %10139 = vmatprep.subr.mxu0 0.0
        %10140 = vmatpush1.msra.mxu0 0.0
        %10141 = vmatprep.subr.mxu0 0.0
        %10142 = vmatpush1.msra.mxu0 0.0
        %10143 = vmatprep.subr.mxu0 0.0
        %10144 = vmatpush1.msra.mxu0 0.0
        %10145 = vmatprep.subr.mxu0 0.0
        %10146 = vmatpush1.msra.mxu0 0.0
        %10147 = vmatprep.subr.mxu0 0.0
        %10148 = vmatpush1.msra.mxu0 0.0
        %10149 = vmatprep.subr.mxu0 0.0
        %10150 = vmatpush1.msra.mxu0 0.0
        %10151 = vmatprep.subr.mxu0 0.0
        %10152 = vmatpush1.msra.mxu0 0.0
        %10153 = vmatprep.subr.mxu0 0.0
        %10154 = vmatpush1.msra.mxu0 0.0
        %10155 = vmatprep.subr.mxu0 0.0
        %10156 = vmatpush1.msra.mxu0 0.0
        %10157 = vmatprep.subr.mxu0 0.0
        %10158 = vmatpush1.msra.mxu0 0.0
        %10159 = vmatprep.subr.mxu0 0.0
        %10160 = vmatpush1.msra.mxu0 0.0
        %10161 = vmatprep.subr.mxu0 0.0
        %10162 = vmatpush1.msra.mxu0 0.0
        %10163 = vmatprep.subr.mxu0 0.0
        %10164 = vmatpush1.msra.mxu0 0.0
        %10165 = vmatprep.subr.mxu0 0.0
        %10166 = vmatpush1.msra.mxu0 0.0
        %10167 = vmatprep.subr.mxu0 0.0
        %10168 = vmatpush1.msra.mxu0 0.0
        %10169 = vmatprep.mubr.f32.mxu0 0.0
        %10170 = vmatmul.mubr.f32.gmra.mrb[0].mxu0 %v10103
        %v10171 = vpop.f32.mrb[0].mxu0
        %v10172 = vadd.f32 0.0, %v10171
        %v10173 = vpop.f32.mrb[0].mxu0
        %10174 = vdwg.mxu0
        %vm10175 = vcmask 125952
        %v10176 = vsel %vm10175, %v10172, -inf
        %v10177 = vrot.slane %v10176, 4
        %v10178 = vmax.f32 %v10176, %v10177
        %v10179 = vrot.slane %v10178, 2
        %v10180 = vmax.f32 %v10178, %v10179
        %v10181 = vrot.slane %v10180, 1
        %v10182 = vmax.f32 %v10180, %v10181
        %v10183 = vsel %vm10175, %v10172, 0.0
        %v10184 = vrot.slane %v10183, 4
        %v10185 = vadd.f32 %v10183, %v10184
        %v10186 = vrot.slane %v10185, 2
        %v10187 = vadd.f32 %v10185, %v10186
        %v10188 = vrot.slane %v10187, 1
        %v10189 = vadd.f32 %v10187, %v10188
        %v10190 = vrcp.pop 4.0
        %v10191 = vmul.f32 %v10189, %v10190
        %v10192 = vadd.f32 %v10182, %v10191
        %v10193 = vld [vmem:[#allocation14] sm:$0xff]
        %v10194 = vld [vmem:[#allocation14 + $0x8] sm:$0xff]
        %v10195 = vld [vmem:[%s11] sm:$0x1]
        %v10197 = vlaneseq
        %v10198 = vshrl.u32 %v10197, 7
        %v10199 = vsub.s32 0, %v10198
        %v10200 = vrot.slane %v10195, %v10199
        %v10203 = vsel %vm10101, %v10192, 0
        %10205 = vmatprep.subr.mxu0 0.0
        %10206 = vmatpush1.msra.mxu0 %v10193
        %10207 = vmatprep.subr.mxu0 0.0
        %10208 = vmatpush1.msra.mxu0 %v10194
        %10209 = vmatprep.subr.mxu0 0.0
        %10210 = vmatpush1.msra.mxu0 0.0
        %10211 = vmatprep.subr.mxu0 0.0
        %10212 = vmatpush1.msra.mxu0 0.0
        %10213 = vmatprep.subr.mxu0 0.0
        %10214 = vmatpush1.msra.mxu0 0.0
        %10215 = vmatprep.subr.mxu0 0.0
        %10216 = vmatpush1.msra.mxu0 0.0
        %10217 = vmatprep.subr.mxu0 0.0
        %10218 = vmatpush1.msra.mxu0 0.0
        %10219 = vmatprep.subr.mxu0 0.0
        %10220 = vmatpush1.msra.mxu0 0.0
        %10221 = vmatprep.subr.mxu0 0.0
        %10222 = vmatpush1.msra.mxu0 0.0
        %10223 = vmatprep.subr.mxu0 0.0
        %10224 = vmatpush1.msra.mxu0 0.0
        %10225 = vmatprep.subr.mxu0 0.0
        %10226 = vmatpush1.msra.mxu0 0.0
        %10227 = vmatprep.subr.mxu0 0.0
        %10228 = vmatpush1.msra.mxu0 0.0
        %10229 = vmatprep.subr.mxu0 0.0
        %10230 = vmatpush1.msra.mxu0 0.0
        %10231 = vmatprep.subr.mxu0 0.0
        %10232 = vmatpush1.msra.mxu0 0.0
        %10233 = vmatprep.subr.mxu0 0.0
        %10234 = vmatpush1.msra.mxu0 0.0
        %10235 = vmatprep.subr.mxu0 0.0
        %10236 = vmatpush1.msra.mxu0 0.0
        %10237 = vmatprep.subr.mxu0 0.0
        %10238 = vmatpush1.msra.mxu0 0.0
        %10239 = vmatprep.subr.mxu0 0.0
        %10240 = vmatpush1.msra.mxu0 0.0
        %10241 = vmatprep.subr.mxu0 0.0
        %10242 = vmatpush1.msra.mxu0 0.0
        %10243 = vmatprep.subr.mxu0 0.0
        %10244 = vmatpush1.msra.mxu0 0.0
        %10245 = vmatprep.subr.mxu0 0.0
        %10246 = vmatpush1.msra.mxu0 0.0
        %10247 = vmatprep.subr.mxu0 0.0
        %10248 = vmatpush1.msra.mxu0 0.0
        %10249 = vmatprep.subr.mxu0 0.0
        %10250 = vmatpush1.msra.mxu0 0.0
        %10251 = vmatprep.subr.mxu0 0.0
        %10252 = vmatpush1.msra.mxu0 0.0
        %10253 = vmatprep.subr.mxu0 0.0
        %10254 = vmatpush1.msra.mxu0 0.0
        %10255 = vmatprep.subr.mxu0 0.0
        %10256 = vmatpush1.msra.mxu0 0.0
        %10257 = vmatprep.subr.mxu0 0.0
        %10258 = vmatpush1.msra.mxu0 0.0
        %10259 = vmatprep.subr.mxu0 0.0
        %10260 = vmatpush1.msra.mxu0 0.0
        %10261 = vmatprep.subr.mxu0 0.0
        %10262 = vmatpush1.msra.mxu0 0.0
        %10263 = vmatprep.subr.mxu0 0.0
        %10264 = vmatpush1.msra.mxu0 0.0
        %10265 = vmatprep.subr.mxu0 0.0
        %10266 = vmatpush1.msra.mxu0 0.0
        %10267 = vmatprep.subr.mxu0 0.0
        %10268 = vmatpush1.msra.mxu0 0.0
        %10269 = vmatprep.mubr.f32.mxu0 0.0
        %10270 = vmatmul.mubr.f32.gmra.mrb[0].mxu0 %v10203
        %v10271 = vpop.f32.mrb[0].mxu0
        %v10272 = vadd.f32 %v10200, %v10271
        %v10273 = vpop.f32.mrb[0].mxu0
        %10274 = vdwg.mxu0
        %v10275 = vmax.f32 %v10272, 0.0
        %v10276 = vld [vmem:[#allocation16] sm:$0xff]
        %v10277 = vld [vmem:[#allocation16 + $0x8] sm:$0xff]
        %v10278 = vld [vmem:[#allocation16 + $0x10] sm:$0xff]
        %v10279 = vld [vmem:[#allocation16 + $0x18] sm:$0xff]
        %v10280 = vld [vmem:[%s13] sm:$0x1]
        %v10282 = vlaneseq
        %v10283 = vshrl.u32 %v10282, 7
        %v10284 = vsub.s32 0, %v10283
        %v10285 = vrot.slane %v10280, %v10284
        %vm10287 = vcmask 261120
        %v10289 = vsel %vm10287, %v10275, 0
        %10291 = vmatprep.subr.mxu0 0.0
        %10292 = vmatpush1.msra.mxu0 %v10276
        %10293 = vmatprep.subr.mxu0 0.0
        %10294 = vmatpush1.msra.mxu0 %v10277
        %10295 = vmatprep.subr.mxu0 0.0
        %10296 = vmatpush1.msra.mxu0 %v10278
        %10297 = vmatprep.subr.mxu0 0.0
        %10298 = vmatpush1.msra.mxu0 %v10279
        %10299 = vmatprep.subr.mxu0 0.0
        %10300 = vmatpush1.msra.mxu0 0.0
        %10301 = vmatprep.subr.mxu0 0.0
        %10302 = vmatpush1.msra.mxu0 0.0
        %10303 = vmatprep.subr.mxu0 0.0
        %10304 = vmatpush1.msra.mxu0 0.0
        %10305 = vmatprep.subr.mxu0 0.0
        %10306 = vmatpush1.msra.mxu0 0.0
        %10307 = vmatprep.subr.mxu0 0.0
        %10308 = vmatpush1.msra.mxu0 0.0
        %10309 = vmatprep.subr.mxu0 0.0
        %10310 = vmatpush1.msra.mxu0 0.0
        %10311 = vmatprep.subr.mxu0 0.0
        %10312 = vmatpush1.msra.mxu0 0.0
        %10313 = vmatprep.subr.mxu0 0.0
        %10314 = vmatpush1.msra.mxu0 0.0
        %10315 = vmatprep.subr.mxu0 0.0
        %10316 = vmatpush1.msra.mxu0 0.0
        %10317 = vmatprep.subr.mxu0 0.0
        %10318 = vmatpush1.msra.mxu0 0.0
        %10319 = vmatprep.subr.mxu0 0.0
        %10320 = vmatpush1.msra.mxu0 0.0
        %10321 = vmatprep.subr.mxu0 0.0
        %10322 = vmatpush1.msra.mxu0 0.0
        %10323 = vmatprep.subr.mxu0 0.0
        %10324 = vmatpush1.msra.mxu0 0.0
        %10325 = vmatprep.subr.mxu0 0.0
        %10326 = vmatpush1.msra.mxu0 0.0
        %10327 = vmatprep.subr.mxu0 0.0
        %10328 = vmatpush1.msra.mxu0 0.0
        %10329 = vmatprep.subr.mxu0 0.0
        %10330 = vmatpush1.msra.mxu0 0.0
        %10331 = vmatprep.subr.mxu0 0.0
        %10332 = vmatpush1.msra.mxu0 0.0
        %10333 = vmatprep.subr.mxu0 0.0
        %10334 = vmatpush1.msra.mxu0 0.0
        %10335 = vmatprep.subr.mxu0 0.0
        %10336 = vmatpush1.msra.mxu0 0.0
        %10337 = vmatprep.subr.mxu0 0.0
        %10338 = vmatpush1.msra.mxu0 0.0
        %10339 = vmatprep.subr.mxu0 0.0
        %10340 = vmatpush1.msra.mxu0 0.0
        %10341 = vmatprep.subr.mxu0 0.0
        %10342 = vmatpush1.msra.mxu0 0.0
        %10343 = vmatprep.subr.mxu0 0.0
        %10344 = vmatpush1.msra.mxu0 0.0
        %10345 = vmatprep.subr.mxu0 0.0
        %10346 = vmatpush1.msra.mxu0 0.0
        %10347 = vmatprep.subr.mxu0 0.0
        %10348 = vmatpush1.msra.mxu0 0.0
        %10349 = vmatprep.subr.mxu0 0.0
        %10350 = vmatpush1.msra.mxu0 0.0
        %10351 = vmatprep.subr.mxu0 0.0
        %10352 = vmatpush1.msra.mxu0 0.0
        %10353 = vmatprep.subr.mxu0 0.0
        %10354 = vmatpush1.msra.mxu0 0.0
        %10355 = vmatprep.mubr.f32.mxu0 0.0
        %10356 = vmatmul.mubr.f32.gmra.mrb[0].mxu0 %v10289
        %v10357 = vpop.f32.mrb[0].mxu0
        %v10358 = vadd.f32 %v10285, %v10357
        %v10359 = vpop.f32.mrb[0].mxu0
        %10360 = vdwg.mxu0
        %vm10361 = vcmask 32768
        %10362 = vst.msk [vmem:[%s588] sm:$0x1] %vm10361, %v10358
        %s10363 = sand.u32 %s340, 1
        %s10364 = scalar_lea.sflag [#allocation4], %s10363
        %s10365 = sand.u32 %s340, 1
        %s10366 = scalar_lea.vmem [#allocation17], %s10365
        // Predicated region
        $region113: #{_lambda_.1} parent=75 // pred_check
          %p10367 = pneg %p350
        $region114: #{_lambda_.1} parent=75 // pred_check_branch
          %10369 = sbr.rel (%p10367) target = $region116
        $region115: #{_lambda_.1} parent=75 // pred_region
          %s10371 = ssub.s32 16, 16
          %10372 = vsyncadd %s10364, %s10371
          %s10373 = smul.addr %s33, 16
          %s10374 = scalar_lea.hbm %s14, %s10373
          %s10376 = sshll.u32 %s10366, 4
          %s10377 = int_to_ptr.vmem [resolvable:$true] %s10376
          %10379 = dma.vmem_to_hbm [thread:$0]  %s10377, 16, %s10374, %s10364
        $region116: #{_lambda_.1} parent=75 // pred_fallthru
          _
      $region76: #{_lambda_.1} parent=5 // pred_fallthru
        _
      %p10380 = scmp.le.s32.totalorder 2, %s28
      // Predicated region
      $region117: #{_lambda_.1} parent=5 // pred_check
        %p10381 = pneg %p10380
      $region118: #{_lambda_.1} parent=5 // pred_check_branch
        %10383 = sbr.rel (%p10381) target = $region120
      $region119: #{_lambda_.1} parent=5 // pred_region
        %s10384 = ssub.s32 %s28, 2
        // Predicated region
        $region121: #{_lambda_.1} parent=119 // pred_check
          %p10385 = pneg %p356
        $region122: #{_lambda_.1} parent=119 // pred_check_branch
          %10387 = sbr.rel (%p10385) target = $region124
        $region123: #{_lambda_.1} parent=119 // pred_region
          %s10388 = sand.u32 %s341, 1
          %s10389 = scalar_lea.sflag [#allocation4], %s10388
          %s10390 = sand.u32 %s341, 1
          %s10391 = scalar_lea.vmem [#allocation17], %s10390
          %10392 = dma.done %s10389, 16
        $region124: #{_lambda_.1} parent=119 // pred_fallthru
          _
      $region120: #{_lambda_.1} parent=5 // pred_fallthru
        _
    $region6: #{_lambda_.1} parent=1 // loop_footer
      %s32 = sadd.s32 1, %s28
    $region7: #{_lambda_.1} parent=1 // loop_footer_branch
      %27 = sbr.rel target = $region3
    $region8: #{_lambda_.1} parent=1 // loop_exit
      _
    %10393 = vsyncpa [#allocation3], 1
    %s10394 = scalar_lea.sflag [#allocation3], 1
    %10395 = vsyncpa %s10394, 1
    %10396 = vsyncpa [#allocation6], 1
    %10397 = vsyncpa [#allocation9], 1
    %10398 = vsyncpa [#allocation12], 1
    %10399 = vsyncpa [#allocation15], 1
    %10400 = vsyncpa [#allocation4], 1
    %s10401 = scalar_lea.sflag [#allocation4], 1
    %10402 = vsyncpa %s10401, 1

</llo_original>
